<compile_context>
chip_gen: v7x
topology: tpu7x:2x2x1
jax: 0.10.0
libtpu: 0.0.40
codegen_flags: <defaults>
</compile_context>

<pallas_src>
import jax
import jax.numpy as jnp
from jax.experimental import pallas as pl
from jax.experimental.pallas import tpu as pltpu

_VMEM_LIMIT = 32 * 1024 * 1024   # keeps kernels portable to v7x (64 MiB physical VMEM)


def _round_up(x, m):
    return ((x + m - 1) // m) * m


# ----------------------------- Pallas kernels ------------------------------

def _conv1_pool_kernel(p_ref, w_ref, b_ref, o_ref):
    """conv1 (matmul form) + bias + ReLU + 2x2/2 maxpool for ONE 28x28 image.

    p_ref: (576, 128) bf16  im2col patches (24*24 rows, K=25 zero-padded to 128)
    w_ref: (128, 128) bf16  conv1 weight (25x6 zero-padded)
    b_ref: (1, 128)   f32   conv1 bias   (6 zero-padded)
    o_ref: (144, 128) bf16  pooled activation (12*12 rows; 6 real channels)
    """
    h = jnp.dot(p_ref[...], w_ref[...], preferred_element_type=jnp.float32)
    h = jnp.maximum(h + b_ref[...], 0.0)                     # (576, 128) f32
    # Rows are hh*24 + ww.  Pool W (adjacent row pairs), then pool H.
    h = jnp.max(h.reshape(288, 2, 128), axis=1)              # -> rows hh*12 + wo
    h = jnp.max(h.reshape(12, 2, 12, 128), axis=1)           # -> (ho, wo, 128)
    o_ref[...] = h.reshape(144, 128).astype(o_ref.dtype)


def _conv2_pool_mlp_kernel(p_ref, wc_ref, bc_ref, w1_ref, b1_ref,
                           w2_ref, b2_ref, w3_ref, b3_ref, o_ref):
    """conv2 + bias + ReLU + 2x2 maxpool + flatten + Linear/ReLU x3 for 8 images.

    p_ref : (512, 256)     bf16  im2col patches (8 imgs * 64 rows, K=150 pad 256)
    wc_ref: (256, 128)     bf16  conv2 weight (150x16 zero-padded)
    bc_ref: (1, 128)       f32   conv2 bias
    w1_ref: (16, 128, 128) bf16  fc1 weight, rows permuted to (hw, channel) order
    w2_ref, w3_ref: (128,128) bf16 ; b1/b2/b3_ref: (1,128) f32
    o_ref : (8, 128)       f32   logits (10 real columns)
    """
    bb = o_ref.shape[0]                                       # images per block (8)
    h = jnp.dot(p_ref[...], wc_ref[...], preferred_element_type=jnp.float32)
    h = jnp.maximum(h + bc_ref[...], 0.0)                     # (bb*64, 128) f32
    # Rows are b*64 + hh*8 + ww.  Pool W, then pool H.
    h = jnp.max(h.reshape(bb * 32, 2, 128), axis=1)           # -> b*32 + hh*4 + wo
    h = jnp.max(h.reshape(bb * 4, 2, 4, 128), axis=1)         # -> (b*4+ho, wo, 128)
    feat = h.reshape(bb, 16, 128).astype(jnp.bfloat16)        # (b, ho*4+wo, channel)
    # fc1 over the zero-padded 16*128 flatten: 16 lane-dense MXU matmuls, f32 acc.
    acc = jnp.zeros((bb, 128), jnp.float32)
    for r in range(16):
        acc = acc + jnp.dot(feat[:, r, :], w1_ref[r],
                            preferred_element_type=jnp.float32)
    h1 = jnp.maximum(acc + b1_ref[...], 0.0).astype(jnp.bfloat16)
    h2 = jnp.dot(h1, w2_ref[...], preferred_element_type=jnp.float32)
    h2 = jnp.maximum(h2 + b2_ref[...], 0.0).astype(jnp.bfloat16)
    o_ref[...] = (jnp.dot(h2, w3_ref[...], preferred_element_type=jnp.float32)
                  + b3_ref[...])


# ------------------------------ host-side glue ------------------------------

def _im2col(x, kh, kw):
    """Valid, stride-1 conv patches. x: (N,H,W,C) -> (N*Ho*Wo, KH*KW*C)."""
    n, h, w, c = x.shape
    ho, wo = h - kh + 1, w - kw + 1
    cols = [x[:, i:i + ho, j:j + wo, :] for i in range(kh) for j in range(kw)]
    patches = jnp.concatenate(cols, axis=-1)                  # (N, Ho, Wo, KH*KW*C)
    return patches.reshape(n * ho * wo, kh * kw * c)


def lenet_forward(prep, x_nchw):
    """x_nchw: (N, 1, 28, 28) float -> logits (N, 10) float32."""
    n = x_nchw.shape[0]
    assert x_nchw.shape[1:] == (1, 28, 28), "LeNet head requires 28x28x1 inputs"
    # NCHW -> NHWC; with C=1 this is a pure reshape (no transpose op).
    x = x_nchw.reshape(n, 28, 28, 1).astype(jnp.bfloat16)

    # ---- kernel 1: conv1 + ReLU + maxpool, one image per grid step ----
    p1 = _im2col(x, 5, 5)                                     # (N*576, 25)
    p1 = jnp.pad(p1, ((0, 0), (0, 128 - 25)))                 # lane-dense K
    a1 = pl.pallas_call(
        _conv1_pool_kernel,
        out_shape=jax.ShapeDtypeStruct((n * 144, 128), jnp.bfloat16),
        grid=(n,),
        in_specs=[
            pl.BlockSpec((576, 128), lambda i: (i, 0)),
            pl.BlockSpec((128, 128), lambda i: (0, 0)),
            pl.BlockSpec((1, 128), lambda i: (0, 0)),
        ],
        out_specs=pl.BlockSpec((144, 128), lambda i: (i, 0)),
        compiler_params=pltpu.CompilerParams(
            dimension_semantics=("parallel",),
            vmem_limit_bytes=_VMEM_LIMIT),
    )(p1, prep["wc1"], prep["bc1"])

    # ---- kernel 2: conv2 + ReLU + maxpool + flatten + MLP, 8 images / step ----
    a1 = a1.reshape(n, 12, 12, 128)[..., :6]                  # drop padded channels
    p2 = _im2col(a1, 5, 5)                                    # (N*64, 150)
    n_pad = _round_up(n, 8)
    bb = 8
    p2 = jnp.pad(p2, ((0, (n_pad - n) * 64), (0, 256 - 150)))
    logits = pl.pallas_call(
        _conv2_pool_mlp_kernel,
        out_shape=jax.ShapeDtypeStruct((n_pad, 128), jnp.float32),
        grid=(n_pad // bb,),
        in_specs=[
            pl.BlockSpec((bb * 64, 256), lambda i: (i, 0)),
            pl.BlockSpec((256, 128), lambda i: (0, 0)),
            pl.BlockSpec((1, 128), lambda i: (0, 0)),
            pl.BlockSpec((16, 128, 128), lambda i: (0, 0, 0)),
            pl.BlockSpec((1, 128), lambda i: (0, 0)),
            pl.BlockSpec((128, 128), lambda i: (0, 0)),
            pl.BlockSpec((1, 128), lambda i: (0, 0)),
            pl.BlockSpec((128, 128), lambda i: (0, 0)),
            pl.BlockSpec((1, 128), lambda i: (0, 0)),
        ],
        out_specs=pl.BlockSpec((bb, 128), lambda i: (i, 0)),
        compiler_params=pltpu.CompilerParams(
            dimension_semantics=("parallel",),
            vmem_limit_bytes=_VMEM_LIMIT),
    )(p2, prep["wc2"], prep["bc2"], prep["w1"], prep["b1"],
      prep["w2"], prep["b2"], prep["w3"], prep["b3"])

    return logits[:n, :10]


# ---------------------------- parameter handling ----------------------------

def _conv_w(key, kh, kw, cin, cout):
    fan_in = kh * kw * cin
    return jax.random.normal(key, (kh, kw, cin, cout), jnp.float32) * jnp.sqrt(2.0 / fan_in)


def _lin_w(key, din, dout):
    return jax.random.normal(key, (din, dout), jnp.float32) * jnp.sqrt(1.0 / din)


def init_params(key):
    ks = jax.random.split(key, 10)
    return {
        "w_conv1": _conv_w(ks[0], 5, 5, 1, 6),
        "b_conv1": 0.05 * jax.random.normal(ks[1], (6,), jnp.float32),
        "w_conv2": _conv_w(ks[2], 5, 5, 6, 16),
        "b_conv2": 0.05 * jax.random.normal(ks[3], (16,), jnp.float32),
        "w_fc1": _lin_w(ks[4], 256, 120),
        "b_fc1": 0.05 * jax.random.normal(ks[5], (120,), jnp.float32),
        "w_fc2": _lin_w(ks[6], 120, 84),
        "b_fc2": 0.05 * jax.random.normal(ks[7], (84,), jnp.float32),
        "w_fc3": _lin_w(ks[8], 84, 10),
        "b_fc3": 0.05 * jax.random.normal(ks[9], (10,), jnp.float32),
    }


def prepare_params(params):
    """Pad / permute weights into the kernels' lane-dense layouts (run once, outside jit)."""
    f32, bf16 = jnp.float32, jnp.bfloat16
    wc1 = jnp.pad(params["w_conv1"].reshape(25, 6),
                  ((0, 128 - 25), (0, 128 - 6))).astype(bf16)
    bc1 = jnp.pad(params["b_conv1"], (0, 128 - 6)).reshape(1, 128).astype(f32)
    wc2 = jnp.pad(params["w_conv2"].reshape(150, 16),
                  ((0, 256 - 150), (0, 128 - 16))).astype(bf16)
    bc2 = jnp.pad(params["b_conv2"], (0, 128 - 16)).reshape(1, 128).astype(f32)
    # PyTorch flatten order is row index c*16 + (ho*4 + wo); the kernel consumes
    # (ho*4+wo)-major, channel-minor chunks -> permute to (hw, c, out), pad to (16,128,128).
    w1 = params["w_fc1"].reshape(16, 16, 120).transpose(1, 0, 2)   # (hw, c, out)
    w1 = jnp.pad(w1, ((0, 0), (0, 128 - 16), (0, 128 - 120))).astype(bf16)
    b1 = jnp.pad(params["b_fc1"], (0, 128 - 120)).reshape(1, 128).astype(f32)
    w2 = jnp.pad(params["w_fc2"], ((0, 128 - 120), (0, 128 - 84))).astype(bf16)
    b2 = jnp.pad(params["b_fc2"], (0, 128 - 84)).reshape(1, 128).astype(f32)
    w3 = jnp.pad(params["w_fc3"], ((0, 128 - 84), (0, 128 - 10))).astype(bf16)
    b3 = jnp.pad(params["b_fc3"], (0, 128 - 10)).reshape(1, 128).astype(f32)
    return {"wc1": wc1, "bc1": bc1, "wc2": wc2, "bc2": bc2,
            "w1": w1, "b1": b1, "w2": w2, "b2": b2, "w3": w3, "b3": b3}


# ---------------------------------- main ------------------------------------

if __name__ == "__main__":
    key = jax.random.PRNGKey(0)
    kp, kx = jax.random.split(key)
    params = init_params(kp)
    prep = prepare_params(params)
    # MNIST-sized input (1, 28, 28) is required so the flattened feature is 16*4*4 = 256,
    # matching Linear(256, 120) in the PyTorch module.
    x = jax.random.normal(kx, (2, 1, 28, 28), jnp.float32)

    fwd = jax.jit(lenet_forward)
    logits = jax.block_until_ready(fwd(prep, x))
    assert logits.shape == (2, 10) and logits.dtype == jnp.float32
    print("KERNEL_OK")
</pallas_src>

<mosaic_0001>
module attributes {stable_mosaic.version = 11 : i64} {
  func.func @_conv1_pool_kernel(%arg0: i32, %arg1: memref<576x128xbf16, #tpu.memory_space<vmem>>, %arg2: memref<128x128xbf16, #tpu.memory_space<vmem>>, %arg3: memref<1x128xf32, #tpu.memory_space<vmem>>, %arg4: memref<144x128xbf16, #tpu.memory_space<vmem>>) attributes {dimension_semantics = [#tpu.dimension_semantics<parallel>], iteration_bounds = array<i64: 2>, scalar_prefetch = 0 : i64, scratch_operands = 0 : i64, tpu.core_type = #tpu.core_type<tc>, window_params = [{transform_indices = @transform_0, window_bounds = array<i64: 576, 128>}, {pipeline_mode = #tpu.pipeline_mode<synchronous>, transform_indices = @transform_1, window_bounds = array<i64: 128, 128>}, {pipeline_mode = #tpu.pipeline_mode<synchronous>, transform_indices = @transform_2, window_bounds = array<i64: 1, 128>}, {transform_indices = @transform_3, window_bounds = array<i64: 144, 128>}]} {
    %c0 = arith.constant 0 : index
    %c0_0 = arith.constant 0 : index
    %0 = vector.load %arg1[%c0, %c0_0] : memref<576x128xbf16, #tpu.memory_space<vmem>>, vector<576x128xbf16>
    %c0_1 = arith.constant 0 : index
    %c0_2 = arith.constant 0 : index
    %1 = vector.load %arg2[%c0_1, %c0_2] : memref<128x128xbf16, #tpu.memory_space<vmem>>, vector<128x128xbf16>
    %cst = arith.constant dense<0.000000e+00> : vector<576x128xf32>
    %2 = tpu.matmul %0, %1, %cst {dimension_numbers = #tpu.dot_dimension_numbers<[1], [0], [0], [1], [0, 0, 1, 1], [], []>} : vector<576x128xbf16>, vector<128x128xbf16>, vector<576x128xf32> -> vector<576x128xf32>
    %c0_3 = arith.constant 0 : index
    %c0_4 = arith.constant 0 : index
    %3 = vector.load %arg3[%c0_3, %c0_4] : memref<1x128xf32, #tpu.memory_space<vmem>>, vector<1x128xf32>
    %4 = vector.broadcast %3 : vector<1x128xf32> to vector<576x128xf32>
    %5 = arith.addf %2, %4 : vector<576x128xf32>
    %cst_5 = arith.constant 0.000000e+00 : f32
    %6 = vector.broadcast %cst_5 : f32 to vector<576x128xf32>
    %7 = arith.maximumf %5, %6 : vector<576x128xf32>
    %8 = vector.shape_cast %7 : vector<576x128xf32> to vector<288x2x128xf32>
    %cst_6 = arith.constant dense<0xFF800000> : vector<288x128xf32>
    %9 = vector.multi_reduction <maximumf>, %8, %cst_6 [1] : vector<288x2x128xf32> to vector<288x128xf32>
    %10 = vector.shape_cast %9 : vector<288x128xf32> to vector<12x2x12x128xf32>
    %cst_7 = arith.constant dense<0xFF800000> : vector<12x12x128xf32>
    %11 = vector.multi_reduction <maximumf>, %10, %cst_7 [1] : vector<12x2x12x128xf32> to vector<12x12x128xf32>
    %12 = vector.shape_cast %11 : vector<12x12x128xf32> to vector<144x128xf32>
    %13 = arith.truncf %12 : vector<144x128xf32> to vector<144x128xbf16>
    %c0_8 = arith.constant 0 : index
    %c0_9 = arith.constant 0 : index
    %14 = vector.load %arg4[%c0_8, %c0_9] : memref<144x128xbf16, #tpu.memory_space<vmem>>, vector<144x128xbf16>
    tpu.vector_store %arg4[%c0_8, %c0_9], %13 {strides = array<i32>} : memref<144x128xbf16, #tpu.memory_space<vmem>>, vector<144x128xbf16>,
    return
  }
  func.func @transform_0(%arg0: i32) -> (i32, i32) {
    %c0_i32 = arith.constant 0 : i32
    %c0_i32_0 = arith.constant 0 : i32
    return %arg0, %c0_i32 : i32, i32
  }
  func.func @transform_1(%arg0: i32) -> (i32, i32) {
    %c0_i32 = arith.constant 0 : i32
    %c0_i32_0 = arith.constant 0 : i32
    %c0_i32_1 = arith.constant 0 : i32
    return %c0_i32, %c0_i32_0 : i32, i32
  }
  func.func @transform_2(%arg0: i32) -> (i32, i32) {
    %c0_i32 = arith.constant 0 : i32
    %c0_i32_0 = arith.constant 0 : i32
    %c0_i32_1 = arith.constant 0 : i32
    return %c0_i32, %c0_i32_0 : i32, i32
  }
  func.func @transform_3(%arg0: i32) -> (i32, i32) {
    %c0_i32 = arith.constant 0 : i32
    %c0_i32_0 = arith.constant 0 : i32
    return %arg0, %c0_i32 : i32, i32
  }
}

module attributes {stable_mosaic.version = 11 : i64} {
  func.func @_conv2_pool_mlp_kernel(%arg0: i32, %arg1: memref<512x256xbf16, #tpu.memory_space<vmem>>, %arg2: memref<256x128xbf16, #tpu.memory_space<vmem>>, %arg3: memref<1x128xf32, #tpu.memory_space<vmem>>, %arg4: memref<16x128x128xbf16, #tpu.memory_space<vmem>>, %arg5: memref<1x128xf32, #tpu.memory_space<vmem>>, %arg6: memref<128x128xbf16, #tpu.memory_space<vmem>>, %arg7: memref<1x128xf32, #tpu.memory_space<vmem>>, %arg8: memref<128x128xbf16, #tpu.memory_space<vmem>>, %arg9: memref<1x128xf32, #tpu.memory_space<vmem>>, %arg10: memref<8x128xf32, #tpu.memory_space<vmem>>) attributes {dimension_semantics = [#tpu.dimension_semantics<parallel>], iteration_bounds = array<i64: 1>, scalar_prefetch = 0 : i64, scratch_operands = 0 : i64, tpu.core_type = #tpu.core_type<tc>, window_params = [{transform_indices = @transform_0, window_bounds = array<i64: 512, 256>}, {pipeline_mode = #tpu.pipeline_mode<synchronous>, transform_indices = @transform_1, window_bounds = array<i64: 256, 128>}, {pipeline_mode = #tpu.pipeline_mode<synchronous>, transform_indices = @transform_2, window_bounds = array<i64: 1, 128>}, {pipeline_mode = #tpu.pipeline_mode<synchronous>, transform_indices = @transform_3, window_bounds = array<i64: 16, 128, 128>}, {pipeline_mode = #tpu.pipeline_mode<synchronous>, transform_indices = @transform_4, window_bounds = array<i64: 1, 128>}, {pipeline_mode = #tpu.pipeline_mode<synchronous>, transform_indices = @transform_5, window_bounds = array<i64: 128, 128>}, {pipeline_mode = #tpu.pipeline_mode<synchronous>, transform_indices = @transform_6, window_bounds = array<i64: 1, 128>}, {pipeline_mode = #tpu.pipeline_mode<synchronous>, transform_indices = @transform_7, window_bounds = array<i64: 128, 128>}, {pipeline_mode = #tpu.pipeline_mode<synchronous>, transform_indices = @transform_8, window_bounds = array<i64: 1, 128>}, {transform_indices = @transform_9, window_bounds = array<i64: 8, 128>}]} {
    %c0 = arith.constant 0 : index
    %c0_0 = arith.constant 0 : index
    %0 = vector.load %arg1[%c0, %c0_0] : memref<512x256xbf16, #tpu.memory_space<vmem>>, vector<512x256xbf16>
    %c0_1 = arith.constant 0 : index
    %c0_2 = arith.constant 0 : index
    %1 = vector.load %arg2[%c0_1, %c0_2] : memref<256x128xbf16, #tpu.memory_space<vmem>>, vector<256x128xbf16>
    %cst = arith.constant dense<0.000000e+00> : vector<512x128xf32>
    %2 = tpu.matmul %0, %1, %cst {dimension_numbers = #tpu.dot_dimension_numbers<[1], [0], [0], [1], [0, 0, 1, 1], [], []>} : vector<512x256xbf16>, vector<256x128xbf16>, vector<512x128xf32> -> vector<512x128xf32>
    %c0_3 = arith.constant 0 : index
    %c0_4 = arith.constant 0 : index
    %3 = vector.load %arg3[%c0_3, %c0_4] : memref<1x128xf32, #tpu.memory_space<vmem>>, vector<1x128xf32>
    %4 = vector.broadcast %3 : vector<1x128xf32> to vector<512x128xf32>
    %5 = arith.addf %2, %4 : vector<512x128xf32>
    %cst_5 = arith.constant 0.000000e+00 : f32
    %6 = vector.broadcast %cst_5 : f32 to vector<512x128xf32>
    %7 = arith.maximumf %5, %6 : vector<512x128xf32>
    %8 = vector.shape_cast %7 : vector<512x128xf32> to vector<256x2x128xf32>
    %cst_6 = arith.constant dense<0xFF800000> : vector<256x128xf32>
    %9 = vector.multi_reduction <maximumf>, %8, %cst_6 [1] : vector<256x2x128xf32> to vector<256x128xf32>
    %10 = vector.shape_cast %9 : vector<256x128xf32> to vector<32x2x4x128xf32>
    %cst_7 = arith.constant dense<0xFF800000> : vector<32x4x128xf32>
    %11 = vector.multi_reduction <maximumf>, %10, %cst_7 [1] : vector<32x2x4x128xf32> to vector<32x4x128xf32>
    %12 = vector.shape_cast %11 : vector<32x4x128xf32> to vector<8x16x128xf32>
    %13 = arith.truncf %12 : vector<8x16x128xf32> to vector<8x16x128xbf16>
    %cst_8 = arith.constant 0.000000e+00 : f32
    %14 = vector.broadcast %cst_8 : f32 to vector<8x128xf32>
    %15 = vector.extract_strided_slice %13 {offsets = [0, 0, 0], sizes = [8, 1, 128], strides = [1, 1, 1]} : vector<8x16x128xbf16> to vector<8x1x128xbf16>
    %16 = vector.shape_cast %15 : vector<8x1x128xbf16> to vector<8x128xbf16>
    %c0_9 = arith.constant 0 : index
    %c0_10 = arith.constant 0 : index
    %c0_11 = arith.constant 0 : index
    %17 = vector.load %arg4[%c0_9, %c0_10, %c0_11] : memref<16x128x128xbf16, #tpu.memory_space<vmem>>, vector<1x128x128xbf16>
    %18 = vector.shape_cast %17 : vector<1x128x128xbf16> to vector<128x128xbf16>
    %cst_12 = arith.constant dense<0.000000e+00> : vector<8x128xf32>
    %19 = tpu.matmul %16, %18, %cst_12 {dimension_numbers = #tpu.dot_dimension_numbers<[1], [0], [0], [1], [0, 0, 1, 1], [], []>} : vector<8x128xbf16>, vector<128x128xbf16>, vector<8x128xf32> -> vector<8x128xf32>
    %20 = arith.addf %14, %19 : vector<8x128xf32>
    %21 = vector.extract_strided_slice %13 {offsets = [0, 1, 0], sizes = [8, 1, 128], strides = [1, 1, 1]} : vector<8x16x128xbf16> to vector<8x1x128xbf16>
    %22 = vector.shape_cast %21 : vector<8x1x128xbf16> to vector<8x128xbf16>
    %c1 = arith.constant 1 : index
    %c0_13 = arith.constant 0 : index
    %c0_14 = arith.constant 0 : index
    %23 = vector.load %arg4[%c1, %c0_13, %c0_14] : memref<16x128x128xbf16, #tpu.memory_space<vmem>>, vector<1x128x128xbf16>
    %24 = vector.shape_cast %23 : vector<1x128x128xbf16> to vector<128x128xbf16>
    %cst_15 = arith.constant dense<0.000000e+00> : vector<8x128xf32>
    %25 = tpu.matmul %22, %24, %cst_15 {dimension_numbers = #tpu.dot_dimension_numbers<[1], [0], [0], [1], [0, 0, 1, 1], [], []>} : vector<8x128xbf16>, vector<128x128xbf16>, vector<8x128xf32> -> vector<8x128xf32>
    %26 = arith.addf %20, %25 : vector<8x128xf32>
    %27 = vector.extract_strided_slice %13 {offsets = [0, 2, 0], sizes = [8, 1, 128], strides = [1, 1, 1]} : vector<8x16x128xbf16> to vector<8x1x128xbf16>
    %28 = vector.shape_cast %27 : vector<8x1x128xbf16> to vector<8x128xbf16>
    %c2 = arith.constant 2 : index
    %c0_16 = arith.constant 0 : index
    %c0_17 = arith.constant 0 : index
    %29 = vector.load %arg4[%c2, %c0_16, %c0_17] : memref<16x128x128xbf16, #tpu.memory_space<vmem>>, vector<1x128x128xbf16>
    %30 = vector.shape_cast %29 : vector<1x128x128xbf16> to vector<128x128xbf16>
    %cst_18 = arith.constant dense<0.000000e+00> : vector<8x128xf32>
    %31 = tpu.matmul %28, %30, %cst_18 {dimension_numbers = #tpu.dot_dimension_numbers<[1], [0], [0], [1], [0, 0, 1, 1], [], []>} : vector<8x128xbf16>, vector<128x128xbf16>, vector<8x128xf32> -> vector<8x128xf32>
    %32 = arith.addf %26, %31 : vector<8x128xf32>
    %33 = vector.extract_strided_slice %13 {offsets = [0, 3, 0], sizes = [8, 1, 128], strides = [1, 1, 1]} : vector<8x16x128xbf16> to vector<8x1x128xbf16>
    %34 = vector.shape_cast %33 : vector<8x1x128xbf16> to vector<8x128xbf16>
    %c3 = arith.constant 3 : index
    %c0_19 = arith.constant 0 : index
    %c0_20 = arith.constant 0 : index
    %35 = vector.load %arg4[%c3, %c0_19, %c0_20] : memref<16x128x128xbf16, #tpu.memory_space<vmem>>, vector<1x128x128xbf16>
    %36 = vector.shape_cast %35 : vector<1x128x128xbf16> to vector<128x128xbf16>
    %cst_21 = arith.constant dense<0.000000e+00> : vector<8x128xf32>
    %37 = tpu.matmul %34, %36, %cst_21 {dimension_numbers = #tpu.dot_dimension_numbers<[1], [0], [0], [1], [0, 0, 1, 1], [], []>} : vector<8x128xbf16>, vector<128x128xbf16>, vector<8x128xf32> -> vector<8x128xf32>
    %38 = arith.addf %32, %37 : vector<8x128xf32>
    %39 = vector.extract_strided_slice %13 {offsets = [0, 4, 0], sizes = [8, 1, 128], strides = [1, 1, 1]} : vector<8x16x128xbf16> to vector<8x1x128xbf16>
    %40 = vector.shape_cast %39 : vector<8x1x128xbf16> to vector<8x128xbf16>
    %c4 = arith.constant 4 : index
    %c0_22 = arith.constant 0 : index
    %c0_23 = arith.constant 0 : index
    %41 = vector.load %arg4[%c4, %c0_22, %c0_23] : memref<16x128x128xbf16, #tpu.memory_space<vmem>>, vector<1x128x128xbf16>
    %42 = vector.shape_cast %41 : vector<1x128x128xbf16> to vector<128x128xbf16>
    %cst_24 = arith.constant dense<0.000000e+00> : vector<8x128xf32>
    %43 = tpu.matmul %40, %42, %cst_24 {dimension_numbers = #tpu.dot_dimension_numbers<[1], [0], [0], [1], [0, 0, 1, 1], [], []>} : vector<8x128xbf16>, vector<128x128xbf16>, vector<8x128xf32> -> vector<8x128xf32>
    %44 = arith.addf %38, %43 : vector<8x128xf32>
    %45 = vector.extract_strided_slice %13 {offsets = [0, 5, 0], sizes = [8, 1, 128], strides = [1, 1, 1]} : vector<8x16x128xbf16> to vector<8x1x128xbf16>
    %46 = vector.shape_cast %45 : vector<8x1x128xbf16> to vector<8x128xbf16>
    %c5 = arith.constant 5 : index
    %c0_25 = arith.constant 0 : index
    %c0_26 = arith.constant 0 : index
    %47 = vector.load %arg4[%c5, %c0_25, %c0_26] : memref<16x128x128xbf16, #tpu.memory_space<vmem>>, vector<1x128x128xbf16>
    %48 = vector.shape_cast %47 : vector<1x128x128xbf16> to vector<128x128xbf16>
    %cst_27 = arith.constant dense<0.000000e+00> : vector<8x128xf32>
    %49 = tpu.matmul %46, %48, %cst_27 {dimension_numbers = #tpu.dot_dimension_numbers<[1], [0], [0], [1], [0, 0, 1, 1], [], []>} : vector<8x128xbf16>, vector<128x128xbf16>, vector<8x128xf32> -> vector<8x128xf32>
    %50 = arith.addf %44, %49 : vector<8x128xf32>
    %51 = vector.extract_strided_slice %13 {offsets = [0, 6, 0], sizes = [8, 1, 128], strides = [1, 1, 1]} : vector<8x16x128xbf16> to vector<8x1x128xbf16>
    %52 = vector.shape_cast %51 : vector<8x1x128xbf16> to vector<8x128xbf16>
    %c6 = arith.constant 6 : index
    %c0_28 = arith.constant 0 : index
    %c0_29 = arith.constant 0 : index
    %53 = vector.load %arg4[%c6, %c0_28, %c0_29] : memref<16x128x128xbf16, #tpu.memory_space<vmem>>, vector<1x128x128xbf16>
    %54 = vector.shape_cast %53 : vector<1x128x128xbf16> to vector<128x128xbf16>
    %cst_30 = arith.constant dense<0.000000e+00> : vector<8x128xf32>
    %55 = tpu.matmul %52, %54, %cst_30 {dimension_numbers = #tpu.dot_dimension_numbers<[1], [0], [0], [1], [0, 0, 1, 1], [], []>} : vector<8x128xbf16>, vector<128x128xbf16>, vector<8x128xf32> -> vector<8x128xf32>
    %56 = arith.addf %50, %55 : vector<8x128xf32>
    %57 = vector.extract_strided_slice %13 {offsets = [0, 7, 0], sizes = [8, 1, 128], strides = [1, 1, 1]} : vector<8x16x128xbf16> to vector<8x1x128xbf16>
    %58 = vector.shape_cast %57 : vector<8x1x128xbf16> to vector<8x128xbf16>
    %c7 = arith.constant 7 : index
    %c0_31 = arith.constant 0 : index
    %c0_32 = arith.constant 0 : index
    %59 = vector.load %arg4[%c7, %c0_31, %c0_32] : memref<16x128x128xbf16, #tpu.memory_space<vmem>>, vector<1x128x128xbf16>
    %60 = vector.shape_cast %59 : vector<1x128x128xbf16> to vector<128x128xbf16>
    %cst_33 = arith.constant dense<0.000000e+00> : vector<8x128xf32>
    %61 = tpu.matmul %58, %60, %cst_33 {dimension_numbers = #tpu.dot_dimension_numbers<[1], [0], [0], [1], [0, 0, 1, 1], [], []>} : vector<8x128xbf16>, vector<128x128xbf16>, vector<8x128xf32> -> vector<8x128xf32>
    %62 = arith.addf %56, %61 : vector<8x128xf32>
    %63 = vector.extract_strided_slice %13 {offsets = [0, 8, 0], sizes = [8, 1, 128], strides = [1, 1, 1]} : vector<8x16x128xbf16> to vector<8x1x128xbf16>
    %64 = vector.shape_cast %63 : vector<8x1x128xbf16> to vector<8x128xbf16>
    %c8 = arith.constant 8 : index
    %c0_34 = arith.constant 0 : index
    %c0_35 = arith.constant 0 : index
    %65 = vector.load %arg4[%c8, %c0_34, %c0_35] : memref<16x128x128xbf16, #tpu.memory_space<vmem>>, vector<1x128x128xbf16>
    %66 = vector.shape_cast %65 : vector<1x128x128xbf16> to vector<128x128xbf16>
    %cst_36 = arith.constant dense<0.000000e+00> : vector<8x128xf32>
    %67 = tpu.matmul %64, %66, %cst_36 {dimension_numbers = #tpu.dot_dimension_numbers<[1], [0], [0], [1], [0, 0, 1, 1], [], []>} : vector<8x128xbf16>, vector<128x128xbf16>, vector<8x128xf32> -> vector<8x128xf32>
    %68 = arith.addf %62, %67 : vector<8x128xf32>
    %69 = vector.extract_strided_slice %13 {offsets = [0, 9, 0], sizes = [8, 1, 128], strides = [1, 1, 1]} : vector<8x16x128xbf16> to vector<8x1x128xbf16>
    %70 = vector.shape_cast %69 : vector<8x1x128xbf16> to vector<8x128xbf16>
    %c9 = arith.constant 9 : index
    %c0_37 = arith.constant 0 : index
    %c0_38 = arith.constant 0 : index
    %71 = vector.load %arg4[%c9, %c0_37, %c0_38] : memref<16x128x128xbf16, #tpu.memory_space<vmem>>, vector<1x128x128xbf16>
    %72 = vector.shape_cast %71 : vector<1x128x128xbf16> to vector<128x128xbf16>
    %cst_39 = arith.constant dense<0.000000e+00> : vector<8x128xf32>
    %73 = tpu.matmul %70, %72, %cst_39 {dimension_numbers = #tpu.dot_dimension_numbers<[1], [0], [0], [1], [0, 0, 1, 1], [], []>} : vector<8x128xbf16>, vector<128x128xbf16>, vector<8x128xf32> -> vector<8x128xf32>
    %74 = arith.addf %68, %73 : vector<8x128xf32>
    %75 = vector.extract_strided_slice %13 {offsets = [0, 10, 0], sizes = [8, 1, 128], strides = [1, 1, 1]} : vector<8x16x128xbf16> to vector<8x1x128xbf16>
    %76 = vector.shape_cast %75 : vector<8x1x128xbf16> to vector<8x128xbf16>
    %c10 = arith.constant 10 : index
    %c0_40 = arith.constant 0 : index
    %c0_41 = arith.constant 0 : index
    %77 = vector.load %arg4[%c10, %c0_40, %c0_41] : memref<16x128x128xbf16, #tpu.memory_space<vmem>>, vector<1x128x128xbf16>
    %78 = vector.shape_cast %77 : vector<1x128x128xbf16> to vector<128x128xbf16>
    %cst_42 = arith.constant dense<0.000000e+00> : vector<8x128xf32>
    %79 = tpu.matmul %76, %78, %cst_42 {dimension_numbers = #tpu.dot_dimension_numbers<[1], [0], [0], [1], [0, 0, 1, 1], [], []>} : vector<8x128xbf16>, vector<128x128xbf16>, vector<8x128xf32> -> vector<8x128xf32>
    %80 = arith.addf %74, %79 : vector<8x128xf32>
    %81 = vector.extract_strided_slice %13 {offsets = [0, 11, 0], sizes = [8, 1, 128], strides = [1, 1, 1]} : vector<8x16x128xbf16> to vector<8x1x128xbf16>
    %82 = vector.shape_cast %81 : vector<8x1x128xbf16> to vector<8x128xbf16>
    %c11 = arith.constant 11 : index
    %c0_43 = arith.constant 0 : index
    %c0_44 = arith.constant 0 : index
    %83 = vector.load %arg4[%c11, %c0_43, %c0_44] : memref<16x128x128xbf16, #tpu.memory_space<vmem>>, vector<1x128x128xbf16>
    %84 = vector.shape_cast %83 : vector<1x128x128xbf16> to vector<128x128xbf16>
    %cst_45 = arith.constant dense<0.000000e+00> : vector<8x128xf32>
    %85 = tpu.matmul %82, %84, %cst_45 {dimension_numbers = #tpu.dot_dimension_numbers<[1], [0], [0], [1], [0, 0, 1, 1], [], []>} : vector<8x128xbf16>, vector<128x128xbf16>, vector<8x128xf32> -> vector<8x128xf32>
    %86 = arith.addf %80, %85 : vector<8x128xf32>
    %87 = vector.extract_strided_slice %13 {offsets = [0, 12, 0], sizes = [8, 1, 128], strides = [1, 1, 1]} : vector<8x16x128xbf16> to vector<8x1x128xbf16>
    %88 = vector.shape_cast %87 : vector<8x1x128xbf16> to vector<8x128xbf16>
    %c12 = arith.constant 12 : index
    %c0_46 = arith.constant 0 : index
    %c0_47 = arith.constant 0 : index
    %89 = vector.load %arg4[%c12, %c0_46, %c0_47] : memref<16x128x128xbf16, #tpu.memory_space<vmem>>, vector<1x128x128xbf16>
    %90 = vector.shape_cast %89 : vector<1x128x128xbf16> to vector<128x128xbf16>
    %cst_48 = arith.constant dense<0.000000e+00> : vector<8x128xf32>
    %91 = tpu.matmul %88, %90, %cst_48 {dimension_numbers = #tpu.dot_dimension_numbers<[1], [0], [0], [1], [0, 0, 1, 1], [], []>} : vector<8x128xbf16>, vector<128x128xbf16>, vector<8x128xf32> -> vector<8x128xf32>
    %92 = arith.addf %86, %91 : vector<8x128xf32>
    %93 = vector.extract_strided_slice %13 {offsets = [0, 13, 0], sizes = [8, 1, 128], strides = [1, 1, 1]} : vector<8x16x128xbf16> to vector<8x1x128xbf16>
    %94 = vector.shape_cast %93 : vector<8x1x128xbf16> to vector<8x128xbf16>
    %c13 = arith.constant 13 : index
    %c0_49 = arith.constant 0 : index
    %c0_50 = arith.constant 0 : index
    %95 = vector.load %arg4[%c13, %c0_49, %c0_50] : memref<16x128x128xbf16, #tpu.memory_space<vmem>>, vector<1x128x128xbf16>
    %96 = vector.shape_cast %95 : vector<1x128x128xbf16> to vector<128x128xbf16>
    %cst_51 = arith.constant dense<0.000000e+00> : vector<8x128xf32>
    %97 = tpu.matmul %94, %96, %cst_51 {dimension_numbers = #tpu.dot_dimension_numbers<[1], [0], [0], [1], [0, 0, 1, 1], [], []>} : vector<8x128xbf16>, vector<128x128xbf16>, vector<8x128xf32> -> vector<8x128xf32>
    %98 = arith.addf %92, %97 : vector<8x128xf32>
    %99 = vector.extract_strided_slice %13 {offsets = [0, 14, 0], sizes = [8, 1, 128], strides = [1, 1, 1]} : vector<8x16x128xbf16> to vector<8x1x128xbf16>
    %100 = vector.shape_cast %99 : vector<8x1x128xbf16> to vector<8x128xbf16>
    %c14 = arith.constant 14 : index
    %c0_52 = arith.constant 0 : index
    %c0_53 = arith.constant 0 : index
    %101 = vector.load %arg4[%c14, %c0_52, %c0_53] : memref<16x128x128xbf16, #tpu.memory_space<vmem>>, vector<1x128x128xbf16>
    %102 = vector.shape_cast %101 : vector<1x128x128xbf16> to vector<128x128xbf16>
    %cst_54 = arith.constant dense<0.000000e+00> : vector<8x128xf32>
    %103 = tpu.matmul %100, %102, %cst_54 {dimension_numbers = #tpu.dot_dimension_numbers<[1], [0], [0], [1], [0, 0, 1, 1], [], []>} : vector<8x128xbf16>, vector<128x128xbf16>, vector<8x128xf32> -> vector<8x128xf32>
    %104 = arith.addf %98, %103 : vector<8x128xf32>
    %105 = vector.extract_strided_slice %13 {offsets = [0, 15, 0], sizes = [8, 1, 128], strides = [1, 1, 1]} : vector<8x16x128xbf16> to vector<8x1x128xbf16>
    %106 = vector.shape_cast %105 : vector<8x1x128xbf16> to vector<8x128xbf16>
    %c15 = arith.constant 15 : index
    %c0_55 = arith.constant 0 : index
    %c0_56 = arith.constant 0 : index
    %107 = vector.load %arg4[%c15, %c0_55, %c0_56] : memref<16x128x128xbf16, #tpu.memory_space<vmem>>, vector<1x128x128xbf16>
    %108 = vector.shape_cast %107 : vector<1x128x128xbf16> to vector<128x128xbf16>
    %cst_57 = arith.constant dense<0.000000e+00> : vector<8x128xf32>
    %109 = tpu.matmul %106, %108, %cst_57 {dimension_numbers = #tpu.dot_dimension_numbers<[1], [0], [0], [1], [0, 0, 1, 1], [], []>} : vector<8x128xbf16>, vector<128x128xbf16>, vector<8x128xf32> -> vector<8x128xf32>
    %110 = arith.addf %104, %109 : vector<8x128xf32>
    %c0_58 = arith.constant 0 : index
    %c0_59 = arith.constant 0 : index
    %111 = vector.load %arg5[%c0_58, %c0_59] : memref<1x128xf32, #tpu.memory_space<vmem>>, vector<1x128xf32>
    %112 = vector.broadcast %111 : vector<1x128xf32> to vector<8x128xf32>
    %113 = arith.addf %110, %112 : vector<8x128xf32>
    %cst_60 = arith.constant 0.000000e+00 : f32
    %114 = vector.broadcast %cst_60 : f32 to vector<8x128xf32>
    %115 = arith.maximumf %113, %114 : vector<8x128xf32>
    %116 = arith.truncf %115 : vector<8x128xf32> to vector<8x128xbf16>
    %c0_61 = arith.constant 0 : index
    %c0_62 = arith.constant 0 : index
    %117 = vector.load %arg6[%c0_61, %c0_62] : memref<128x128xbf16, #tpu.memory_space<vmem>>, vector<128x128xbf16>
    %cst_63 = arith.constant dense<0.000000e+00> : vector<8x128xf32>
    %118 = tpu.matmul %116, %117, %cst_63 {dimension_numbers = #tpu.dot_dimension_numbers<[1], [0], [0], [1], [0, 0, 1, 1], [], []>} : vector<8x128xbf16>, vector<128x128xbf16>, vector<8x128xf32> -> vector<8x128xf32>
    %c0_64 = arith.constant 0 : index
    %c0_65 = arith.constant 0 : index
    %119 = vector.load %arg7[%c0_64, %c0_65] : memref<1x128xf32, #tpu.memory_space<vmem>>, vector<1x128xf32>
    %120 = vector.broadcast %119 : vector<1x128xf32> to vector<8x128xf32>
    %121 = arith.addf %118, %120 : vector<8x128xf32>
    %cst_66 = arith.constant 0.000000e+00 : f32
    %122 = vector.broadcast %cst_66 : f32 to vector<8x128xf32>
    %123 = arith.maximumf %121, %122 : vector<8x128xf32>
    %124 = arith.truncf %123 : vector<8x128xf32> to vector<8x128xbf16>
    %c0_67 = arith.constant 0 : index
    %c0_68 = arith.constant 0 : index
    %125 = vector.load %arg8[%c0_67, %c0_68] : memref<128x128xbf16, #tpu.memory_space<vmem>>, vector<128x128xbf16>
    %cst_69 = arith.constant dense<0.000000e+00> : vector<8x128xf32>
    %126 = tpu.matmul %124, %125, %cst_69 {dimension_numbers = #tpu.dot_dimension_numbers<[1], [0], [0], [1], [0, 0, 1, 1], [], []>} : vector<8x128xbf16>, vector<128x128xbf16>, vector<8x128xf32> -> vector<8x128xf32>
    %c0_70 = arith.constant 0 : index
    %c0_71 = arith.constant 0 : index
    %127 = vector.load %arg9[%c0_70, %c0_71] : memref<1x128xf32, #tpu.memory_space<vmem>>, vector<1x128xf32>
    %128 = vector.broadcast %127 : vector<1x128xf32> to vector<8x128xf32>
    %129 = arith.addf %126, %128 : vector<8x128xf32>
    %c0_72 = arith.constant 0 : index
    %c0_73 = arith.constant 0 : index
    %130 = vector.load %arg10[%c0_72, %c0_73] : memref<8x128xf32, #tpu.memory_space<vmem>>, vector<8x128xf32>
    tpu.vector_store %arg10[%c0_72, %c0_73], %129 {strides = array<i32>} : memref<8x128xf32, #tpu.memory_space<vmem>>, vector<8x128xf32>,
    return
  }
  func.func @transform_0(%arg0: i32) -> (i32, i32) {
    %c0_i32 = arith.constant 0 : i32
    %c0_i32_0 = arith.constant 0 : i32
    return %arg0, %c0_i32 : i32, i32
  }
  func.func @transform_1(%arg0: i32) -> (i32, i32) {
    %c0_i32 = arith.constant 0 : i32
    %c0_i32_0 = arith.constant 0 : i32
    %c0_i32_1 = arith.constant 0 : i32
    return %c0_i32, %c0_i32_0 : i32, i32
  }
  func.func @transform_2(%arg0: i32) -> (i32, i32) {
    %c0_i32 = arith.constant 0 : i32
    %c0_i32_0 = arith.constant 0 : i32
    %c0_i32_1 = arith.constant 0 : i32
    return %c0_i32, %c0_i32_0 : i32, i32
  }
  func.func @transform_3(%arg0: i32) -> (i32, i32, i32) {
    %c0_i32 = arith.constant 0 : i32
    %c0_i32_0 = arith.constant 0 : i32
    %c0_i32_1 = arith.constant 0 : i32
    %c0_i32_2 = arith.constant 0 : i32
    return %c0_i32, %c0_i32_0, %c0_i32_1 : i32, i32, i32
  }
  func.func @transform_4(%arg0: i32) -> (i32, i32) {
    %c0_i32 = arith.constant 0 : i32
    %c0_i32_0 = arith.constant 0 : i32
    %c0_i32_1 = arith.constant 0 : i32
    return %c0_i32, %c0_i32_0 : i32, i32
  }
  func.func @transform_5(%arg0: i32) -> (i32, i32) {
    %c0_i32 = arith.constant 0 : i32
    %c0_i32_0 = arith.constant 0 : i32
    %c0_i32_1 = arith.constant 0 : i32
    return %c0_i32, %c0_i32_0 : i32, i32
  }
  func.func @transform_6(%arg0: i32) -> (i32, i32) {
    %c0_i32 = arith.constant 0 : i32
    %c0_i32_0 = arith.constant 0 : i32
    %c0_i32_1 = arith.constant 0 : i32
    return %c0_i32, %c0_i32_0 : i32, i32
  }
  func.func @transform_7(%arg0: i32) -> (i32, i32) {
    %c0_i32 = arith.constant 0 : i32
    %c0_i32_0 = arith.constant 0 : i32
    %c0_i32_1 = arith.constant 0 : i32
    return %c0_i32, %c0_i32_0 : i32, i32
  }
  func.func @transform_8(%arg0: i32) -> (i32, i32) {
    %c0_i32 = arith.constant 0 : i32
    %c0_i32_0 = arith.constant 0 : i32
    %c0_i32_1 = arith.constant 0 : i32
    return %c0_i32, %c0_i32_0 : i32, i32
  }
  func.func @transform_9(%arg0: i32) -> (i32, i32) {
    %c0_i32 = arith.constant 0 : i32
    %c0_i32_0 = arith.constant 0 : i32
    return %arg0, %c0_i32 : i32, i32
  }
}

</mosaic_0001>

<llo_original>
// kernel: lenet_forward.2
$region0: #{lenet_forward.2}
  #allocation0 [shape = 'u32[]', space=smem, size = 0x4, offset = 0x4, fixed_abs, tag = 'smem constant byte address 0x4 - core index']
  #allocation1 [shape = 'u32[144,128]{1,0:T(1,128)}', space=vmem, size = 0x12000, scoped, tag = 'internal scratch']
  %s0 = inlined_call_operand.vmem [shape: bf16[1152,128], index: 0, kind: input, shape index: {}]
  %s1 = inlined_call_operand.vmem [shape: bf16[128,128], index: 1, kind: input, shape index: {}]
  %s2 = inlined_call_operand.vmem [shape: f32[1,128], index: 2, kind: input, shape index: {}]
  %s3 = inlined_call_operand.vmem [shape: bf16[288,128], index: 3, kind: output, shape index: {}]
  %s4 = sld [smem:[#allocation0]]
  $region45: #{lenet_forward.2} parent=0
    _
  %s6 = ssub.s32 1, %s4
  %s7 = scalar_select 0, %s6, %s4
  loop: start=0, step=1, limit=4
  $region2: #{lenet_forward.2} parent=0 // loop_pre_header
    _
  $region3: #{lenet_forward.2} parent=0 // loop_header
    %s9 = sphi 0, %s13
    %p10 = scmp.ge.s32.totalorder %s9, 4
    %s19 = sphi 0, %s21
    %s22 = sphi 0, %s19
    %s23 = sphi 0, %s22
    %s39 = sphi 0, %s23
    %s43 = sphi 0, %s43
    %s45 = sphi 0, %s43
    %s46 = sphi 0, %s45
    %s60 = sphi 0, %s46
    %s64 = sphi 0, %s64
    %s66 = sphi 0, %s64
    %s67 = sphi 0, %s66
    %s81 = sphi 0, %s67
    %s87 = sphi 0, %s89
    %s90 = sphi 0, %s87
    %s91 = sphi 0, %s90
    %s107 = sphi 0, %s91
  $region4: #{lenet_forward.2} parent=0 // loop_header_branch
    %12 = sbr.rel (%p10) target = $region8
  $region5: #{lenet_forward.2} parent=0 // loop_body
    %s14 = ssub.s32 %s9, 1
    %s15 = ssub.s32 %s9, 2
    %s16 = sadd.s32 %s9, 1
    %s17 = ssub.s32 %s9, %s16
    %p18 = scmp.eq.s32.totalorder %s17, 0
    %s20 = sadd.s32 %s19, 1
    %s21 = scalar_select %p18, %s19, %s20
    %p24 = pneg %p18
    %p25 = scmp.eq.s32.totalorder %s9, 1
    %p26 = por %p24, %p25
    %p27 = scmp.ne.s32.totalorder %s19, %s22
    %p28 = scmp.eq.s32.totalorder %s9, 0
    %p29 = por %p27, %p28
    %p30 = scmp.ne.s32.totalorder %s19, %s22
    %p31 = scmp.eq.s32.totalorder %s14, 1
    %p32 = por %p30, %p31
    %p33 = scmp.ne.s32.totalorder %s22, %s23
    %p34 = scmp.eq.s32.totalorder %s14, 0
    %p35 = por %p33, %p34
    %p36 = scmp.ne.s32.totalorder %s22, %s23
    %p37 = scmp.eq.s32.totalorder %s15, 1
    %p38 = por %p36, %p37
    %p40 = scmp.ne.s32.totalorder %s23, %s39
    %p41 = scmp.eq.s32.totalorder %s15, 0
    %p42 = por %p40, %p41
    %s44 = sadd.s32 %s43, 1
    %p47 = scmp.eq.s32.totalorder %s9, 1
    %p48 = scmp.ne.s32.totalorder %s43, %s45
    %p49 = scmp.eq.s32.totalorder %s9, 0
    %p50 = por %p48, %p49
    %p51 = scmp.ne.s32.totalorder %s43, %s45
    %p52 = scmp.eq.s32.totalorder %s14, 1
    %p53 = por %p51, %p52
    %p54 = scmp.ne.s32.totalorder %s45, %s46
    %p55 = scmp.eq.s32.totalorder %s14, 0
    %p56 = por %p54, %p55
    %p57 = scmp.ne.s32.totalorder %s45, %s46
    %p58 = scmp.eq.s32.totalorder %s15, 1
    %p59 = por %p57, %p58
    %p61 = scmp.ne.s32.totalorder %s46, %s60
    %p62 = scmp.eq.s32.totalorder %s15, 0
    %p63 = por %p61, %p62
    %s65 = sadd.s32 %s64, 1
    %p68 = scmp.eq.s32.totalorder %s9, 1
    %p69 = scmp.ne.s32.totalorder %s64, %s66
    %p70 = scmp.eq.s32.totalorder %s9, 0
    %p71 = por %p69, %p70
    %p72 = scmp.ne.s32.totalorder %s64, %s66
    %p73 = scmp.eq.s32.totalorder %s14, 1
    %p74 = por %p72, %p73
    %p75 = scmp.ne.s32.totalorder %s66, %s67
    %p76 = scmp.eq.s32.totalorder %s14, 0
    %p77 = por %p75, %p76
    %p78 = scmp.ne.s32.totalorder %s66, %s67
    %p79 = scmp.eq.s32.totalorder %s15, 1
    %p80 = por %p78, %p79
    %p82 = scmp.ne.s32.totalorder %s67, %s81
    %p83 = scmp.eq.s32.totalorder %s15, 0
    %p84 = por %p82, %p83
    %s85 = ssub.s32 %s9, %s16
    %p86 = scmp.eq.s32.totalorder %s85, 0
    %s88 = sadd.s32 %s87, 1
    %s89 = scalar_select %p86, %s87, %s88
    %p92 = pneg %p86
    %p93 = scmp.eq.s32.totalorder %s9, 1
    %p94 = por %p92, %p93
    %p95 = scmp.ne.s32.totalorder %s87, %s90
    %p96 = scmp.eq.s32.totalorder %s9, 0
    %p97 = por %p95, %p96
    %p98 = scmp.ne.s32.totalorder %s87, %s90
    %p99 = scmp.eq.s32.totalorder %s14, 1
    %p100 = por %p98, %p99
    %p101 = scmp.ne.s32.totalorder %s90, %s91
    %p102 = scmp.eq.s32.totalorder %s14, 0
    %p103 = por %p101, %p102
    %p104 = scmp.ne.s32.totalorder %s90, %s91
    %p105 = scmp.eq.s32.totalorder %s15, 1
    %p106 = por %p104, %p105
    %p108 = scmp.ne.s32.totalorder %s91, %s107
    %p109 = scmp.eq.s32.totalorder %s15, 0
    %p110 = por %p108, %p109
    %p111 = scmp.le.s32.totalorder 1, %s9
    %p112 = scmp.lt.s32.totalorder %s9, 3
    %p113 = pnand %p111, %p112
    %p114 = pneg %p113
    // Predicated region
    $region9: #{lenet_forward.2} parent=5 // pred_check
      _
    $region10: #{lenet_forward.2} parent=5 // pred_check_branch
      %116 = sbr.rel (%p113) target = $region12
    $region11: #{lenet_forward.2} parent=5 // pred_region
      %s117 = ssub.s32 %s9, 1
      // Predicated region
      $region13: #{lenet_forward.2} parent=11 // pred_check
        %p118 = pneg %p56
      $region14: #{lenet_forward.2} parent=11 // pred_check_branch
        %120 = sbr.rel (%p118) target = $region16
      $region15: #{lenet_forward.2} parent=11 // pred_region
        _
      $region16: #{lenet_forward.2} parent=11 // pred_fallthru
        _
      // Predicated region
      $region17: #{lenet_forward.2} parent=11 // pred_check
        %p121 = pneg %p77
      $region18: #{lenet_forward.2} parent=11 // pred_check_branch
        %123 = sbr.rel (%p121) target = $region20
      $region19: #{lenet_forward.2} parent=11 // pred_region
        _
      $region20: #{lenet_forward.2} parent=11 // pred_fallthru
        _
    $region12: #{lenet_forward.2} parent=5 // pred_fallthru
      _
    %p124 = scmp.lt.s32.totalorder %s9, 2
    // Predicated region
    $region21: #{lenet_forward.2} parent=5 // pred_check
      %p125 = pneg %p124
    $region22: #{lenet_forward.2} parent=5 // pred_check_branch
      %127 = sbr.rel (%p125) target = $region24
    $region23: #{lenet_forward.2} parent=5 // pred_region
      // Predicated region
      $region25: #{lenet_forward.2} parent=23 // pred_check
        %p128 = pneg %p29
      $region26: #{lenet_forward.2} parent=23 // pred_check_branch
        %130 = sbr.rel (%p128) target = $region28
      $region27: #{lenet_forward.2} parent=23 // pred_region
        %s131 = smul.u32 72, %s9
        %p132 = scmp.lt.s32.totalorder %s131, 143
        %s133 = scalar_select %p132, %s131, 143
        %s134 = smul.addr %s133, 4
        %s135 = scalar_lea.vmem %s0, %s134
        %s136 = smul.u32 72, %s9
      $region28: #{lenet_forward.2} parent=23 // pred_fallthru
        _
    $region24: #{lenet_forward.2} parent=5 // pred_fallthru
      _
    %p137 = scmp.le.s32.totalorder 1, %s9
    %p138 = scmp.lt.s32.totalorder %s9, 3
    %p139 = pnand %p137, %p138
    %p140 = pneg %p139
    // Predicated region
    $region29: #{lenet_forward.2} parent=5 // pred_check
      _
    $region30: #{lenet_forward.2} parent=5 // pred_check_branch
      %142 = sbr.rel (%p139) target = $region32
    $region31: #{lenet_forward.2} parent=5 // pred_region
      %s143 = ssub.s32 %s9, 1
      %s144 = smul.u32 72, %s14
      %p145 = scmp.lt.s32.totalorder %s144, 143
      %s146 = scalar_select %p145, %s144, 143
      %s147 = smul.addr %s146, 4
      %s148 = scalar_lea.vmem %s0, %s147
      %p149 = pneg %p35
      %p150 = pneg %p32
      %p151 = pneg %p56
      %p152 = pneg %p53
      %p153 = pneg %p77
      %p154 = pneg %p74
      %p155 = pneg %p103
      %p156 = pneg %p100
      %s157 = smul.u32 18, %s14
      %p158 = scmp.lt.s32.totalorder %s157, 35
      %s159 = scalar_select %p158, %s157, 35
      %s160 = smul.addr %s159, 4
      %s161 = scalar_lea.vmem %s3, %s160
      %s162 = smul.u32 72, %s14
      %p163 = scmp.lt.s32.totalorder %s162, 143
      %s164 = scalar_select %p163, %s162, 143
      %s165 = smul.addr %s164, 4
      %s166 = scalar_lea.vmem %s0, %s165
      %s167 = smul.u32 72, %s14
      %s168 = smul.u32 18, %s14
      %p169 = scmp.lt.s32.totalorder %s168, 35
      %s170 = scalar_select %p169, %s168, 35
      %s171 = smul.addr %s170, 4
      %s172 = scalar_lea.vmem %s3, %s171
      %s173 = smul.u32 18, %s14
      %v175 = vld [vmem:[%s166] sm:$0xf]
      %v176 = vld [vmem:[%s166 + $0x4] sm:$0xf]
      %v177 = vld [vmem:[%s166 + $0x8] sm:$0xf]
      %v178 = vld [vmem:[%s166 + $0xc] sm:$0xf]
      %v179 = vld [vmem:[%s166 + $0x10] sm:$0xf]
      %v180 = vld [vmem:[%s166 + $0x14] sm:$0xf]
      %v181 = vld [vmem:[%s166 + $0x18] sm:$0xf]
      %v182 = vld [vmem:[%s166 + $0x1c] sm:$0xf]
      %v183 = vld [vmem:[%s166 + $0x20] sm:$0xf]
      %v184 = vld [vmem:[%s166 + $0x24] sm:$0xf]
      %v185 = vld [vmem:[%s166 + $0x28] sm:$0xf]
      %v186 = vld [vmem:[%s166 + $0x2c] sm:$0xf]
      %v187 = vld [vmem:[%s166 + $0x30] sm:$0xf]
      %v188 = vld [vmem:[%s166 + $0x34] sm:$0xf]
      %v189 = vld [vmem:[%s166 + $0x38] sm:$0xf]
      %v190 = vld [vmem:[%s166 + $0x3c] sm:$0xf]
      %v191 = vld [vmem:[%s166 + $0x40] sm:$0xf]
      %v192 = vld [vmem:[%s166 + $0x44] sm:$0xf]
      %v193 = vld [vmem:[%s166 + $0x48] sm:$0xf]
      %v194 = vld [vmem:[%s166 + $0x4c] sm:$0xf]
      %v195 = vld [vmem:[%s166 + $0x50] sm:$0xf]
      %v196 = vld [vmem:[%s166 + $0x54] sm:$0xf]
      %v197 = vld [vmem:[%s166 + $0x58] sm:$0xf]
      %v198 = vld [vmem:[%s166 + $0x5c] sm:$0xf]
      %v199 = vld [vmem:[%s166 + $0x60] sm:$0xf]
      %v200 = vld [vmem:[%s166 + $0x64] sm:$0xf]
      %v201 = vld [vmem:[%s166 + $0x68] sm:$0xf]
      %v202 = vld [vmem:[%s166 + $0x6c] sm:$0xf]
      %v203 = vld [vmem:[%s166 + $0x70] sm:$0xf]
      %v204 = vld [vmem:[%s166 + $0x74] sm:$0xf]
      %v205 = vld [vmem:[%s166 + $0x78] sm:$0xf]
      %v206 = vld [vmem:[%s166 + $0x7c] sm:$0xf]
      %v207 = vld [vmem:[%s166 + $0x80] sm:$0xf]
      %v208 = vld [vmem:[%s166 + $0x84] sm:$0xf]
      %v209 = vld [vmem:[%s166 + $0x88] sm:$0xf]
      %v210 = vld [vmem:[%s166 + $0x8c] sm:$0xf]
      %v211 = vld [vmem:[%s166 + $0x90] sm:$0xf]
      %v212 = vld [vmem:[%s166 + $0x94] sm:$0xf]
      %v213 = vld [vmem:[%s166 + $0x98] sm:$0xf]
      %v214 = vld [vmem:[%s166 + $0x9c] sm:$0xf]
      %v215 = vld [vmem:[%s166 + $0xa0] sm:$0xf]
      %v216 = vld [vmem:[%s166 + $0xa4] sm:$0xf]
      %v217 = vld [vmem:[%s166 + $0xa8] sm:$0xf]
      %v218 = vld [vmem:[%s166 + $0xac] sm:$0xf]
      %v219 = vld [vmem:[%s166 + $0xb0] sm:$0xf]
      %v220 = vld [vmem:[%s166 + $0xb4] sm:$0xf]
      %v221 = vld [vmem:[%s166 + $0xb8] sm:$0xf]
      %v222 = vld [vmem:[%s166 + $0xbc] sm:$0xf]
      %v223 = vld [vmem:[%s166 + $0xc0] sm:$0xf]
      %v224 = vld [vmem:[%s166 + $0xc4] sm:$0xf]
      %v225 = vld [vmem:[%s166 + $0xc8] sm:$0xf]
      %v226 = vld [vmem:[%s166 + $0xcc] sm:$0xf]
      %v227 = vld [vmem:[%s166 + $0xd0] sm:$0xf]
      %v228 = vld [vmem:[%s166 + $0xd4] sm:$0xf]
      %v229 = vld [vmem:[%s166 + $0xd8] sm:$0xf]
      %v230 = vld [vmem:[%s166 + $0xdc] sm:$0xf]
      %v231 = vld [vmem:[%s166 + $0xe0] sm:$0xf]
      %v232 = vld [vmem:[%s166 + $0xe4] sm:$0xf]
      %v233 = vld [vmem:[%s166 + $0xe8] sm:$0xf]
      %v234 = vld [vmem:[%s166 + $0xec] sm:$0xf]
      %v235 = vld [vmem:[%s166 + $0xf0] sm:$0xf]
      %v236 = vld [vmem:[%s166 + $0xf4] sm:$0xf]
      %v237 = vld [vmem:[%s166 + $0xf8] sm:$0xf]
      %v238 = vld [vmem:[%s166 + $0xfc] sm:$0xf]
      %v239 = vld [vmem:[%s166 + $0x100] sm:$0xf]
      %v240 = vld [vmem:[%s166 + $0x104] sm:$0xf]
      %v241 = vld [vmem:[%s166 + $0x108] sm:$0xf]
      %v242 = vld [vmem:[%s166 + $0x10c] sm:$0xf]
      %v243 = vld [vmem:[%s166 + $0x110] sm:$0xf]
      %v244 = vld [vmem:[%s166 + $0x114] sm:$0xf]
      %v245 = vld [vmem:[%s166 + $0x118] sm:$0xf]
      %v246 = vld [vmem:[%s166 + $0x11c] sm:$0xf]
      %v247 = vld [vmem:[%s1] sm:$0xf]
      %v248 = vld [vmem:[%s1 + $0x4] sm:$0xf]
      %v249 = vld [vmem:[%s1 + $0x8] sm:$0xf]
      %v250 = vld [vmem:[%s1 + $0xc] sm:$0xf]
      %v251 = vld [vmem:[%s1 + $0x10] sm:$0xf]
      %v252 = vld [vmem:[%s1 + $0x14] sm:$0xf]
      %v253 = vld [vmem:[%s1 + $0x18] sm:$0xf]
      %v254 = vld [vmem:[%s1 + $0x1c] sm:$0xf]
      %v255 = vld [vmem:[%s1 + $0x20] sm:$0xf]
      %v256 = vld [vmem:[%s1 + $0x24] sm:$0xf]
      %v257 = vld [vmem:[%s1 + $0x28] sm:$0xf]
      %v258 = vld [vmem:[%s1 + $0x2c] sm:$0xf]
      %v259 = vld [vmem:[%s1 + $0x30] sm:$0xf]
      %v260 = vld [vmem:[%s1 + $0x34] sm:$0xf]
      %v261 = vld [vmem:[%s1 + $0x38] sm:$0xf]
      %v262 = vld [vmem:[%s1 + $0x3c] sm:$0xf]
      %v263 = vld [vmem:[%s2] sm:$0x1]
      %v265 = vlaneseq
      %v266 = vshrl.u32 %v265, 7
      %v267 = vsub.s32 0, %v266
      %v268 = vrot.slane %v263, %v267
      %v342 = vunpack.c.l.b16 %v175
      %v343 = vunpack.c.l.b16 %v176
      %v344 = vunpack.c.l.b16 %v177
      %v345 = vunpack.c.l.b16 %v178
      %v346 = vunpack.c.l.b16 %v179
      %v347 = vunpack.c.l.b16 %v180
      %v348 = vunpack.c.l.b16 %v181
      %v349 = vunpack.c.l.b16 %v182
      %v350 = vunpack.c.l.b16 %v183
      %v351 = vunpack.c.l.b16 %v184
      %v352 = vunpack.c.l.b16 %v185
      %v353 = vunpack.c.l.b16 %v186
      %v354 = vunpack.c.l.b16 %v187
      %v355 = vunpack.c.l.b16 %v188
      %v356 = vunpack.c.l.b16 %v189
      %v357 = vunpack.c.l.b16 %v190
      %v358 = vunpack.c.l.b16 %v191
      %v359 = vunpack.c.l.b16 %v192
      %v360 = vunpack.c.l.b16 %v193
      %v361 = vunpack.c.l.b16 %v194
      %v362 = vunpack.c.l.b16 %v195
      %v363 = vunpack.c.l.b16 %v196
      %v364 = vunpack.c.l.b16 %v197
      %v365 = vunpack.c.l.b16 %v198
      %v366 = vunpack.c.l.b16 %v199
      %v367 = vunpack.c.l.b16 %v200
      %v368 = vunpack.c.l.b16 %v201
      %v369 = vunpack.c.l.b16 %v202
      %v370 = vunpack.c.l.b16 %v203
      %v371 = vunpack.c.l.b16 %v204
      %v372 = vunpack.c.l.b16 %v205
      %v373 = vunpack.c.l.b16 %v206
      %v374 = vunpack.c.l.b16 %v207
      %v375 = vunpack.c.l.b16 %v208
      %v376 = vunpack.c.l.b16 %v209
      %v377 = vunpack.c.l.b16 %v210
      %v378 = vunpack.c.l.b16 %v211
      %v379 = vunpack.c.l.b16 %v212
      %v380 = vunpack.c.l.b16 %v213
      %v381 = vunpack.c.l.b16 %v214
      %v382 = vunpack.c.l.b16 %v215
      %v383 = vunpack.c.l.b16 %v216
      %v384 = vunpack.c.l.b16 %v217
      %v385 = vunpack.c.l.b16 %v218
      %v386 = vunpack.c.l.b16 %v219
      %v387 = vunpack.c.l.b16 %v220
      %v388 = vunpack.c.l.b16 %v221
      %v389 = vunpack.c.l.b16 %v222
      %v390 = vunpack.c.l.b16 %v223
      %v391 = vunpack.c.l.b16 %v224
      %v392 = vunpack.c.l.b16 %v225
      %v393 = vunpack.c.l.b16 %v226
      %v394 = vunpack.c.l.b16 %v227
      %v395 = vunpack.c.l.b16 %v228
      %v396 = vunpack.c.l.b16 %v229
      %v397 = vunpack.c.l.b16 %v230
      %v398 = vunpack.c.l.b16 %v231
      %v399 = vunpack.c.l.b16 %v232
      %v400 = vunpack.c.l.b16 %v233
      %v401 = vunpack.c.l.b16 %v234
      %v402 = vunpack.c.l.b16 %v235
      %v403 = vunpack.c.l.b16 %v236
      %v404 = vunpack.c.l.b16 %v237
      %v405 = vunpack.c.l.b16 %v238
      %v406 = vunpack.c.l.b16 %v239
      %v407 = vunpack.c.l.b16 %v240
      %v408 = vunpack.c.l.b16 %v241
      %v409 = vunpack.c.l.b16 %v242
      %v410 = vunpack.c.l.b16 %v243
      %v411 = vunpack.c.l.b16 %v244
      %v412 = vunpack.c.l.b16 %v245
      %v413 = vunpack.c.l.b16 %v246
      %v414 = vpack.c.b16 %v343, %v342
      %v415 = vpack.c.b16 %v345, %v344
      %v416 = vpack.c.b16 %v347, %v346
      %v417 = vpack.c.b16 %v349, %v348
      %v418 = vpack.c.b16 %v351, %v350
      %v419 = vpack.c.b16 %v353, %v352
      %v420 = vpack.c.b16 %v355, %v354
      %v421 = vpack.c.b16 %v357, %v356
      %v422 = vpack.c.b16 %v359, %v358
      %v423 = vpack.c.b16 %v361, %v360
      %v424 = vpack.c.b16 %v363, %v362
      %v425 = vpack.c.b16 %v365, %v364
      %v426 = vpack.c.b16 %v367, %v366
      %v427 = vpack.c.b16 %v369, %v368
      %v428 = vpack.c.b16 %v371, %v370
      %v429 = vpack.c.b16 %v373, %v372
      %v430 = vpack.c.b16 %v375, %v374
      %v431 = vpack.c.b16 %v377, %v376
      %v432 = vpack.c.b16 %v379, %v378
      %v433 = vpack.c.b16 %v381, %v380
      %v434 = vpack.c.b16 %v383, %v382
      %v435 = vpack.c.b16 %v385, %v384
      %v436 = vpack.c.b16 %v387, %v386
      %v437 = vpack.c.b16 %v389, %v388
      %v438 = vpack.c.b16 %v391, %v390
      %v439 = vpack.c.b16 %v393, %v392
      %v440 = vpack.c.b16 %v395, %v394
      %v441 = vpack.c.b16 %v397, %v396
      %v442 = vpack.c.b16 %v399, %v398
      %v443 = vpack.c.b16 %v401, %v400
      %v444 = vpack.c.b16 %v403, %v402
      %v445 = vpack.c.b16 %v405, %v404
      %v446 = vpack.c.b16 %v407, %v406
      %v447 = vpack.c.b16 %v409, %v408
      %v448 = vpack.c.b16 %v411, %v410
      %v449 = vpack.c.b16 %v413, %v412
      %v502 = vunpack.c.l.b16 %v247
      %v503 = vunpack.c.l.b16 %v248
      %v504 = vunpack.c.l.b16 %v249
      %v505 = vunpack.c.l.b16 %v250
      %v506 = vunpack.c.l.b16 %v251
      %v507 = vunpack.c.l.b16 %v252
      %v508 = vunpack.c.l.b16 %v253
      %v509 = vunpack.c.l.b16 %v254
      %v510 = vunpack.c.l.b16 %v255
      %v511 = vunpack.c.l.b16 %v256
      %v512 = vunpack.c.l.b16 %v257
      %v513 = vunpack.c.l.b16 %v258
      %v514 = vunpack.c.l.b16 %v259
      %v515 = vunpack.c.l.b16 %v260
      %v516 = vunpack.c.l.b16 %v261
      %v517 = vunpack.c.l.b16 %v262
      %v518 = vpack.c.b16 %v503, %v502
      %v519 = vpack.c.b16 %v505, %v504
      %v520 = vpack.c.b16 %v507, %v506
      %v521 = vpack.c.b16 %v509, %v508
      %v522 = vpack.c.b16 %v511, %v510
      %v523 = vpack.c.b16 %v513, %v512
      %v524 = vpack.c.b16 %v515, %v514
      %v525 = vpack.c.b16 %v517, %v516
      %534 = vmatprep.subr.bf16.mxu0 0
      %535 = vmatpush1.bf16.msra.mxu0 %v518
      %536 = vmatprep.subr.bf16.mxu0 0
      %537 = vmatpush1.bf16.msra.mxu0 %v519
      %538 = vmatprep.subr.bf16.mxu0 0
      %539 = vmatpush1.bf16.msra.mxu0 %v520
      %540 = vmatprep.subr.bf16.mxu0 0
      %541 = vmatpush1.bf16.msra.mxu0 %v521
      %542 = vmatprep.subr.bf16.mxu0 0
      %543 = vmatpush1.bf16.msra.mxu0 %v522
      %544 = vmatprep.subr.bf16.mxu0 0
      %545 = vmatpush1.bf16.msra.mxu0 %v523
      %546 = vmatprep.subr.bf16.mxu0 0
      %547 = vmatpush1.bf16.msra.mxu0 %v524
      %548 = vmatprep.subr.bf16.mxu0 0
      %549 = vmatpush1.bf16.msra.mxu0 %v525
      %550 = vmatprep.subr.bf16.mxu0 0
      %551 = vmatpush1.bf16.msra.mxu0 0
      %552 = vmatprep.subr.bf16.mxu0 0
      %553 = vmatpush1.bf16.msra.mxu0 0
      %554 = vmatprep.subr.bf16.mxu0 0
      %555 = vmatpush1.bf16.msra.mxu0 0
      %556 = vmatprep.subr.bf16.mxu0 0
      %557 = vmatpush1.bf16.msra.mxu0 0
      %558 = vmatprep.subr.bf16.mxu0 0
      %559 = vmatpush1.bf16.msra.mxu0 0
      %560 = vmatprep.subr.bf16.mxu0 0
      %561 = vmatpush1.bf16.msra.mxu0 0
      %562 = vmatprep.subr.bf16.mxu0 0
      %563 = vmatpush1.bf16.msra.mxu0 0
      %564 = vmatprep.subr.bf16.mxu0 0
      %565 = vmatpush1.bf16.msra.mxu0 0
      %566 = vmatprep.mubr.bf16.mxu0 0
      %567 = vmatmul.mubr.bf16.gmra.mrb[0].mxu0 %v414
      %v568 = vpop.f32.mrb[0].mxu0
      %v569 = vadd.f32 %v268, %v568
      %v570 = vpop.f32.mrb[0].mxu0
      %v571 = vpop.f32.mrb[0].mxu0
      %v572 = vadd.f32 %v268, %v571
      %v573 = vpop.f32.mrb[0].mxu0
      %574 = vmatprep.mubr.bf16.mxu0 0
      %575 = vmatmul.mubr.bf16.gmra.mrb[0].mxu0 %v415
      %v576 = vpop.f32.mrb[0].mxu0
      %v577 = vadd.f32 %v268, %v576
      %v578 = vpop.f32.mrb[0].mxu0
      %v579 = vpop.f32.mrb[0].mxu0
      %v580 = vadd.f32 %v268, %v579
      %v581 = vpop.f32.mrb[0].mxu0
      %582 = vmatprep.mubr.bf16.mxu0 0
      %583 = vmatmul.mubr.bf16.gmra.mrb[0].mxu0 %v416
      %v584 = vpop.f32.mrb[0].mxu0
      %v585 = vadd.f32 %v268, %v584
      %v586 = vpop.f32.mrb[0].mxu0
      %v587 = vpop.f32.mrb[0].mxu0
      %v588 = vadd.f32 %v268, %v587
      %v589 = vpop.f32.mrb[0].mxu0
      %590 = vmatprep.mubr.bf16.mxu0 0
      %591 = vmatmul.mubr.bf16.gmra.mrb[0].mxu0 %v417
      %v592 = vpop.f32.mrb[0].mxu0
      %v593 = vadd.f32 %v268, %v592
      %v594 = vpop.f32.mrb[0].mxu0
      %v595 = vpop.f32.mrb[0].mxu0
      %v596 = vadd.f32 %v268, %v595
      %v597 = vpop.f32.mrb[0].mxu0
      %598 = vmatprep.mubr.bf16.mxu0 0
      %599 = vmatmul.mubr.bf16.gmra.mrb[0].mxu0 %v418
      %v600 = vpop.f32.mrb[0].mxu0
      %v601 = vadd.f32 %v268, %v600
      %v602 = vpop.f32.mrb[0].mxu0
      %v603 = vpop.f32.mrb[0].mxu0
      %v604 = vadd.f32 %v268, %v603
      %v605 = vpop.f32.mrb[0].mxu0
      %606 = vmatprep.mubr.bf16.mxu0 0
      %607 = vmatmul.mubr.bf16.gmra.mrb[0].mxu0 %v419
      %v608 = vpop.f32.mrb[0].mxu0
      %v609 = vadd.f32 %v268, %v608
      %v610 = vpop.f32.mrb[0].mxu0
      %v611 = vpop.f32.mrb[0].mxu0
      %v612 = vadd.f32 %v268, %v611
      %v613 = vpop.f32.mrb[0].mxu0
      %614 = vmatprep.mubr.bf16.mxu0 0
      %615 = vmatmul.mubr.bf16.gmra.mrb[0].mxu0 %v420
      %v616 = vpop.f32.mrb[0].mxu0
      %v617 = vadd.f32 %v268, %v616
      %v618 = vpop.f32.mrb[0].mxu0
      %v619 = vpop.f32.mrb[0].mxu0
      %v620 = vadd.f32 %v268, %v619
      %v621 = vpop.f32.mrb[0].mxu0
      %622 = vmatprep.mubr.bf16.mxu0 0
      %623 = vmatmul.mubr.bf16.gmra.mrb[0].mxu0 %v421
      %v624 = vpop.f32.mrb[0].mxu0
      %v625 = vadd.f32 %v268, %v624
      %v626 = vpop.f32.mrb[0].mxu0
      %v627 = vpop.f32.mrb[0].mxu0
      %v628 = vadd.f32 %v268, %v627
      %v629 = vpop.f32.mrb[0].mxu0
      %630 = vmatprep.mubr.bf16.mxu0 0
      %631 = vmatmul.mubr.bf16.gmra.mrb[0].mxu0 %v422
      %v632 = vpop.f32.mrb[0].mxu0
      %v633 = vadd.f32 %v268, %v632
      %v634 = vpop.f32.mrb[0].mxu0
      %v635 = vpop.f32.mrb[0].mxu0
      %v636 = vadd.f32 %v268, %v635
      %v637 = vpop.f32.mrb[0].mxu0
      %638 = vmatprep.mubr.bf16.mxu0 0
      %639 = vmatmul.mubr.bf16.gmra.mrb[0].mxu0 %v423
      %v640 = vpop.f32.mrb[0].mxu0
      %v641 = vadd.f32 %v268, %v640
      %v642 = vpop.f32.mrb[0].mxu0
      %v643 = vpop.f32.mrb[0].mxu0
      %v644 = vadd.f32 %v268, %v643
      %v645 = vpop.f32.mrb[0].mxu0
      %646 = vmatprep.mubr.bf16.mxu0 0
      %647 = vmatmul.mubr.bf16.gmra.mrb[0].mxu0 %v424
      %v648 = vpop.f32.mrb[0].mxu0
      %v649 = vadd.f32 %v268, %v648
      %v650 = vpop.f32.mrb[0].mxu0
      %v651 = vpop.f32.mrb[0].mxu0
      %v652 = vadd.f32 %v268, %v651
      %v653 = vpop.f32.mrb[0].mxu0
      %654 = vmatprep.mubr.bf16.mxu0 0
      %655 = vmatmul.mubr.bf16.gmra.mrb[0].mxu0 %v425
      %v656 = vpop.f32.mrb[0].mxu0
      %v657 = vadd.f32 %v268, %v656
      %v658 = vpop.f32.mrb[0].mxu0
      %v659 = vpop.f32.mrb[0].mxu0
      %v660 = vadd.f32 %v268, %v659
      %v661 = vpop.f32.mrb[0].mxu0
      %662 = vmatprep.mubr.bf16.mxu0 0
      %663 = vmatmul.mubr.bf16.gmra.mrb[0].mxu0 %v426
      %v664 = vpop.f32.mrb[0].mxu0
      %v665 = vadd.f32 %v268, %v664
      %v666 = vpop.f32.mrb[0].mxu0
      %v667 = vpop.f32.mrb[0].mxu0
      %v668 = vadd.f32 %v268, %v667
      %v669 = vpop.f32.mrb[0].mxu0
      %670 = vmatprep.mubr.bf16.mxu0 0
      %671 = vmatmul.mubr.bf16.gmra.mrb[0].mxu0 %v427
      %v672 = vpop.f32.mrb[0].mxu0
      %v673 = vadd.f32 %v268, %v672
      %v674 = vpop.f32.mrb[0].mxu0
      %v675 = vpop.f32.mrb[0].mxu0
      %v676 = vadd.f32 %v268, %v675
      %v677 = vpop.f32.mrb[0].mxu0
      %678 = vmatprep.mubr.bf16.mxu0 0
      %679 = vmatmul.mubr.bf16.gmra.mrb[0].mxu0 %v428
      %v680 = vpop.f32.mrb[0].mxu0
      %v681 = vadd.f32 %v268, %v680
      %v682 = vpop.f32.mrb[0].mxu0
      %v683 = vpop.f32.mrb[0].mxu0
      %v684 = vadd.f32 %v268, %v683
      %v685 = vpop.f32.mrb[0].mxu0
      %686 = vmatprep.mubr.bf16.mxu0 0
      %687 = vmatmul.mubr.bf16.gmra.mrb[0].mxu0 %v429
      %v688 = vpop.f32.mrb[0].mxu0
      %v689 = vadd.f32 %v268, %v688
      %v690 = vpop.f32.mrb[0].mxu0
      %v691 = vpop.f32.mrb[0].mxu0
      %v692 = vadd.f32 %v268, %v691
      %v693 = vpop.f32.mrb[0].mxu0
      %694 = vmatprep.mubr.bf16.mxu0 0
      %695 = vmatmul.mubr.bf16.gmra.mrb[0].mxu0 %v430
      %v696 = vpop.f32.mrb[0].mxu0
      %v697 = vadd.f32 %v268, %v696
      %v698 = vpop.f32.mrb[0].mxu0
      %v699 = vpop.f32.mrb[0].mxu0
      %v700 = vadd.f32 %v268, %v699
      %v701 = vpop.f32.mrb[0].mxu0
      %702 = vmatprep.mubr.bf16.mxu0 0
      %703 = vmatmul.mubr.bf16.gmra.mrb[0].mxu0 %v431
      %v704 = vpop.f32.mrb[0].mxu0
      %v705 = vadd.f32 %v268, %v704
      %v706 = vpop.f32.mrb[0].mxu0
      %v707 = vpop.f32.mrb[0].mxu0
      %v708 = vadd.f32 %v268, %v707
      %v709 = vpop.f32.mrb[0].mxu0
      %710 = vmatprep.mubr.bf16.mxu0 0
      %711 = vmatmul.mubr.bf16.gmra.mrb[0].mxu0 %v432
      %v712 = vpop.f32.mrb[0].mxu0
      %v713 = vadd.f32 %v268, %v712
      %v714 = vpop.f32.mrb[0].mxu0
      %v715 = vpop.f32.mrb[0].mxu0
      %v716 = vadd.f32 %v268, %v715
      %v717 = vpop.f32.mrb[0].mxu0
      %718 = vmatprep.mubr.bf16.mxu0 0
      %719 = vmatmul.mubr.bf16.gmra.mrb[0].mxu0 %v433
      %v720 = vpop.f32.mrb[0].mxu0
      %v721 = vadd.f32 %v268, %v720
      %v722 = vpop.f32.mrb[0].mxu0
      %v723 = vpop.f32.mrb[0].mxu0
      %v724 = vadd.f32 %v268, %v723
      %v725 = vpop.f32.mrb[0].mxu0
      %726 = vmatprep.mubr.bf16.mxu0 0
      %727 = vmatmul.mubr.bf16.gmra.mrb[0].mxu0 %v434
      %v728 = vpop.f32.mrb[0].mxu0
      %v729 = vadd.f32 %v268, %v728
      %v730 = vpop.f32.mrb[0].mxu0
      %v731 = vpop.f32.mrb[0].mxu0
      %v732 = vadd.f32 %v268, %v731
      %v733 = vpop.f32.mrb[0].mxu0
      %734 = vmatprep.mubr.bf16.mxu0 0
      %735 = vmatmul.mubr.bf16.gmra.mrb[0].mxu0 %v435
      %v736 = vpop.f32.mrb[0].mxu0
      %v737 = vadd.f32 %v268, %v736
      %v738 = vpop.f32.mrb[0].mxu0
      %v739 = vpop.f32.mrb[0].mxu0
      %v740 = vadd.f32 %v268, %v739
      %v741 = vpop.f32.mrb[0].mxu0
      %742 = vmatprep.mubr.bf16.mxu0 0
      %743 = vmatmul.mubr.bf16.gmra.mrb[0].mxu0 %v436
      %v744 = vpop.f32.mrb[0].mxu0
      %v745 = vadd.f32 %v268, %v744
      %v746 = vpop.f32.mrb[0].mxu0
      %v747 = vpop.f32.mrb[0].mxu0
      %v748 = vadd.f32 %v268, %v747
      %v749 = vpop.f32.mrb[0].mxu0
      %750 = vmatprep.mubr.bf16.mxu0 0
      %751 = vmatmul.mubr.bf16.gmra.mrb[0].mxu0 %v437
      %v752 = vpop.f32.mrb[0].mxu0
      %v753 = vadd.f32 %v268, %v752
      %v754 = vpop.f32.mrb[0].mxu0
      %v755 = vpop.f32.mrb[0].mxu0
      %v756 = vadd.f32 %v268, %v755
      %v757 = vpop.f32.mrb[0].mxu0
      %758 = vmatprep.mubr.bf16.mxu0 0
      %759 = vmatmul.mubr.bf16.gmra.mrb[0].mxu0 %v438
      %v760 = vpop.f32.mrb[0].mxu0
      %v761 = vadd.f32 %v268, %v760
      %v762 = vpop.f32.mrb[0].mxu0
      %v763 = vpop.f32.mrb[0].mxu0
      %v764 = vadd.f32 %v268, %v763
      %v765 = vpop.f32.mrb[0].mxu0
      %766 = vmatprep.mubr.bf16.mxu0 0
      %767 = vmatmul.mubr.bf16.gmra.mrb[0].mxu0 %v439
      %v768 = vpop.f32.mrb[0].mxu0
      %v769 = vadd.f32 %v268, %v768
      %v770 = vpop.f32.mrb[0].mxu0
      %v771 = vpop.f32.mrb[0].mxu0
      %v772 = vadd.f32 %v268, %v771
      %v773 = vpop.f32.mrb[0].mxu0
      %774 = vmatprep.mubr.bf16.mxu0 0
      %775 = vmatmul.mubr.bf16.gmra.mrb[0].mxu0 %v440
      %v776 = vpop.f32.mrb[0].mxu0
      %v777 = vadd.f32 %v268, %v776
      %v778 = vpop.f32.mrb[0].mxu0
      %v779 = vpop.f32.mrb[0].mxu0
      %v780 = vadd.f32 %v268, %v779
      %v781 = vpop.f32.mrb[0].mxu0
      %782 = vmatprep.mubr.bf16.mxu0 0
      %783 = vmatmul.mubr.bf16.gmra.mrb[0].mxu0 %v441
      %v784 = vpop.f32.mrb[0].mxu0
      %v785 = vadd.f32 %v268, %v784
      %v786 = vpop.f32.mrb[0].mxu0
      %v787 = vpop.f32.mrb[0].mxu0
      %v788 = vadd.f32 %v268, %v787
      %v789 = vpop.f32.mrb[0].mxu0
      %790 = vmatprep.mubr.bf16.mxu0 0
      %791 = vmatmul.mubr.bf16.gmra.mrb[0].mxu0 %v442
      %v792 = vpop.f32.mrb[0].mxu0
      %v793 = vadd.f32 %v268, %v792
      %v794 = vpop.f32.mrb[0].mxu0
      %v795 = vpop.f32.mrb[0].mxu0
      %v796 = vadd.f32 %v268, %v795
      %v797 = vpop.f32.mrb[0].mxu0
      %798 = vmatprep.mubr.bf16.mxu0 0
      %799 = vmatmul.mubr.bf16.gmra.mrb[0].mxu0 %v443
      %v800 = vpop.f32.mrb[0].mxu0
      %v801 = vadd.f32 %v268, %v800
      %v802 = vpop.f32.mrb[0].mxu0
      %v803 = vpop.f32.mrb[0].mxu0
      %v804 = vadd.f32 %v268, %v803
      %v805 = vpop.f32.mrb[0].mxu0
      %806 = vmatprep.mubr.bf16.mxu0 0
      %807 = vmatmul.mubr.bf16.gmra.mrb[0].mxu0 %v444
      %v808 = vpop.f32.mrb[0].mxu0
      %v809 = vadd.f32 %v268, %v808
      %v810 = vpop.f32.mrb[0].mxu0
      %v811 = vpop.f32.mrb[0].mxu0
      %v812 = vadd.f32 %v268, %v811
      %v813 = vpop.f32.mrb[0].mxu0
      %814 = vmatprep.mubr.bf16.mxu0 0
      %815 = vmatmul.mubr.bf16.gmra.mrb[0].mxu0 %v445
      %v816 = vpop.f32.mrb[0].mxu0
      %v817 = vadd.f32 %v268, %v816
      %v818 = vpop.f32.mrb[0].mxu0
      %v819 = vpop.f32.mrb[0].mxu0
      %v820 = vadd.f32 %v268, %v819
      %v821 = vpop.f32.mrb[0].mxu0
      %822 = vmatprep.mubr.bf16.mxu0 0
      %823 = vmatmul.mubr.bf16.gmra.mrb[0].mxu0 %v446
      %v824 = vpop.f32.mrb[0].mxu0
      %v825 = vadd.f32 %v268, %v824
      %v826 = vpop.f32.mrb[0].mxu0
      %v827 = vpop.f32.mrb[0].mxu0
      %v828 = vadd.f32 %v268, %v827
      %v829 = vpop.f32.mrb[0].mxu0
      %830 = vmatprep.mubr.bf16.mxu0 0
      %831 = vmatmul.mubr.bf16.gmra.mrb[0].mxu0 %v447
      %v832 = vpop.f32.mrb[0].mxu0
      %v833 = vadd.f32 %v268, %v832
      %v834 = vpop.f32.mrb[0].mxu0
      %v835 = vpop.f32.mrb[0].mxu0
      %v836 = vadd.f32 %v268, %v835
      %v837 = vpop.f32.mrb[0].mxu0
      %838 = vmatprep.mubr.bf16.mxu0 0
      %839 = vmatmul.mubr.bf16.gmra.mrb[0].mxu0 %v448
      %v840 = vpop.f32.mrb[0].mxu0
      %v841 = vadd.f32 %v268, %v840
      %v842 = vpop.f32.mrb[0].mxu0
      %v843 = vpop.f32.mrb[0].mxu0
      %v844 = vadd.f32 %v268, %v843
      %v845 = vpop.f32.mrb[0].mxu0
      %846 = vmatprep.mubr.bf16.mxu0 0
      %847 = vmatmul.mubr.bf16.gmra.mrb[0].mxu0 %v449
      %v848 = vpop.f32.mrb[0].mxu0
      %v849 = vadd.f32 %v268, %v848
      %v850 = vpop.f32.mrb[0].mxu0
      %v851 = vpop.f32.mrb[0].mxu0
      %v852 = vadd.f32 %v268, %v851
      %v853 = vpop.f32.mrb[0].mxu0
      %854 = vdwg.mxu0
      %v855 = vmax.f32 %v569, 0.0
      %v856 = vmax.f32 %v572, 0.0
      %v857 = vmax.f32 %v577, 0.0
      %v858 = vmax.f32 %v580, 0.0
      %v859 = vmax.f32 %v585, 0.0
      %v860 = vmax.f32 %v588, 0.0
      %v861 = vmax.f32 %v593, 0.0
      %v862 = vmax.f32 %v596, 0.0
      %v863 = vmax.f32 %v601, 0.0
      %v864 = vmax.f32 %v604, 0.0
      %v865 = vmax.f32 %v609, 0.0
      %v866 = vmax.f32 %v612, 0.0
      %v867 = vmax.f32 %v617, 0.0
      %v868 = vmax.f32 %v620, 0.0
      %v869 = vmax.f32 %v625, 0.0
      %v870 = vmax.f32 %v628, 0.0
      %v871 = vmax.f32 %v633, 0.0
      %v872 = vmax.f32 %v636, 0.0
      %v873 = vmax.f32 %v641, 0.0
      %v874 = vmax.f32 %v644, 0.0
      %v875 = vmax.f32 %v649, 0.0
      %v876 = vmax.f32 %v652, 0.0
      %v877 = vmax.f32 %v657, 0.0
      %v878 = vmax.f32 %v660, 0.0
      %v879 = vmax.f32 %v665, 0.0
      %v880 = vmax.f32 %v668, 0.0
      %v881 = vmax.f32 %v673, 0.0
      %v882 = vmax.f32 %v676, 0.0
      %v883 = vmax.f32 %v681, 0.0
      %v884 = vmax.f32 %v684, 0.0
      %v885 = vmax.f32 %v689, 0.0
      %v886 = vmax.f32 %v692, 0.0
      %v887 = vmax.f32 %v697, 0.0
      %v888 = vmax.f32 %v700, 0.0
      %v889 = vmax.f32 %v705, 0.0
      %v890 = vmax.f32 %v708, 0.0
      %v891 = vmax.f32 %v713, 0.0
      %v892 = vmax.f32 %v716, 0.0
      %v893 = vmax.f32 %v721, 0.0
      %v894 = vmax.f32 %v724, 0.0
      %v895 = vmax.f32 %v729, 0.0
      %v896 = vmax.f32 %v732, 0.0
      %v897 = vmax.f32 %v737, 0.0
      %v898 = vmax.f32 %v740, 0.0
      %v899 = vmax.f32 %v745, 0.0
      %v900 = vmax.f32 %v748, 0.0
      %v901 = vmax.f32 %v753, 0.0
      %v902 = vmax.f32 %v756, 0.0
      %v903 = vmax.f32 %v761, 0.0
      %v904 = vmax.f32 %v764, 0.0
      %v905 = vmax.f32 %v769, 0.0
      %v906 = vmax.f32 %v772, 0.0
      %v907 = vmax.f32 %v777, 0.0
      %v908 = vmax.f32 %v780, 0.0
      %v909 = vmax.f32 %v785, 0.0
      %v910 = vmax.f32 %v788, 0.0
      %v911 = vmax.f32 %v793, 0.0
      %v912 = vmax.f32 %v796, 0.0
      %v913 = vmax.f32 %v801, 0.0
      %v914 = vmax.f32 %v804, 0.0
      %v915 = vmax.f32 %v809, 0.0
      %v916 = vmax.f32 %v812, 0.0
      %v917 = vmax.f32 %v817, 0.0
      %v918 = vmax.f32 %v820, 0.0
      %v919 = vmax.f32 %v825, 0.0
      %v920 = vmax.f32 %v828, 0.0
      %v921 = vmax.f32 %v833, 0.0
      %v922 = vmax.f32 %v836, 0.0
      %v923 = vmax.f32 %v841, 0.0
      %v924 = vmax.f32 %v844, 0.0
      %v925 = vmax.f32 %v849, 0.0
      %v926 = vmax.f32 %v852, 0.0
      %v999 = vcombine.high %v855, %v855
      %v1001 = vunpack.c.l.s4 1983009808
      %v1002 = vunpack.c.0.s8 %v1001
      %v1003 = vlaneseq
      %v1004 = vshrl.u32 %v1003, 7
      %v1005 = vsub.s32 %v1002, %v1004
      %v1006 = vrot.slane %v855, %v1005
      %v1008 = vunpack.c.l.s4 1983009808
      %v1009 = vunpack.c.0.s8 %v1008
      %v1010 = vlaneseq
      %v1011 = vshrl.u32 %v1010, 7
      %v1012 = vsub.s32 %v1009, %v1011
      %v1013 = vrot.slane %v999, %v1012
      %v1014 = vcombine.high %v1006, %v1006
      %v1015 = vcombine.high %v1013, %v1013
      %v1016 = vcombine.high %v856, %v856
      %v1018 = vunpack.c.l.s4 1983009808
      %v1019 = vunpack.c.0.s8 %v1018
      %v1020 = vlaneseq
      %v1021 = vshrl.u32 %v1020, 7
      %v1022 = vsub.s32 %v1019, %v1021
      %v1023 = vrot.slane %v856, %v1022
      %v1025 = vunpack.c.l.s4 1983009808
      %v1026 = vunpack.c.0.s8 %v1025
      %v1027 = vlaneseq
      %v1028 = vshrl.u32 %v1027, 7
      %v1029 = vsub.s32 %v1026, %v1028
      %v1030 = vrot.slane %v1016, %v1029
      %v1031 = vcombine.high %v1023, %v1023
      %v1032 = vcombine.high %v1030, %v1030
      %v1033 = vcombine.high %v857, %v857
      %v1035 = vunpack.c.l.s4 1983009808
      %v1036 = vunpack.c.0.s8 %v1035
      %v1037 = vlaneseq
      %v1038 = vshrl.u32 %v1037, 7
      %v1039 = vsub.s32 %v1036, %v1038
      %v1040 = vrot.slane %v857, %v1039
      %v1042 = vunpack.c.l.s4 1983009808
      %v1043 = vunpack.c.0.s8 %v1042
      %v1044 = vlaneseq
      %v1045 = vshrl.u32 %v1044, 7
      %v1046 = vsub.s32 %v1043, %v1045
      %v1047 = vrot.slane %v1033, %v1046
      %v1048 = vcombine.high %v1040, %v1040
      %v1049 = vcombine.high %v1047, %v1047
      %v1050 = vcombine.high %v858, %v858
      %v1052 = vunpack.c.l.s4 1983009808
      %v1053 = vunpack.c.0.s8 %v1052
      %v1054 = vlaneseq
      %v1055 = vshrl.u32 %v1054, 7
      %v1056 = vsub.s32 %v1053, %v1055
      %v1057 = vrot.slane %v858, %v1056
      %v1059 = vunpack.c.l.s4 1983009808
      %v1060 = vunpack.c.0.s8 %v1059
      %v1061 = vlaneseq
      %v1062 = vshrl.u32 %v1061, 7
      %v1063 = vsub.s32 %v1060, %v1062
      %v1064 = vrot.slane %v1050, %v1063
      %v1065 = vcombine.high %v1057, %v1057
      %v1066 = vcombine.high %v1064, %v1064
      %v1067 = vcombine.high %v859, %v859
      %v1069 = vunpack.c.l.s4 1983009808
      %v1070 = vunpack.c.0.s8 %v1069
      %v1071 = vlaneseq
      %v1072 = vshrl.u32 %v1071, 7
      %v1073 = vsub.s32 %v1070, %v1072
      %v1074 = vrot.slane %v859, %v1073
      %v1076 = vunpack.c.l.s4 1983009808
      %v1077 = vunpack.c.0.s8 %v1076
      %v1078 = vlaneseq
      %v1079 = vshrl.u32 %v1078, 7
      %v1080 = vsub.s32 %v1077, %v1079
      %v1081 = vrot.slane %v1067, %v1080
      %v1082 = vcombine.high %v1074, %v1074
      %v1083 = vcombine.high %v1081, %v1081
      %v1084 = vcombine.high %v860, %v860
      %v1086 = vunpack.c.l.s4 1983009808
      %v1087 = vunpack.c.0.s8 %v1086
      %v1088 = vlaneseq
      %v1089 = vshrl.u32 %v1088, 7
      %v1090 = vsub.s32 %v1087, %v1089
      %v1091 = vrot.slane %v860, %v1090
      %v1093 = vunpack.c.l.s4 1983009808
      %v1094 = vunpack.c.0.s8 %v1093
      %v1095 = vlaneseq
      %v1096 = vshrl.u32 %v1095, 7
      %v1097 = vsub.s32 %v1094, %v1096
      %v1098 = vrot.slane %v1084, %v1097
      %v1099 = vcombine.high %v1091, %v1091
      %v1100 = vcombine.high %v1098, %v1098
      %v1101 = vcombine.high %v861, %v861
      %v1103 = vunpack.c.l.s4 1983009808
      %v1104 = vunpack.c.0.s8 %v1103
      %v1105 = vlaneseq
      %v1106 = vshrl.u32 %v1105, 7
      %v1107 = vsub.s32 %v1104, %v1106
      %v1108 = vrot.slane %v861, %v1107
      %v1110 = vunpack.c.l.s4 1983009808
      %v1111 = vunpack.c.0.s8 %v1110
      %v1112 = vlaneseq
      %v1113 = vshrl.u32 %v1112, 7
      %v1114 = vsub.s32 %v1111, %v1113
      %v1115 = vrot.slane %v1101, %v1114
      %v1116 = vcombine.high %v1108, %v1108
      %v1117 = vcombine.high %v1115, %v1115
      %v1118 = vcombine.high %v862, %v862
      %v1120 = vunpack.c.l.s4 1983009808
      %v1121 = vunpack.c.0.s8 %v1120
      %v1122 = vlaneseq
      %v1123 = vshrl.u32 %v1122, 7
      %v1124 = vsub.s32 %v1121, %v1123
      %v1125 = vrot.slane %v862, %v1124
      %v1127 = vunpack.c.l.s4 1983009808
      %v1128 = vunpack.c.0.s8 %v1127
      %v1129 = vlaneseq
      %v1130 = vshrl.u32 %v1129, 7
      %v1131 = vsub.s32 %v1128, %v1130
      %v1132 = vrot.slane %v1118, %v1131
      %v1133 = vcombine.high %v1125, %v1125
      %v1134 = vcombine.high %v1132, %v1132
      %v1135 = vcombine.high %v863, %v863
      %v1137 = vunpack.c.l.s4 1983009808
      %v1138 = vunpack.c.0.s8 %v1137
      %v1139 = vlaneseq
      %v1140 = vshrl.u32 %v1139, 7
      %v1141 = vsub.s32 %v1138, %v1140
      %v1142 = vrot.slane %v863, %v1141
      %v1144 = vunpack.c.l.s4 1983009808
      %v1145 = vunpack.c.0.s8 %v1144
      %v1146 = vlaneseq
      %v1147 = vshrl.u32 %v1146, 7
      %v1148 = vsub.s32 %v1145, %v1147
      %v1149 = vrot.slane %v1135, %v1148
      %v1150 = vcombine.high %v1142, %v1142
      %v1151 = vcombine.high %v1149, %v1149
      %v1152 = vcombine.high %v864, %v864
      %v1154 = vunpack.c.l.s4 1983009808
      %v1155 = vunpack.c.0.s8 %v1154
      %v1156 = vlaneseq
      %v1157 = vshrl.u32 %v1156, 7
      %v1158 = vsub.s32 %v1155, %v1157
      %v1159 = vrot.slane %v864, %v1158
      %v1161 = vunpack.c.l.s4 1983009808
      %v1162 = vunpack.c.0.s8 %v1161
      %v1163 = vlaneseq
      %v1164 = vshrl.u32 %v1163, 7
      %v1165 = vsub.s32 %v1162, %v1164
      %v1166 = vrot.slane %v1152, %v1165
      %v1167 = vcombine.high %v1159, %v1159
      %v1168 = vcombine.high %v1166, %v1166
      %v1169 = vcombine.high %v865, %v865
      %v1171 = vunpack.c.l.s4 1983009808
      %v1172 = vunpack.c.0.s8 %v1171
      %v1173 = vlaneseq
      %v1174 = vshrl.u32 %v1173, 7
      %v1175 = vsub.s32 %v1172, %v1174
      %v1176 = vrot.slane %v865, %v1175
      %v1178 = vunpack.c.l.s4 1983009808
      %v1179 = vunpack.c.0.s8 %v1178
      %v1180 = vlaneseq
      %v1181 = vshrl.u32 %v1180, 7
      %v1182 = vsub.s32 %v1179, %v1181
      %v1183 = vrot.slane %v1169, %v1182
      %v1184 = vcombine.high %v1176, %v1176
      %v1185 = vcombine.high %v1183, %v1183
      %v1186 = vcombine.high %v866, %v866
      %v1188 = vunpack.c.l.s4 1983009808
      %v1189 = vunpack.c.0.s8 %v1188
      %v1190 = vlaneseq
      %v1191 = vshrl.u32 %v1190, 7
      %v1192 = vsub.s32 %v1189, %v1191
      %v1193 = vrot.slane %v866, %v1192
      %v1195 = vunpack.c.l.s4 1983009808
      %v1196 = vunpack.c.0.s8 %v1195
      %v1197 = vlaneseq
      %v1198 = vshrl.u32 %v1197, 7
      %v1199 = vsub.s32 %v1196, %v1198
      %v1200 = vrot.slane %v1186, %v1199
      %v1201 = vcombine.high %v1193, %v1193
      %v1202 = vcombine.high %v1200, %v1200
      %v1203 = vcombine.high %v867, %v867
      %v1205 = vunpack.c.l.s4 1983009808
      %v1206 = vunpack.c.0.s8 %v1205
      %v1207 = vlaneseq
      %v1208 = vshrl.u32 %v1207, 7
      %v1209 = vsub.s32 %v1206, %v1208
      %v1210 = vrot.slane %v867, %v1209
      %v1212 = vunpack.c.l.s4 1983009808
      %v1213 = vunpack.c.0.s8 %v1212
      %v1214 = vlaneseq
      %v1215 = vshrl.u32 %v1214, 7
      %v1216 = vsub.s32 %v1213, %v1215
      %v1217 = vrot.slane %v1203, %v1216
      %v1218 = vcombine.high %v1210, %v1210
      %v1219 = vcombine.high %v1217, %v1217
      %v1220 = vcombine.high %v868, %v868
      %v1222 = vunpack.c.l.s4 1983009808
      %v1223 = vunpack.c.0.s8 %v1222
      %v1224 = vlaneseq
      %v1225 = vshrl.u32 %v1224, 7
      %v1226 = vsub.s32 %v1223, %v1225
      %v1227 = vrot.slane %v868, %v1226
      %v1229 = vunpack.c.l.s4 1983009808
      %v1230 = vunpack.c.0.s8 %v1229
      %v1231 = vlaneseq
      %v1232 = vshrl.u32 %v1231, 7
      %v1233 = vsub.s32 %v1230, %v1232
      %v1234 = vrot.slane %v1220, %v1233
      %v1235 = vcombine.high %v1227, %v1227
      %v1236 = vcombine.high %v1234, %v1234
      %v1237 = vcombine.high %v869, %v869
      %v1239 = vunpack.c.l.s4 1983009808
      %v1240 = vunpack.c.0.s8 %v1239
      %v1241 = vlaneseq
      %v1242 = vshrl.u32 %v1241, 7
      %v1243 = vsub.s32 %v1240, %v1242
      %v1244 = vrot.slane %v869, %v1243
      %v1246 = vunpack.c.l.s4 1983009808
      %v1247 = vunpack.c.0.s8 %v1246
      %v1248 = vlaneseq
      %v1249 = vshrl.u32 %v1248, 7
      %v1250 = vsub.s32 %v1247, %v1249
      %v1251 = vrot.slane %v1237, %v1250
      %v1252 = vcombine.high %v1244, %v1244
      %v1253 = vcombine.high %v1251, %v1251
      %v1254 = vcombine.high %v870, %v870
      %v1256 = vunpack.c.l.s4 1983009808
      %v1257 = vunpack.c.0.s8 %v1256
      %v1258 = vlaneseq
      %v1259 = vshrl.u32 %v1258, 7
      %v1260 = vsub.s32 %v1257, %v1259
      %v1261 = vrot.slane %v870, %v1260
      %v1263 = vunpack.c.l.s4 1983009808
      %v1264 = vunpack.c.0.s8 %v1263
      %v1265 = vlaneseq
      %v1266 = vshrl.u32 %v1265, 7
      %v1267 = vsub.s32 %v1264, %v1266
      %v1268 = vrot.slane %v1254, %v1267
      %v1269 = vcombine.high %v1261, %v1261
      %v1270 = vcombine.high %v1268, %v1268
      %v1271 = vcombine.high %v871, %v871
      %v1273 = vunpack.c.l.s4 1983009808
      %v1274 = vunpack.c.0.s8 %v1273
      %v1275 = vlaneseq
      %v1276 = vshrl.u32 %v1275, 7
      %v1277 = vsub.s32 %v1274, %v1276
      %v1278 = vrot.slane %v871, %v1277
      %v1280 = vunpack.c.l.s4 1983009808
      %v1281 = vunpack.c.0.s8 %v1280
      %v1282 = vlaneseq
      %v1283 = vshrl.u32 %v1282, 7
      %v1284 = vsub.s32 %v1281, %v1283
      %v1285 = vrot.slane %v1271, %v1284
      %v1286 = vcombine.high %v1278, %v1278
      %v1287 = vcombine.high %v1285, %v1285
      %v1288 = vcombine.high %v872, %v872
      %v1290 = vunpack.c.l.s4 1983009808
      %v1291 = vunpack.c.0.s8 %v1290
      %v1292 = vlaneseq
      %v1293 = vshrl.u32 %v1292, 7
      %v1294 = vsub.s32 %v1291, %v1293
      %v1295 = vrot.slane %v872, %v1294
      %v1297 = vunpack.c.l.s4 1983009808
      %v1298 = vunpack.c.0.s8 %v1297
      %v1299 = vlaneseq
      %v1300 = vshrl.u32 %v1299, 7
      %v1301 = vsub.s32 %v1298, %v1300
      %v1302 = vrot.slane %v1288, %v1301
      %v1303 = vcombine.high %v1295, %v1295
      %v1304 = vcombine.high %v1302, %v1302
      %v1305 = vcombine.high %v873, %v873
      %v1307 = vunpack.c.l.s4 1983009808
      %v1308 = vunpack.c.0.s8 %v1307
      %v1309 = vlaneseq
      %v1310 = vshrl.u32 %v1309, 7
      %v1311 = vsub.s32 %v1308, %v1310
      %v1312 = vrot.slane %v873, %v1311
      %v1314 = vunpack.c.l.s4 1983009808
      %v1315 = vunpack.c.0.s8 %v1314
      %v1316 = vlaneseq
      %v1317 = vshrl.u32 %v1316, 7
      %v1318 = vsub.s32 %v1315, %v1317
      %v1319 = vrot.slane %v1305, %v1318
      %v1320 = vcombine.high %v1312, %v1312
      %v1321 = vcombine.high %v1319, %v1319
      %v1322 = vcombine.high %v874, %v874
      %v1324 = vunpack.c.l.s4 1983009808
      %v1325 = vunpack.c.0.s8 %v1324
      %v1326 = vlaneseq
      %v1327 = vshrl.u32 %v1326, 7
      %v1328 = vsub.s32 %v1325, %v1327
      %v1329 = vrot.slane %v874, %v1328
      %v1331 = vunpack.c.l.s4 1983009808
      %v1332 = vunpack.c.0.s8 %v1331
      %v1333 = vlaneseq
      %v1334 = vshrl.u32 %v1333, 7
      %v1335 = vsub.s32 %v1332, %v1334
      %v1336 = vrot.slane %v1322, %v1335
      %v1337 = vcombine.high %v1329, %v1329
      %v1338 = vcombine.high %v1336, %v1336
      %v1339 = vcombine.high %v875, %v875
      %v1341 = vunpack.c.l.s4 1983009808
      %v1342 = vunpack.c.0.s8 %v1341
      %v1343 = vlaneseq
      %v1344 = vshrl.u32 %v1343, 7
      %v1345 = vsub.s32 %v1342, %v1344
      %v1346 = vrot.slane %v875, %v1345
      %v1348 = vunpack.c.l.s4 1983009808
      %v1349 = vunpack.c.0.s8 %v1348
      %v1350 = vlaneseq
      %v1351 = vshrl.u32 %v1350, 7
      %v1352 = vsub.s32 %v1349, %v1351
      %v1353 = vrot.slane %v1339, %v1352
      %v1354 = vcombine.high %v1346, %v1346
      %v1355 = vcombine.high %v1353, %v1353
      %v1356 = vcombine.high %v876, %v876
      %v1358 = vunpack.c.l.s4 1983009808
      %v1359 = vunpack.c.0.s8 %v1358
      %v1360 = vlaneseq
      %v1361 = vshrl.u32 %v1360, 7
      %v1362 = vsub.s32 %v1359, %v1361
      %v1363 = vrot.slane %v876, %v1362
      %v1365 = vunpack.c.l.s4 1983009808
      %v1366 = vunpack.c.0.s8 %v1365
      %v1367 = vlaneseq
      %v1368 = vshrl.u32 %v1367, 7
      %v1369 = vsub.s32 %v1366, %v1368
      %v1370 = vrot.slane %v1356, %v1369
      %v1371 = vcombine.high %v1363, %v1363
      %v1372 = vcombine.high %v1370, %v1370
      %v1373 = vcombine.high %v877, %v877
      %v1375 = vunpack.c.l.s4 1983009808
      %v1376 = vunpack.c.0.s8 %v1375
      %v1377 = vlaneseq
      %v1378 = vshrl.u32 %v1377, 7
      %v1379 = vsub.s32 %v1376, %v1378
      %v1380 = vrot.slane %v877, %v1379
      %v1382 = vunpack.c.l.s4 1983009808
      %v1383 = vunpack.c.0.s8 %v1382
      %v1384 = vlaneseq
      %v1385 = vshrl.u32 %v1384, 7
      %v1386 = vsub.s32 %v1383, %v1385
      %v1387 = vrot.slane %v1373, %v1386
      %v1388 = vcombine.high %v1380, %v1380
      %v1389 = vcombine.high %v1387, %v1387
      %v1390 = vcombine.high %v878, %v878
      %v1392 = vunpack.c.l.s4 1983009808
      %v1393 = vunpack.c.0.s8 %v1392
      %v1394 = vlaneseq
      %v1395 = vshrl.u32 %v1394, 7
      %v1396 = vsub.s32 %v1393, %v1395
      %v1397 = vrot.slane %v878, %v1396
      %v1399 = vunpack.c.l.s4 1983009808
      %v1400 = vunpack.c.0.s8 %v1399
      %v1401 = vlaneseq
      %v1402 = vshrl.u32 %v1401, 7
      %v1403 = vsub.s32 %v1400, %v1402
      %v1404 = vrot.slane %v1390, %v1403
      %v1405 = vcombine.high %v1397, %v1397
      %v1406 = vcombine.high %v1404, %v1404
      %v1407 = vcombine.high %v879, %v879
      %v1409 = vunpack.c.l.s4 1983009808
      %v1410 = vunpack.c.0.s8 %v1409
      %v1411 = vlaneseq
      %v1412 = vshrl.u32 %v1411, 7
      %v1413 = vsub.s32 %v1410, %v1412
      %v1414 = vrot.slane %v879, %v1413
      %v1416 = vunpack.c.l.s4 1983009808
      %v1417 = vunpack.c.0.s8 %v1416
      %v1418 = vlaneseq
      %v1419 = vshrl.u32 %v1418, 7
      %v1420 = vsub.s32 %v1417, %v1419
      %v1421 = vrot.slane %v1407, %v1420
      %v1422 = vcombine.high %v1414, %v1414
      %v1423 = vcombine.high %v1421, %v1421
      %v1424 = vcombine.high %v880, %v880
      %v1426 = vunpack.c.l.s4 1983009808
      %v1427 = vunpack.c.0.s8 %v1426
      %v1428 = vlaneseq
      %v1429 = vshrl.u32 %v1428, 7
      %v1430 = vsub.s32 %v1427, %v1429
      %v1431 = vrot.slane %v880, %v1430
      %v1433 = vunpack.c.l.s4 1983009808
      %v1434 = vunpack.c.0.s8 %v1433
      %v1435 = vlaneseq
      %v1436 = vshrl.u32 %v1435, 7
      %v1437 = vsub.s32 %v1434, %v1436
      %v1438 = vrot.slane %v1424, %v1437
      %v1439 = vcombine.high %v1431, %v1431
      %v1440 = vcombine.high %v1438, %v1438
      %v1441 = vcombine.high %v881, %v881
      %v1443 = vunpack.c.l.s4 1983009808
      %v1444 = vunpack.c.0.s8 %v1443
      %v1445 = vlaneseq
      %v1446 = vshrl.u32 %v1445, 7
      %v1447 = vsub.s32 %v1444, %v1446
      %v1448 = vrot.slane %v881, %v1447
      %v1450 = vunpack.c.l.s4 1983009808
      %v1451 = vunpack.c.0.s8 %v1450
      %v1452 = vlaneseq
      %v1453 = vshrl.u32 %v1452, 7
      %v1454 = vsub.s32 %v1451, %v1453
      %v1455 = vrot.slane %v1441, %v1454
      %v1456 = vcombine.high %v1448, %v1448
      %v1457 = vcombine.high %v1455, %v1455
      %v1458 = vcombine.high %v882, %v882
      %v1460 = vunpack.c.l.s4 1983009808
      %v1461 = vunpack.c.0.s8 %v1460
      %v1462 = vlaneseq
      %v1463 = vshrl.u32 %v1462, 7
      %v1464 = vsub.s32 %v1461, %v1463
      %v1465 = vrot.slane %v882, %v1464
      %v1467 = vunpack.c.l.s4 1983009808
      %v1468 = vunpack.c.0.s8 %v1467
      %v1469 = vlaneseq
      %v1470 = vshrl.u32 %v1469, 7
      %v1471 = vsub.s32 %v1468, %v1470
      %v1472 = vrot.slane %v1458, %v1471
      %v1473 = vcombine.high %v1465, %v1465
      %v1474 = vcombine.high %v1472, %v1472
      %v1475 = vcombine.high %v883, %v883
      %v1477 = vunpack.c.l.s4 1983009808
      %v1478 = vunpack.c.0.s8 %v1477
      %v1479 = vlaneseq
      %v1480 = vshrl.u32 %v1479, 7
      %v1481 = vsub.s32 %v1478, %v1480
      %v1482 = vrot.slane %v883, %v1481
      %v1484 = vunpack.c.l.s4 1983009808
      %v1485 = vunpack.c.0.s8 %v1484
      %v1486 = vlaneseq
      %v1487 = vshrl.u32 %v1486, 7
      %v1488 = vsub.s32 %v1485, %v1487
      %v1489 = vrot.slane %v1475, %v1488
      %v1490 = vcombine.high %v1482, %v1482
      %v1491 = vcombine.high %v1489, %v1489
      %v1492 = vcombine.high %v884, %v884
      %v1494 = vunpack.c.l.s4 1983009808
      %v1495 = vunpack.c.0.s8 %v1494
      %v1496 = vlaneseq
      %v1497 = vshrl.u32 %v1496, 7
      %v1498 = vsub.s32 %v1495, %v1497
      %v1499 = vrot.slane %v884, %v1498
      %v1501 = vunpack.c.l.s4 1983009808
      %v1502 = vunpack.c.0.s8 %v1501
      %v1503 = vlaneseq
      %v1504 = vshrl.u32 %v1503, 7
      %v1505 = vsub.s32 %v1502, %v1504
      %v1506 = vrot.slane %v1492, %v1505
      %v1507 = vcombine.high %v1499, %v1499
      %v1508 = vcombine.high %v1506, %v1506
      %v1509 = vcombine.high %v885, %v885
      %v1511 = vunpack.c.l.s4 1983009808
      %v1512 = vunpack.c.0.s8 %v1511
      %v1513 = vlaneseq
      %v1514 = vshrl.u32 %v1513, 7
      %v1515 = vsub.s32 %v1512, %v1514
      %v1516 = vrot.slane %v885, %v1515
      %v1518 = vunpack.c.l.s4 1983009808
      %v1519 = vunpack.c.0.s8 %v1518
      %v1520 = vlaneseq
      %v1521 = vshrl.u32 %v1520, 7
      %v1522 = vsub.s32 %v1519, %v1521
      %v1523 = vrot.slane %v1509, %v1522
      %v1524 = vcombine.high %v1516, %v1516
      %v1525 = vcombine.high %v1523, %v1523
      %v1526 = vcombine.high %v886, %v886
      %v1528 = vunpack.c.l.s4 1983009808
      %v1529 = vunpack.c.0.s8 %v1528
      %v1530 = vlaneseq
      %v1531 = vshrl.u32 %v1530, 7
      %v1532 = vsub.s32 %v1529, %v1531
      %v1533 = vrot.slane %v886, %v1532
      %v1535 = vunpack.c.l.s4 1983009808
      %v1536 = vunpack.c.0.s8 %v1535
      %v1537 = vlaneseq
      %v1538 = vshrl.u32 %v1537, 7
      %v1539 = vsub.s32 %v1536, %v1538
      %v1540 = vrot.slane %v1526, %v1539
      %v1541 = vcombine.high %v1533, %v1533
      %v1542 = vcombine.high %v1540, %v1540
      %v1543 = vcombine.high %v887, %v887
      %v1545 = vunpack.c.l.s4 1983009808
      %v1546 = vunpack.c.0.s8 %v1545
      %v1547 = vlaneseq
      %v1548 = vshrl.u32 %v1547, 7
      %v1549 = vsub.s32 %v1546, %v1548
      %v1550 = vrot.slane %v887, %v1549
      %v1552 = vunpack.c.l.s4 1983009808
      %v1553 = vunpack.c.0.s8 %v1552
      %v1554 = vlaneseq
      %v1555 = vshrl.u32 %v1554, 7
      %v1556 = vsub.s32 %v1553, %v1555
      %v1557 = vrot.slane %v1543, %v1556
      %v1558 = vcombine.high %v1550, %v1550
      %v1559 = vcombine.high %v1557, %v1557
      %v1560 = vcombine.high %v888, %v888
      %v1562 = vunpack.c.l.s4 1983009808
      %v1563 = vunpack.c.0.s8 %v1562
      %v1564 = vlaneseq
      %v1565 = vshrl.u32 %v1564, 7
      %v1566 = vsub.s32 %v1563, %v1565
      %v1567 = vrot.slane %v888, %v1566
      %v1569 = vunpack.c.l.s4 1983009808
      %v1570 = vunpack.c.0.s8 %v1569
      %v1571 = vlaneseq
      %v1572 = vshrl.u32 %v1571, 7
      %v1573 = vsub.s32 %v1570, %v1572
      %v1574 = vrot.slane %v1560, %v1573
      %v1575 = vcombine.high %v1567, %v1567
      %v1576 = vcombine.high %v1574, %v1574
      %v1577 = vcombine.high %v889, %v889
      %v1579 = vunpack.c.l.s4 1983009808
      %v1580 = vunpack.c.0.s8 %v1579
      %v1581 = vlaneseq
      %v1582 = vshrl.u32 %v1581, 7
      %v1583 = vsub.s32 %v1580, %v1582
      %v1584 = vrot.slane %v889, %v1583
      %v1586 = vunpack.c.l.s4 1983009808
      %v1587 = vunpack.c.0.s8 %v1586
      %v1588 = vlaneseq
      %v1589 = vshrl.u32 %v1588, 7
      %v1590 = vsub.s32 %v1587, %v1589
      %v1591 = vrot.slane %v1577, %v1590
      %v1592 = vcombine.high %v1584, %v1584
      %v1593 = vcombine.high %v1591, %v1591
      %v1594 = vcombine.high %v890, %v890
      %v1596 = vunpack.c.l.s4 1983009808
      %v1597 = vunpack.c.0.s8 %v1596
      %v1598 = vlaneseq
      %v1599 = vshrl.u32 %v1598, 7
      %v1600 = vsub.s32 %v1597, %v1599
      %v1601 = vrot.slane %v890, %v1600
      %v1603 = vunpack.c.l.s4 1983009808
      %v1604 = vunpack.c.0.s8 %v1603
      %v1605 = vlaneseq
      %v1606 = vshrl.u32 %v1605, 7
      %v1607 = vsub.s32 %v1604, %v1606
      %v1608 = vrot.slane %v1594, %v1607
      %v1609 = vcombine.high %v1601, %v1601
      %v1610 = vcombine.high %v1608, %v1608
      %v1611 = vcombine.high %v891, %v891
      %v1613 = vunpack.c.l.s4 1983009808
      %v1614 = vunpack.c.0.s8 %v1613
      %v1615 = vlaneseq
      %v1616 = vshrl.u32 %v1615, 7
      %v1617 = vsub.s32 %v1614, %v1616
      %v1618 = vrot.slane %v891, %v1617
      %v1620 = vunpack.c.l.s4 1983009808
      %v1621 = vunpack.c.0.s8 %v1620
      %v1622 = vlaneseq
      %v1623 = vshrl.u32 %v1622, 7
      %v1624 = vsub.s32 %v1621, %v1623
      %v1625 = vrot.slane %v1611, %v1624
      %v1626 = vcombine.high %v1618, %v1618
      %v1627 = vcombine.high %v1625, %v1625
      %v1628 = vcombine.high %v892, %v892
      %v1630 = vunpack.c.l.s4 1983009808
      %v1631 = vunpack.c.0.s8 %v1630
      %v1632 = vlaneseq
      %v1633 = vshrl.u32 %v1632, 7
      %v1634 = vsub.s32 %v1631, %v1633
      %v1635 = vrot.slane %v892, %v1634
      %v1637 = vunpack.c.l.s4 1983009808
      %v1638 = vunpack.c.0.s8 %v1637
      %v1639 = vlaneseq
      %v1640 = vshrl.u32 %v1639, 7
      %v1641 = vsub.s32 %v1638, %v1640
      %v1642 = vrot.slane %v1628, %v1641
      %v1643 = vcombine.high %v1635, %v1635
      %v1644 = vcombine.high %v1642, %v1642
      %v1645 = vcombine.high %v893, %v893
      %v1647 = vunpack.c.l.s4 1983009808
      %v1648 = vunpack.c.0.s8 %v1647
      %v1649 = vlaneseq
      %v1650 = vshrl.u32 %v1649, 7
      %v1651 = vsub.s32 %v1648, %v1650
      %v1652 = vrot.slane %v893, %v1651
      %v1654 = vunpack.c.l.s4 1983009808
      %v1655 = vunpack.c.0.s8 %v1654
      %v1656 = vlaneseq
      %v1657 = vshrl.u32 %v1656, 7
      %v1658 = vsub.s32 %v1655, %v1657
      %v1659 = vrot.slane %v1645, %v1658
      %v1660 = vcombine.high %v1652, %v1652
      %v1661 = vcombine.high %v1659, %v1659
      %v1662 = vcombine.high %v894, %v894
      %v1664 = vunpack.c.l.s4 1983009808
      %v1665 = vunpack.c.0.s8 %v1664
      %v1666 = vlaneseq
      %v1667 = vshrl.u32 %v1666, 7
      %v1668 = vsub.s32 %v1665, %v1667
      %v1669 = vrot.slane %v894, %v1668
      %v1671 = vunpack.c.l.s4 1983009808
      %v1672 = vunpack.c.0.s8 %v1671
      %v1673 = vlaneseq
      %v1674 = vshrl.u32 %v1673, 7
      %v1675 = vsub.s32 %v1672, %v1674
      %v1676 = vrot.slane %v1662, %v1675
      %v1677 = vcombine.high %v1669, %v1669
      %v1678 = vcombine.high %v1676, %v1676
      %v1679 = vcombine.high %v895, %v895
      %v1681 = vunpack.c.l.s4 1983009808
      %v1682 = vunpack.c.0.s8 %v1681
      %v1683 = vlaneseq
      %v1684 = vshrl.u32 %v1683, 7
      %v1685 = vsub.s32 %v1682, %v1684
      %v1686 = vrot.slane %v895, %v1685
      %v1688 = vunpack.c.l.s4 1983009808
      %v1689 = vunpack.c.0.s8 %v1688
      %v1690 = vlaneseq
      %v1691 = vshrl.u32 %v1690, 7
      %v1692 = vsub.s32 %v1689, %v1691
      %v1693 = vrot.slane %v1679, %v1692
      %v1694 = vcombine.high %v1686, %v1686
      %v1695 = vcombine.high %v1693, %v1693
      %v1696 = vcombine.high %v896, %v896
      %v1698 = vunpack.c.l.s4 1983009808
      %v1699 = vunpack.c.0.s8 %v1698
      %v1700 = vlaneseq
      %v1701 = vshrl.u32 %v1700, 7
      %v1702 = vsub.s32 %v1699, %v1701
      %v1703 = vrot.slane %v896, %v1702
      %v1705 = vunpack.c.l.s4 1983009808
      %v1706 = vunpack.c.0.s8 %v1705
      %v1707 = vlaneseq
      %v1708 = vshrl.u32 %v1707, 7
      %v1709 = vsub.s32 %v1706, %v1708
      %v1710 = vrot.slane %v1696, %v1709
      %v1711 = vcombine.high %v1703, %v1703
      %v1712 = vcombine.high %v1710, %v1710
      %v1713 = vcombine.high %v897, %v897
      %v1715 = vunpack.c.l.s4 1983009808
      %v1716 = vunpack.c.0.s8 %v1715
      %v1717 = vlaneseq
      %v1718 = vshrl.u32 %v1717, 7
      %v1719 = vsub.s32 %v1716, %v1718
      %v1720 = vrot.slane %v897, %v1719
      %v1722 = vunpack.c.l.s4 1983009808
      %v1723 = vunpack.c.0.s8 %v1722
      %v1724 = vlaneseq
      %v1725 = vshrl.u32 %v1724, 7
      %v1726 = vsub.s32 %v1723, %v1725
      %v1727 = vrot.slane %v1713, %v1726
      %v1728 = vcombine.high %v1720, %v1720
      %v1729 = vcombine.high %v1727, %v1727
      %v1730 = vcombine.high %v898, %v898
      %v1732 = vunpack.c.l.s4 1983009808
      %v1733 = vunpack.c.0.s8 %v1732
      %v1734 = vlaneseq
      %v1735 = vshrl.u32 %v1734, 7
      %v1736 = vsub.s32 %v1733, %v1735
      %v1737 = vrot.slane %v898, %v1736
      %v1739 = vunpack.c.l.s4 1983009808
      %v1740 = vunpack.c.0.s8 %v1739
      %v1741 = vlaneseq
      %v1742 = vshrl.u32 %v1741, 7
      %v1743 = vsub.s32 %v1740, %v1742
      %v1744 = vrot.slane %v1730, %v1743
      %v1745 = vcombine.high %v1737, %v1737
      %v1746 = vcombine.high %v1744, %v1744
      %v1747 = vcombine.high %v899, %v899
      %v1749 = vunpack.c.l.s4 1983009808
      %v1750 = vunpack.c.0.s8 %v1749
      %v1751 = vlaneseq
      %v1752 = vshrl.u32 %v1751, 7
      %v1753 = vsub.s32 %v1750, %v1752
      %v1754 = vrot.slane %v899, %v1753
      %v1756 = vunpack.c.l.s4 1983009808
      %v1757 = vunpack.c.0.s8 %v1756
      %v1758 = vlaneseq
      %v1759 = vshrl.u32 %v1758, 7
      %v1760 = vsub.s32 %v1757, %v1759
      %v1761 = vrot.slane %v1747, %v1760
      %v1762 = vcombine.high %v1754, %v1754
      %v1763 = vcombine.high %v1761, %v1761
      %v1764 = vcombine.high %v900, %v900
      %v1766 = vunpack.c.l.s4 1983009808
      %v1767 = vunpack.c.0.s8 %v1766
      %v1768 = vlaneseq
      %v1769 = vshrl.u32 %v1768, 7
      %v1770 = vsub.s32 %v1767, %v1769
      %v1771 = vrot.slane %v900, %v1770
      %v1773 = vunpack.c.l.s4 1983009808
      %v1774 = vunpack.c.0.s8 %v1773
      %v1775 = vlaneseq
      %v1776 = vshrl.u32 %v1775, 7
      %v1777 = vsub.s32 %v1774, %v1776
      %v1778 = vrot.slane %v1764, %v1777
      %v1779 = vcombine.high %v1771, %v1771
      %v1780 = vcombine.high %v1778, %v1778
      %v1781 = vcombine.high %v901, %v901
      %v1783 = vunpack.c.l.s4 1983009808
      %v1784 = vunpack.c.0.s8 %v1783
      %v1785 = vlaneseq
      %v1786 = vshrl.u32 %v1785, 7
      %v1787 = vsub.s32 %v1784, %v1786
      %v1788 = vrot.slane %v901, %v1787
      %v1790 = vunpack.c.l.s4 1983009808
      %v1791 = vunpack.c.0.s8 %v1790
      %v1792 = vlaneseq
      %v1793 = vshrl.u32 %v1792, 7
      %v1794 = vsub.s32 %v1791, %v1793
      %v1795 = vrot.slane %v1781, %v1794
      %v1796 = vcombine.high %v1788, %v1788
      %v1797 = vcombine.high %v1795, %v1795
      %v1798 = vcombine.high %v902, %v902
      %v1800 = vunpack.c.l.s4 1983009808
      %v1801 = vunpack.c.0.s8 %v1800
      %v1802 = vlaneseq
      %v1803 = vshrl.u32 %v1802, 7
      %v1804 = vsub.s32 %v1801, %v1803
      %v1805 = vrot.slane %v902, %v1804
      %v1807 = vunpack.c.l.s4 1983009808
      %v1808 = vunpack.c.0.s8 %v1807
      %v1809 = vlaneseq
      %v1810 = vshrl.u32 %v1809, 7
      %v1811 = vsub.s32 %v1808, %v1810
      %v1812 = vrot.slane %v1798, %v1811
      %v1813 = vcombine.high %v1805, %v1805
      %v1814 = vcombine.high %v1812, %v1812
      %v1815 = vcombine.high %v903, %v903
      %v1817 = vunpack.c.l.s4 1983009808
      %v1818 = vunpack.c.0.s8 %v1817
      %v1819 = vlaneseq
      %v1820 = vshrl.u32 %v1819, 7
      %v1821 = vsub.s32 %v1818, %v1820
      %v1822 = vrot.slane %v903, %v1821
      %v1824 = vunpack.c.l.s4 1983009808
      %v1825 = vunpack.c.0.s8 %v1824
      %v1826 = vlaneseq
      %v1827 = vshrl.u32 %v1826, 7
      %v1828 = vsub.s32 %v1825, %v1827
      %v1829 = vrot.slane %v1815, %v1828
      %v1830 = vcombine.high %v1822, %v1822
      %v1831 = vcombine.high %v1829, %v1829
      %v1832 = vcombine.high %v904, %v904
      %v1834 = vunpack.c.l.s4 1983009808
      %v1835 = vunpack.c.0.s8 %v1834
      %v1836 = vlaneseq
      %v1837 = vshrl.u32 %v1836, 7
      %v1838 = vsub.s32 %v1835, %v1837
      %v1839 = vrot.slane %v904, %v1838
      %v1841 = vunpack.c.l.s4 1983009808
      %v1842 = vunpack.c.0.s8 %v1841
      %v1843 = vlaneseq
      %v1844 = vshrl.u32 %v1843, 7
      %v1845 = vsub.s32 %v1842, %v1844
      %v1846 = vrot.slane %v1832, %v1845
      %v1847 = vcombine.high %v1839, %v1839
      %v1848 = vcombine.high %v1846, %v1846
      %v1849 = vcombine.high %v905, %v905
      %v1851 = vunpack.c.l.s4 1983009808
      %v1852 = vunpack.c.0.s8 %v1851
      %v1853 = vlaneseq
      %v1854 = vshrl.u32 %v1853, 7
      %v1855 = vsub.s32 %v1852, %v1854
      %v1856 = vrot.slane %v905, %v1855
      %v1858 = vunpack.c.l.s4 1983009808
      %v1859 = vunpack.c.0.s8 %v1858
      %v1860 = vlaneseq
      %v1861 = vshrl.u32 %v1860, 7
      %v1862 = vsub.s32 %v1859, %v1861
      %v1863 = vrot.slane %v1849, %v1862
      %v1864 = vcombine.high %v1856, %v1856
      %v1865 = vcombine.high %v1863, %v1863
      %v1866 = vcombine.high %v906, %v906
      %v1868 = vunpack.c.l.s4 1983009808
      %v1869 = vunpack.c.0.s8 %v1868
      %v1870 = vlaneseq
      %v1871 = vshrl.u32 %v1870, 7
      %v1872 = vsub.s32 %v1869, %v1871
      %v1873 = vrot.slane %v906, %v1872
      %v1875 = vunpack.c.l.s4 1983009808
      %v1876 = vunpack.c.0.s8 %v1875
      %v1877 = vlaneseq
      %v1878 = vshrl.u32 %v1877, 7
      %v1879 = vsub.s32 %v1876, %v1878
      %v1880 = vrot.slane %v1866, %v1879
      %v1881 = vcombine.high %v1873, %v1873
      %v1882 = vcombine.high %v1880, %v1880
      %v1883 = vcombine.high %v907, %v907
      %v1885 = vunpack.c.l.s4 1983009808
      %v1886 = vunpack.c.0.s8 %v1885
      %v1887 = vlaneseq
      %v1888 = vshrl.u32 %v1887, 7
      %v1889 = vsub.s32 %v1886, %v1888
      %v1890 = vrot.slane %v907, %v1889
      %v1892 = vunpack.c.l.s4 1983009808
      %v1893 = vunpack.c.0.s8 %v1892
      %v1894 = vlaneseq
      %v1895 = vshrl.u32 %v1894, 7
      %v1896 = vsub.s32 %v1893, %v1895
      %v1897 = vrot.slane %v1883, %v1896
      %v1898 = vcombine.high %v1890, %v1890
      %v1899 = vcombine.high %v1897, %v1897
      %v1900 = vcombine.high %v908, %v908
      %v1902 = vunpack.c.l.s4 1983009808
      %v1903 = vunpack.c.0.s8 %v1902
      %v1904 = vlaneseq
      %v1905 = vshrl.u32 %v1904, 7
      %v1906 = vsub.s32 %v1903, %v1905
      %v1907 = vrot.slane %v908, %v1906
      %v1909 = vunpack.c.l.s4 1983009808
      %v1910 = vunpack.c.0.s8 %v1909
      %v1911 = vlaneseq
      %v1912 = vshrl.u32 %v1911, 7
      %v1913 = vsub.s32 %v1910, %v1912
      %v1914 = vrot.slane %v1900, %v1913
      %v1915 = vcombine.high %v1907, %v1907
      %v1916 = vcombine.high %v1914, %v1914
      %v1917 = vcombine.high %v909, %v909
      %v1919 = vunpack.c.l.s4 1983009808
      %v1920 = vunpack.c.0.s8 %v1919
      %v1921 = vlaneseq
      %v1922 = vshrl.u32 %v1921, 7
      %v1923 = vsub.s32 %v1920, %v1922
      %v1924 = vrot.slane %v909, %v1923
      %v1926 = vunpack.c.l.s4 1983009808
      %v1927 = vunpack.c.0.s8 %v1926
      %v1928 = vlaneseq
      %v1929 = vshrl.u32 %v1928, 7
      %v1930 = vsub.s32 %v1927, %v1929
      %v1931 = vrot.slane %v1917, %v1930
      %v1932 = vcombine.high %v1924, %v1924
      %v1933 = vcombine.high %v1931, %v1931
      %v1934 = vcombine.high %v910, %v910
      %v1936 = vunpack.c.l.s4 1983009808
      %v1937 = vunpack.c.0.s8 %v1936
      %v1938 = vlaneseq
      %v1939 = vshrl.u32 %v1938, 7
      %v1940 = vsub.s32 %v1937, %v1939
      %v1941 = vrot.slane %v910, %v1940
      %v1943 = vunpack.c.l.s4 1983009808
      %v1944 = vunpack.c.0.s8 %v1943
      %v1945 = vlaneseq
      %v1946 = vshrl.u32 %v1945, 7
      %v1947 = vsub.s32 %v1944, %v1946
      %v1948 = vrot.slane %v1934, %v1947
      %v1949 = vcombine.high %v1941, %v1941
      %v1950 = vcombine.high %v1948, %v1948
      %v1951 = vcombine.high %v911, %v911
      %v1953 = vunpack.c.l.s4 1983009808
      %v1954 = vunpack.c.0.s8 %v1953
      %v1955 = vlaneseq
      %v1956 = vshrl.u32 %v1955, 7
      %v1957 = vsub.s32 %v1954, %v1956
      %v1958 = vrot.slane %v911, %v1957
      %v1960 = vunpack.c.l.s4 1983009808
      %v1961 = vunpack.c.0.s8 %v1960
      %v1962 = vlaneseq
      %v1963 = vshrl.u32 %v1962, 7
      %v1964 = vsub.s32 %v1961, %v1963
      %v1965 = vrot.slane %v1951, %v1964
      %v1966 = vcombine.high %v1958, %v1958
      %v1967 = vcombine.high %v1965, %v1965
      %v1968 = vcombine.high %v912, %v912
      %v1970 = vunpack.c.l.s4 1983009808
      %v1971 = vunpack.c.0.s8 %v1970
      %v1972 = vlaneseq
      %v1973 = vshrl.u32 %v1972, 7
      %v1974 = vsub.s32 %v1971, %v1973
      %v1975 = vrot.slane %v912, %v1974
      %v1977 = vunpack.c.l.s4 1983009808
      %v1978 = vunpack.c.0.s8 %v1977
      %v1979 = vlaneseq
      %v1980 = vshrl.u32 %v1979, 7
      %v1981 = vsub.s32 %v1978, %v1980
      %v1982 = vrot.slane %v1968, %v1981
      %v1983 = vcombine.high %v1975, %v1975
      %v1984 = vcombine.high %v1982, %v1982
      %v1985 = vcombine.high %v913, %v913
      %v1987 = vunpack.c.l.s4 1983009808
      %v1988 = vunpack.c.0.s8 %v1987
      %v1989 = vlaneseq
      %v1990 = vshrl.u32 %v1989, 7
      %v1991 = vsub.s32 %v1988, %v1990
      %v1992 = vrot.slane %v913, %v1991
      %v1994 = vunpack.c.l.s4 1983009808
      %v1995 = vunpack.c.0.s8 %v1994
      %v1996 = vlaneseq
      %v1997 = vshrl.u32 %v1996, 7
      %v1998 = vsub.s32 %v1995, %v1997
      %v1999 = vrot.slane %v1985, %v1998
      %v2000 = vcombine.high %v1992, %v1992
      %v2001 = vcombine.high %v1999, %v1999
      %v2002 = vcombine.high %v914, %v914
      %v2004 = vunpack.c.l.s4 1983009808
      %v2005 = vunpack.c.0.s8 %v2004
      %v2006 = vlaneseq
      %v2007 = vshrl.u32 %v2006, 7
      %v2008 = vsub.s32 %v2005, %v2007
      %v2009 = vrot.slane %v914, %v2008
      %v2011 = vunpack.c.l.s4 1983009808
      %v2012 = vunpack.c.0.s8 %v2011
      %v2013 = vlaneseq
      %v2014 = vshrl.u32 %v2013, 7
      %v2015 = vsub.s32 %v2012, %v2014
      %v2016 = vrot.slane %v2002, %v2015
      %v2017 = vcombine.high %v2009, %v2009
      %v2018 = vcombine.high %v2016, %v2016
      %v2019 = vcombine.high %v915, %v915
      %v2021 = vunpack.c.l.s4 1983009808
      %v2022 = vunpack.c.0.s8 %v2021
      %v2023 = vlaneseq
      %v2024 = vshrl.u32 %v2023, 7
      %v2025 = vsub.s32 %v2022, %v2024
      %v2026 = vrot.slane %v915, %v2025
      %v2028 = vunpack.c.l.s4 1983009808
      %v2029 = vunpack.c.0.s8 %v2028
      %v2030 = vlaneseq
      %v2031 = vshrl.u32 %v2030, 7
      %v2032 = vsub.s32 %v2029, %v2031
      %v2033 = vrot.slane %v2019, %v2032
      %v2034 = vcombine.high %v2026, %v2026
      %v2035 = vcombine.high %v2033, %v2033
      %v2036 = vcombine.high %v916, %v916
      %v2038 = vunpack.c.l.s4 1983009808
      %v2039 = vunpack.c.0.s8 %v2038
      %v2040 = vlaneseq
      %v2041 = vshrl.u32 %v2040, 7
      %v2042 = vsub.s32 %v2039, %v2041
      %v2043 = vrot.slane %v916, %v2042
      %v2045 = vunpack.c.l.s4 1983009808
      %v2046 = vunpack.c.0.s8 %v2045
      %v2047 = vlaneseq
      %v2048 = vshrl.u32 %v2047, 7
      %v2049 = vsub.s32 %v2046, %v2048
      %v2050 = vrot.slane %v2036, %v2049
      %v2051 = vcombine.high %v2043, %v2043
      %v2052 = vcombine.high %v2050, %v2050
      %v2053 = vcombine.high %v917, %v917
      %v2055 = vunpack.c.l.s4 1983009808
      %v2056 = vunpack.c.0.s8 %v2055
      %v2057 = vlaneseq
      %v2058 = vshrl.u32 %v2057, 7
      %v2059 = vsub.s32 %v2056, %v2058
      %v2060 = vrot.slane %v917, %v2059
      %v2062 = vunpack.c.l.s4 1983009808
      %v2063 = vunpack.c.0.s8 %v2062
      %v2064 = vlaneseq
      %v2065 = vshrl.u32 %v2064, 7
      %v2066 = vsub.s32 %v2063, %v2065
      %v2067 = vrot.slane %v2053, %v2066
      %v2068 = vcombine.high %v2060, %v2060
      %v2069 = vcombine.high %v2067, %v2067
      %v2070 = vcombine.high %v918, %v918
      %v2072 = vunpack.c.l.s4 1983009808
      %v2073 = vunpack.c.0.s8 %v2072
      %v2074 = vlaneseq
      %v2075 = vshrl.u32 %v2074, 7
      %v2076 = vsub.s32 %v2073, %v2075
      %v2077 = vrot.slane %v918, %v2076
      %v2079 = vunpack.c.l.s4 1983009808
      %v2080 = vunpack.c.0.s8 %v2079
      %v2081 = vlaneseq
      %v2082 = vshrl.u32 %v2081, 7
      %v2083 = vsub.s32 %v2080, %v2082
      %v2084 = vrot.slane %v2070, %v2083
      %v2085 = vcombine.high %v2077, %v2077
      %v2086 = vcombine.high %v2084, %v2084
      %v2087 = vcombine.high %v919, %v919
      %v2089 = vunpack.c.l.s4 1983009808
      %v2090 = vunpack.c.0.s8 %v2089
      %v2091 = vlaneseq
      %v2092 = vshrl.u32 %v2091, 7
      %v2093 = vsub.s32 %v2090, %v2092
      %v2094 = vrot.slane %v919, %v2093
      %v2096 = vunpack.c.l.s4 1983009808
      %v2097 = vunpack.c.0.s8 %v2096
      %v2098 = vlaneseq
      %v2099 = vshrl.u32 %v2098, 7
      %v2100 = vsub.s32 %v2097, %v2099
      %v2101 = vrot.slane %v2087, %v2100
      %v2102 = vcombine.high %v2094, %v2094
      %v2103 = vcombine.high %v2101, %v2101
      %v2104 = vcombine.high %v920, %v920
      %v2106 = vunpack.c.l.s4 1983009808
      %v2107 = vunpack.c.0.s8 %v2106
      %v2108 = vlaneseq
      %v2109 = vshrl.u32 %v2108, 7
      %v2110 = vsub.s32 %v2107, %v2109
      %v2111 = vrot.slane %v920, %v2110
      %v2113 = vunpack.c.l.s4 1983009808
      %v2114 = vunpack.c.0.s8 %v2113
      %v2115 = vlaneseq
      %v2116 = vshrl.u32 %v2115, 7
      %v2117 = vsub.s32 %v2114, %v2116
      %v2118 = vrot.slane %v2104, %v2117
      %v2119 = vcombine.high %v2111, %v2111
      %v2120 = vcombine.high %v2118, %v2118
      %v2121 = vcombine.high %v921, %v921
      %v2123 = vunpack.c.l.s4 1983009808
      %v2124 = vunpack.c.0.s8 %v2123
      %v2125 = vlaneseq
      %v2126 = vshrl.u32 %v2125, 7
      %v2127 = vsub.s32 %v2124, %v2126
      %v2128 = vrot.slane %v921, %v2127
      %v2130 = vunpack.c.l.s4 1983009808
      %v2131 = vunpack.c.0.s8 %v2130
      %v2132 = vlaneseq
      %v2133 = vshrl.u32 %v2132, 7
      %v2134 = vsub.s32 %v2131, %v2133
      %v2135 = vrot.slane %v2121, %v2134
      %v2136 = vcombine.high %v2128, %v2128
      %v2137 = vcombine.high %v2135, %v2135
      %v2138 = vcombine.high %v922, %v922
      %v2140 = vunpack.c.l.s4 1983009808
      %v2141 = vunpack.c.0.s8 %v2140
      %v2142 = vlaneseq
      %v2143 = vshrl.u32 %v2142, 7
      %v2144 = vsub.s32 %v2141, %v2143
      %v2145 = vrot.slane %v922, %v2144
      %v2147 = vunpack.c.l.s4 1983009808
      %v2148 = vunpack.c.0.s8 %v2147
      %v2149 = vlaneseq
      %v2150 = vshrl.u32 %v2149, 7
      %v2151 = vsub.s32 %v2148, %v2150
      %v2152 = vrot.slane %v2138, %v2151
      %v2153 = vcombine.high %v2145, %v2145
      %v2154 = vcombine.high %v2152, %v2152
      %v2155 = vcombine.high %v923, %v923
      %v2157 = vunpack.c.l.s4 1983009808
      %v2158 = vunpack.c.0.s8 %v2157
      %v2159 = vlaneseq
      %v2160 = vshrl.u32 %v2159, 7
      %v2161 = vsub.s32 %v2158, %v2160
      %v2162 = vrot.slane %v923, %v2161
      %v2164 = vunpack.c.l.s4 1983009808
      %v2165 = vunpack.c.0.s8 %v2164
      %v2166 = vlaneseq
      %v2167 = vshrl.u32 %v2166, 7
      %v2168 = vsub.s32 %v2165, %v2167
      %v2169 = vrot.slane %v2155, %v2168
      %v2170 = vcombine.high %v2162, %v2162
      %v2171 = vcombine.high %v2169, %v2169
      %v2172 = vcombine.high %v924, %v924
      %v2174 = vunpack.c.l.s4 1983009808
      %v2175 = vunpack.c.0.s8 %v2174
      %v2176 = vlaneseq
      %v2177 = vshrl.u32 %v2176, 7
      %v2178 = vsub.s32 %v2175, %v2177
      %v2179 = vrot.slane %v924, %v2178
      %v2181 = vunpack.c.l.s4 1983009808
      %v2182 = vunpack.c.0.s8 %v2181
      %v2183 = vlaneseq
      %v2184 = vshrl.u32 %v2183, 7
      %v2185 = vsub.s32 %v2182, %v2184
      %v2186 = vrot.slane %v2172, %v2185
      %v2187 = vcombine.high %v2179, %v2179
      %v2188 = vcombine.high %v2186, %v2186
      %v2189 = vcombine.high %v925, %v925
      %v2191 = vunpack.c.l.s4 1983009808
      %v2192 = vunpack.c.0.s8 %v2191
      %v2193 = vlaneseq
      %v2194 = vshrl.u32 %v2193, 7
      %v2195 = vsub.s32 %v2192, %v2194
      %v2196 = vrot.slane %v925, %v2195
      %v2198 = vunpack.c.l.s4 1983009808
      %v2199 = vunpack.c.0.s8 %v2198
      %v2200 = vlaneseq
      %v2201 = vshrl.u32 %v2200, 7
      %v2202 = vsub.s32 %v2199, %v2201
      %v2203 = vrot.slane %v2189, %v2202
      %v2204 = vcombine.high %v2196, %v2196
      %v2205 = vcombine.high %v2203, %v2203
      %v2206 = vcombine.high %v926, %v926
      %v2208 = vunpack.c.l.s4 1983009808
      %v2209 = vunpack.c.0.s8 %v2208
      %v2210 = vlaneseq
      %v2211 = vshrl.u32 %v2210, 7
      %v2212 = vsub.s32 %v2209, %v2211
      %v2213 = vrot.slane %v926, %v2212
      %v2215 = vunpack.c.l.s4 1983009808
      %v2216 = vunpack.c.0.s8 %v2215
      %v2217 = vlaneseq
      %v2218 = vshrl.u32 %v2217, 7
      %v2219 = vsub.s32 %v2216, %v2218
      %v2220 = vrot.slane %v2206, %v2219
      %v2221 = vcombine.high %v2213, %v2213
      %v2222 = vcombine.high %v2220, %v2220
      %vm2511 = vcmask 1041408
      %v2512 = vsel %vm2511, %v1006, -inf
      %v2513 = vrot.slane %v2512, 4
      %v2514 = vmax.f32 %v2512, %v2513
      %v2515 = vrot.slane %v2514, 2
      %v2516 = vmax.f32 %v2514, %v2515
      %v2517 = vrot.slane %v2516, 1
      %v2518 = vmax.f32 %v2516, %v2517
      %v2519 = vsel %vm2511, %v1014, -inf
      %v2520 = vrot.slane %v2519, 4
      %v2521 = vmax.f32 %v2519, %v2520
      %v2522 = vrot.slane %v2521, 2
      %v2523 = vmax.f32 %v2521, %v2522
      %v2524 = vrot.slane %v2523, 1
      %v2525 = vmax.f32 %v2523, %v2524
      %v2526 = vsel %vm2511, %v1013, -inf
      %v2527 = vrot.slane %v2526, 4
      %v2528 = vmax.f32 %v2526, %v2527
      %v2529 = vrot.slane %v2528, 2
      %v2530 = vmax.f32 %v2528, %v2529
      %v2531 = vrot.slane %v2530, 1
      %v2532 = vmax.f32 %v2530, %v2531
      %v2533 = vsel %vm2511, %v1015, -inf
      %v2534 = vrot.slane %v2533, 4
      %v2535 = vmax.f32 %v2533, %v2534
      %v2536 = vrot.slane %v2535, 2
      %v2537 = vmax.f32 %v2535, %v2536
      %v2538 = vrot.slane %v2537, 1
      %v2539 = vmax.f32 %v2537, %v2538
      %v2540 = vsel %vm2511, %v1023, -inf
      %v2541 = vrot.slane %v2540, 4
      %v2542 = vmax.f32 %v2540, %v2541
      %v2543 = vrot.slane %v2542, 2
      %v2544 = vmax.f32 %v2542, %v2543
      %v2545 = vrot.slane %v2544, 1
      %v2546 = vmax.f32 %v2544, %v2545
      %v2547 = vsel %vm2511, %v1031, -inf
      %v2548 = vrot.slane %v2547, 4
      %v2549 = vmax.f32 %v2547, %v2548
      %v2550 = vrot.slane %v2549, 2
      %v2551 = vmax.f32 %v2549, %v2550
      %v2552 = vrot.slane %v2551, 1
      %v2553 = vmax.f32 %v2551, %v2552
      %v2554 = vsel %vm2511, %v1030, -inf
      %v2555 = vrot.slane %v2554, 4
      %v2556 = vmax.f32 %v2554, %v2555
      %v2557 = vrot.slane %v2556, 2
      %v2558 = vmax.f32 %v2556, %v2557
      %v2559 = vrot.slane %v2558, 1
      %v2560 = vmax.f32 %v2558, %v2559
      %v2561 = vsel %vm2511, %v1032, -inf
      %v2562 = vrot.slane %v2561, 4
      %v2563 = vmax.f32 %v2561, %v2562
      %v2564 = vrot.slane %v2563, 2
      %v2565 = vmax.f32 %v2563, %v2564
      %v2566 = vrot.slane %v2565, 1
      %v2567 = vmax.f32 %v2565, %v2566
      %v2568 = vsel %vm2511, %v1040, -inf
      %v2569 = vrot.slane %v2568, 4
      %v2570 = vmax.f32 %v2568, %v2569
      %v2571 = vrot.slane %v2570, 2
      %v2572 = vmax.f32 %v2570, %v2571
      %v2573 = vrot.slane %v2572, 1
      %v2574 = vmax.f32 %v2572, %v2573
      %v2575 = vsel %vm2511, %v1048, -inf
      %v2576 = vrot.slane %v2575, 4
      %v2577 = vmax.f32 %v2575, %v2576
      %v2578 = vrot.slane %v2577, 2
      %v2579 = vmax.f32 %v2577, %v2578
      %v2580 = vrot.slane %v2579, 1
      %v2581 = vmax.f32 %v2579, %v2580
      %v2582 = vsel %vm2511, %v1047, -inf
      %v2583 = vrot.slane %v2582, 4
      %v2584 = vmax.f32 %v2582, %v2583
      %v2585 = vrot.slane %v2584, 2
      %v2586 = vmax.f32 %v2584, %v2585
      %v2587 = vrot.slane %v2586, 1
      %v2588 = vmax.f32 %v2586, %v2587
      %v2589 = vsel %vm2511, %v1049, -inf
      %v2590 = vrot.slane %v2589, 4
      %v2591 = vmax.f32 %v2589, %v2590
      %v2592 = vrot.slane %v2591, 2
      %v2593 = vmax.f32 %v2591, %v2592
      %v2594 = vrot.slane %v2593, 1
      %v2595 = vmax.f32 %v2593, %v2594
      %v2596 = vsel %vm2511, %v1057, -inf
      %v2597 = vrot.slane %v2596, 4
      %v2598 = vmax.f32 %v2596, %v2597
      %v2599 = vrot.slane %v2598, 2
      %v2600 = vmax.f32 %v2598, %v2599
      %v2601 = vrot.slane %v2600, 1
      %v2602 = vmax.f32 %v2600, %v2601
      %v2603 = vsel %vm2511, %v1065, -inf
      %v2604 = vrot.slane %v2603, 4
      %v2605 = vmax.f32 %v2603, %v2604
      %v2606 = vrot.slane %v2605, 2
      %v2607 = vmax.f32 %v2605, %v2606
      %v2608 = vrot.slane %v2607, 1
      %v2609 = vmax.f32 %v2607, %v2608
      %v2610 = vsel %vm2511, %v1064, -inf
      %v2611 = vrot.slane %v2610, 4
      %v2612 = vmax.f32 %v2610, %v2611
      %v2613 = vrot.slane %v2612, 2
      %v2614 = vmax.f32 %v2612, %v2613
      %v2615 = vrot.slane %v2614, 1
      %v2616 = vmax.f32 %v2614, %v2615
      %v2617 = vsel %vm2511, %v1066, -inf
      %v2618 = vrot.slane %v2617, 4
      %v2619 = vmax.f32 %v2617, %v2618
      %v2620 = vrot.slane %v2619, 2
      %v2621 = vmax.f32 %v2619, %v2620
      %v2622 = vrot.slane %v2621, 1
      %v2623 = vmax.f32 %v2621, %v2622
      %v2624 = vsel %vm2511, %v1074, -inf
      %v2625 = vrot.slane %v2624, 4
      %v2626 = vmax.f32 %v2624, %v2625
      %v2627 = vrot.slane %v2626, 2
      %v2628 = vmax.f32 %v2626, %v2627
      %v2629 = vrot.slane %v2628, 1
      %v2630 = vmax.f32 %v2628, %v2629
      %v2631 = vsel %vm2511, %v1082, -inf
      %v2632 = vrot.slane %v2631, 4
      %v2633 = vmax.f32 %v2631, %v2632
      %v2634 = vrot.slane %v2633, 2
      %v2635 = vmax.f32 %v2633, %v2634
      %v2636 = vrot.slane %v2635, 1
      %v2637 = vmax.f32 %v2635, %v2636
      %v2638 = vsel %vm2511, %v1081, -inf
      %v2639 = vrot.slane %v2638, 4
      %v2640 = vmax.f32 %v2638, %v2639
      %v2641 = vrot.slane %v2640, 2
      %v2642 = vmax.f32 %v2640, %v2641
      %v2643 = vrot.slane %v2642, 1
      %v2644 = vmax.f32 %v2642, %v2643
      %v2645 = vsel %vm2511, %v1083, -inf
      %v2646 = vrot.slane %v2645, 4
      %v2647 = vmax.f32 %v2645, %v2646
      %v2648 = vrot.slane %v2647, 2
      %v2649 = vmax.f32 %v2647, %v2648
      %v2650 = vrot.slane %v2649, 1
      %v2651 = vmax.f32 %v2649, %v2650
      %v2652 = vsel %vm2511, %v1091, -inf
      %v2653 = vrot.slane %v2652, 4
      %v2654 = vmax.f32 %v2652, %v2653
      %v2655 = vrot.slane %v2654, 2
      %v2656 = vmax.f32 %v2654, %v2655
      %v2657 = vrot.slane %v2656, 1
      %v2658 = vmax.f32 %v2656, %v2657
      %v2659 = vsel %vm2511, %v1099, -inf
      %v2660 = vrot.slane %v2659, 4
      %v2661 = vmax.f32 %v2659, %v2660
      %v2662 = vrot.slane %v2661, 2
      %v2663 = vmax.f32 %v2661, %v2662
      %v2664 = vrot.slane %v2663, 1
      %v2665 = vmax.f32 %v2663, %v2664
      %v2666 = vsel %vm2511, %v1098, -inf
      %v2667 = vrot.slane %v2666, 4
      %v2668 = vmax.f32 %v2666, %v2667
      %v2669 = vrot.slane %v2668, 2
      %v2670 = vmax.f32 %v2668, %v2669
      %v2671 = vrot.slane %v2670, 1
      %v2672 = vmax.f32 %v2670, %v2671
      %v2673 = vsel %vm2511, %v1100, -inf
      %v2674 = vrot.slane %v2673, 4
      %v2675 = vmax.f32 %v2673, %v2674
      %v2676 = vrot.slane %v2675, 2
      %v2677 = vmax.f32 %v2675, %v2676
      %v2678 = vrot.slane %v2677, 1
      %v2679 = vmax.f32 %v2677, %v2678
      %v2680 = vsel %vm2511, %v1108, -inf
      %v2681 = vrot.slane %v2680, 4
      %v2682 = vmax.f32 %v2680, %v2681
      %v2683 = vrot.slane %v2682, 2
      %v2684 = vmax.f32 %v2682, %v2683
      %v2685 = vrot.slane %v2684, 1
      %v2686 = vmax.f32 %v2684, %v2685
      %v2687 = vsel %vm2511, %v1116, -inf
      %v2688 = vrot.slane %v2687, 4
      %v2689 = vmax.f32 %v2687, %v2688
      %v2690 = vrot.slane %v2689, 2
      %v2691 = vmax.f32 %v2689, %v2690
      %v2692 = vrot.slane %v2691, 1
      %v2693 = vmax.f32 %v2691, %v2692
      %v2694 = vsel %vm2511, %v1115, -inf
      %v2695 = vrot.slane %v2694, 4
      %v2696 = vmax.f32 %v2694, %v2695
      %v2697 = vrot.slane %v2696, 2
      %v2698 = vmax.f32 %v2696, %v2697
      %v2699 = vrot.slane %v2698, 1
      %v2700 = vmax.f32 %v2698, %v2699
      %v2701 = vsel %vm2511, %v1117, -inf
      %v2702 = vrot.slane %v2701, 4
      %v2703 = vmax.f32 %v2701, %v2702
      %v2704 = vrot.slane %v2703, 2
      %v2705 = vmax.f32 %v2703, %v2704
      %v2706 = vrot.slane %v2705, 1
      %v2707 = vmax.f32 %v2705, %v2706
      %v2708 = vsel %vm2511, %v1125, -inf
      %v2709 = vrot.slane %v2708, 4
      %v2710 = vmax.f32 %v2708, %v2709
      %v2711 = vrot.slane %v2710, 2
      %v2712 = vmax.f32 %v2710, %v2711
      %v2713 = vrot.slane %v2712, 1
      %v2714 = vmax.f32 %v2712, %v2713
      %v2715 = vsel %vm2511, %v1133, -inf
      %v2716 = vrot.slane %v2715, 4
      %v2717 = vmax.f32 %v2715, %v2716
      %v2718 = vrot.slane %v2717, 2
      %v2719 = vmax.f32 %v2717, %v2718
      %v2720 = vrot.slane %v2719, 1
      %v2721 = vmax.f32 %v2719, %v2720
      %v2722 = vsel %vm2511, %v1132, -inf
      %v2723 = vrot.slane %v2722, 4
      %v2724 = vmax.f32 %v2722, %v2723
      %v2725 = vrot.slane %v2724, 2
      %v2726 = vmax.f32 %v2724, %v2725
      %v2727 = vrot.slane %v2726, 1
      %v2728 = vmax.f32 %v2726, %v2727
      %v2729 = vsel %vm2511, %v1134, -inf
      %v2730 = vrot.slane %v2729, 4
      %v2731 = vmax.f32 %v2729, %v2730
      %v2732 = vrot.slane %v2731, 2
      %v2733 = vmax.f32 %v2731, %v2732
      %v2734 = vrot.slane %v2733, 1
      %v2735 = vmax.f32 %v2733, %v2734
      %v2736 = vsel %vm2511, %v1142, -inf
      %v2737 = vrot.slane %v2736, 4
      %v2738 = vmax.f32 %v2736, %v2737
      %v2739 = vrot.slane %v2738, 2
      %v2740 = vmax.f32 %v2738, %v2739
      %v2741 = vrot.slane %v2740, 1
      %v2742 = vmax.f32 %v2740, %v2741
      %v2743 = vsel %vm2511, %v1150, -inf
      %v2744 = vrot.slane %v2743, 4
      %v2745 = vmax.f32 %v2743, %v2744
      %v2746 = vrot.slane %v2745, 2
      %v2747 = vmax.f32 %v2745, %v2746
      %v2748 = vrot.slane %v2747, 1
      %v2749 = vmax.f32 %v2747, %v2748
      %v2750 = vsel %vm2511, %v1149, -inf
      %v2751 = vrot.slane %v2750, 4
      %v2752 = vmax.f32 %v2750, %v2751
      %v2753 = vrot.slane %v2752, 2
      %v2754 = vmax.f32 %v2752, %v2753
      %v2755 = vrot.slane %v2754, 1
      %v2756 = vmax.f32 %v2754, %v2755
      %v2757 = vsel %vm2511, %v1151, -inf
      %v2758 = vrot.slane %v2757, 4
      %v2759 = vmax.f32 %v2757, %v2758
      %v2760 = vrot.slane %v2759, 2
      %v2761 = vmax.f32 %v2759, %v2760
      %v2762 = vrot.slane %v2761, 1
      %v2763 = vmax.f32 %v2761, %v2762
      %v2764 = vsel %vm2511, %v1159, -inf
      %v2765 = vrot.slane %v2764, 4
      %v2766 = vmax.f32 %v2764, %v2765
      %v2767 = vrot.slane %v2766, 2
      %v2768 = vmax.f32 %v2766, %v2767
      %v2769 = vrot.slane %v2768, 1
      %v2770 = vmax.f32 %v2768, %v2769
      %v2771 = vsel %vm2511, %v1167, -inf
      %v2772 = vrot.slane %v2771, 4
      %v2773 = vmax.f32 %v2771, %v2772
      %v2774 = vrot.slane %v2773, 2
      %v2775 = vmax.f32 %v2773, %v2774
      %v2776 = vrot.slane %v2775, 1
      %v2777 = vmax.f32 %v2775, %v2776
      %v2778 = vsel %vm2511, %v1166, -inf
      %v2779 = vrot.slane %v2778, 4
      %v2780 = vmax.f32 %v2778, %v2779
      %v2781 = vrot.slane %v2780, 2
      %v2782 = vmax.f32 %v2780, %v2781
      %v2783 = vrot.slane %v2782, 1
      %v2784 = vmax.f32 %v2782, %v2783
      %v2785 = vsel %vm2511, %v1168, -inf
      %v2786 = vrot.slane %v2785, 4
      %v2787 = vmax.f32 %v2785, %v2786
      %v2788 = vrot.slane %v2787, 2
      %v2789 = vmax.f32 %v2787, %v2788
      %v2790 = vrot.slane %v2789, 1
      %v2791 = vmax.f32 %v2789, %v2790
      %v2792 = vsel %vm2511, %v1176, -inf
      %v2793 = vrot.slane %v2792, 4
      %v2794 = vmax.f32 %v2792, %v2793
      %v2795 = vrot.slane %v2794, 2
      %v2796 = vmax.f32 %v2794, %v2795
      %v2797 = vrot.slane %v2796, 1
      %v2798 = vmax.f32 %v2796, %v2797
      %v2799 = vsel %vm2511, %v1184, -inf
      %v2800 = vrot.slane %v2799, 4
      %v2801 = vmax.f32 %v2799, %v2800
      %v2802 = vrot.slane %v2801, 2
      %v2803 = vmax.f32 %v2801, %v2802
      %v2804 = vrot.slane %v2803, 1
      %v2805 = vmax.f32 %v2803, %v2804
      %v2806 = vsel %vm2511, %v1183, -inf
      %v2807 = vrot.slane %v2806, 4
      %v2808 = vmax.f32 %v2806, %v2807
      %v2809 = vrot.slane %v2808, 2
      %v2810 = vmax.f32 %v2808, %v2809
      %v2811 = vrot.slane %v2810, 1
      %v2812 = vmax.f32 %v2810, %v2811
      %v2813 = vsel %vm2511, %v1185, -inf
      %v2814 = vrot.slane %v2813, 4
      %v2815 = vmax.f32 %v2813, %v2814
      %v2816 = vrot.slane %v2815, 2
      %v2817 = vmax.f32 %v2815, %v2816
      %v2818 = vrot.slane %v2817, 1
      %v2819 = vmax.f32 %v2817, %v2818
      %v2820 = vsel %vm2511, %v1193, -inf
      %v2821 = vrot.slane %v2820, 4
      %v2822 = vmax.f32 %v2820, %v2821
      %v2823 = vrot.slane %v2822, 2
      %v2824 = vmax.f32 %v2822, %v2823
      %v2825 = vrot.slane %v2824, 1
      %v2826 = vmax.f32 %v2824, %v2825
      %v2827 = vsel %vm2511, %v1201, -inf
      %v2828 = vrot.slane %v2827, 4
      %v2829 = vmax.f32 %v2827, %v2828
      %v2830 = vrot.slane %v2829, 2
      %v2831 = vmax.f32 %v2829, %v2830
      %v2832 = vrot.slane %v2831, 1
      %v2833 = vmax.f32 %v2831, %v2832
      %v2834 = vsel %vm2511, %v1200, -inf
      %v2835 = vrot.slane %v2834, 4
      %v2836 = vmax.f32 %v2834, %v2835
      %v2837 = vrot.slane %v2836, 2
      %v2838 = vmax.f32 %v2836, %v2837
      %v2839 = vrot.slane %v2838, 1
      %v2840 = vmax.f32 %v2838, %v2839
      %v2841 = vsel %vm2511, %v1202, -inf
      %v2842 = vrot.slane %v2841, 4
      %v2843 = vmax.f32 %v2841, %v2842
      %v2844 = vrot.slane %v2843, 2
      %v2845 = vmax.f32 %v2843, %v2844
      %v2846 = vrot.slane %v2845, 1
      %v2847 = vmax.f32 %v2845, %v2846
      %v2848 = vsel %vm2511, %v1210, -inf
      %v2849 = vrot.slane %v2848, 4
      %v2850 = vmax.f32 %v2848, %v2849
      %v2851 = vrot.slane %v2850, 2
      %v2852 = vmax.f32 %v2850, %v2851
      %v2853 = vrot.slane %v2852, 1
      %v2854 = vmax.f32 %v2852, %v2853
      %v2855 = vsel %vm2511, %v1218, -inf
      %v2856 = vrot.slane %v2855, 4
      %v2857 = vmax.f32 %v2855, %v2856
      %v2858 = vrot.slane %v2857, 2
      %v2859 = vmax.f32 %v2857, %v2858
      %v2860 = vrot.slane %v2859, 1
      %v2861 = vmax.f32 %v2859, %v2860
      %v2862 = vsel %vm2511, %v1217, -inf
      %v2863 = vrot.slane %v2862, 4
      %v2864 = vmax.f32 %v2862, %v2863
      %v2865 = vrot.slane %v2864, 2
      %v2866 = vmax.f32 %v2864, %v2865
      %v2867 = vrot.slane %v2866, 1
      %v2868 = vmax.f32 %v2866, %v2867
      %v2869 = vsel %vm2511, %v1219, -inf
      %v2870 = vrot.slane %v2869, 4
      %v2871 = vmax.f32 %v2869, %v2870
      %v2872 = vrot.slane %v2871, 2
      %v2873 = vmax.f32 %v2871, %v2872
      %v2874 = vrot.slane %v2873, 1
      %v2875 = vmax.f32 %v2873, %v2874
      %v2876 = vsel %vm2511, %v1227, -inf
      %v2877 = vrot.slane %v2876, 4
      %v2878 = vmax.f32 %v2876, %v2877
      %v2879 = vrot.slane %v2878, 2
      %v2880 = vmax.f32 %v2878, %v2879
      %v2881 = vrot.slane %v2880, 1
      %v2882 = vmax.f32 %v2880, %v2881
      %v2883 = vsel %vm2511, %v1235, -inf
      %v2884 = vrot.slane %v2883, 4
      %v2885 = vmax.f32 %v2883, %v2884
      %v2886 = vrot.slane %v2885, 2
      %v2887 = vmax.f32 %v2885, %v2886
      %v2888 = vrot.slane %v2887, 1
      %v2889 = vmax.f32 %v2887, %v2888
      %v2890 = vsel %vm2511, %v1234, -inf
      %v2891 = vrot.slane %v2890, 4
      %v2892 = vmax.f32 %v2890, %v2891
      %v2893 = vrot.slane %v2892, 2
      %v2894 = vmax.f32 %v2892, %v2893
      %v2895 = vrot.slane %v2894, 1
      %v2896 = vmax.f32 %v2894, %v2895
      %v2897 = vsel %vm2511, %v1236, -inf
      %v2898 = vrot.slane %v2897, 4
      %v2899 = vmax.f32 %v2897, %v2898
      %v2900 = vrot.slane %v2899, 2
      %v2901 = vmax.f32 %v2899, %v2900
      %v2902 = vrot.slane %v2901, 1
      %v2903 = vmax.f32 %v2901, %v2902
      %v2904 = vsel %vm2511, %v1244, -inf
      %v2905 = vrot.slane %v2904, 4
      %v2906 = vmax.f32 %v2904, %v2905
      %v2907 = vrot.slane %v2906, 2
      %v2908 = vmax.f32 %v2906, %v2907
      %v2909 = vrot.slane %v2908, 1
      %v2910 = vmax.f32 %v2908, %v2909
      %v2911 = vsel %vm2511, %v1252, -inf
      %v2912 = vrot.slane %v2911, 4
      %v2913 = vmax.f32 %v2911, %v2912
      %v2914 = vrot.slane %v2913, 2
      %v2915 = vmax.f32 %v2913, %v2914
      %v2916 = vrot.slane %v2915, 1
      %v2917 = vmax.f32 %v2915, %v2916
      %v2918 = vsel %vm2511, %v1251, -inf
      %v2919 = vrot.slane %v2918, 4
      %v2920 = vmax.f32 %v2918, %v2919
      %v2921 = vrot.slane %v2920, 2
      %v2922 = vmax.f32 %v2920, %v2921
      %v2923 = vrot.slane %v2922, 1
      %v2924 = vmax.f32 %v2922, %v2923
      %v2925 = vsel %vm2511, %v1253, -inf
      %v2926 = vrot.slane %v2925, 4
      %v2927 = vmax.f32 %v2925, %v2926
      %v2928 = vrot.slane %v2927, 2
      %v2929 = vmax.f32 %v2927, %v2928
      %v2930 = vrot.slane %v2929, 1
      %v2931 = vmax.f32 %v2929, %v2930
      %v2932 = vsel %vm2511, %v1261, -inf
      %v2933 = vrot.slane %v2932, 4
      %v2934 = vmax.f32 %v2932, %v2933
      %v2935 = vrot.slane %v2934, 2
      %v2936 = vmax.f32 %v2934, %v2935
      %v2937 = vrot.slane %v2936, 1
      %v2938 = vmax.f32 %v2936, %v2937
      %v2939 = vsel %vm2511, %v1269, -inf
      %v2940 = vrot.slane %v2939, 4
      %v2941 = vmax.f32 %v2939, %v2940
      %v2942 = vrot.slane %v2941, 2
      %v2943 = vmax.f32 %v2941, %v2942
      %v2944 = vrot.slane %v2943, 1
      %v2945 = vmax.f32 %v2943, %v2944
      %v2946 = vsel %vm2511, %v1268, -inf
      %v2947 = vrot.slane %v2946, 4
      %v2948 = vmax.f32 %v2946, %v2947
      %v2949 = vrot.slane %v2948, 2
      %v2950 = vmax.f32 %v2948, %v2949
      %v2951 = vrot.slane %v2950, 1
      %v2952 = vmax.f32 %v2950, %v2951
      %v2953 = vsel %vm2511, %v1270, -inf
      %v2954 = vrot.slane %v2953, 4
      %v2955 = vmax.f32 %v2953, %v2954
      %v2956 = vrot.slane %v2955, 2
      %v2957 = vmax.f32 %v2955, %v2956
      %v2958 = vrot.slane %v2957, 1
      %v2959 = vmax.f32 %v2957, %v2958
      %v2960 = vsel %vm2511, %v1278, -inf
      %v2961 = vrot.slane %v2960, 4
      %v2962 = vmax.f32 %v2960, %v2961
      %v2963 = vrot.slane %v2962, 2
      %v2964 = vmax.f32 %v2962, %v2963
      %v2965 = vrot.slane %v2964, 1
      %v2966 = vmax.f32 %v2964, %v2965
      %v2967 = vsel %vm2511, %v1286, -inf
      %v2968 = vrot.slane %v2967, 4
      %v2969 = vmax.f32 %v2967, %v2968
      %v2970 = vrot.slane %v2969, 2
      %v2971 = vmax.f32 %v2969, %v2970
      %v2972 = vrot.slane %v2971, 1
      %v2973 = vmax.f32 %v2971, %v2972
      %v2974 = vsel %vm2511, %v1285, -inf
      %v2975 = vrot.slane %v2974, 4
      %v2976 = vmax.f32 %v2974, %v2975
      %v2977 = vrot.slane %v2976, 2
      %v2978 = vmax.f32 %v2976, %v2977
      %v2979 = vrot.slane %v2978, 1
      %v2980 = vmax.f32 %v2978, %v2979
      %v2981 = vsel %vm2511, %v1287, -inf
      %v2982 = vrot.slane %v2981, 4
      %v2983 = vmax.f32 %v2981, %v2982
      %v2984 = vrot.slane %v2983, 2
      %v2985 = vmax.f32 %v2983, %v2984
      %v2986 = vrot.slane %v2985, 1
      %v2987 = vmax.f32 %v2985, %v2986
      %v2988 = vsel %vm2511, %v1295, -inf
      %v2989 = vrot.slane %v2988, 4
      %v2990 = vmax.f32 %v2988, %v2989
      %v2991 = vrot.slane %v2990, 2
      %v2992 = vmax.f32 %v2990, %v2991
      %v2993 = vrot.slane %v2992, 1
      %v2994 = vmax.f32 %v2992, %v2993
      %v2995 = vsel %vm2511, %v1303, -inf
      %v2996 = vrot.slane %v2995, 4
      %v2997 = vmax.f32 %v2995, %v2996
      %v2998 = vrot.slane %v2997, 2
      %v2999 = vmax.f32 %v2997, %v2998
      %v3000 = vrot.slane %v2999, 1
      %v3001 = vmax.f32 %v2999, %v3000
      %v3002 = vsel %vm2511, %v1302, -inf
      %v3003 = vrot.slane %v3002, 4
      %v3004 = vmax.f32 %v3002, %v3003
      %v3005 = vrot.slane %v3004, 2
      %v3006 = vmax.f32 %v3004, %v3005
      %v3007 = vrot.slane %v3006, 1
      %v3008 = vmax.f32 %v3006, %v3007
      %v3009 = vsel %vm2511, %v1304, -inf
      %v3010 = vrot.slane %v3009, 4
      %v3011 = vmax.f32 %v3009, %v3010
      %v3012 = vrot.slane %v3011, 2
      %v3013 = vmax.f32 %v3011, %v3012
      %v3014 = vrot.slane %v3013, 1
      %v3015 = vmax.f32 %v3013, %v3014
      %v3016 = vsel %vm2511, %v1312, -inf
      %v3017 = vrot.slane %v3016, 4
      %v3018 = vmax.f32 %v3016, %v3017
      %v3019 = vrot.slane %v3018, 2
      %v3020 = vmax.f32 %v3018, %v3019
      %v3021 = vrot.slane %v3020, 1
      %v3022 = vmax.f32 %v3020, %v3021
      %v3023 = vsel %vm2511, %v1320, -inf
      %v3024 = vrot.slane %v3023, 4
      %v3025 = vmax.f32 %v3023, %v3024
      %v3026 = vrot.slane %v3025, 2
      %v3027 = vmax.f32 %v3025, %v3026
      %v3028 = vrot.slane %v3027, 1
      %v3029 = vmax.f32 %v3027, %v3028
      %v3030 = vsel %vm2511, %v1319, -inf
      %v3031 = vrot.slane %v3030, 4
      %v3032 = vmax.f32 %v3030, %v3031
      %v3033 = vrot.slane %v3032, 2
      %v3034 = vmax.f32 %v3032, %v3033
      %v3035 = vrot.slane %v3034, 1
      %v3036 = vmax.f32 %v3034, %v3035
      %v3037 = vsel %vm2511, %v1321, -inf
      %v3038 = vrot.slane %v3037, 4
      %v3039 = vmax.f32 %v3037, %v3038
      %v3040 = vrot.slane %v3039, 2
      %v3041 = vmax.f32 %v3039, %v3040
      %v3042 = vrot.slane %v3041, 1
      %v3043 = vmax.f32 %v3041, %v3042
      %v3044 = vsel %vm2511, %v1329, -inf
      %v3045 = vrot.slane %v3044, 4
      %v3046 = vmax.f32 %v3044, %v3045
      %v3047 = vrot.slane %v3046, 2
      %v3048 = vmax.f32 %v3046, %v3047
      %v3049 = vrot.slane %v3048, 1
      %v3050 = vmax.f32 %v3048, %v3049
      %v3051 = vsel %vm2511, %v1337, -inf
      %v3052 = vrot.slane %v3051, 4
      %v3053 = vmax.f32 %v3051, %v3052
      %v3054 = vrot.slane %v3053, 2
      %v3055 = vmax.f32 %v3053, %v3054
      %v3056 = vrot.slane %v3055, 1
      %v3057 = vmax.f32 %v3055, %v3056
      %v3058 = vsel %vm2511, %v1336, -inf
      %v3059 = vrot.slane %v3058, 4
      %v3060 = vmax.f32 %v3058, %v3059
      %v3061 = vrot.slane %v3060, 2
      %v3062 = vmax.f32 %v3060, %v3061
      %v3063 = vrot.slane %v3062, 1
      %v3064 = vmax.f32 %v3062, %v3063
      %v3065 = vsel %vm2511, %v1338, -inf
      %v3066 = vrot.slane %v3065, 4
      %v3067 = vmax.f32 %v3065, %v3066
      %v3068 = vrot.slane %v3067, 2
      %v3069 = vmax.f32 %v3067, %v3068
      %v3070 = vrot.slane %v3069, 1
      %v3071 = vmax.f32 %v3069, %v3070
      %v3072 = vsel %vm2511, %v1346, -inf
      %v3073 = vrot.slane %v3072, 4
      %v3074 = vmax.f32 %v3072, %v3073
      %v3075 = vrot.slane %v3074, 2
      %v3076 = vmax.f32 %v3074, %v3075
      %v3077 = vrot.slane %v3076, 1
      %v3078 = vmax.f32 %v3076, %v3077
      %v3079 = vsel %vm2511, %v1354, -inf
      %v3080 = vrot.slane %v3079, 4
      %v3081 = vmax.f32 %v3079, %v3080
      %v3082 = vrot.slane %v3081, 2
      %v3083 = vmax.f32 %v3081, %v3082
      %v3084 = vrot.slane %v3083, 1
      %v3085 = vmax.f32 %v3083, %v3084
      %v3086 = vsel %vm2511, %v1353, -inf
      %v3087 = vrot.slane %v3086, 4
      %v3088 = vmax.f32 %v3086, %v3087
      %v3089 = vrot.slane %v3088, 2
      %v3090 = vmax.f32 %v3088, %v3089
      %v3091 = vrot.slane %v3090, 1
      %v3092 = vmax.f32 %v3090, %v3091
      %v3093 = vsel %vm2511, %v1355, -inf
      %v3094 = vrot.slane %v3093, 4
      %v3095 = vmax.f32 %v3093, %v3094
      %v3096 = vrot.slane %v3095, 2
      %v3097 = vmax.f32 %v3095, %v3096
      %v3098 = vrot.slane %v3097, 1
      %v3099 = vmax.f32 %v3097, %v3098
      %v3100 = vsel %vm2511, %v1363, -inf
      %v3101 = vrot.slane %v3100, 4
      %v3102 = vmax.f32 %v3100, %v3101
      %v3103 = vrot.slane %v3102, 2
      %v3104 = vmax.f32 %v3102, %v3103
      %v3105 = vrot.slane %v3104, 1
      %v3106 = vmax.f32 %v3104, %v3105
      %v3107 = vsel %vm2511, %v1371, -inf
      %v3108 = vrot.slane %v3107, 4
      %v3109 = vmax.f32 %v3107, %v3108
      %v3110 = vrot.slane %v3109, 2
      %v3111 = vmax.f32 %v3109, %v3110
      %v3112 = vrot.slane %v3111, 1
      %v3113 = vmax.f32 %v3111, %v3112
      %v3114 = vsel %vm2511, %v1370, -inf
      %v3115 = vrot.slane %v3114, 4
      %v3116 = vmax.f32 %v3114, %v3115
      %v3117 = vrot.slane %v3116, 2
      %v3118 = vmax.f32 %v3116, %v3117
      %v3119 = vrot.slane %v3118, 1
      %v3120 = vmax.f32 %v3118, %v3119
      %v3121 = vsel %vm2511, %v1372, -inf
      %v3122 = vrot.slane %v3121, 4
      %v3123 = vmax.f32 %v3121, %v3122
      %v3124 = vrot.slane %v3123, 2
      %v3125 = vmax.f32 %v3123, %v3124
      %v3126 = vrot.slane %v3125, 1
      %v3127 = vmax.f32 %v3125, %v3126
      %v3128 = vsel %vm2511, %v1380, -inf
      %v3129 = vrot.slane %v3128, 4
      %v3130 = vmax.f32 %v3128, %v3129
      %v3131 = vrot.slane %v3130, 2
      %v3132 = vmax.f32 %v3130, %v3131
      %v3133 = vrot.slane %v3132, 1
      %v3134 = vmax.f32 %v3132, %v3133
      %v3135 = vsel %vm2511, %v1388, -inf
      %v3136 = vrot.slane %v3135, 4
      %v3137 = vmax.f32 %v3135, %v3136
      %v3138 = vrot.slane %v3137, 2
      %v3139 = vmax.f32 %v3137, %v3138
      %v3140 = vrot.slane %v3139, 1
      %v3141 = vmax.f32 %v3139, %v3140
      %v3142 = vsel %vm2511, %v1387, -inf
      %v3143 = vrot.slane %v3142, 4
      %v3144 = vmax.f32 %v3142, %v3143
      %v3145 = vrot.slane %v3144, 2
      %v3146 = vmax.f32 %v3144, %v3145
      %v3147 = vrot.slane %v3146, 1
      %v3148 = vmax.f32 %v3146, %v3147
      %v3149 = vsel %vm2511, %v1389, -inf
      %v3150 = vrot.slane %v3149, 4
      %v3151 = vmax.f32 %v3149, %v3150
      %v3152 = vrot.slane %v3151, 2
      %v3153 = vmax.f32 %v3151, %v3152
      %v3154 = vrot.slane %v3153, 1
      %v3155 = vmax.f32 %v3153, %v3154
      %v3156 = vsel %vm2511, %v1397, -inf
      %v3157 = vrot.slane %v3156, 4
      %v3158 = vmax.f32 %v3156, %v3157
      %v3159 = vrot.slane %v3158, 2
      %v3160 = vmax.f32 %v3158, %v3159
      %v3161 = vrot.slane %v3160, 1
      %v3162 = vmax.f32 %v3160, %v3161
      %v3163 = vsel %vm2511, %v1405, -inf
      %v3164 = vrot.slane %v3163, 4
      %v3165 = vmax.f32 %v3163, %v3164
      %v3166 = vrot.slane %v3165, 2
      %v3167 = vmax.f32 %v3165, %v3166
      %v3168 = vrot.slane %v3167, 1
      %v3169 = vmax.f32 %v3167, %v3168
      %v3170 = vsel %vm2511, %v1404, -inf
      %v3171 = vrot.slane %v3170, 4
      %v3172 = vmax.f32 %v3170, %v3171
      %v3173 = vrot.slane %v3172, 2
      %v3174 = vmax.f32 %v3172, %v3173
      %v3175 = vrot.slane %v3174, 1
      %v3176 = vmax.f32 %v3174, %v3175
      %v3177 = vsel %vm2511, %v1406, -inf
      %v3178 = vrot.slane %v3177, 4
      %v3179 = vmax.f32 %v3177, %v3178
      %v3180 = vrot.slane %v3179, 2
      %v3181 = vmax.f32 %v3179, %v3180
      %v3182 = vrot.slane %v3181, 1
      %v3183 = vmax.f32 %v3181, %v3182
      %v3184 = vsel %vm2511, %v1414, -inf
      %v3185 = vrot.slane %v3184, 4
      %v3186 = vmax.f32 %v3184, %v3185
      %v3187 = vrot.slane %v3186, 2
      %v3188 = vmax.f32 %v3186, %v3187
      %v3189 = vrot.slane %v3188, 1
      %v3190 = vmax.f32 %v3188, %v3189
      %v3191 = vsel %vm2511, %v1422, -inf
      %v3192 = vrot.slane %v3191, 4
      %v3193 = vmax.f32 %v3191, %v3192
      %v3194 = vrot.slane %v3193, 2
      %v3195 = vmax.f32 %v3193, %v3194
      %v3196 = vrot.slane %v3195, 1
      %v3197 = vmax.f32 %v3195, %v3196
      %v3198 = vsel %vm2511, %v1421, -inf
      %v3199 = vrot.slane %v3198, 4
      %v3200 = vmax.f32 %v3198, %v3199
      %v3201 = vrot.slane %v3200, 2
      %v3202 = vmax.f32 %v3200, %v3201
      %v3203 = vrot.slane %v3202, 1
      %v3204 = vmax.f32 %v3202, %v3203
      %v3205 = vsel %vm2511, %v1423, -inf
      %v3206 = vrot.slane %v3205, 4
      %v3207 = vmax.f32 %v3205, %v3206
      %v3208 = vrot.slane %v3207, 2
      %v3209 = vmax.f32 %v3207, %v3208
      %v3210 = vrot.slane %v3209, 1
      %v3211 = vmax.f32 %v3209, %v3210
      %v3212 = vsel %vm2511, %v1431, -inf
      %v3213 = vrot.slane %v3212, 4
      %v3214 = vmax.f32 %v3212, %v3213
      %v3215 = vrot.slane %v3214, 2
      %v3216 = vmax.f32 %v3214, %v3215
      %v3217 = vrot.slane %v3216, 1
      %v3218 = vmax.f32 %v3216, %v3217
      %v3219 = vsel %vm2511, %v1439, -inf
      %v3220 = vrot.slane %v3219, 4
      %v3221 = vmax.f32 %v3219, %v3220
      %v3222 = vrot.slane %v3221, 2
      %v3223 = vmax.f32 %v3221, %v3222
      %v3224 = vrot.slane %v3223, 1
      %v3225 = vmax.f32 %v3223, %v3224
      %v3226 = vsel %vm2511, %v1438, -inf
      %v3227 = vrot.slane %v3226, 4
      %v3228 = vmax.f32 %v3226, %v3227
      %v3229 = vrot.slane %v3228, 2
      %v3230 = vmax.f32 %v3228, %v3229
      %v3231 = vrot.slane %v3230, 1
      %v3232 = vmax.f32 %v3230, %v3231
      %v3233 = vsel %vm2511, %v1440, -inf
      %v3234 = vrot.slane %v3233, 4
      %v3235 = vmax.f32 %v3233, %v3234
      %v3236 = vrot.slane %v3235, 2
      %v3237 = vmax.f32 %v3235, %v3236
      %v3238 = vrot.slane %v3237, 1
      %v3239 = vmax.f32 %v3237, %v3238
      %v3240 = vsel %vm2511, %v1448, -inf
      %v3241 = vrot.slane %v3240, 4
      %v3242 = vmax.f32 %v3240, %v3241
      %v3243 = vrot.slane %v3242, 2
      %v3244 = vmax.f32 %v3242, %v3243
      %v3245 = vrot.slane %v3244, 1
      %v3246 = vmax.f32 %v3244, %v3245
      %v3247 = vsel %vm2511, %v1456, -inf
      %v3248 = vrot.slane %v3247, 4
      %v3249 = vmax.f32 %v3247, %v3248
      %v3250 = vrot.slane %v3249, 2
      %v3251 = vmax.f32 %v3249, %v3250
      %v3252 = vrot.slane %v3251, 1
      %v3253 = vmax.f32 %v3251, %v3252
      %v3254 = vsel %vm2511, %v1455, -inf
      %v3255 = vrot.slane %v3254, 4
      %v3256 = vmax.f32 %v3254, %v3255
      %v3257 = vrot.slane %v3256, 2
      %v3258 = vmax.f32 %v3256, %v3257
      %v3259 = vrot.slane %v3258, 1
      %v3260 = vmax.f32 %v3258, %v3259
      %v3261 = vsel %vm2511, %v1457, -inf
      %v3262 = vrot.slane %v3261, 4
      %v3263 = vmax.f32 %v3261, %v3262
      %v3264 = vrot.slane %v3263, 2
      %v3265 = vmax.f32 %v3263, %v3264
      %v3266 = vrot.slane %v3265, 1
      %v3267 = vmax.f32 %v3265, %v3266
      %v3268 = vsel %vm2511, %v1465, -inf
      %v3269 = vrot.slane %v3268, 4
      %v3270 = vmax.f32 %v3268, %v3269
      %v3271 = vrot.slane %v3270, 2
      %v3272 = vmax.f32 %v3270, %v3271
      %v3273 = vrot.slane %v3272, 1
      %v3274 = vmax.f32 %v3272, %v3273
      %v3275 = vsel %vm2511, %v1473, -inf
      %v3276 = vrot.slane %v3275, 4
      %v3277 = vmax.f32 %v3275, %v3276
      %v3278 = vrot.slane %v3277, 2
      %v3279 = vmax.f32 %v3277, %v3278
      %v3280 = vrot.slane %v3279, 1
      %v3281 = vmax.f32 %v3279, %v3280
      %v3282 = vsel %vm2511, %v1472, -inf
      %v3283 = vrot.slane %v3282, 4
      %v3284 = vmax.f32 %v3282, %v3283
      %v3285 = vrot.slane %v3284, 2
      %v3286 = vmax.f32 %v3284, %v3285
      %v3287 = vrot.slane %v3286, 1
      %v3288 = vmax.f32 %v3286, %v3287
      %v3289 = vsel %vm2511, %v1474, -inf
      %v3290 = vrot.slane %v3289, 4
      %v3291 = vmax.f32 %v3289, %v3290
      %v3292 = vrot.slane %v3291, 2
      %v3293 = vmax.f32 %v3291, %v3292
      %v3294 = vrot.slane %v3293, 1
      %v3295 = vmax.f32 %v3293, %v3294
      %v3296 = vsel %vm2511, %v1482, -inf
      %v3297 = vrot.slane %v3296, 4
      %v3298 = vmax.f32 %v3296, %v3297
      %v3299 = vrot.slane %v3298, 2
      %v3300 = vmax.f32 %v3298, %v3299
      %v3301 = vrot.slane %v3300, 1
      %v3302 = vmax.f32 %v3300, %v3301
      %v3303 = vsel %vm2511, %v1490, -inf
      %v3304 = vrot.slane %v3303, 4
      %v3305 = vmax.f32 %v3303, %v3304
      %v3306 = vrot.slane %v3305, 2
      %v3307 = vmax.f32 %v3305, %v3306
      %v3308 = vrot.slane %v3307, 1
      %v3309 = vmax.f32 %v3307, %v3308
      %v3310 = vsel %vm2511, %v1489, -inf
      %v3311 = vrot.slane %v3310, 4
      %v3312 = vmax.f32 %v3310, %v3311
      %v3313 = vrot.slane %v3312, 2
      %v3314 = vmax.f32 %v3312, %v3313
      %v3315 = vrot.slane %v3314, 1
      %v3316 = vmax.f32 %v3314, %v3315
      %v3317 = vsel %vm2511, %v1491, -inf
      %v3318 = vrot.slane %v3317, 4
      %v3319 = vmax.f32 %v3317, %v3318
      %v3320 = vrot.slane %v3319, 2
      %v3321 = vmax.f32 %v3319, %v3320
      %v3322 = vrot.slane %v3321, 1
      %v3323 = vmax.f32 %v3321, %v3322
      %v3324 = vsel %vm2511, %v1499, -inf
      %v3325 = vrot.slane %v3324, 4
      %v3326 = vmax.f32 %v3324, %v3325
      %v3327 = vrot.slane %v3326, 2
      %v3328 = vmax.f32 %v3326, %v3327
      %v3329 = vrot.slane %v3328, 1
      %v3330 = vmax.f32 %v3328, %v3329
      %v3331 = vsel %vm2511, %v1507, -inf
      %v3332 = vrot.slane %v3331, 4
      %v3333 = vmax.f32 %v3331, %v3332
      %v3334 = vrot.slane %v3333, 2
      %v3335 = vmax.f32 %v3333, %v3334
      %v3336 = vrot.slane %v3335, 1
      %v3337 = vmax.f32 %v3335, %v3336
      %v3338 = vsel %vm2511, %v1506, -inf
      %v3339 = vrot.slane %v3338, 4
      %v3340 = vmax.f32 %v3338, %v3339
      %v3341 = vrot.slane %v3340, 2
      %v3342 = vmax.f32 %v3340, %v3341
      %v3343 = vrot.slane %v3342, 1
      %v3344 = vmax.f32 %v3342, %v3343
      %v3345 = vsel %vm2511, %v1508, -inf
      %v3346 = vrot.slane %v3345, 4
      %v3347 = vmax.f32 %v3345, %v3346
      %v3348 = vrot.slane %v3347, 2
      %v3349 = vmax.f32 %v3347, %v3348
      %v3350 = vrot.slane %v3349, 1
      %v3351 = vmax.f32 %v3349, %v3350
      %v3352 = vsel %vm2511, %v1516, -inf
      %v3353 = vrot.slane %v3352, 4
      %v3354 = vmax.f32 %v3352, %v3353
      %v3355 = vrot.slane %v3354, 2
      %v3356 = vmax.f32 %v3354, %v3355
      %v3357 = vrot.slane %v3356, 1
      %v3358 = vmax.f32 %v3356, %v3357
      %v3359 = vsel %vm2511, %v1524, -inf
      %v3360 = vrot.slane %v3359, 4
      %v3361 = vmax.f32 %v3359, %v3360
      %v3362 = vrot.slane %v3361, 2
      %v3363 = vmax.f32 %v3361, %v3362
      %v3364 = vrot.slane %v3363, 1
      %v3365 = vmax.f32 %v3363, %v3364
      %v3366 = vsel %vm2511, %v1523, -inf
      %v3367 = vrot.slane %v3366, 4
      %v3368 = vmax.f32 %v3366, %v3367
      %v3369 = vrot.slane %v3368, 2
      %v3370 = vmax.f32 %v3368, %v3369
      %v3371 = vrot.slane %v3370, 1
      %v3372 = vmax.f32 %v3370, %v3371
      %v3373 = vsel %vm2511, %v1525, -inf
      %v3374 = vrot.slane %v3373, 4
      %v3375 = vmax.f32 %v3373, %v3374
      %v3376 = vrot.slane %v3375, 2
      %v3377 = vmax.f32 %v3375, %v3376
      %v3378 = vrot.slane %v3377, 1
      %v3379 = vmax.f32 %v3377, %v3378
      %v3380 = vsel %vm2511, %v1533, -inf
      %v3381 = vrot.slane %v3380, 4
      %v3382 = vmax.f32 %v3380, %v3381
      %v3383 = vrot.slane %v3382, 2
      %v3384 = vmax.f32 %v3382, %v3383
      %v3385 = vrot.slane %v3384, 1
      %v3386 = vmax.f32 %v3384, %v3385
      %v3387 = vsel %vm2511, %v1541, -inf
      %v3388 = vrot.slane %v3387, 4
      %v3389 = vmax.f32 %v3387, %v3388
      %v3390 = vrot.slane %v3389, 2
      %v3391 = vmax.f32 %v3389, %v3390
      %v3392 = vrot.slane %v3391, 1
      %v3393 = vmax.f32 %v3391, %v3392
      %v3394 = vsel %vm2511, %v1540, -inf
      %v3395 = vrot.slane %v3394, 4
      %v3396 = vmax.f32 %v3394, %v3395
      %v3397 = vrot.slane %v3396, 2
      %v3398 = vmax.f32 %v3396, %v3397
      %v3399 = vrot.slane %v3398, 1
      %v3400 = vmax.f32 %v3398, %v3399
      %v3401 = vsel %vm2511, %v1542, -inf
      %v3402 = vrot.slane %v3401, 4
      %v3403 = vmax.f32 %v3401, %v3402
      %v3404 = vrot.slane %v3403, 2
      %v3405 = vmax.f32 %v3403, %v3404
      %v3406 = vrot.slane %v3405, 1
      %v3407 = vmax.f32 %v3405, %v3406
      %v3408 = vsel %vm2511, %v1550, -inf
      %v3409 = vrot.slane %v3408, 4
      %v3410 = vmax.f32 %v3408, %v3409
      %v3411 = vrot.slane %v3410, 2
      %v3412 = vmax.f32 %v3410, %v3411
      %v3413 = vrot.slane %v3412, 1
      %v3414 = vmax.f32 %v3412, %v3413
      %v3415 = vsel %vm2511, %v1558, -inf
      %v3416 = vrot.slane %v3415, 4
      %v3417 = vmax.f32 %v3415, %v3416
      %v3418 = vrot.slane %v3417, 2
      %v3419 = vmax.f32 %v3417, %v3418
      %v3420 = vrot.slane %v3419, 1
      %v3421 = vmax.f32 %v3419, %v3420
      %v3422 = vsel %vm2511, %v1557, -inf
      %v3423 = vrot.slane %v3422, 4
      %v3424 = vmax.f32 %v3422, %v3423
      %v3425 = vrot.slane %v3424, 2
      %v3426 = vmax.f32 %v3424, %v3425
      %v3427 = vrot.slane %v3426, 1
      %v3428 = vmax.f32 %v3426, %v3427
      %v3429 = vsel %vm2511, %v1559, -inf
      %v3430 = vrot.slane %v3429, 4
      %v3431 = vmax.f32 %v3429, %v3430
      %v3432 = vrot.slane %v3431, 2
      %v3433 = vmax.f32 %v3431, %v3432
      %v3434 = vrot.slane %v3433, 1
      %v3435 = vmax.f32 %v3433, %v3434
      %v3436 = vsel %vm2511, %v1567, -inf
      %v3437 = vrot.slane %v3436, 4
      %v3438 = vmax.f32 %v3436, %v3437
      %v3439 = vrot.slane %v3438, 2
      %v3440 = vmax.f32 %v3438, %v3439
      %v3441 = vrot.slane %v3440, 1
      %v3442 = vmax.f32 %v3440, %v3441
      %v3443 = vsel %vm2511, %v1575, -inf
      %v3444 = vrot.slane %v3443, 4
      %v3445 = vmax.f32 %v3443, %v3444
      %v3446 = vrot.slane %v3445, 2
      %v3447 = vmax.f32 %v3445, %v3446
      %v3448 = vrot.slane %v3447, 1
      %v3449 = vmax.f32 %v3447, %v3448
      %v3450 = vsel %vm2511, %v1574, -inf
      %v3451 = vrot.slane %v3450, 4
      %v3452 = vmax.f32 %v3450, %v3451
      %v3453 = vrot.slane %v3452, 2
      %v3454 = vmax.f32 %v3452, %v3453
      %v3455 = vrot.slane %v3454, 1
      %v3456 = vmax.f32 %v3454, %v3455
      %v3457 = vsel %vm2511, %v1576, -inf
      %v3458 = vrot.slane %v3457, 4
      %v3459 = vmax.f32 %v3457, %v3458
      %v3460 = vrot.slane %v3459, 2
      %v3461 = vmax.f32 %v3459, %v3460
      %v3462 = vrot.slane %v3461, 1
      %v3463 = vmax.f32 %v3461, %v3462
      %v3464 = vsel %vm2511, %v1584, -inf
      %v3465 = vrot.slane %v3464, 4
      %v3466 = vmax.f32 %v3464, %v3465
      %v3467 = vrot.slane %v3466, 2
      %v3468 = vmax.f32 %v3466, %v3467
      %v3469 = vrot.slane %v3468, 1
      %v3470 = vmax.f32 %v3468, %v3469
      %v3471 = vsel %vm2511, %v1592, -inf
      %v3472 = vrot.slane %v3471, 4
      %v3473 = vmax.f32 %v3471, %v3472
      %v3474 = vrot.slane %v3473, 2
      %v3475 = vmax.f32 %v3473, %v3474
      %v3476 = vrot.slane %v3475, 1
      %v3477 = vmax.f32 %v3475, %v3476
      %v3478 = vsel %vm2511, %v1591, -inf
      %v3479 = vrot.slane %v3478, 4
      %v3480 = vmax.f32 %v3478, %v3479
      %v3481 = vrot.slane %v3480, 2
      %v3482 = vmax.f32 %v3480, %v3481
      %v3483 = vrot.slane %v3482, 1
      %v3484 = vmax.f32 %v3482, %v3483
      %v3485 = vsel %vm2511, %v1593, -inf
      %v3486 = vrot.slane %v3485, 4
      %v3487 = vmax.f32 %v3485, %v3486
      %v3488 = vrot.slane %v3487, 2
      %v3489 = vmax.f32 %v3487, %v3488
      %v3490 = vrot.slane %v3489, 1
      %v3491 = vmax.f32 %v3489, %v3490
      %v3492 = vsel %vm2511, %v1601, -inf
      %v3493 = vrot.slane %v3492, 4
      %v3494 = vmax.f32 %v3492, %v3493
      %v3495 = vrot.slane %v3494, 2
      %v3496 = vmax.f32 %v3494, %v3495
      %v3497 = vrot.slane %v3496, 1
      %v3498 = vmax.f32 %v3496, %v3497
      %v3499 = vsel %vm2511, %v1609, -inf
      %v3500 = vrot.slane %v3499, 4
      %v3501 = vmax.f32 %v3499, %v3500
      %v3502 = vrot.slane %v3501, 2
      %v3503 = vmax.f32 %v3501, %v3502
      %v3504 = vrot.slane %v3503, 1
      %v3505 = vmax.f32 %v3503, %v3504
      %v3506 = vsel %vm2511, %v1608, -inf
      %v3507 = vrot.slane %v3506, 4
      %v3508 = vmax.f32 %v3506, %v3507
      %v3509 = vrot.slane %v3508, 2
      %v3510 = vmax.f32 %v3508, %v3509
      %v3511 = vrot.slane %v3510, 1
      %v3512 = vmax.f32 %v3510, %v3511
      %v3513 = vsel %vm2511, %v1610, -inf
      %v3514 = vrot.slane %v3513, 4
      %v3515 = vmax.f32 %v3513, %v3514
      %v3516 = vrot.slane %v3515, 2
      %v3517 = vmax.f32 %v3515, %v3516
      %v3518 = vrot.slane %v3517, 1
      %v3519 = vmax.f32 %v3517, %v3518
      %v3520 = vsel %vm2511, %v1618, -inf
      %v3521 = vrot.slane %v3520, 4
      %v3522 = vmax.f32 %v3520, %v3521
      %v3523 = vrot.slane %v3522, 2
      %v3524 = vmax.f32 %v3522, %v3523
      %v3525 = vrot.slane %v3524, 1
      %v3526 = vmax.f32 %v3524, %v3525
      %v3527 = vsel %vm2511, %v1626, -inf
      %v3528 = vrot.slane %v3527, 4
      %v3529 = vmax.f32 %v3527, %v3528
      %v3530 = vrot.slane %v3529, 2
      %v3531 = vmax.f32 %v3529, %v3530
      %v3532 = vrot.slane %v3531, 1
      %v3533 = vmax.f32 %v3531, %v3532
      %v3534 = vsel %vm2511, %v1625, -inf
      %v3535 = vrot.slane %v3534, 4
      %v3536 = vmax.f32 %v3534, %v3535
      %v3537 = vrot.slane %v3536, 2
      %v3538 = vmax.f32 %v3536, %v3537
      %v3539 = vrot.slane %v3538, 1
      %v3540 = vmax.f32 %v3538, %v3539
      %v3541 = vsel %vm2511, %v1627, -inf
      %v3542 = vrot.slane %v3541, 4
      %v3543 = vmax.f32 %v3541, %v3542
      %v3544 = vrot.slane %v3543, 2
      %v3545 = vmax.f32 %v3543, %v3544
      %v3546 = vrot.slane %v3545, 1
      %v3547 = vmax.f32 %v3545, %v3546
      %v3548 = vsel %vm2511, %v1635, -inf
      %v3549 = vrot.slane %v3548, 4
      %v3550 = vmax.f32 %v3548, %v3549
      %v3551 = vrot.slane %v3550, 2
      %v3552 = vmax.f32 %v3550, %v3551
      %v3553 = vrot.slane %v3552, 1
      %v3554 = vmax.f32 %v3552, %v3553
      %v3555 = vsel %vm2511, %v1643, -inf
      %v3556 = vrot.slane %v3555, 4
      %v3557 = vmax.f32 %v3555, %v3556
      %v3558 = vrot.slane %v3557, 2
      %v3559 = vmax.f32 %v3557, %v3558
      %v3560 = vrot.slane %v3559, 1
      %v3561 = vmax.f32 %v3559, %v3560
      %v3562 = vsel %vm2511, %v1642, -inf
      %v3563 = vrot.slane %v3562, 4
      %v3564 = vmax.f32 %v3562, %v3563
      %v3565 = vrot.slane %v3564, 2
      %v3566 = vmax.f32 %v3564, %v3565
      %v3567 = vrot.slane %v3566, 1
      %v3568 = vmax.f32 %v3566, %v3567
      %v3569 = vsel %vm2511, %v1644, -inf
      %v3570 = vrot.slane %v3569, 4
      %v3571 = vmax.f32 %v3569, %v3570
      %v3572 = vrot.slane %v3571, 2
      %v3573 = vmax.f32 %v3571, %v3572
      %v3574 = vrot.slane %v3573, 1
      %v3575 = vmax.f32 %v3573, %v3574
      %v3576 = vsel %vm2511, %v1652, -inf
      %v3577 = vrot.slane %v3576, 4
      %v3578 = vmax.f32 %v3576, %v3577
      %v3579 = vrot.slane %v3578, 2
      %v3580 = vmax.f32 %v3578, %v3579
      %v3581 = vrot.slane %v3580, 1
      %v3582 = vmax.f32 %v3580, %v3581
      %v3583 = vsel %vm2511, %v1660, -inf
      %v3584 = vrot.slane %v3583, 4
      %v3585 = vmax.f32 %v3583, %v3584
      %v3586 = vrot.slane %v3585, 2
      %v3587 = vmax.f32 %v3585, %v3586
      %v3588 = vrot.slane %v3587, 1
      %v3589 = vmax.f32 %v3587, %v3588
      %v3590 = vsel %vm2511, %v1659, -inf
      %v3591 = vrot.slane %v3590, 4
      %v3592 = vmax.f32 %v3590, %v3591
      %v3593 = vrot.slane %v3592, 2
      %v3594 = vmax.f32 %v3592, %v3593
      %v3595 = vrot.slane %v3594, 1
      %v3596 = vmax.f32 %v3594, %v3595
      %v3597 = vsel %vm2511, %v1661, -inf
      %v3598 = vrot.slane %v3597, 4
      %v3599 = vmax.f32 %v3597, %v3598
      %v3600 = vrot.slane %v3599, 2
      %v3601 = vmax.f32 %v3599, %v3600
      %v3602 = vrot.slane %v3601, 1
      %v3603 = vmax.f32 %v3601, %v3602
      %v3604 = vsel %vm2511, %v1669, -inf
      %v3605 = vrot.slane %v3604, 4
      %v3606 = vmax.f32 %v3604, %v3605
      %v3607 = vrot.slane %v3606, 2
      %v3608 = vmax.f32 %v3606, %v3607
      %v3609 = vrot.slane %v3608, 1
      %v3610 = vmax.f32 %v3608, %v3609
      %v3611 = vsel %vm2511, %v1677, -inf
      %v3612 = vrot.slane %v3611, 4
      %v3613 = vmax.f32 %v3611, %v3612
      %v3614 = vrot.slane %v3613, 2
      %v3615 = vmax.f32 %v3613, %v3614
      %v3616 = vrot.slane %v3615, 1
      %v3617 = vmax.f32 %v3615, %v3616
      %v3618 = vsel %vm2511, %v1676, -inf
      %v3619 = vrot.slane %v3618, 4
      %v3620 = vmax.f32 %v3618, %v3619
      %v3621 = vrot.slane %v3620, 2
      %v3622 = vmax.f32 %v3620, %v3621
      %v3623 = vrot.slane %v3622, 1
      %v3624 = vmax.f32 %v3622, %v3623
      %v3625 = vsel %vm2511, %v1678, -inf
      %v3626 = vrot.slane %v3625, 4
      %v3627 = vmax.f32 %v3625, %v3626
      %v3628 = vrot.slane %v3627, 2
      %v3629 = vmax.f32 %v3627, %v3628
      %v3630 = vrot.slane %v3629, 1
      %v3631 = vmax.f32 %v3629, %v3630
      %v3632 = vsel %vm2511, %v1686, -inf
      %v3633 = vrot.slane %v3632, 4
      %v3634 = vmax.f32 %v3632, %v3633
      %v3635 = vrot.slane %v3634, 2
      %v3636 = vmax.f32 %v3634, %v3635
      %v3637 = vrot.slane %v3636, 1
      %v3638 = vmax.f32 %v3636, %v3637
      %v3639 = vsel %vm2511, %v1694, -inf
      %v3640 = vrot.slane %v3639, 4
      %v3641 = vmax.f32 %v3639, %v3640
      %v3642 = vrot.slane %v3641, 2
      %v3643 = vmax.f32 %v3641, %v3642
      %v3644 = vrot.slane %v3643, 1
      %v3645 = vmax.f32 %v3643, %v3644
      %v3646 = vsel %vm2511, %v1693, -inf
      %v3647 = vrot.slane %v3646, 4
      %v3648 = vmax.f32 %v3646, %v3647
      %v3649 = vrot.slane %v3648, 2
      %v3650 = vmax.f32 %v3648, %v3649
      %v3651 = vrot.slane %v3650, 1
      %v3652 = vmax.f32 %v3650, %v3651
      %v3653 = vsel %vm2511, %v1695, -inf
      %v3654 = vrot.slane %v3653, 4
      %v3655 = vmax.f32 %v3653, %v3654
      %v3656 = vrot.slane %v3655, 2
      %v3657 = vmax.f32 %v3655, %v3656
      %v3658 = vrot.slane %v3657, 1
      %v3659 = vmax.f32 %v3657, %v3658
      %v3660 = vsel %vm2511, %v1703, -inf
      %v3661 = vrot.slane %v3660, 4
      %v3662 = vmax.f32 %v3660, %v3661
      %v3663 = vrot.slane %v3662, 2
      %v3664 = vmax.f32 %v3662, %v3663
      %v3665 = vrot.slane %v3664, 1
      %v3666 = vmax.f32 %v3664, %v3665
      %v3667 = vsel %vm2511, %v1711, -inf
      %v3668 = vrot.slane %v3667, 4
      %v3669 = vmax.f32 %v3667, %v3668
      %v3670 = vrot.slane %v3669, 2
      %v3671 = vmax.f32 %v3669, %v3670
      %v3672 = vrot.slane %v3671, 1
      %v3673 = vmax.f32 %v3671, %v3672
      %v3674 = vsel %vm2511, %v1710, -inf
      %v3675 = vrot.slane %v3674, 4
      %v3676 = vmax.f32 %v3674, %v3675
      %v3677 = vrot.slane %v3676, 2
      %v3678 = vmax.f32 %v3676, %v3677
      %v3679 = vrot.slane %v3678, 1
      %v3680 = vmax.f32 %v3678, %v3679
      %v3681 = vsel %vm2511, %v1712, -inf
      %v3682 = vrot.slane %v3681, 4
      %v3683 = vmax.f32 %v3681, %v3682
      %v3684 = vrot.slane %v3683, 2
      %v3685 = vmax.f32 %v3683, %v3684
      %v3686 = vrot.slane %v3685, 1
      %v3687 = vmax.f32 %v3685, %v3686
      %v3688 = vsel %vm2511, %v1720, -inf
      %v3689 = vrot.slane %v3688, 4
      %v3690 = vmax.f32 %v3688, %v3689
      %v3691 = vrot.slane %v3690, 2
      %v3692 = vmax.f32 %v3690, %v3691
      %v3693 = vrot.slane %v3692, 1
      %v3694 = vmax.f32 %v3692, %v3693
      %v3695 = vsel %vm2511, %v1728, -inf
      %v3696 = vrot.slane %v3695, 4
      %v3697 = vmax.f32 %v3695, %v3696
      %v3698 = vrot.slane %v3697, 2
      %v3699 = vmax.f32 %v3697, %v3698
      %v3700 = vrot.slane %v3699, 1
      %v3701 = vmax.f32 %v3699, %v3700
      %v3702 = vsel %vm2511, %v1727, -inf
      %v3703 = vrot.slane %v3702, 4
      %v3704 = vmax.f32 %v3702, %v3703
      %v3705 = vrot.slane %v3704, 2
      %v3706 = vmax.f32 %v3704, %v3705
      %v3707 = vrot.slane %v3706, 1
      %v3708 = vmax.f32 %v3706, %v3707
      %v3709 = vsel %vm2511, %v1729, -inf
      %v3710 = vrot.slane %v3709, 4
      %v3711 = vmax.f32 %v3709, %v3710
      %v3712 = vrot.slane %v3711, 2
      %v3713 = vmax.f32 %v3711, %v3712
      %v3714 = vrot.slane %v3713, 1
      %v3715 = vmax.f32 %v3713, %v3714
      %v3716 = vsel %vm2511, %v1737, -inf
      %v3717 = vrot.slane %v3716, 4
      %v3718 = vmax.f32 %v3716, %v3717
      %v3719 = vrot.slane %v3718, 2
      %v3720 = vmax.f32 %v3718, %v3719
      %v3721 = vrot.slane %v3720, 1
      %v3722 = vmax.f32 %v3720, %v3721
      %v3723 = vsel %vm2511, %v1745, -inf
      %v3724 = vrot.slane %v3723, 4
      %v3725 = vmax.f32 %v3723, %v3724
      %v3726 = vrot.slane %v3725, 2
      %v3727 = vmax.f32 %v3725, %v3726
      %v3728 = vrot.slane %v3727, 1
      %v3729 = vmax.f32 %v3727, %v3728
      %v3730 = vsel %vm2511, %v1744, -inf
      %v3731 = vrot.slane %v3730, 4
      %v3732 = vmax.f32 %v3730, %v3731
      %v3733 = vrot.slane %v3732, 2
      %v3734 = vmax.f32 %v3732, %v3733
      %v3735 = vrot.slane %v3734, 1
      %v3736 = vmax.f32 %v3734, %v3735
      %v3737 = vsel %vm2511, %v1746, -inf
      %v3738 = vrot.slane %v3737, 4
      %v3739 = vmax.f32 %v3737, %v3738
      %v3740 = vrot.slane %v3739, 2
      %v3741 = vmax.f32 %v3739, %v3740
      %v3742 = vrot.slane %v3741, 1
      %v3743 = vmax.f32 %v3741, %v3742
      %v3744 = vsel %vm2511, %v1754, -inf
      %v3745 = vrot.slane %v3744, 4
      %v3746 = vmax.f32 %v3744, %v3745
      %v3747 = vrot.slane %v3746, 2
      %v3748 = vmax.f32 %v3746, %v3747
      %v3749 = vrot.slane %v3748, 1
      %v3750 = vmax.f32 %v3748, %v3749
      %v3751 = vsel %vm2511, %v1762, -inf
      %v3752 = vrot.slane %v3751, 4
      %v3753 = vmax.f32 %v3751, %v3752
      %v3754 = vrot.slane %v3753, 2
      %v3755 = vmax.f32 %v3753, %v3754
      %v3756 = vrot.slane %v3755, 1
      %v3757 = vmax.f32 %v3755, %v3756
      %v3758 = vsel %vm2511, %v1761, -inf
      %v3759 = vrot.slane %v3758, 4
      %v3760 = vmax.f32 %v3758, %v3759
      %v3761 = vrot.slane %v3760, 2
      %v3762 = vmax.f32 %v3760, %v3761
      %v3763 = vrot.slane %v3762, 1
      %v3764 = vmax.f32 %v3762, %v3763
      %v3765 = vsel %vm2511, %v1763, -inf
      %v3766 = vrot.slane %v3765, 4
      %v3767 = vmax.f32 %v3765, %v3766
      %v3768 = vrot.slane %v3767, 2
      %v3769 = vmax.f32 %v3767, %v3768
      %v3770 = vrot.slane %v3769, 1
      %v3771 = vmax.f32 %v3769, %v3770
      %v3772 = vsel %vm2511, %v1771, -inf
      %v3773 = vrot.slane %v3772, 4
      %v3774 = vmax.f32 %v3772, %v3773
      %v3775 = vrot.slane %v3774, 2
      %v3776 = vmax.f32 %v3774, %v3775
      %v3777 = vrot.slane %v3776, 1
      %v3778 = vmax.f32 %v3776, %v3777
      %v3779 = vsel %vm2511, %v1779, -inf
      %v3780 = vrot.slane %v3779, 4
      %v3781 = vmax.f32 %v3779, %v3780
      %v3782 = vrot.slane %v3781, 2
      %v3783 = vmax.f32 %v3781, %v3782
      %v3784 = vrot.slane %v3783, 1
      %v3785 = vmax.f32 %v3783, %v3784
      %v3786 = vsel %vm2511, %v1778, -inf
      %v3787 = vrot.slane %v3786, 4
      %v3788 = vmax.f32 %v3786, %v3787
      %v3789 = vrot.slane %v3788, 2
      %v3790 = vmax.f32 %v3788, %v3789
      %v3791 = vrot.slane %v3790, 1
      %v3792 = vmax.f32 %v3790, %v3791
      %v3793 = vsel %vm2511, %v1780, -inf
      %v3794 = vrot.slane %v3793, 4
      %v3795 = vmax.f32 %v3793, %v3794
      %v3796 = vrot.slane %v3795, 2
      %v3797 = vmax.f32 %v3795, %v3796
      %v3798 = vrot.slane %v3797, 1
      %v3799 = vmax.f32 %v3797, %v3798
      %v3800 = vsel %vm2511, %v1788, -inf
      %v3801 = vrot.slane %v3800, 4
      %v3802 = vmax.f32 %v3800, %v3801
      %v3803 = vrot.slane %v3802, 2
      %v3804 = vmax.f32 %v3802, %v3803
      %v3805 = vrot.slane %v3804, 1
      %v3806 = vmax.f32 %v3804, %v3805
      %v3807 = vsel %vm2511, %v1796, -inf
      %v3808 = vrot.slane %v3807, 4
      %v3809 = vmax.f32 %v3807, %v3808
      %v3810 = vrot.slane %v3809, 2
      %v3811 = vmax.f32 %v3809, %v3810
      %v3812 = vrot.slane %v3811, 1
      %v3813 = vmax.f32 %v3811, %v3812
      %v3814 = vsel %vm2511, %v1795, -inf
      %v3815 = vrot.slane %v3814, 4
      %v3816 = vmax.f32 %v3814, %v3815
      %v3817 = vrot.slane %v3816, 2
      %v3818 = vmax.f32 %v3816, %v3817
      %v3819 = vrot.slane %v3818, 1
      %v3820 = vmax.f32 %v3818, %v3819
      %v3821 = vsel %vm2511, %v1797, -inf
      %v3822 = vrot.slane %v3821, 4
      %v3823 = vmax.f32 %v3821, %v3822
      %v3824 = vrot.slane %v3823, 2
      %v3825 = vmax.f32 %v3823, %v3824
      %v3826 = vrot.slane %v3825, 1
      %v3827 = vmax.f32 %v3825, %v3826
      %v3828 = vsel %vm2511, %v1805, -inf
      %v3829 = vrot.slane %v3828, 4
      %v3830 = vmax.f32 %v3828, %v3829
      %v3831 = vrot.slane %v3830, 2
      %v3832 = vmax.f32 %v3830, %v3831
      %v3833 = vrot.slane %v3832, 1
      %v3834 = vmax.f32 %v3832, %v3833
      %v3835 = vsel %vm2511, %v1813, -inf
      %v3836 = vrot.slane %v3835, 4
      %v3837 = vmax.f32 %v3835, %v3836
      %v3838 = vrot.slane %v3837, 2
      %v3839 = vmax.f32 %v3837, %v3838
      %v3840 = vrot.slane %v3839, 1
      %v3841 = vmax.f32 %v3839, %v3840
      %v3842 = vsel %vm2511, %v1812, -inf
      %v3843 = vrot.slane %v3842, 4
      %v3844 = vmax.f32 %v3842, %v3843
      %v3845 = vrot.slane %v3844, 2
      %v3846 = vmax.f32 %v3844, %v3845
      %v3847 = vrot.slane %v3846, 1
      %v3848 = vmax.f32 %v3846, %v3847
      %v3849 = vsel %vm2511, %v1814, -inf
      %v3850 = vrot.slane %v3849, 4
      %v3851 = vmax.f32 %v3849, %v3850
      %v3852 = vrot.slane %v3851, 2
      %v3853 = vmax.f32 %v3851, %v3852
      %v3854 = vrot.slane %v3853, 1
      %v3855 = vmax.f32 %v3853, %v3854
      %v3856 = vsel %vm2511, %v1822, -inf
      %v3857 = vrot.slane %v3856, 4
      %v3858 = vmax.f32 %v3856, %v3857
      %v3859 = vrot.slane %v3858, 2
      %v3860 = vmax.f32 %v3858, %v3859
      %v3861 = vrot.slane %v3860, 1
      %v3862 = vmax.f32 %v3860, %v3861
      %v3863 = vsel %vm2511, %v1830, -inf
      %v3864 = vrot.slane %v3863, 4
      %v3865 = vmax.f32 %v3863, %v3864
      %v3866 = vrot.slane %v3865, 2
      %v3867 = vmax.f32 %v3865, %v3866
      %v3868 = vrot.slane %v3867, 1
      %v3869 = vmax.f32 %v3867, %v3868
      %v3870 = vsel %vm2511, %v1829, -inf
      %v3871 = vrot.slane %v3870, 4
      %v3872 = vmax.f32 %v3870, %v3871
      %v3873 = vrot.slane %v3872, 2
      %v3874 = vmax.f32 %v3872, %v3873
      %v3875 = vrot.slane %v3874, 1
      %v3876 = vmax.f32 %v3874, %v3875
      %v3877 = vsel %vm2511, %v1831, -inf
      %v3878 = vrot.slane %v3877, 4
      %v3879 = vmax.f32 %v3877, %v3878
      %v3880 = vrot.slane %v3879, 2
      %v3881 = vmax.f32 %v3879, %v3880
      %v3882 = vrot.slane %v3881, 1
      %v3883 = vmax.f32 %v3881, %v3882
      %v3884 = vsel %vm2511, %v1839, -inf
      %v3885 = vrot.slane %v3884, 4
      %v3886 = vmax.f32 %v3884, %v3885
      %v3887 = vrot.slane %v3886, 2
      %v3888 = vmax.f32 %v3886, %v3887
      %v3889 = vrot.slane %v3888, 1
      %v3890 = vmax.f32 %v3888, %v3889
      %v3891 = vsel %vm2511, %v1847, -inf
      %v3892 = vrot.slane %v3891, 4
      %v3893 = vmax.f32 %v3891, %v3892
      %v3894 = vrot.slane %v3893, 2
      %v3895 = vmax.f32 %v3893, %v3894
      %v3896 = vrot.slane %v3895, 1
      %v3897 = vmax.f32 %v3895, %v3896
      %v3898 = vsel %vm2511, %v1846, -inf
      %v3899 = vrot.slane %v3898, 4
      %v3900 = vmax.f32 %v3898, %v3899
      %v3901 = vrot.slane %v3900, 2
      %v3902 = vmax.f32 %v3900, %v3901
      %v3903 = vrot.slane %v3902, 1
      %v3904 = vmax.f32 %v3902, %v3903
      %v3905 = vsel %vm2511, %v1848, -inf
      %v3906 = vrot.slane %v3905, 4
      %v3907 = vmax.f32 %v3905, %v3906
      %v3908 = vrot.slane %v3907, 2
      %v3909 = vmax.f32 %v3907, %v3908
      %v3910 = vrot.slane %v3909, 1
      %v3911 = vmax.f32 %v3909, %v3910
      %v3912 = vsel %vm2511, %v1856, -inf
      %v3913 = vrot.slane %v3912, 4
      %v3914 = vmax.f32 %v3912, %v3913
      %v3915 = vrot.slane %v3914, 2
      %v3916 = vmax.f32 %v3914, %v3915
      %v3917 = vrot.slane %v3916, 1
      %v3918 = vmax.f32 %v3916, %v3917
      %v3919 = vsel %vm2511, %v1864, -inf
      %v3920 = vrot.slane %v3919, 4
      %v3921 = vmax.f32 %v3919, %v3920
      %v3922 = vrot.slane %v3921, 2
      %v3923 = vmax.f32 %v3921, %v3922
      %v3924 = vrot.slane %v3923, 1
      %v3925 = vmax.f32 %v3923, %v3924
      %v3926 = vsel %vm2511, %v1863, -inf
      %v3927 = vrot.slane %v3926, 4
      %v3928 = vmax.f32 %v3926, %v3927
      %v3929 = vrot.slane %v3928, 2
      %v3930 = vmax.f32 %v3928, %v3929
      %v3931 = vrot.slane %v3930, 1
      %v3932 = vmax.f32 %v3930, %v3931
      %v3933 = vsel %vm2511, %v1865, -inf
      %v3934 = vrot.slane %v3933, 4
      %v3935 = vmax.f32 %v3933, %v3934
      %v3936 = vrot.slane %v3935, 2
      %v3937 = vmax.f32 %v3935, %v3936
      %v3938 = vrot.slane %v3937, 1
      %v3939 = vmax.f32 %v3937, %v3938
      %v3940 = vsel %vm2511, %v1873, -inf
      %v3941 = vrot.slane %v3940, 4
      %v3942 = vmax.f32 %v3940, %v3941
      %v3943 = vrot.slane %v3942, 2
      %v3944 = vmax.f32 %v3942, %v3943
      %v3945 = vrot.slane %v3944, 1
      %v3946 = vmax.f32 %v3944, %v3945
      %v3947 = vsel %vm2511, %v1881, -inf
      %v3948 = vrot.slane %v3947, 4
      %v3949 = vmax.f32 %v3947, %v3948
      %v3950 = vrot.slane %v3949, 2
      %v3951 = vmax.f32 %v3949, %v3950
      %v3952 = vrot.slane %v3951, 1
      %v3953 = vmax.f32 %v3951, %v3952
      %v3954 = vsel %vm2511, %v1880, -inf
      %v3955 = vrot.slane %v3954, 4
      %v3956 = vmax.f32 %v3954, %v3955
      %v3957 = vrot.slane %v3956, 2
      %v3958 = vmax.f32 %v3956, %v3957
      %v3959 = vrot.slane %v3958, 1
      %v3960 = vmax.f32 %v3958, %v3959
      %v3961 = vsel %vm2511, %v1882, -inf
      %v3962 = vrot.slane %v3961, 4
      %v3963 = vmax.f32 %v3961, %v3962
      %v3964 = vrot.slane %v3963, 2
      %v3965 = vmax.f32 %v3963, %v3964
      %v3966 = vrot.slane %v3965, 1
      %v3967 = vmax.f32 %v3965, %v3966
      %v3968 = vsel %vm2511, %v1890, -inf
      %v3969 = vrot.slane %v3968, 4
      %v3970 = vmax.f32 %v3968, %v3969
      %v3971 = vrot.slane %v3970, 2
      %v3972 = vmax.f32 %v3970, %v3971
      %v3973 = vrot.slane %v3972, 1
      %v3974 = vmax.f32 %v3972, %v3973
      %v3975 = vsel %vm2511, %v1898, -inf
      %v3976 = vrot.slane %v3975, 4
      %v3977 = vmax.f32 %v3975, %v3976
      %v3978 = vrot.slane %v3977, 2
      %v3979 = vmax.f32 %v3977, %v3978
      %v3980 = vrot.slane %v3979, 1
      %v3981 = vmax.f32 %v3979, %v3980
      %v3982 = vsel %vm2511, %v1897, -inf
      %v3983 = vrot.slane %v3982, 4
      %v3984 = vmax.f32 %v3982, %v3983
      %v3985 = vrot.slane %v3984, 2
      %v3986 = vmax.f32 %v3984, %v3985
      %v3987 = vrot.slane %v3986, 1
      %v3988 = vmax.f32 %v3986, %v3987
      %v3989 = vsel %vm2511, %v1899, -inf
      %v3990 = vrot.slane %v3989, 4
      %v3991 = vmax.f32 %v3989, %v3990
      %v3992 = vrot.slane %v3991, 2
      %v3993 = vmax.f32 %v3991, %v3992
      %v3994 = vrot.slane %v3993, 1
      %v3995 = vmax.f32 %v3993, %v3994
      %v3996 = vsel %vm2511, %v1907, -inf
      %v3997 = vrot.slane %v3996, 4
      %v3998 = vmax.f32 %v3996, %v3997
      %v3999 = vrot.slane %v3998, 2
      %v4000 = vmax.f32 %v3998, %v3999
      %v4001 = vrot.slane %v4000, 1
      %v4002 = vmax.f32 %v4000, %v4001
      %v4003 = vsel %vm2511, %v1915, -inf
      %v4004 = vrot.slane %v4003, 4
      %v4005 = vmax.f32 %v4003, %v4004
      %v4006 = vrot.slane %v4005, 2
      %v4007 = vmax.f32 %v4005, %v4006
      %v4008 = vrot.slane %v4007, 1
      %v4009 = vmax.f32 %v4007, %v4008
      %v4010 = vsel %vm2511, %v1914, -inf
      %v4011 = vrot.slane %v4010, 4
      %v4012 = vmax.f32 %v4010, %v4011
      %v4013 = vrot.slane %v4012, 2
      %v4014 = vmax.f32 %v4012, %v4013
      %v4015 = vrot.slane %v4014, 1
      %v4016 = vmax.f32 %v4014, %v4015
      %v4017 = vsel %vm2511, %v1916, -inf
      %v4018 = vrot.slane %v4017, 4
      %v4019 = vmax.f32 %v4017, %v4018
      %v4020 = vrot.slane %v4019, 2
      %v4021 = vmax.f32 %v4019, %v4020
      %v4022 = vrot.slane %v4021, 1
      %v4023 = vmax.f32 %v4021, %v4022
      %v4024 = vsel %vm2511, %v1924, -inf
      %v4025 = vrot.slane %v4024, 4
      %v4026 = vmax.f32 %v4024, %v4025
      %v4027 = vrot.slane %v4026, 2
      %v4028 = vmax.f32 %v4026, %v4027
      %v4029 = vrot.slane %v4028, 1
      %v4030 = vmax.f32 %v4028, %v4029
      %v4031 = vsel %vm2511, %v1932, -inf
      %v4032 = vrot.slane %v4031, 4
      %v4033 = vmax.f32 %v4031, %v4032
      %v4034 = vrot.slane %v4033, 2
      %v4035 = vmax.f32 %v4033, %v4034
      %v4036 = vrot.slane %v4035, 1
      %v4037 = vmax.f32 %v4035, %v4036
      %v4038 = vsel %vm2511, %v1931, -inf
      %v4039 = vrot.slane %v4038, 4
      %v4040 = vmax.f32 %v4038, %v4039
      %v4041 = vrot.slane %v4040, 2
      %v4042 = vmax.f32 %v4040, %v4041
      %v4043 = vrot.slane %v4042, 1
      %v4044 = vmax.f32 %v4042, %v4043
      %v4045 = vsel %vm2511, %v1933, -inf
      %v4046 = vrot.slane %v4045, 4
      %v4047 = vmax.f32 %v4045, %v4046
      %v4048 = vrot.slane %v4047, 2
      %v4049 = vmax.f32 %v4047, %v4048
      %v4050 = vrot.slane %v4049, 1
      %v4051 = vmax.f32 %v4049, %v4050
      %v4052 = vsel %vm2511, %v1941, -inf
      %v4053 = vrot.slane %v4052, 4
      %v4054 = vmax.f32 %v4052, %v4053
      %v4055 = vrot.slane %v4054, 2
      %v4056 = vmax.f32 %v4054, %v4055
      %v4057 = vrot.slane %v4056, 1
      %v4058 = vmax.f32 %v4056, %v4057
      %v4059 = vsel %vm2511, %v1949, -inf
      %v4060 = vrot.slane %v4059, 4
      %v4061 = vmax.f32 %v4059, %v4060
      %v4062 = vrot.slane %v4061, 2
      %v4063 = vmax.f32 %v4061, %v4062
      %v4064 = vrot.slane %v4063, 1
      %v4065 = vmax.f32 %v4063, %v4064
      %v4066 = vsel %vm2511, %v1948, -inf
      %v4067 = vrot.slane %v4066, 4
      %v4068 = vmax.f32 %v4066, %v4067
      %v4069 = vrot.slane %v4068, 2
      %v4070 = vmax.f32 %v4068, %v4069
      %v4071 = vrot.slane %v4070, 1
      %v4072 = vmax.f32 %v4070, %v4071
      %v4073 = vsel %vm2511, %v1950, -inf
      %v4074 = vrot.slane %v4073, 4
      %v4075 = vmax.f32 %v4073, %v4074
      %v4076 = vrot.slane %v4075, 2
      %v4077 = vmax.f32 %v4075, %v4076
      %v4078 = vrot.slane %v4077, 1
      %v4079 = vmax.f32 %v4077, %v4078
      %v4080 = vsel %vm2511, %v1958, -inf
      %v4081 = vrot.slane %v4080, 4
      %v4082 = vmax.f32 %v4080, %v4081
      %v4083 = vrot.slane %v4082, 2
      %v4084 = vmax.f32 %v4082, %v4083
      %v4085 = vrot.slane %v4084, 1
      %v4086 = vmax.f32 %v4084, %v4085
      %v4087 = vsel %vm2511, %v1966, -inf
      %v4088 = vrot.slane %v4087, 4
      %v4089 = vmax.f32 %v4087, %v4088
      %v4090 = vrot.slane %v4089, 2
      %v4091 = vmax.f32 %v4089, %v4090
      %v4092 = vrot.slane %v4091, 1
      %v4093 = vmax.f32 %v4091, %v4092
      %v4094 = vsel %vm2511, %v1965, -inf
      %v4095 = vrot.slane %v4094, 4
      %v4096 = vmax.f32 %v4094, %v4095
      %v4097 = vrot.slane %v4096, 2
      %v4098 = vmax.f32 %v4096, %v4097
      %v4099 = vrot.slane %v4098, 1
      %v4100 = vmax.f32 %v4098, %v4099
      %v4101 = vsel %vm2511, %v1967, -inf
      %v4102 = vrot.slane %v4101, 4
      %v4103 = vmax.f32 %v4101, %v4102
      %v4104 = vrot.slane %v4103, 2
      %v4105 = vmax.f32 %v4103, %v4104
      %v4106 = vrot.slane %v4105, 1
      %v4107 = vmax.f32 %v4105, %v4106
      %v4108 = vsel %vm2511, %v1975, -inf
      %v4109 = vrot.slane %v4108, 4
      %v4110 = vmax.f32 %v4108, %v4109
      %v4111 = vrot.slane %v4110, 2
      %v4112 = vmax.f32 %v4110, %v4111
      %v4113 = vrot.slane %v4112, 1
      %v4114 = vmax.f32 %v4112, %v4113
      %v4115 = vsel %vm2511, %v1983, -inf
      %v4116 = vrot.slane %v4115, 4
      %v4117 = vmax.f32 %v4115, %v4116
      %v4118 = vrot.slane %v4117, 2
      %v4119 = vmax.f32 %v4117, %v4118
      %v4120 = vrot.slane %v4119, 1
      %v4121 = vmax.f32 %v4119, %v4120
      %v4122 = vsel %vm2511, %v1982, -inf
      %v4123 = vrot.slane %v4122, 4
      %v4124 = vmax.f32 %v4122, %v4123
      %v4125 = vrot.slane %v4124, 2
      %v4126 = vmax.f32 %v4124, %v4125
      %v4127 = vrot.slane %v4126, 1
      %v4128 = vmax.f32 %v4126, %v4127
      %v4129 = vsel %vm2511, %v1984, -inf
      %v4130 = vrot.slane %v4129, 4
      %v4131 = vmax.f32 %v4129, %v4130
      %v4132 = vrot.slane %v4131, 2
      %v4133 = vmax.f32 %v4131, %v4132
      %v4134 = vrot.slane %v4133, 1
      %v4135 = vmax.f32 %v4133, %v4134
      %v4136 = vsel %vm2511, %v1992, -inf
      %v4137 = vrot.slane %v4136, 4
      %v4138 = vmax.f32 %v4136, %v4137
      %v4139 = vrot.slane %v4138, 2
      %v4140 = vmax.f32 %v4138, %v4139
      %v4141 = vrot.slane %v4140, 1
      %v4142 = vmax.f32 %v4140, %v4141
      %v4143 = vsel %vm2511, %v2000, -inf
      %v4144 = vrot.slane %v4143, 4
      %v4145 = vmax.f32 %v4143, %v4144
      %v4146 = vrot.slane %v4145, 2
      %v4147 = vmax.f32 %v4145, %v4146
      %v4148 = vrot.slane %v4147, 1
      %v4149 = vmax.f32 %v4147, %v4148
      %v4150 = vsel %vm2511, %v1999, -inf
      %v4151 = vrot.slane %v4150, 4
      %v4152 = vmax.f32 %v4150, %v4151
      %v4153 = vrot.slane %v4152, 2
      %v4154 = vmax.f32 %v4152, %v4153
      %v4155 = vrot.slane %v4154, 1
      %v4156 = vmax.f32 %v4154, %v4155
      %v4157 = vsel %vm2511, %v2001, -inf
      %v4158 = vrot.slane %v4157, 4
      %v4159 = vmax.f32 %v4157, %v4158
      %v4160 = vrot.slane %v4159, 2
      %v4161 = vmax.f32 %v4159, %v4160
      %v4162 = vrot.slane %v4161, 1
      %v4163 = vmax.f32 %v4161, %v4162
      %v4164 = vsel %vm2511, %v2009, -inf
      %v4165 = vrot.slane %v4164, 4
      %v4166 = vmax.f32 %v4164, %v4165
      %v4167 = vrot.slane %v4166, 2
      %v4168 = vmax.f32 %v4166, %v4167
      %v4169 = vrot.slane %v4168, 1
      %v4170 = vmax.f32 %v4168, %v4169
      %v4171 = vsel %vm2511, %v2017, -inf
      %v4172 = vrot.slane %v4171, 4
      %v4173 = vmax.f32 %v4171, %v4172
      %v4174 = vrot.slane %v4173, 2
      %v4175 = vmax.f32 %v4173, %v4174
      %v4176 = vrot.slane %v4175, 1
      %v4177 = vmax.f32 %v4175, %v4176
      %v4178 = vsel %vm2511, %v2016, -inf
      %v4179 = vrot.slane %v4178, 4
      %v4180 = vmax.f32 %v4178, %v4179
      %v4181 = vrot.slane %v4180, 2
      %v4182 = vmax.f32 %v4180, %v4181
      %v4183 = vrot.slane %v4182, 1
      %v4184 = vmax.f32 %v4182, %v4183
      %v4185 = vsel %vm2511, %v2018, -inf
      %v4186 = vrot.slane %v4185, 4
      %v4187 = vmax.f32 %v4185, %v4186
      %v4188 = vrot.slane %v4187, 2
      %v4189 = vmax.f32 %v4187, %v4188
      %v4190 = vrot.slane %v4189, 1
      %v4191 = vmax.f32 %v4189, %v4190
      %v4192 = vsel %vm2511, %v2026, -inf
      %v4193 = vrot.slane %v4192, 4
      %v4194 = vmax.f32 %v4192, %v4193
      %v4195 = vrot.slane %v4194, 2
      %v4196 = vmax.f32 %v4194, %v4195
      %v4197 = vrot.slane %v4196, 1
      %v4198 = vmax.f32 %v4196, %v4197
      %v4199 = vsel %vm2511, %v2034, -inf
      %v4200 = vrot.slane %v4199, 4
      %v4201 = vmax.f32 %v4199, %v4200
      %v4202 = vrot.slane %v4201, 2
      %v4203 = vmax.f32 %v4201, %v4202
      %v4204 = vrot.slane %v4203, 1
      %v4205 = vmax.f32 %v4203, %v4204
      %v4206 = vsel %vm2511, %v2033, -inf
      %v4207 = vrot.slane %v4206, 4
      %v4208 = vmax.f32 %v4206, %v4207
      %v4209 = vrot.slane %v4208, 2
      %v4210 = vmax.f32 %v4208, %v4209
      %v4211 = vrot.slane %v4210, 1
      %v4212 = vmax.f32 %v4210, %v4211
      %v4213 = vsel %vm2511, %v2035, -inf
      %v4214 = vrot.slane %v4213, 4
      %v4215 = vmax.f32 %v4213, %v4214
      %v4216 = vrot.slane %v4215, 2
      %v4217 = vmax.f32 %v4215, %v4216
      %v4218 = vrot.slane %v4217, 1
      %v4219 = vmax.f32 %v4217, %v4218
      %v4220 = vsel %vm2511, %v2043, -inf
      %v4221 = vrot.slane %v4220, 4
      %v4222 = vmax.f32 %v4220, %v4221
      %v4223 = vrot.slane %v4222, 2
      %v4224 = vmax.f32 %v4222, %v4223
      %v4225 = vrot.slane %v4224, 1
      %v4226 = vmax.f32 %v4224, %v4225
      %v4227 = vsel %vm2511, %v2051, -inf
      %v4228 = vrot.slane %v4227, 4
      %v4229 = vmax.f32 %v4227, %v4228
      %v4230 = vrot.slane %v4229, 2
      %v4231 = vmax.f32 %v4229, %v4230
      %v4232 = vrot.slane %v4231, 1
      %v4233 = vmax.f32 %v4231, %v4232
      %v4234 = vsel %vm2511, %v2050, -inf
      %v4235 = vrot.slane %v4234, 4
      %v4236 = vmax.f32 %v4234, %v4235
      %v4237 = vrot.slane %v4236, 2
      %v4238 = vmax.f32 %v4236, %v4237
      %v4239 = vrot.slane %v4238, 1
      %v4240 = vmax.f32 %v4238, %v4239
      %v4241 = vsel %vm2511, %v2052, -inf
      %v4242 = vrot.slane %v4241, 4
      %v4243 = vmax.f32 %v4241, %v4242
      %v4244 = vrot.slane %v4243, 2
      %v4245 = vmax.f32 %v4243, %v4244
      %v4246 = vrot.slane %v4245, 1
      %v4247 = vmax.f32 %v4245, %v4246
      %v4248 = vsel %vm2511, %v2060, -inf
      %v4249 = vrot.slane %v4248, 4
      %v4250 = vmax.f32 %v4248, %v4249
      %v4251 = vrot.slane %v4250, 2
      %v4252 = vmax.f32 %v4250, %v4251
      %v4253 = vrot.slane %v4252, 1
      %v4254 = vmax.f32 %v4252, %v4253
      %v4255 = vsel %vm2511, %v2068, -inf
      %v4256 = vrot.slane %v4255, 4
      %v4257 = vmax.f32 %v4255, %v4256
      %v4258 = vrot.slane %v4257, 2
      %v4259 = vmax.f32 %v4257, %v4258
      %v4260 = vrot.slane %v4259, 1
      %v4261 = vmax.f32 %v4259, %v4260
      %v4262 = vsel %vm2511, %v2067, -inf
      %v4263 = vrot.slane %v4262, 4
      %v4264 = vmax.f32 %v4262, %v4263
      %v4265 = vrot.slane %v4264, 2
      %v4266 = vmax.f32 %v4264, %v4265
      %v4267 = vrot.slane %v4266, 1
      %v4268 = vmax.f32 %v4266, %v4267
      %v4269 = vsel %vm2511, %v2069, -inf
      %v4270 = vrot.slane %v4269, 4
      %v4271 = vmax.f32 %v4269, %v4270
      %v4272 = vrot.slane %v4271, 2
      %v4273 = vmax.f32 %v4271, %v4272
      %v4274 = vrot.slane %v4273, 1
      %v4275 = vmax.f32 %v4273, %v4274
      %v4276 = vsel %vm2511, %v2077, -inf
      %v4277 = vrot.slane %v4276, 4
      %v4278 = vmax.f32 %v4276, %v4277
      %v4279 = vrot.slane %v4278, 2
      %v4280 = vmax.f32 %v4278, %v4279
      %v4281 = vrot.slane %v4280, 1
      %v4282 = vmax.f32 %v4280, %v4281
      %v4283 = vsel %vm2511, %v2085, -inf
      %v4284 = vrot.slane %v4283, 4
      %v4285 = vmax.f32 %v4283, %v4284
      %v4286 = vrot.slane %v4285, 2
      %v4287 = vmax.f32 %v4285, %v4286
      %v4288 = vrot.slane %v4287, 1
      %v4289 = vmax.f32 %v4287, %v4288
      %v4290 = vsel %vm2511, %v2084, -inf
      %v4291 = vrot.slane %v4290, 4
      %v4292 = vmax.f32 %v4290, %v4291
      %v4293 = vrot.slane %v4292, 2
      %v4294 = vmax.f32 %v4292, %v4293
      %v4295 = vrot.slane %v4294, 1
      %v4296 = vmax.f32 %v4294, %v4295
      %v4297 = vsel %vm2511, %v2086, -inf
      %v4298 = vrot.slane %v4297, 4
      %v4299 = vmax.f32 %v4297, %v4298
      %v4300 = vrot.slane %v4299, 2
      %v4301 = vmax.f32 %v4299, %v4300
      %v4302 = vrot.slane %v4301, 1
      %v4303 = vmax.f32 %v4301, %v4302
      %v4304 = vsel %vm2511, %v2094, -inf
      %v4305 = vrot.slane %v4304, 4
      %v4306 = vmax.f32 %v4304, %v4305
      %v4307 = vrot.slane %v4306, 2
      %v4308 = vmax.f32 %v4306, %v4307
      %v4309 = vrot.slane %v4308, 1
      %v4310 = vmax.f32 %v4308, %v4309
      %v4311 = vsel %vm2511, %v2102, -inf
      %v4312 = vrot.slane %v4311, 4
      %v4313 = vmax.f32 %v4311, %v4312
      %v4314 = vrot.slane %v4313, 2
      %v4315 = vmax.f32 %v4313, %v4314
      %v4316 = vrot.slane %v4315, 1
      %v4317 = vmax.f32 %v4315, %v4316
      %v4318 = vsel %vm2511, %v2101, -inf
      %v4319 = vrot.slane %v4318, 4
      %v4320 = vmax.f32 %v4318, %v4319
      %v4321 = vrot.slane %v4320, 2
      %v4322 = vmax.f32 %v4320, %v4321
      %v4323 = vrot.slane %v4322, 1
      %v4324 = vmax.f32 %v4322, %v4323
      %v4325 = vsel %vm2511, %v2103, -inf
      %v4326 = vrot.slane %v4325, 4
      %v4327 = vmax.f32 %v4325, %v4326
      %v4328 = vrot.slane %v4327, 2
      %v4329 = vmax.f32 %v4327, %v4328
      %v4330 = vrot.slane %v4329, 1
      %v4331 = vmax.f32 %v4329, %v4330
      %v4332 = vsel %vm2511, %v2111, -inf
      %v4333 = vrot.slane %v4332, 4
      %v4334 = vmax.f32 %v4332, %v4333
      %v4335 = vrot.slane %v4334, 2
      %v4336 = vmax.f32 %v4334, %v4335
      %v4337 = vrot.slane %v4336, 1
      %v4338 = vmax.f32 %v4336, %v4337
      %v4339 = vsel %vm2511, %v2119, -inf
      %v4340 = vrot.slane %v4339, 4
      %v4341 = vmax.f32 %v4339, %v4340
      %v4342 = vrot.slane %v4341, 2
      %v4343 = vmax.f32 %v4341, %v4342
      %v4344 = vrot.slane %v4343, 1
      %v4345 = vmax.f32 %v4343, %v4344
      %v4346 = vsel %vm2511, %v2118, -inf
      %v4347 = vrot.slane %v4346, 4
      %v4348 = vmax.f32 %v4346, %v4347
      %v4349 = vrot.slane %v4348, 2
      %v4350 = vmax.f32 %v4348, %v4349
      %v4351 = vrot.slane %v4350, 1
      %v4352 = vmax.f32 %v4350, %v4351
      %v4353 = vsel %vm2511, %v2120, -inf
      %v4354 = vrot.slane %v4353, 4
      %v4355 = vmax.f32 %v4353, %v4354
      %v4356 = vrot.slane %v4355, 2
      %v4357 = vmax.f32 %v4355, %v4356
      %v4358 = vrot.slane %v4357, 1
      %v4359 = vmax.f32 %v4357, %v4358
      %v4360 = vsel %vm2511, %v2128, -inf
      %v4361 = vrot.slane %v4360, 4
      %v4362 = vmax.f32 %v4360, %v4361
      %v4363 = vrot.slane %v4362, 2
      %v4364 = vmax.f32 %v4362, %v4363
      %v4365 = vrot.slane %v4364, 1
      %v4366 = vmax.f32 %v4364, %v4365
      %v4367 = vsel %vm2511, %v2136, -inf
      %v4368 = vrot.slane %v4367, 4
      %v4369 = vmax.f32 %v4367, %v4368
      %v4370 = vrot.slane %v4369, 2
      %v4371 = vmax.f32 %v4369, %v4370
      %v4372 = vrot.slane %v4371, 1
      %v4373 = vmax.f32 %v4371, %v4372
      %v4374 = vsel %vm2511, %v2135, -inf
      %v4375 = vrot.slane %v4374, 4
      %v4376 = vmax.f32 %v4374, %v4375
      %v4377 = vrot.slane %v4376, 2
      %v4378 = vmax.f32 %v4376, %v4377
      %v4379 = vrot.slane %v4378, 1
      %v4380 = vmax.f32 %v4378, %v4379
      %v4381 = vsel %vm2511, %v2137, -inf
      %v4382 = vrot.slane %v4381, 4
      %v4383 = vmax.f32 %v4381, %v4382
      %v4384 = vrot.slane %v4383, 2
      %v4385 = vmax.f32 %v4383, %v4384
      %v4386 = vrot.slane %v4385, 1
      %v4387 = vmax.f32 %v4385, %v4386
      %v4388 = vsel %vm2511, %v2145, -inf
      %v4389 = vrot.slane %v4388, 4
      %v4390 = vmax.f32 %v4388, %v4389
      %v4391 = vrot.slane %v4390, 2
      %v4392 = vmax.f32 %v4390, %v4391
      %v4393 = vrot.slane %v4392, 1
      %v4394 = vmax.f32 %v4392, %v4393
      %v4395 = vsel %vm2511, %v2153, -inf
      %v4396 = vrot.slane %v4395, 4
      %v4397 = vmax.f32 %v4395, %v4396
      %v4398 = vrot.slane %v4397, 2
      %v4399 = vmax.f32 %v4397, %v4398
      %v4400 = vrot.slane %v4399, 1
      %v4401 = vmax.f32 %v4399, %v4400
      %v4402 = vsel %vm2511, %v2152, -inf
      %v4403 = vrot.slane %v4402, 4
      %v4404 = vmax.f32 %v4402, %v4403
      %v4405 = vrot.slane %v4404, 2
      %v4406 = vmax.f32 %v4404, %v4405
      %v4407 = vrot.slane %v4406, 1
      %v4408 = vmax.f32 %v4406, %v4407
      %v4409 = vsel %vm2511, %v2154, -inf
      %v4410 = vrot.slane %v4409, 4
      %v4411 = vmax.f32 %v4409, %v4410
      %v4412 = vrot.slane %v4411, 2
      %v4413 = vmax.f32 %v4411, %v4412
      %v4414 = vrot.slane %v4413, 1
      %v4415 = vmax.f32 %v4413, %v4414
      %v4416 = vsel %vm2511, %v2162, -inf
      %v4417 = vrot.slane %v4416, 4
      %v4418 = vmax.f32 %v4416, %v4417
      %v4419 = vrot.slane %v4418, 2
      %v4420 = vmax.f32 %v4418, %v4419
      %v4421 = vrot.slane %v4420, 1
      %v4422 = vmax.f32 %v4420, %v4421
      %v4423 = vsel %vm2511, %v2170, -inf
      %v4424 = vrot.slane %v4423, 4
      %v4425 = vmax.f32 %v4423, %v4424
      %v4426 = vrot.slane %v4425, 2
      %v4427 = vmax.f32 %v4425, %v4426
      %v4428 = vrot.slane %v4427, 1
      %v4429 = vmax.f32 %v4427, %v4428
      %v4430 = vsel %vm2511, %v2169, -inf
      %v4431 = vrot.slane %v4430, 4
      %v4432 = vmax.f32 %v4430, %v4431
      %v4433 = vrot.slane %v4432, 2
      %v4434 = vmax.f32 %v4432, %v4433
      %v4435 = vrot.slane %v4434, 1
      %v4436 = vmax.f32 %v4434, %v4435
      %v4437 = vsel %vm2511, %v2171, -inf
      %v4438 = vrot.slane %v4437, 4
      %v4439 = vmax.f32 %v4437, %v4438
      %v4440 = vrot.slane %v4439, 2
      %v4441 = vmax.f32 %v4439, %v4440
      %v4442 = vrot.slane %v4441, 1
      %v4443 = vmax.f32 %v4441, %v4442
      %v4444 = vsel %vm2511, %v2179, -inf
      %v4445 = vrot.slane %v4444, 4
      %v4446 = vmax.f32 %v4444, %v4445
      %v4447 = vrot.slane %v4446, 2
      %v4448 = vmax.f32 %v4446, %v4447
      %v4449 = vrot.slane %v4448, 1
      %v4450 = vmax.f32 %v4448, %v4449
      %v4451 = vsel %vm2511, %v2187, -inf
      %v4452 = vrot.slane %v4451, 4
      %v4453 = vmax.f32 %v4451, %v4452
      %v4454 = vrot.slane %v4453, 2
      %v4455 = vmax.f32 %v4453, %v4454
      %v4456 = vrot.slane %v4455, 1
      %v4457 = vmax.f32 %v4455, %v4456
      %v4458 = vsel %vm2511, %v2186, -inf
      %v4459 = vrot.slane %v4458, 4
      %v4460 = vmax.f32 %v4458, %v4459
      %v4461 = vrot.slane %v4460, 2
      %v4462 = vmax.f32 %v4460, %v4461
      %v4463 = vrot.slane %v4462, 1
      %v4464 = vmax.f32 %v4462, %v4463
      %v4465 = vsel %vm2511, %v2188, -inf
      %v4466 = vrot.slane %v4465, 4
      %v4467 = vmax.f32 %v4465, %v4466
      %v4468 = vrot.slane %v4467, 2
      %v4469 = vmax.f32 %v4467, %v4468
      %v4470 = vrot.slane %v4469, 1
      %v4471 = vmax.f32 %v4469, %v4470
      %v4472 = vsel %vm2511, %v2196, -inf
      %v4473 = vrot.slane %v4472, 4
      %v4474 = vmax.f32 %v4472, %v4473
      %v4475 = vrot.slane %v4474, 2
      %v4476 = vmax.f32 %v4474, %v4475
      %v4477 = vrot.slane %v4476, 1
      %v4478 = vmax.f32 %v4476, %v4477
      %v4479 = vsel %vm2511, %v2204, -inf
      %v4480 = vrot.slane %v4479, 4
      %v4481 = vmax.f32 %v4479, %v4480
      %v4482 = vrot.slane %v4481, 2
      %v4483 = vmax.f32 %v4481, %v4482
      %v4484 = vrot.slane %v4483, 1
      %v4485 = vmax.f32 %v4483, %v4484
      %v4486 = vsel %vm2511, %v2203, -inf
      %v4487 = vrot.slane %v4486, 4
      %v4488 = vmax.f32 %v4486, %v4487
      %v4489 = vrot.slane %v4488, 2
      %v4490 = vmax.f32 %v4488, %v4489
      %v4491 = vrot.slane %v4490, 1
      %v4492 = vmax.f32 %v4490, %v4491
      %v4493 = vsel %vm2511, %v2205, -inf
      %v4494 = vrot.slane %v4493, 4
      %v4495 = vmax.f32 %v4493, %v4494
      %v4496 = vrot.slane %v4495, 2
      %v4497 = vmax.f32 %v4495, %v4496
      %v4498 = vrot.slane %v4497, 1
      %v4499 = vmax.f32 %v4497, %v4498
      %v4500 = vsel %vm2511, %v2213, -inf
      %v4501 = vrot.slane %v4500, 4
      %v4502 = vmax.f32 %v4500, %v4501
      %v4503 = vrot.slane %v4502, 2
      %v4504 = vmax.f32 %v4502, %v4503
      %v4505 = vrot.slane %v4504, 1
      %v4506 = vmax.f32 %v4504, %v4505
      %v4507 = vsel %vm2511, %v2221, -inf
      %v4508 = vrot.slane %v4507, 4
      %v4509 = vmax.f32 %v4507, %v4508
      %v4510 = vrot.slane %v4509, 2
      %v4511 = vmax.f32 %v4509, %v4510
      %v4512 = vrot.slane %v4511, 1
      %v4513 = vmax.f32 %v4511, %v4512
      %v4514 = vsel %vm2511, %v2220, -inf
      %v4515 = vrot.slane %v4514, 4
      %v4516 = vmax.f32 %v4514, %v4515
      %v4517 = vrot.slane %v4516, 2
      %v4518 = vmax.f32 %v4516, %v4517
      %v4519 = vrot.slane %v4518, 1
      %v4520 = vmax.f32 %v4518, %v4519
      %v4521 = vsel %vm2511, %v2222, -inf
      %v4522 = vrot.slane %v4521, 4
      %v4523 = vmax.f32 %v4521, %v4522
      %v4524 = vrot.slane %v4523, 2
      %v4525 = vmax.f32 %v4523, %v4524
      %v4526 = vrot.slane %v4525, 1
      %v4527 = vmax.f32 %v4525, %v4526
      %v4528 = vmax.f32 %v2518, %v2602
      %v4529 = vmax.f32 %v2525, %v2609
      %v4530 = vmax.f32 %v2532, %v2616
      %v4531 = vmax.f32 %v2539, %v2623
      %v4532 = vmax.f32 %v2546, %v2630
      %v4533 = vmax.f32 %v2553, %v2637
      %v4534 = vmax.f32 %v2560, %v2644
      %v4535 = vmax.f32 %v2567, %v2651
      %v4536 = vmax.f32 %v2574, %v2658
      %v4537 = vmax.f32 %v2581, %v2665
      %v4538 = vmax.f32 %v2588, %v2672
      %v4539 = vmax.f32 %v2595, %v2679
      %v4540 = vmax.f32 %v2686, %v2770
      %v4541 = vmax.f32 %v2693, %v2777
      %v4542 = vmax.f32 %v2700, %v2784
      %v4543 = vmax.f32 %v2707, %v2791
      %v4544 = vmax.f32 %v2714, %v2798
      %v4545 = vmax.f32 %v2721, %v2805
      %v4546 = vmax.f32 %v2728, %v2812
      %v4547 = vmax.f32 %v2735, %v2819
      %v4548 = vmax.f32 %v2742, %v2826
      %v4549 = vmax.f32 %v2749, %v2833
      %v4550 = vmax.f32 %v2756, %v2840
      %v4551 = vmax.f32 %v2763, %v2847
      %v4552 = vmax.f32 %v2854, %v2938
      %v4553 = vmax.f32 %v2861, %v2945
      %v4554 = vmax.f32 %v2868, %v2952
      %v4555 = vmax.f32 %v2875, %v2959
      %v4556 = vmax.f32 %v2882, %v2966
      %v4557 = vmax.f32 %v2889, %v2973
      %v4558 = vmax.f32 %v2896, %v2980
      %v4559 = vmax.f32 %v2903, %v2987
      %v4560 = vmax.f32 %v2910, %v2994
      %v4561 = vmax.f32 %v2917, %v3001
      %v4562 = vmax.f32 %v2924, %v3008
      %v4563 = vmax.f32 %v2931, %v3015
      %v4564 = vmax.f32 %v3022, %v3106
      %v4565 = vmax.f32 %v3029, %v3113
      %v4566 = vmax.f32 %v3036, %v3120
      %v4567 = vmax.f32 %v3043, %v3127
      %v4568 = vmax.f32 %v3050, %v3134
      %v4569 = vmax.f32 %v3057, %v3141
      %v4570 = vmax.f32 %v3064, %v3148
      %v4571 = vmax.f32 %v3071, %v3155
      %v4572 = vmax.f32 %v3078, %v3162
      %v4573 = vmax.f32 %v3085, %v3169
      %v4574 = vmax.f32 %v3092, %v3176
      %v4575 = vmax.f32 %v3099, %v3183
      %v4576 = vmax.f32 %v3190, %v3274
      %v4577 = vmax.f32 %v3197, %v3281
      %v4578 = vmax.f32 %v3204, %v3288
      %v4579 = vmax.f32 %v3211, %v3295
      %v4580 = vmax.f32 %v3218, %v3302
      %v4581 = vmax.f32 %v3225, %v3309
      %v4582 = vmax.f32 %v3232, %v3316
      %v4583 = vmax.f32 %v3239, %v3323
      %v4584 = vmax.f32 %v3246, %v3330
      %v4585 = vmax.f32 %v3253, %v3337
      %v4586 = vmax.f32 %v3260, %v3344
      %v4587 = vmax.f32 %v3267, %v3351
      %v4588 = vmax.f32 %v3358, %v3442
      %v4589 = vmax.f32 %v3365, %v3449
      %v4590 = vmax.f32 %v3372, %v3456
      %v4591 = vmax.f32 %v3379, %v3463
      %v4592 = vmax.f32 %v3386, %v3470
      %v4593 = vmax.f32 %v3393, %v3477
      %v4594 = vmax.f32 %v3400, %v3484
      %v4595 = vmax.f32 %v3407, %v3491
      %v4596 = vmax.f32 %v3414, %v3498
      %v4597 = vmax.f32 %v3421, %v3505
      %v4598 = vmax.f32 %v3428, %v3512
      %v4599 = vmax.f32 %v3435, %v3519
      %v4600 = vmax.f32 %v3526, %v3610
      %v4601 = vmax.f32 %v3533, %v3617
      %v4602 = vmax.f32 %v3540, %v3624
      %v4603 = vmax.f32 %v3547, %v3631
      %v4604 = vmax.f32 %v3554, %v3638
      %v4605 = vmax.f32 %v3561, %v3645
      %v4606 = vmax.f32 %v3568, %v3652
      %v4607 = vmax.f32 %v3575, %v3659
      %v4608 = vmax.f32 %v3582, %v3666
      %v4609 = vmax.f32 %v3589, %v3673
      %v4610 = vmax.f32 %v3596, %v3680
      %v4611 = vmax.f32 %v3603, %v3687
      %v4612 = vmax.f32 %v3694, %v3778
      %v4613 = vmax.f32 %v3701, %v3785
      %v4614 = vmax.f32 %v3708, %v3792
      %v4615 = vmax.f32 %v3715, %v3799
      %v4616 = vmax.f32 %v3722, %v3806
      %v4617 = vmax.f32 %v3729, %v3813
      %v4618 = vmax.f32 %v3736, %v3820
      %v4619 = vmax.f32 %v3743, %v3827
      %v4620 = vmax.f32 %v3750, %v3834
      %v4621 = vmax.f32 %v3757, %v3841
      %v4622 = vmax.f32 %v3764, %v3848
      %v4623 = vmax.f32 %v3771, %v3855
      %v4624 = vmax.f32 %v3862, %v3946
      %v4625 = vmax.f32 %v3869, %v3953
      %v4626 = vmax.f32 %v3876, %v3960
      %v4627 = vmax.f32 %v3883, %v3967
      %v4628 = vmax.f32 %v3890, %v3974
      %v4629 = vmax.f32 %v3897, %v3981
      %v4630 = vmax.f32 %v3904, %v3988
      %v4631 = vmax.f32 %v3911, %v3995
      %v4632 = vmax.f32 %v3918, %v4002
      %v4633 = vmax.f32 %v3925, %v4009
      %v4634 = vmax.f32 %v3932, %v4016
      %v4635 = vmax.f32 %v3939, %v4023
      %v4636 = vmax.f32 %v4030, %v4114
      %v4637 = vmax.f32 %v4037, %v4121
      %v4638 = vmax.f32 %v4044, %v4128
      %v4639 = vmax.f32 %v4051, %v4135
      %v4640 = vmax.f32 %v4058, %v4142
      %v4641 = vmax.f32 %v4065, %v4149
      %v4642 = vmax.f32 %v4072, %v4156
      %v4643 = vmax.f32 %v4079, %v4163
      %v4644 = vmax.f32 %v4086, %v4170
      %v4645 = vmax.f32 %v4093, %v4177
      %v4646 = vmax.f32 %v4100, %v4184
      %v4647 = vmax.f32 %v4107, %v4191
      %v4648 = vmax.f32 %v4198, %v4282
      %v4649 = vmax.f32 %v4205, %v4289
      %v4650 = vmax.f32 %v4212, %v4296
      %v4651 = vmax.f32 %v4219, %v4303
      %v4652 = vmax.f32 %v4226, %v4310
      %v4653 = vmax.f32 %v4233, %v4317
      %v4654 = vmax.f32 %v4240, %v4324
      %v4655 = vmax.f32 %v4247, %v4331
      %v4656 = vmax.f32 %v4254, %v4338
      %v4657 = vmax.f32 %v4261, %v4345
      %v4658 = vmax.f32 %v4268, %v4352
      %v4659 = vmax.f32 %v4275, %v4359
      %v4660 = vmax.f32 %v4366, %v4450
      %v4661 = vmax.f32 %v4373, %v4457
      %v4662 = vmax.f32 %v4380, %v4464
      %v4663 = vmax.f32 %v4387, %v4471
      %v4664 = vmax.f32 %v4394, %v4478
      %v4665 = vmax.f32 %v4401, %v4485
      %v4666 = vmax.f32 %v4408, %v4492
      %v4667 = vmax.f32 %v4415, %v4499
      %v4668 = vmax.f32 %v4422, %v4506
      %v4669 = vmax.f32 %v4429, %v4513
      %v4670 = vmax.f32 %v4436, %v4520
      %v4671 = vmax.f32 %v4443, %v4527
      %v4672 = vpack.c.bf16 %v4528, %v4528
      %v4673 = vpack.c.bf16 %v4529, %v4529
      %v4674 = vpack.c.bf16 %v4530, %v4530
      %v4675 = vpack.c.bf16 %v4531, %v4531
      %v4676 = vpack.c.bf16 %v4532, %v4532
      %v4677 = vpack.c.bf16 %v4533, %v4533
      %v4678 = vpack.c.bf16 %v4534, %v4534
      %v4679 = vpack.c.bf16 %v4535, %v4535
      %v4680 = vpack.c.bf16 %v4536, %v4536
      %v4681 = vpack.c.bf16 %v4537, %v4537
      %v4682 = vpack.c.bf16 %v4538, %v4538
      %v4683 = vpack.c.bf16 %v4539, %v4539
      %v4684 = vpack.c.bf16 %v4540, %v4540
      %v4685 = vpack.c.bf16 %v4541, %v4541
      %v4686 = vpack.c.bf16 %v4542, %v4542
      %v4687 = vpack.c.bf16 %v4543, %v4543
      %v4688 = vpack.c.bf16 %v4544, %v4544
      %v4689 = vpack.c.bf16 %v4545, %v4545
      %v4690 = vpack.c.bf16 %v4546, %v4546
      %v4691 = vpack.c.bf16 %v4547, %v4547
      %v4692 = vpack.c.bf16 %v4548, %v4548
      %v4693 = vpack.c.bf16 %v4549, %v4549
      %v4694 = vpack.c.bf16 %v4550, %v4550
      %v4695 = vpack.c.bf16 %v4551, %v4551
      %v4696 = vpack.c.bf16 %v4552, %v4552
      %v4697 = vpack.c.bf16 %v4553, %v4553
      %v4698 = vpack.c.bf16 %v4554, %v4554
      %v4699 = vpack.c.bf16 %v4555, %v4555
      %v4700 = vpack.c.bf16 %v4556, %v4556
      %v4701 = vpack.c.bf16 %v4557, %v4557
      %v4702 = vpack.c.bf16 %v4558, %v4558
      %v4703 = vpack.c.bf16 %v4559, %v4559
      %v4704 = vpack.c.bf16 %v4560, %v4560
      %v4705 = vpack.c.bf16 %v4561, %v4561
      %v4706 = vpack.c.bf16 %v4562, %v4562
      %v4707 = vpack.c.bf16 %v4563, %v4563
      %v4708 = vpack.c.bf16 %v4564, %v4564
      %v4709 = vpack.c.bf16 %v4565, %v4565
      %v4710 = vpack.c.bf16 %v4566, %v4566
      %v4711 = vpack.c.bf16 %v4567, %v4567
      %v4712 = vpack.c.bf16 %v4568, %v4568
      %v4713 = vpack.c.bf16 %v4569, %v4569
      %v4714 = vpack.c.bf16 %v4570, %v4570
      %v4715 = vpack.c.bf16 %v4571, %v4571
      %v4716 = vpack.c.bf16 %v4572, %v4572
      %v4717 = vpack.c.bf16 %v4573, %v4573
      %v4718 = vpack.c.bf16 %v4574, %v4574
      %v4719 = vpack.c.bf16 %v4575, %v4575
      %v4720 = vpack.c.bf16 %v4576, %v4576
      %v4721 = vpack.c.bf16 %v4577, %v4577
      %v4722 = vpack.c.bf16 %v4578, %v4578
      %v4723 = vpack.c.bf16 %v4579, %v4579
      %v4724 = vpack.c.bf16 %v4580, %v4580
      %v4725 = vpack.c.bf16 %v4581, %v4581
      %v4726 = vpack.c.bf16 %v4582, %v4582
      %v4727 = vpack.c.bf16 %v4583, %v4583
      %v4728 = vpack.c.bf16 %v4584, %v4584
      %v4729 = vpack.c.bf16 %v4585, %v4585
      %v4730 = vpack.c.bf16 %v4586, %v4586
      %v4731 = vpack.c.bf16 %v4587, %v4587
      %v4732 = vpack.c.bf16 %v4588, %v4588
      %v4733 = vpack.c.bf16 %v4589, %v4589
      %v4734 = vpack.c.bf16 %v4590, %v4590
      %v4735 = vpack.c.bf16 %v4591, %v4591
      %v4736 = vpack.c.bf16 %v4592, %v4592
      %v4737 = vpack.c.bf16 %v4593, %v4593
      %v4738 = vpack.c.bf16 %v4594, %v4594
      %v4739 = vpack.c.bf16 %v4595, %v4595
      %v4740 = vpack.c.bf16 %v4596, %v4596
      %v4741 = vpack.c.bf16 %v4597, %v4597
      %v4742 = vpack.c.bf16 %v4598, %v4598
      %v4743 = vpack.c.bf16 %v4599, %v4599
      %v4744 = vpack.c.bf16 %v4600, %v4600
      %v4745 = vpack.c.bf16 %v4601, %v4601
      %v4746 = vpack.c.bf16 %v4602, %v4602
      %v4747 = vpack.c.bf16 %v4603, %v4603
      %v4748 = vpack.c.bf16 %v4604, %v4604
      %v4749 = vpack.c.bf16 %v4605, %v4605
      %v4750 = vpack.c.bf16 %v4606, %v4606
      %v4751 = vpack.c.bf16 %v4607, %v4607
      %v4752 = vpack.c.bf16 %v4608, %v4608
      %v4753 = vpack.c.bf16 %v4609, %v4609
      %v4754 = vpack.c.bf16 %v4610, %v4610
      %v4755 = vpack.c.bf16 %v4611, %v4611
      %v4756 = vpack.c.bf16 %v4612, %v4612
      %v4757 = vpack.c.bf16 %v4613, %v4613
      %v4758 = vpack.c.bf16 %v4614, %v4614
      %v4759 = vpack.c.bf16 %v4615, %v4615
      %v4760 = vpack.c.bf16 %v4616, %v4616
      %v4761 = vpack.c.bf16 %v4617, %v4617
      %v4762 = vpack.c.bf16 %v4618, %v4618
      %v4763 = vpack.c.bf16 %v4619, %v4619
      %v4764 = vpack.c.bf16 %v4620, %v4620
      %v4765 = vpack.c.bf16 %v4621, %v4621
      %v4766 = vpack.c.bf16 %v4622, %v4622
      %v4767 = vpack.c.bf16 %v4623, %v4623
      %v4768 = vpack.c.bf16 %v4624, %v4624
      %v4769 = vpack.c.bf16 %v4625, %v4625
      %v4770 = vpack.c.bf16 %v4626, %v4626
      %v4771 = vpack.c.bf16 %v4627, %v4627
      %v4772 = vpack.c.bf16 %v4628, %v4628
      %v4773 = vpack.c.bf16 %v4629, %v4629
      %v4774 = vpack.c.bf16 %v4630, %v4630
      %v4775 = vpack.c.bf16 %v4631, %v4631
      %v4776 = vpack.c.bf16 %v4632, %v4632
      %v4777 = vpack.c.bf16 %v4633, %v4633
      %v4778 = vpack.c.bf16 %v4634, %v4634
      %v4779 = vpack.c.bf16 %v4635, %v4635
      %v4780 = vpack.c.bf16 %v4636, %v4636
      %v4781 = vpack.c.bf16 %v4637, %v4637
      %v4782 = vpack.c.bf16 %v4638, %v4638
      %v4783 = vpack.c.bf16 %v4639, %v4639
      %v4784 = vpack.c.bf16 %v4640, %v4640
      %v4785 = vpack.c.bf16 %v4641, %v4641
      %v4786 = vpack.c.bf16 %v4642, %v4642
      %v4787 = vpack.c.bf16 %v4643, %v4643
      %v4788 = vpack.c.bf16 %v4644, %v4644
      %v4789 = vpack.c.bf16 %v4645, %v4645
      %v4790 = vpack.c.bf16 %v4646, %v4646
      %v4791 = vpack.c.bf16 %v4647, %v4647
      %v4792 = vpack.c.bf16 %v4648, %v4648
      %v4793 = vpack.c.bf16 %v4649, %v4649
      %v4794 = vpack.c.bf16 %v4650, %v4650
      %v4795 = vpack.c.bf16 %v4651, %v4651
      %v4796 = vpack.c.bf16 %v4652, %v4652
      %v4797 = vpack.c.bf16 %v4653, %v4653
      %v4798 = vpack.c.bf16 %v4654, %v4654
      %v4799 = vpack.c.bf16 %v4655, %v4655
      %v4800 = vpack.c.bf16 %v4656, %v4656
      %v4801 = vpack.c.bf16 %v4657, %v4657
      %v4802 = vpack.c.bf16 %v4658, %v4658
      %v4803 = vpack.c.bf16 %v4659, %v4659
      %v4804 = vpack.c.bf16 %v4660, %v4660
      %v4805 = vpack.c.bf16 %v4661, %v4661
      %v4806 = vpack.c.bf16 %v4662, %v4662
      %v4807 = vpack.c.bf16 %v4663, %v4663
      %v4808 = vpack.c.bf16 %v4664, %v4664
      %v4809 = vpack.c.bf16 %v4665, %v4665
      %v4810 = vpack.c.bf16 %v4666, %v4666
      %v4811 = vpack.c.bf16 %v4667, %v4667
      %v4812 = vpack.c.bf16 %v4668, %v4668
      %v4813 = vpack.c.bf16 %v4669, %v4669
      %v4814 = vpack.c.bf16 %v4670, %v4670
      %v4815 = vpack.c.bf16 %v4671, %v4671
      %v4960 = vunpack.c.l.b16 %v4672
      %v4961 = vunpack.c.l.b16 %v4673
      %v4962 = vunpack.c.l.b16 %v4674
      %v4963 = vunpack.c.l.b16 %v4675
      %v4964 = vunpack.c.l.b16 %v4676
      %v4965 = vunpack.c.l.b16 %v4677
      %v4966 = vunpack.c.l.b16 %v4678
      %v4967 = vunpack.c.l.b16 %v4679
      %v4968 = vunpack.c.l.b16 %v4680
      %v4969 = vunpack.c.l.b16 %v4681
      %v4970 = vunpack.c.l.b16 %v4682
      %v4971 = vunpack.c.l.b16 %v4683
      %v4972 = vunpack.c.l.b16 %v4684
      %v4973 = vunpack.c.l.b16 %v4685
      %v4974 = vunpack.c.l.b16 %v4686
      %v4975 = vunpack.c.l.b16 %v4687
      %v4976 = vunpack.c.l.b16 %v4688
      %v4977 = vunpack.c.l.b16 %v4689
      %v4978 = vunpack.c.l.b16 %v4690
      %v4979 = vunpack.c.l.b16 %v4691
      %v4980 = vunpack.c.l.b16 %v4692
      %v4981 = vunpack.c.l.b16 %v4693
      %v4982 = vunpack.c.l.b16 %v4694
      %v4983 = vunpack.c.l.b16 %v4695
      %v4984 = vunpack.c.l.b16 %v4696
      %v4985 = vunpack.c.l.b16 %v4697
      %v4986 = vunpack.c.l.b16 %v4698
      %v4987 = vunpack.c.l.b16 %v4699
      %v4988 = vunpack.c.l.b16 %v4700
      %v4989 = vunpack.c.l.b16 %v4701
      %v4990 = vunpack.c.l.b16 %v4702
      %v4991 = vunpack.c.l.b16 %v4703
      %v4992 = vunpack.c.l.b16 %v4704
      %v4993 = vunpack.c.l.b16 %v4705
      %v4994 = vunpack.c.l.b16 %v4706
      %v4995 = vunpack.c.l.b16 %v4707
      %v4996 = vunpack.c.l.b16 %v4708
      %v4997 = vunpack.c.l.b16 %v4709
      %v4998 = vunpack.c.l.b16 %v4710
      %v4999 = vunpack.c.l.b16 %v4711
      %v5000 = vunpack.c.l.b16 %v4712
      %v5001 = vunpack.c.l.b16 %v4713
      %v5002 = vunpack.c.l.b16 %v4714
      %v5003 = vunpack.c.l.b16 %v4715
      %v5004 = vunpack.c.l.b16 %v4716
      %v5005 = vunpack.c.l.b16 %v4717
      %v5006 = vunpack.c.l.b16 %v4718
      %v5007 = vunpack.c.l.b16 %v4719
      %v5008 = vunpack.c.l.b16 %v4720
      %v5009 = vunpack.c.l.b16 %v4721
      %v5010 = vunpack.c.l.b16 %v4722
      %v5011 = vunpack.c.l.b16 %v4723
      %v5012 = vunpack.c.l.b16 %v4724
      %v5013 = vunpack.c.l.b16 %v4725
      %v5014 = vunpack.c.l.b16 %v4726
      %v5015 = vunpack.c.l.b16 %v4727
      %v5016 = vunpack.c.l.b16 %v4728
      %v5017 = vunpack.c.l.b16 %v4729
      %v5018 = vunpack.c.l.b16 %v4730
      %v5019 = vunpack.c.l.b16 %v4731
      %v5020 = vunpack.c.l.b16 %v4732
      %v5021 = vunpack.c.l.b16 %v4733
      %v5022 = vunpack.c.l.b16 %v4734
      %v5023 = vunpack.c.l.b16 %v4735
      %v5024 = vunpack.c.l.b16 %v4736
      %v5025 = vunpack.c.l.b16 %v4737
      %v5026 = vunpack.c.l.b16 %v4738
      %v5027 = vunpack.c.l.b16 %v4739
      %v5028 = vunpack.c.l.b16 %v4740
      %v5029 = vunpack.c.l.b16 %v4741
      %v5030 = vunpack.c.l.b16 %v4742
      %v5031 = vunpack.c.l.b16 %v4743
      %v5032 = vunpack.c.l.b16 %v4744
      %v5033 = vunpack.c.l.b16 %v4745
      %v5034 = vunpack.c.l.b16 %v4746
      %v5035 = vunpack.c.l.b16 %v4747
      %v5036 = vunpack.c.l.b16 %v4748
      %v5037 = vunpack.c.l.b16 %v4749
      %v5038 = vunpack.c.l.b16 %v4750
      %v5039 = vunpack.c.l.b16 %v4751
      %v5040 = vunpack.c.l.b16 %v4752
      %v5041 = vunpack.c.l.b16 %v4753
      %v5042 = vunpack.c.l.b16 %v4754
      %v5043 = vunpack.c.l.b16 %v4755
      %v5044 = vunpack.c.l.b16 %v4756
      %v5045 = vunpack.c.l.b16 %v4757
      %v5046 = vunpack.c.l.b16 %v4758
      %v5047 = vunpack.c.l.b16 %v4759
      %v5048 = vunpack.c.l.b16 %v4760
      %v5049 = vunpack.c.l.b16 %v4761
      %v5050 = vunpack.c.l.b16 %v4762
      %v5051 = vunpack.c.l.b16 %v4763
      %v5052 = vunpack.c.l.b16 %v4764
      %v5053 = vunpack.c.l.b16 %v4765
      %v5054 = vunpack.c.l.b16 %v4766
      %v5055 = vunpack.c.l.b16 %v4767
      %v5056 = vunpack.c.l.b16 %v4768
      %v5057 = vunpack.c.l.b16 %v4769
      %v5058 = vunpack.c.l.b16 %v4770
      %v5059 = vunpack.c.l.b16 %v4771
      %v5060 = vunpack.c.l.b16 %v4772
      %v5061 = vunpack.c.l.b16 %v4773
      %v5062 = vunpack.c.l.b16 %v4774
      %v5063 = vunpack.c.l.b16 %v4775
      %v5064 = vunpack.c.l.b16 %v4776
      %v5065 = vunpack.c.l.b16 %v4777
      %v5066 = vunpack.c.l.b16 %v4778
      %v5067 = vunpack.c.l.b16 %v4779
      %v5068 = vunpack.c.l.b16 %v4780
      %v5069 = vunpack.c.l.b16 %v4781
      %v5070 = vunpack.c.l.b16 %v4782
      %v5071 = vunpack.c.l.b16 %v4783
      %v5072 = vunpack.c.l.b16 %v4784
      %v5073 = vunpack.c.l.b16 %v4785
      %v5074 = vunpack.c.l.b16 %v4786
      %v5075 = vunpack.c.l.b16 %v4787
      %v5076 = vunpack.c.l.b16 %v4788
      %v5077 = vunpack.c.l.b16 %v4789
      %v5078 = vunpack.c.l.b16 %v4790
      %v5079 = vunpack.c.l.b16 %v4791
      %v5080 = vunpack.c.l.b16 %v4792
      %v5081 = vunpack.c.l.b16 %v4793
      %v5082 = vunpack.c.l.b16 %v4794
      %v5083 = vunpack.c.l.b16 %v4795
      %v5084 = vunpack.c.l.b16 %v4796
      %v5085 = vunpack.c.l.b16 %v4797
      %v5086 = vunpack.c.l.b16 %v4798
      %v5087 = vunpack.c.l.b16 %v4799
      %v5088 = vunpack.c.l.b16 %v4800
      %v5089 = vunpack.c.l.b16 %v4801
      %v5090 = vunpack.c.l.b16 %v4802
      %v5091 = vunpack.c.l.b16 %v4803
      %v5092 = vunpack.c.l.b16 %v4804
      %v5093 = vunpack.c.l.b16 %v4805
      %v5094 = vunpack.c.l.b16 %v4806
      %v5095 = vunpack.c.l.b16 %v4807
      %v5096 = vunpack.c.l.b16 %v4808
      %v5097 = vunpack.c.l.b16 %v4809
      %v5098 = vunpack.c.l.b16 %v4810
      %v5099 = vunpack.c.l.b16 %v4811
      %v5100 = vunpack.c.l.b16 %v4812
      %v5101 = vunpack.c.l.b16 %v4813
      %v5102 = vunpack.c.l.b16 %v4814
      %v5103 = vunpack.c.l.b16 %v4815
      %v5104 = vpack.c.b16 %v4960, %v4960
      %v5105 = vpack.c.b16 %v4961, %v4961
      %v5106 = vpack.c.b16 %v4962, %v4962
      %v5107 = vpack.c.b16 %v4963, %v4963
      %v5108 = vpack.c.b16 %v4964, %v4964
      %v5109 = vpack.c.b16 %v4965, %v4965
      %v5110 = vpack.c.b16 %v4966, %v4966
      %v5111 = vpack.c.b16 %v4967, %v4967
      %v5112 = vpack.c.b16 %v4968, %v4968
      %v5113 = vpack.c.b16 %v4969, %v4969
      %v5114 = vpack.c.b16 %v4970, %v4970
      %v5115 = vpack.c.b16 %v4971, %v4971
      %v5116 = vpack.c.b16 %v4972, %v4972
      %v5117 = vpack.c.b16 %v4973, %v4973
      %v5118 = vpack.c.b16 %v4974, %v4974
      %v5119 = vpack.c.b16 %v4975, %v4975
      %v5120 = vpack.c.b16 %v4976, %v4976
      %v5121 = vpack.c.b16 %v4977, %v4977
      %v5122 = vpack.c.b16 %v4978, %v4978
      %v5123 = vpack.c.b16 %v4979, %v4979
      %v5124 = vpack.c.b16 %v4980, %v4980
      %v5125 = vpack.c.b16 %v4981, %v4981
      %v5126 = vpack.c.b16 %v4982, %v4982
      %v5127 = vpack.c.b16 %v4983, %v4983
      %v5128 = vpack.c.b16 %v4984, %v4984
      %v5129 = vpack.c.b16 %v4985, %v4985
      %v5130 = vpack.c.b16 %v4986, %v4986
      %v5131 = vpack.c.b16 %v4987, %v4987
      %v5132 = vpack.c.b16 %v4988, %v4988
      %v5133 = vpack.c.b16 %v4989, %v4989
      %v5134 = vpack.c.b16 %v4990, %v4990
      %v5135 = vpack.c.b16 %v4991, %v4991
      %v5136 = vpack.c.b16 %v4992, %v4992
      %v5137 = vpack.c.b16 %v4993, %v4993
      %v5138 = vpack.c.b16 %v4994, %v4994
      %v5139 = vpack.c.b16 %v4995, %v4995
      %v5140 = vpack.c.b16 %v4996, %v4996
      %v5141 = vpack.c.b16 %v4997, %v4997
      %v5142 = vpack.c.b16 %v4998, %v4998
      %v5143 = vpack.c.b16 %v4999, %v4999
      %v5144 = vpack.c.b16 %v5000, %v5000
      %v5145 = vpack.c.b16 %v5001, %v5001
      %v5146 = vpack.c.b16 %v5002, %v5002
      %v5147 = vpack.c.b16 %v5003, %v5003
      %v5148 = vpack.c.b16 %v5004, %v5004
      %v5149 = vpack.c.b16 %v5005, %v5005
      %v5150 = vpack.c.b16 %v5006, %v5006
      %v5151 = vpack.c.b16 %v5007, %v5007
      %v5152 = vpack.c.b16 %v5008, %v5008
      %v5153 = vpack.c.b16 %v5009, %v5009
      %v5154 = vpack.c.b16 %v5010, %v5010
      %v5155 = vpack.c.b16 %v5011, %v5011
      %v5156 = vpack.c.b16 %v5012, %v5012
      %v5157 = vpack.c.b16 %v5013, %v5013
      %v5158 = vpack.c.b16 %v5014, %v5014
      %v5159 = vpack.c.b16 %v5015, %v5015
      %v5160 = vpack.c.b16 %v5016, %v5016
      %v5161 = vpack.c.b16 %v5017, %v5017
      %v5162 = vpack.c.b16 %v5018, %v5018
      %v5163 = vpack.c.b16 %v5019, %v5019
      %v5164 = vpack.c.b16 %v5020, %v5020
      %v5165 = vpack.c.b16 %v5021, %v5021
      %v5166 = vpack.c.b16 %v5022, %v5022
      %v5167 = vpack.c.b16 %v5023, %v5023
      %v5168 = vpack.c.b16 %v5024, %v5024
      %v5169 = vpack.c.b16 %v5025, %v5025
      %v5170 = vpack.c.b16 %v5026, %v5026
      %v5171 = vpack.c.b16 %v5027, %v5027
      %v5172 = vpack.c.b16 %v5028, %v5028
      %v5173 = vpack.c.b16 %v5029, %v5029
      %v5174 = vpack.c.b16 %v5030, %v5030
      %v5175 = vpack.c.b16 %v5031, %v5031
      %v5176 = vpack.c.b16 %v5032, %v5032
      %v5177 = vpack.c.b16 %v5033, %v5033
      %v5178 = vpack.c.b16 %v5034, %v5034
      %v5179 = vpack.c.b16 %v5035, %v5035
      %v5180 = vpack.c.b16 %v5036, %v5036
      %v5181 = vpack.c.b16 %v5037, %v5037
      %v5182 = vpack.c.b16 %v5038, %v5038
      %v5183 = vpack.c.b16 %v5039, %v5039
      %v5184 = vpack.c.b16 %v5040, %v5040
      %v5185 = vpack.c.b16 %v5041, %v5041
      %v5186 = vpack.c.b16 %v5042, %v5042
      %v5187 = vpack.c.b16 %v5043, %v5043
      %v5188 = vpack.c.b16 %v5044, %v5044
      %v5189 = vpack.c.b16 %v5045, %v5045
      %v5190 = vpack.c.b16 %v5046, %v5046
      %v5191 = vpack.c.b16 %v5047, %v5047
      %v5192 = vpack.c.b16 %v5048, %v5048
      %v5193 = vpack.c.b16 %v5049, %v5049
      %v5194 = vpack.c.b16 %v5050, %v5050
      %v5195 = vpack.c.b16 %v5051, %v5051
      %v5196 = vpack.c.b16 %v5052, %v5052
      %v5197 = vpack.c.b16 %v5053, %v5053
      %v5198 = vpack.c.b16 %v5054, %v5054
      %v5199 = vpack.c.b16 %v5055, %v5055
      %v5200 = vpack.c.b16 %v5056, %v5056
      %v5201 = vpack.c.b16 %v5057, %v5057
      %v5202 = vpack.c.b16 %v5058, %v5058
      %v5203 = vpack.c.b16 %v5059, %v5059
      %v5204 = vpack.c.b16 %v5060, %v5060
      %v5205 = vpack.c.b16 %v5061, %v5061
      %v5206 = vpack.c.b16 %v5062, %v5062
      %v5207 = vpack.c.b16 %v5063, %v5063
      %v5208 = vpack.c.b16 %v5064, %v5064
      %v5209 = vpack.c.b16 %v5065, %v5065
      %v5210 = vpack.c.b16 %v5066, %v5066
      %v5211 = vpack.c.b16 %v5067, %v5067
      %v5212 = vpack.c.b16 %v5068, %v5068
      %v5213 = vpack.c.b16 %v5069, %v5069
      %v5214 = vpack.c.b16 %v5070, %v5070
      %v5215 = vpack.c.b16 %v5071, %v5071
      %v5216 = vpack.c.b16 %v5072, %v5072
      %v5217 = vpack.c.b16 %v5073, %v5073
      %v5218 = vpack.c.b16 %v5074, %v5074
      %v5219 = vpack.c.b16 %v5075, %v5075
      %v5220 = vpack.c.b16 %v5076, %v5076
      %v5221 = vpack.c.b16 %v5077, %v5077
      %v5222 = vpack.c.b16 %v5078, %v5078
      %v5223 = vpack.c.b16 %v5079, %v5079
      %v5224 = vpack.c.b16 %v5080, %v5080
      %v5225 = vpack.c.b16 %v5081, %v5081
      %v5226 = vpack.c.b16 %v5082, %v5082
      %v5227 = vpack.c.b16 %v5083, %v5083
      %v5228 = vpack.c.b16 %v5084, %v5084
      %v5229 = vpack.c.b16 %v5085, %v5085
      %v5230 = vpack.c.b16 %v5086, %v5086
      %v5231 = vpack.c.b16 %v5087, %v5087
      %v5232 = vpack.c.b16 %v5088, %v5088
      %v5233 = vpack.c.b16 %v5089, %v5089
      %v5234 = vpack.c.b16 %v5090, %v5090
      %v5235 = vpack.c.b16 %v5091, %v5091
      %v5236 = vpack.c.b16 %v5092, %v5092
      %v5237 = vpack.c.b16 %v5093, %v5093
      %v5238 = vpack.c.b16 %v5094, %v5094
      %v5239 = vpack.c.b16 %v5095, %v5095
      %v5240 = vpack.c.b16 %v5096, %v5096
      %v5241 = vpack.c.b16 %v5097, %v5097
      %v5242 = vpack.c.b16 %v5098, %v5098
      %v5243 = vpack.c.b16 %v5099, %v5099
      %v5244 = vpack.c.b16 %v5100, %v5100
      %v5245 = vpack.c.b16 %v5101, %v5101
      %v5246 = vpack.c.b16 %v5102, %v5102
      %v5247 = vpack.c.b16 %v5103, %v5103
      %v5248 = vunpack.c.l.b16 %v5104
      %v5249 = vunpack.c.l.b16 %v5105
      %v5250 = vunpack.c.l.b16 %v5106
      %v5251 = vunpack.c.l.b16 %v5107
      %v5252 = vunpack.c.l.b16 %v5108
      %v5253 = vunpack.c.l.b16 %v5109
      %v5254 = vunpack.c.l.b16 %v5110
      %v5255 = vunpack.c.l.b16 %v5111
      %v5256 = vunpack.c.l.b16 %v5112
      %v5257 = vunpack.c.l.b16 %v5113
      %v5258 = vunpack.c.l.b16 %v5114
      %v5259 = vunpack.c.l.b16 %v5115
      %v5260 = vunpack.c.l.b16 %v5116
      %v5261 = vunpack.c.l.b16 %v5117
      %v5262 = vunpack.c.l.b16 %v5118
      %v5263 = vunpack.c.l.b16 %v5119
      %v5264 = vunpack.c.l.b16 %v5120
      %v5265 = vunpack.c.l.b16 %v5121
      %v5266 = vunpack.c.l.b16 %v5122
      %v5267 = vunpack.c.l.b16 %v5123
      %v5268 = vunpack.c.l.b16 %v5124
      %v5269 = vunpack.c.l.b16 %v5125
      %v5270 = vunpack.c.l.b16 %v5126
      %v5271 = vunpack.c.l.b16 %v5127
      %v5272 = vunpack.c.l.b16 %v5128
      %v5273 = vunpack.c.l.b16 %v5129
      %v5274 = vunpack.c.l.b16 %v5130
      %v5275 = vunpack.c.l.b16 %v5131
      %v5276 = vunpack.c.l.b16 %v5132
      %v5277 = vunpack.c.l.b16 %v5133
      %v5278 = vunpack.c.l.b16 %v5134
      %v5279 = vunpack.c.l.b16 %v5135
      %v5280 = vunpack.c.l.b16 %v5136
      %v5281 = vunpack.c.l.b16 %v5137
      %v5282 = vunpack.c.l.b16 %v5138
      %v5283 = vunpack.c.l.b16 %v5139
      %v5284 = vunpack.c.l.b16 %v5140
      %v5285 = vunpack.c.l.b16 %v5141
      %v5286 = vunpack.c.l.b16 %v5142
      %v5287 = vunpack.c.l.b16 %v5143
      %v5288 = vunpack.c.l.b16 %v5144
      %v5289 = vunpack.c.l.b16 %v5145
      %v5290 = vunpack.c.l.b16 %v5146
      %v5291 = vunpack.c.l.b16 %v5147
      %v5292 = vunpack.c.l.b16 %v5148
      %v5293 = vunpack.c.l.b16 %v5149
      %v5294 = vunpack.c.l.b16 %v5150
      %v5295 = vunpack.c.l.b16 %v5151
      %v5296 = vunpack.c.l.b16 %v5152
      %v5297 = vunpack.c.l.b16 %v5153
      %v5298 = vunpack.c.l.b16 %v5154
      %v5299 = vunpack.c.l.b16 %v5155
      %v5300 = vunpack.c.l.b16 %v5156
      %v5301 = vunpack.c.l.b16 %v5157
      %v5302 = vunpack.c.l.b16 %v5158
      %v5303 = vunpack.c.l.b16 %v5159
      %v5304 = vunpack.c.l.b16 %v5160
      %v5305 = vunpack.c.l.b16 %v5161
      %v5306 = vunpack.c.l.b16 %v5162
      %v5307 = vunpack.c.l.b16 %v5163
      %v5308 = vunpack.c.l.b16 %v5164
      %v5309 = vunpack.c.l.b16 %v5165
      %v5310 = vunpack.c.l.b16 %v5166
      %v5311 = vunpack.c.l.b16 %v5167
      %v5312 = vunpack.c.l.b16 %v5168
      %v5313 = vunpack.c.l.b16 %v5169
      %v5314 = vunpack.c.l.b16 %v5170
      %v5315 = vunpack.c.l.b16 %v5171
      %v5316 = vunpack.c.l.b16 %v5172
      %v5317 = vunpack.c.l.b16 %v5173
      %v5318 = vunpack.c.l.b16 %v5174
      %v5319 = vunpack.c.l.b16 %v5175
      %v5320 = vunpack.c.l.b16 %v5176
      %v5321 = vunpack.c.l.b16 %v5177
      %v5322 = vunpack.c.l.b16 %v5178
      %v5323 = vunpack.c.l.b16 %v5179
      %v5324 = vunpack.c.l.b16 %v5180
      %v5325 = vunpack.c.l.b16 %v5181
      %v5326 = vunpack.c.l.b16 %v5182
      %v5327 = vunpack.c.l.b16 %v5183
      %v5328 = vunpack.c.l.b16 %v5184
      %v5329 = vunpack.c.l.b16 %v5185
      %v5330 = vunpack.c.l.b16 %v5186
      %v5331 = vunpack.c.l.b16 %v5187
      %v5332 = vunpack.c.l.b16 %v5188
      %v5333 = vunpack.c.l.b16 %v5189
      %v5334 = vunpack.c.l.b16 %v5190
      %v5335 = vunpack.c.l.b16 %v5191
      %v5336 = vunpack.c.l.b16 %v5192
      %v5337 = vunpack.c.l.b16 %v5193
      %v5338 = vunpack.c.l.b16 %v5194
      %v5339 = vunpack.c.l.b16 %v5195
      %v5340 = vunpack.c.l.b16 %v5196
      %v5341 = vunpack.c.l.b16 %v5197
      %v5342 = vunpack.c.l.b16 %v5198
      %v5343 = vunpack.c.l.b16 %v5199
      %v5344 = vunpack.c.l.b16 %v5200
      %v5345 = vunpack.c.l.b16 %v5201
      %v5346 = vunpack.c.l.b16 %v5202
      %v5347 = vunpack.c.l.b16 %v5203
      %v5348 = vunpack.c.l.b16 %v5204
      %v5349 = vunpack.c.l.b16 %v5205
      %v5350 = vunpack.c.l.b16 %v5206
      %v5351 = vunpack.c.l.b16 %v5207
      %v5352 = vunpack.c.l.b16 %v5208
      %v5353 = vunpack.c.l.b16 %v5209
      %v5354 = vunpack.c.l.b16 %v5210
      %v5355 = vunpack.c.l.b16 %v5211
      %v5356 = vunpack.c.l.b16 %v5212
      %v5357 = vunpack.c.l.b16 %v5213
      %v5358 = vunpack.c.l.b16 %v5214
      %v5359 = vunpack.c.l.b16 %v5215
      %v5360 = vunpack.c.l.b16 %v5216
      %v5361 = vunpack.c.l.b16 %v5217
      %v5362 = vunpack.c.l.b16 %v5218
      %v5363 = vunpack.c.l.b16 %v5219
      %v5364 = vunpack.c.l.b16 %v5220
      %v5365 = vunpack.c.l.b16 %v5221
      %v5366 = vunpack.c.l.b16 %v5222
      %v5367 = vunpack.c.l.b16 %v5223
      %v5368 = vunpack.c.l.b16 %v5224
      %v5369 = vunpack.c.l.b16 %v5225
      %v5370 = vunpack.c.l.b16 %v5226
      %v5371 = vunpack.c.l.b16 %v5227
      %v5372 = vunpack.c.l.b16 %v5228
      %v5373 = vunpack.c.l.b16 %v5229
      %v5374 = vunpack.c.l.b16 %v5230
      %v5375 = vunpack.c.l.b16 %v5231
      %v5376 = vunpack.c.l.b16 %v5232
      %v5377 = vunpack.c.l.b16 %v5233
      %v5378 = vunpack.c.l.b16 %v5234
      %v5379 = vunpack.c.l.b16 %v5235
      %v5380 = vunpack.c.l.b16 %v5236
      %v5381 = vunpack.c.l.b16 %v5237
      %v5382 = vunpack.c.l.b16 %v5238
      %v5383 = vunpack.c.l.b16 %v5239
      %v5384 = vunpack.c.l.b16 %v5240
      %v5385 = vunpack.c.l.b16 %v5241
      %v5386 = vunpack.c.l.b16 %v5242
      %v5387 = vunpack.c.l.b16 %v5243
      %v5388 = vunpack.c.l.b16 %v5244
      %v5389 = vunpack.c.l.b16 %v5245
      %v5390 = vunpack.c.l.b16 %v5246
      %v5391 = vunpack.c.l.b16 %v5247
      %vm5392 = vcmask 1041409
      %v5393 = vsel %vm5392, %v5249, %v5248
      %vm5394 = vcmask 1042434
      %v5395 = vsel %vm5394, %v5250, %v5393
      %vm5396 = vcmask 1043459
      %v5397 = vsel %vm5396, %v5251, %v5395
      %vm5398 = vcmask 1044484
      %v5399 = vsel %vm5398, %v5252, %v5397
      %vm5400 = vcmask 1045509
      %v5401 = vsel %vm5400, %v5253, %v5399
      %vm5402 = vcmask 1046534
      %v5403 = vsel %vm5402, %v5254, %v5401
      %vm5404 = vcmask 1047559
      %v5405 = vsel %vm5404, %v5255, %v5403
      %v5406 = vsel %vm5392, %v5257, %v5256
      %v5407 = vsel %vm5394, %v5258, %v5406
      %v5408 = vsel %vm5396, %v5259, %v5407
      %v5409 = vsel %vm5398, %v5260, %v5408
      %v5410 = vsel %vm5400, %v5261, %v5409
      %v5411 = vsel %vm5402, %v5262, %v5410
      %v5412 = vsel %vm5404, %v5263, %v5411
      %v5413 = vsel %vm5392, %v5265, %v5264
      %v5414 = vsel %vm5394, %v5266, %v5413
      %v5415 = vsel %vm5396, %v5267, %v5414
      %v5416 = vsel %vm5398, %v5268, %v5415
      %v5417 = vsel %vm5400, %v5269, %v5416
      %v5418 = vsel %vm5402, %v5270, %v5417
      %v5419 = vsel %vm5404, %v5271, %v5418
      %v5420 = vsel %vm5392, %v5273, %v5272
      %v5421 = vsel %vm5394, %v5274, %v5420
      %v5422 = vsel %vm5396, %v5275, %v5421
      %v5423 = vsel %vm5398, %v5276, %v5422
      %v5424 = vsel %vm5400, %v5277, %v5423
      %v5425 = vsel %vm5402, %v5278, %v5424
      %v5426 = vsel %vm5404, %v5279, %v5425
      %v5427 = vsel %vm5392, %v5281, %v5280
      %v5428 = vsel %vm5394, %v5282, %v5427
      %v5429 = vsel %vm5396, %v5283, %v5428
      %v5430 = vsel %vm5398, %v5284, %v5429
      %v5431 = vsel %vm5400, %v5285, %v5430
      %v5432 = vsel %vm5402, %v5286, %v5431
      %v5433 = vsel %vm5404, %v5287, %v5432
      %v5434 = vsel %vm5392, %v5289, %v5288
      %v5435 = vsel %vm5394, %v5290, %v5434
      %v5436 = vsel %vm5396, %v5291, %v5435
      %v5437 = vsel %vm5398, %v5292, %v5436
      %v5438 = vsel %vm5400, %v5293, %v5437
      %v5439 = vsel %vm5402, %v5294, %v5438
      %v5440 = vsel %vm5404, %v5295, %v5439
      %v5441 = vsel %vm5392, %v5297, %v5296
      %v5442 = vsel %vm5394, %v5298, %v5441
      %v5443 = vsel %vm5396, %v5299, %v5442
      %v5444 = vsel %vm5398, %v5300, %v5443
      %v5445 = vsel %vm5400, %v5301, %v5444
      %v5446 = vsel %vm5402, %v5302, %v5445
      %v5447 = vsel %vm5404, %v5303, %v5446
      %v5448 = vsel %vm5392, %v5305, %v5304
      %v5449 = vsel %vm5394, %v5306, %v5448
      %v5450 = vsel %vm5396, %v5307, %v5449
      %v5451 = vsel %vm5398, %v5308, %v5450
      %v5452 = vsel %vm5400, %v5309, %v5451
      %v5453 = vsel %vm5402, %v5310, %v5452
      %v5454 = vsel %vm5404, %v5311, %v5453
      %v5455 = vsel %vm5392, %v5313, %v5312
      %v5456 = vsel %vm5394, %v5314, %v5455
      %v5457 = vsel %vm5396, %v5315, %v5456
      %v5458 = vsel %vm5398, %v5316, %v5457
      %v5459 = vsel %vm5400, %v5317, %v5458
      %v5460 = vsel %vm5402, %v5318, %v5459
      %v5461 = vsel %vm5404, %v5319, %v5460
      %v5462 = vsel %vm5392, %v5321, %v5320
      %v5463 = vsel %vm5394, %v5322, %v5462
      %v5464 = vsel %vm5396, %v5323, %v5463
      %v5465 = vsel %vm5398, %v5324, %v5464
      %v5466 = vsel %vm5400, %v5325, %v5465
      %v5467 = vsel %vm5402, %v5326, %v5466
      %v5468 = vsel %vm5404, %v5327, %v5467
      %v5469 = vsel %vm5392, %v5329, %v5328
      %v5470 = vsel %vm5394, %v5330, %v5469
      %v5471 = vsel %vm5396, %v5331, %v5470
      %v5472 = vsel %vm5398, %v5332, %v5471
      %v5473 = vsel %vm5400, %v5333, %v5472
      %v5474 = vsel %vm5402, %v5334, %v5473
      %v5475 = vsel %vm5404, %v5335, %v5474
      %v5476 = vsel %vm5392, %v5337, %v5336
      %v5477 = vsel %vm5394, %v5338, %v5476
      %v5478 = vsel %vm5396, %v5339, %v5477
      %v5479 = vsel %vm5398, %v5340, %v5478
      %v5480 = vsel %vm5400, %v5341, %v5479
      %v5481 = vsel %vm5402, %v5342, %v5480
      %v5482 = vsel %vm5404, %v5343, %v5481
      %v5483 = vsel %vm5392, %v5345, %v5344
      %v5484 = vsel %vm5394, %v5346, %v5483
      %v5485 = vsel %vm5396, %v5347, %v5484
      %v5486 = vsel %vm5398, %v5348, %v5485
      %v5487 = vsel %vm5400, %v5349, %v5486
      %v5488 = vsel %vm5402, %v5350, %v5487
      %v5489 = vsel %vm5404, %v5351, %v5488
      %v5490 = vsel %vm5392, %v5353, %v5352
      %v5491 = vsel %vm5394, %v5354, %v5490
      %v5492 = vsel %vm5396, %v5355, %v5491
      %v5493 = vsel %vm5398, %v5356, %v5492
      %v5494 = vsel %vm5400, %v5357, %v5493
      %v5495 = vsel %vm5402, %v5358, %v5494
      %v5496 = vsel %vm5404, %v5359, %v5495
      %v5497 = vsel %vm5392, %v5361, %v5360
      %v5498 = vsel %vm5394, %v5362, %v5497
      %v5499 = vsel %vm5396, %v5363, %v5498
      %v5500 = vsel %vm5398, %v5364, %v5499
      %v5501 = vsel %vm5400, %v5365, %v5500
      %v5502 = vsel %vm5402, %v5366, %v5501
      %v5503 = vsel %vm5404, %v5367, %v5502
      %v5504 = vsel %vm5392, %v5369, %v5368
      %v5505 = vsel %vm5394, %v5370, %v5504
      %v5506 = vsel %vm5396, %v5371, %v5505
      %v5507 = vsel %vm5398, %v5372, %v5506
      %v5508 = vsel %vm5400, %v5373, %v5507
      %v5509 = vsel %vm5402, %v5374, %v5508
      %v5510 = vsel %vm5404, %v5375, %v5509
      %v5511 = vsel %vm5392, %v5377, %v5376
      %v5512 = vsel %vm5394, %v5378, %v5511
      %v5513 = vsel %vm5396, %v5379, %v5512
      %v5514 = vsel %vm5398, %v5380, %v5513
      %v5515 = vsel %vm5400, %v5381, %v5514
      %v5516 = vsel %vm5402, %v5382, %v5515
      %v5517 = vsel %vm5404, %v5383, %v5516
      %v5518 = vsel %vm5392, %v5385, %v5384
      %v5519 = vsel %vm5394, %v5386, %v5518
      %v5520 = vsel %vm5396, %v5387, %v5519
      %v5521 = vsel %vm5398, %v5388, %v5520
      %v5522 = vsel %vm5400, %v5389, %v5521
      %v5523 = vsel %vm5402, %v5390, %v5522
      %v5524 = vsel %vm5404, %v5391, %v5523
      %v5525 = vpack.c.b16 %v5405, %v5405
      %v5526 = vpack.c.b16 %v5412, %v5412
      %v5527 = vpack.c.b16 %v5419, %v5419
      %v5528 = vpack.c.b16 %v5426, %v5426
      %v5529 = vpack.c.b16 %v5433, %v5433
      %v5530 = vpack.c.b16 %v5440, %v5440
      %v5531 = vpack.c.b16 %v5447, %v5447
      %v5532 = vpack.c.b16 %v5454, %v5454
      %v5533 = vpack.c.b16 %v5461, %v5461
      %v5534 = vpack.c.b16 %v5468, %v5468
      %v5535 = vpack.c.b16 %v5475, %v5475
      %v5536 = vpack.c.b16 %v5482, %v5482
      %v5537 = vpack.c.b16 %v5489, %v5489
      %v5538 = vpack.c.b16 %v5496, %v5496
      %v5539 = vpack.c.b16 %v5503, %v5503
      %v5540 = vpack.c.b16 %v5510, %v5510
      %v5541 = vpack.c.b16 %v5517, %v5517
      %v5542 = vpack.c.b16 %v5524, %v5524
      %5561 = vst [vmem:[%s172] sm:$0xf] %v5525
      %5562 = vst [vmem:[%s172 + $0x4] sm:$0xf] %v5526
      %5563 = vst [vmem:[%s172 + $0x8] sm:$0xf] %v5527
      %5564 = vst [vmem:[%s172 + $0xc] sm:$0xf] %v5528
      %5565 = vst [vmem:[%s172 + $0x10] sm:$0xf] %v5529
      %5566 = vst [vmem:[%s172 + $0x14] sm:$0xf] %v5530
      %5567 = vst [vmem:[%s172 + $0x18] sm:$0xf] %v5531
      %5568 = vst [vmem:[%s172 + $0x1c] sm:$0xf] %v5532
      %5569 = vst [vmem:[%s172 + $0x20] sm:$0xf] %v5533
      %5570 = vst [vmem:[%s172 + $0x24] sm:$0xf] %v5534
      %5571 = vst [vmem:[%s172 + $0x28] sm:$0xf] %v5535
      %5572 = vst [vmem:[%s172 + $0x2c] sm:$0xf] %v5536
      %5573 = vst [vmem:[%s172 + $0x30] sm:$0xf] %v5537
      %5574 = vst [vmem:[%s172 + $0x34] sm:$0xf] %v5538
      %5575 = vst [vmem:[%s172 + $0x38] sm:$0xf] %v5539
      %5576 = vst [vmem:[%s172 + $0x3c] sm:$0xf] %v5540
      %5577 = vst [vmem:[%s172 + $0x40] sm:$0xf] %v5541
      %5578 = vst [vmem:[%s172 + $0x44] sm:$0xf] %v5542
      %s5579 = smul.u32 18, %s14
      %p5580 = scmp.lt.s32.totalorder %s5579, 35
      %s5581 = scalar_select %p5580, %s5579, 35
      %s5582 = smul.addr %s5581, 4
      %s5583 = scalar_lea.vmem %s3, %s5582
      // Predicated region
      $region33: #{lenet_forward.2} parent=31 // pred_check
        %p5584 = pneg %p100
      $region34: #{lenet_forward.2} parent=31 // pred_check_branch
        %5586 = sbr.rel (%p5584) target = $region36
      $region35: #{lenet_forward.2} parent=31 // pred_region
        %s5587 = smul.u32 18, %s14
      $region36: #{lenet_forward.2} parent=31 // pred_fallthru
        _
    $region32: #{lenet_forward.2} parent=5 // pred_fallthru
      _
    %p5588 = scmp.le.s32.totalorder 2, %s9
    // Predicated region
    $region37: #{lenet_forward.2} parent=5 // pred_check
      %p5589 = pneg %p5588
    $region38: #{lenet_forward.2} parent=5 // pred_check_branch
      %5591 = sbr.rel (%p5589) target = $region40
    $region39: #{lenet_forward.2} parent=5 // pred_region
      %s5592 = ssub.s32 %s9, 2
      // Predicated region
      $region41: #{lenet_forward.2} parent=39 // pred_check
        %p5593 = pneg %p106
      $region42: #{lenet_forward.2} parent=39 // pred_check_branch
        %5595 = sbr.rel (%p5593) target = $region44
      $region43: #{lenet_forward.2} parent=39 // pred_region
        %s5596 = smul.u32 18, %s15
        %p5597 = scmp.lt.s32.totalorder %s5596, 35
        %s5598 = scalar_select %p5597, %s5596, 35
        %s5599 = smul.addr %s5598, 4
        %s5600 = scalar_lea.vmem %s3, %s5599
      $region44: #{lenet_forward.2} parent=39 // pred_fallthru
        _
    $region40: #{lenet_forward.2} parent=5 // pred_fallthru
      _
  $region6: #{lenet_forward.2} parent=0 // loop_footer
    %s13 = sadd.s32 1, %s9
  $region7: #{lenet_forward.2} parent=0 // loop_footer_branch
    %8 = sbr.rel target = $region3
  $region8: #{lenet_forward.2} parent=0 // loop_exit
    _

// kernel: lenet_forward.3
$region0: #{lenet_forward.3}
  #allocation0 [shape = 'u32[]', space=smem, size = 0x4, offset = 0x4, fixed_abs, tag = 'smem constant byte address 0x4 - core index']
  #allocation1 [shape = 'u32[144,128]{1,0:T(1,128)}', space=vmem, size = 0x12000, scoped, tag = 'internal scratch']
  %s0 = inlined_call_operand.vmem [shape: bf16[512,256], index: 0, kind: input, shape index: {}]
  %s1 = inlined_call_operand.vmem [shape: bf16[256,128], index: 1, kind: input, shape index: {}]
  %s2 = inlined_call_operand.vmem [shape: f32[1,128], index: 2, kind: input, shape index: {}]
  %s3 = inlined_call_operand.vmem [shape: bf16[16,128,128], index: 3, kind: input, shape index: {}]
  %s4 = inlined_call_operand.vmem [shape: f32[1,128], index: 4, kind: input, shape index: {}]
  %s5 = inlined_call_operand.vmem [shape: bf16[128,128], index: 5, kind: input, shape index: {}]
  %s6 = inlined_call_operand.vmem [shape: f32[1,128], index: 6, kind: input, shape index: {}]
  %s7 = inlined_call_operand.vmem [shape: bf16[128,128], index: 7, kind: input, shape index: {}]
  %s8 = inlined_call_operand.vmem [shape: f32[1,128], index: 8, kind: input, shape index: {}]
  %s9 = inlined_call_operand.vmem [shape: f32[8,128], index: 9, kind: output, shape index: {}]
  %s10 = sld [smem:[#allocation0]]
  $region46: #{lenet_forward.3} parent=0
    _
  %s12 = ssub.s32 1, %s10
  %s13 = scalar_select 0, %s12, %s10
  // Predicated region
  $region2: #{lenet_forward.3} parent=0 // pred_check
    _
  $region3: #{lenet_forward.3} parent=0 // pred_check_branch
    %15 = sbr.rel (0) target = $region5
  $region4: #{lenet_forward.3} parent=0 // pred_region
    _
  $region5: #{lenet_forward.3} parent=0 // pred_fallthru
    _
  // Predicated region
  $region6: #{lenet_forward.3} parent=0 // pred_check
    _
  $region7: #{lenet_forward.3} parent=0 // pred_check_branch
    %17 = sbr.rel (0) target = $region9
  $region8: #{lenet_forward.3} parent=0 // pred_region
    _
  $region9: #{lenet_forward.3} parent=0 // pred_fallthru
    _
  // Predicated region
  $region10: #{lenet_forward.3} parent=0 // pred_check
    _
  $region11: #{lenet_forward.3} parent=0 // pred_check_branch
    %19 = sbr.rel (0) target = $region13
  $region12: #{lenet_forward.3} parent=0 // pred_region
    _
  $region13: #{lenet_forward.3} parent=0 // pred_fallthru
    _
  // Predicated region
  $region14: #{lenet_forward.3} parent=0 // pred_check
    _
  $region15: #{lenet_forward.3} parent=0 // pred_check_branch
    %21 = sbr.rel (0) target = $region17
  $region16: #{lenet_forward.3} parent=0 // pred_region
    _
  $region17: #{lenet_forward.3} parent=0 // pred_fallthru
    _
  // Predicated region
  $region18: #{lenet_forward.3} parent=0 // pred_check
    _
  $region19: #{lenet_forward.3} parent=0 // pred_check_branch
    %23 = sbr.rel (0) target = $region21
  $region20: #{lenet_forward.3} parent=0 // pred_region
    _
  $region21: #{lenet_forward.3} parent=0 // pred_fallthru
    _
  // Predicated region
  $region22: #{lenet_forward.3} parent=0 // pred_check
    _
  $region23: #{lenet_forward.3} parent=0 // pred_check_branch
    %25 = sbr.rel (0) target = $region25
  $region24: #{lenet_forward.3} parent=0 // pred_region
    _
  $region25: #{lenet_forward.3} parent=0 // pred_fallthru
    _
  // Predicated region
  $region26: #{lenet_forward.3} parent=0 // pred_check
    _
  $region27: #{lenet_forward.3} parent=0 // pred_check_branch
    %27 = sbr.rel (0) target = $region29
  $region28: #{lenet_forward.3} parent=0 // pred_region
    _
  $region29: #{lenet_forward.3} parent=0 // pred_fallthru
    _
  // Predicated region
  $region30: #{lenet_forward.3} parent=0 // pred_check
    _
  $region31: #{lenet_forward.3} parent=0 // pred_check_branch
    %29 = sbr.rel (0) target = $region33
  $region32: #{lenet_forward.3} parent=0 // pred_region
    _
  $region33: #{lenet_forward.3} parent=0 // pred_fallthru
    _
  // Predicated region
  $region34: #{lenet_forward.3} parent=0 // pred_check
    _
  $region35: #{lenet_forward.3} parent=0 // pred_check_branch
    %31 = sbr.rel (0) target = $region37
  $region36: #{lenet_forward.3} parent=0 // pred_region
    _
  $region37: #{lenet_forward.3} parent=0 // pred_fallthru
    _
  %v33 = vld [vmem:[%s0] sm:$0xff]
  %v34 = vld [vmem:[%s0 + $0x8] sm:$0xff]
  %v35 = vld [vmem:[%s0 + $0x10] sm:$0xff]
  %v36 = vld [vmem:[%s0 + $0x18] sm:$0xff]
  %v37 = vld [vmem:[%s0 + $0x20] sm:$0xff]
  %v38 = vld [vmem:[%s0 + $0x28] sm:$0xff]
  %v39 = vld [vmem:[%s0 + $0x30] sm:$0xff]
  %v40 = vld [vmem:[%s0 + $0x38] sm:$0xff]
  %v41 = vld [vmem:[%s0 + $0x40] sm:$0xff]
  %v42 = vld [vmem:[%s0 + $0x48] sm:$0xff]
  %v43 = vld [vmem:[%s0 + $0x50] sm:$0xff]
  %v44 = vld [vmem:[%s0 + $0x58] sm:$0xff]
  %v45 = vld [vmem:[%s0 + $0x60] sm:$0xff]
  %v46 = vld [vmem:[%s0 + $0x68] sm:$0xff]
  %v47 = vld [vmem:[%s0 + $0x70] sm:$0xff]
  %v48 = vld [vmem:[%s0 + $0x78] sm:$0xff]
  %v49 = vld [vmem:[%s0 + $0x80] sm:$0xff]
  %v50 = vld [vmem:[%s0 + $0x88] sm:$0xff]
  %v51 = vld [vmem:[%s0 + $0x90] sm:$0xff]
  %v52 = vld [vmem:[%s0 + $0x98] sm:$0xff]
  %v53 = vld [vmem:[%s0 + $0xa0] sm:$0xff]
  %v54 = vld [vmem:[%s0 + $0xa8] sm:$0xff]
  %v55 = vld [vmem:[%s0 + $0xb0] sm:$0xff]
  %v56 = vld [vmem:[%s0 + $0xb8] sm:$0xff]
  %v57 = vld [vmem:[%s0 + $0xc0] sm:$0xff]
  %v58 = vld [vmem:[%s0 + $0xc8] sm:$0xff]
  %v59 = vld [vmem:[%s0 + $0xd0] sm:$0xff]
  %v60 = vld [vmem:[%s0 + $0xd8] sm:$0xff]
  %v61 = vld [vmem:[%s0 + $0xe0] sm:$0xff]
  %v62 = vld [vmem:[%s0 + $0xe8] sm:$0xff]
  %v63 = vld [vmem:[%s0 + $0xf0] sm:$0xff]
  %v64 = vld [vmem:[%s0 + $0xf8] sm:$0xff]
  %v65 = vld [vmem:[%s0 + $0x100] sm:$0xff]
  %v66 = vld [vmem:[%s0 + $0x108] sm:$0xff]
  %v67 = vld [vmem:[%s0 + $0x110] sm:$0xff]
  %v68 = vld [vmem:[%s0 + $0x118] sm:$0xff]
  %v69 = vld [vmem:[%s0 + $0x120] sm:$0xff]
  %v70 = vld [vmem:[%s0 + $0x128] sm:$0xff]
  %v71 = vld [vmem:[%s0 + $0x130] sm:$0xff]
  %v72 = vld [vmem:[%s0 + $0x138] sm:$0xff]
  %v73 = vld [vmem:[%s0 + $0x140] sm:$0xff]
  %v74 = vld [vmem:[%s0 + $0x148] sm:$0xff]
  %v75 = vld [vmem:[%s0 + $0x150] sm:$0xff]
  %v76 = vld [vmem:[%s0 + $0x158] sm:$0xff]
  %v77 = vld [vmem:[%s0 + $0x160] sm:$0xff]
  %v78 = vld [vmem:[%s0 + $0x168] sm:$0xff]
  %v79 = vld [vmem:[%s0 + $0x170] sm:$0xff]
  %v80 = vld [vmem:[%s0 + $0x178] sm:$0xff]
  %v81 = vld [vmem:[%s0 + $0x180] sm:$0xff]
  %v82 = vld [vmem:[%s0 + $0x188] sm:$0xff]
  %v83 = vld [vmem:[%s0 + $0x190] sm:$0xff]
  %v84 = vld [vmem:[%s0 + $0x198] sm:$0xff]
  %v85 = vld [vmem:[%s0 + $0x1a0] sm:$0xff]
  %v86 = vld [vmem:[%s0 + $0x1a8] sm:$0xff]
  %v87 = vld [vmem:[%s0 + $0x1b0] sm:$0xff]
  %v88 = vld [vmem:[%s0 + $0x1b8] sm:$0xff]
  %v89 = vld [vmem:[%s0 + $0x1c0] sm:$0xff]
  %v90 = vld [vmem:[%s0 + $0x1c8] sm:$0xff]
  %v91 = vld [vmem:[%s0 + $0x1d0] sm:$0xff]
  %v92 = vld [vmem:[%s0 + $0x1d8] sm:$0xff]
  %v93 = vld [vmem:[%s0 + $0x1e0] sm:$0xff]
  %v94 = vld [vmem:[%s0 + $0x1e8] sm:$0xff]
  %v95 = vld [vmem:[%s0 + $0x1f0] sm:$0xff]
  %v96 = vld [vmem:[%s0 + $0x1f8] sm:$0xff]
  %v97 = vld [vmem:[%s1] sm:$0xf]
  %v98 = vld [vmem:[%s1 + $0x4] sm:$0xf]
  %v99 = vld [vmem:[%s1 + $0x8] sm:$0xf]
  %v100 = vld [vmem:[%s1 + $0xc] sm:$0xf]
  %v101 = vld [vmem:[%s1 + $0x10] sm:$0xf]
  %v102 = vld [vmem:[%s1 + $0x14] sm:$0xf]
  %v103 = vld [vmem:[%s1 + $0x18] sm:$0xf]
  %v104 = vld [vmem:[%s1 + $0x1c] sm:$0xf]
  %v105 = vld [vmem:[%s1 + $0x20] sm:$0xf]
  %v106 = vld [vmem:[%s1 + $0x24] sm:$0xf]
  %v107 = vld [vmem:[%s1 + $0x28] sm:$0xf]
  %v108 = vld [vmem:[%s1 + $0x2c] sm:$0xf]
  %v109 = vld [vmem:[%s1 + $0x30] sm:$0xf]
  %v110 = vld [vmem:[%s1 + $0x34] sm:$0xf]
  %v111 = vld [vmem:[%s1 + $0x38] sm:$0xf]
  %v112 = vld [vmem:[%s1 + $0x3c] sm:$0xf]
  %v113 = vld [vmem:[%s1 + $0x40] sm:$0xf]
  %v114 = vld [vmem:[%s1 + $0x44] sm:$0xf]
  %v115 = vld [vmem:[%s1 + $0x48] sm:$0xf]
  %v116 = vld [vmem:[%s1 + $0x4c] sm:$0xf]
  %v117 = vld [vmem:[%s1 + $0x50] sm:$0xf]
  %v118 = vld [vmem:[%s1 + $0x54] sm:$0xf]
  %v119 = vld [vmem:[%s1 + $0x58] sm:$0xf]
  %v120 = vld [vmem:[%s1 + $0x5c] sm:$0xf]
  %v121 = vld [vmem:[%s1 + $0x60] sm:$0xf]
  %v122 = vld [vmem:[%s1 + $0x64] sm:$0xf]
  %v123 = vld [vmem:[%s1 + $0x68] sm:$0xf]
  %v124 = vld [vmem:[%s1 + $0x6c] sm:$0xf]
  %v125 = vld [vmem:[%s1 + $0x70] sm:$0xf]
  %v126 = vld [vmem:[%s1 + $0x74] sm:$0xf]
  %v127 = vld [vmem:[%s1 + $0x78] sm:$0xf]
  %v128 = vld [vmem:[%s1 + $0x7c] sm:$0xf]
  %v129 = vld [vmem:[%s2] sm:$0x1]
  %v131 = vlaneseq
  %v132 = vshrl.u32 %v131, 7
  %v133 = vsub.s32 0, %v132
  %v134 = vrot.slane %v129, %v133
  %v200 = vunpack.c.l.b16 %v33
  %v201 = vunpack.c.h.b16 %v33
  %v202 = vunpack.c.l.b16 %v34
  %v203 = vunpack.c.h.b16 %v34
  %v204 = vunpack.c.l.b16 %v35
  %v205 = vunpack.c.h.b16 %v35
  %v206 = vunpack.c.l.b16 %v36
  %v207 = vunpack.c.h.b16 %v36
  %v208 = vunpack.c.l.b16 %v37
  %v209 = vunpack.c.h.b16 %v37
  %v210 = vunpack.c.l.b16 %v38
  %v211 = vunpack.c.h.b16 %v38
  %v212 = vunpack.c.l.b16 %v39
  %v213 = vunpack.c.h.b16 %v39
  %v214 = vunpack.c.l.b16 %v40
  %v215 = vunpack.c.h.b16 %v40
  %v216 = vunpack.c.l.b16 %v41
  %v217 = vunpack.c.h.b16 %v41
  %v218 = vunpack.c.l.b16 %v42
  %v219 = vunpack.c.h.b16 %v42
  %v220 = vunpack.c.l.b16 %v43
  %v221 = vunpack.c.h.b16 %v43
  %v222 = vunpack.c.l.b16 %v44
  %v223 = vunpack.c.h.b16 %v44
  %v224 = vunpack.c.l.b16 %v45
  %v225 = vunpack.c.h.b16 %v45
  %v226 = vunpack.c.l.b16 %v46
  %v227 = vunpack.c.h.b16 %v46
  %v228 = vunpack.c.l.b16 %v47
  %v229 = vunpack.c.h.b16 %v47
  %v230 = vunpack.c.l.b16 %v48
  %v231 = vunpack.c.h.b16 %v48
  %v232 = vunpack.c.l.b16 %v49
  %v233 = vunpack.c.h.b16 %v49
  %v234 = vunpack.c.l.b16 %v50
  %v235 = vunpack.c.h.b16 %v50
  %v236 = vunpack.c.l.b16 %v51
  %v237 = vunpack.c.h.b16 %v51
  %v238 = vunpack.c.l.b16 %v52
  %v239 = vunpack.c.h.b16 %v52
  %v240 = vunpack.c.l.b16 %v53
  %v241 = vunpack.c.h.b16 %v53
  %v242 = vunpack.c.l.b16 %v54
  %v243 = vunpack.c.h.b16 %v54
  %v244 = vunpack.c.l.b16 %v55
  %v245 = vunpack.c.h.b16 %v55
  %v246 = vunpack.c.l.b16 %v56
  %v247 = vunpack.c.h.b16 %v56
  %v248 = vunpack.c.l.b16 %v57
  %v249 = vunpack.c.h.b16 %v57
  %v250 = vunpack.c.l.b16 %v58
  %v251 = vunpack.c.h.b16 %v58
  %v252 = vunpack.c.l.b16 %v59
  %v253 = vunpack.c.h.b16 %v59
  %v254 = vunpack.c.l.b16 %v60
  %v255 = vunpack.c.h.b16 %v60
  %v256 = vunpack.c.l.b16 %v61
  %v257 = vunpack.c.h.b16 %v61
  %v258 = vunpack.c.l.b16 %v62
  %v259 = vunpack.c.h.b16 %v62
  %v260 = vunpack.c.l.b16 %v63
  %v261 = vunpack.c.h.b16 %v63
  %v262 = vunpack.c.l.b16 %v64
  %v263 = vunpack.c.h.b16 %v64
  %v264 = vunpack.c.l.b16 %v65
  %v265 = vunpack.c.h.b16 %v65
  %v266 = vunpack.c.l.b16 %v66
  %v267 = vunpack.c.h.b16 %v66
  %v268 = vunpack.c.l.b16 %v67
  %v269 = vunpack.c.h.b16 %v67
  %v270 = vunpack.c.l.b16 %v68
  %v271 = vunpack.c.h.b16 %v68
  %v272 = vunpack.c.l.b16 %v69
  %v273 = vunpack.c.h.b16 %v69
  %v274 = vunpack.c.l.b16 %v70
  %v275 = vunpack.c.h.b16 %v70
  %v276 = vunpack.c.l.b16 %v71
  %v277 = vunpack.c.h.b16 %v71
  %v278 = vunpack.c.l.b16 %v72
  %v279 = vunpack.c.h.b16 %v72
  %v280 = vunpack.c.l.b16 %v73
  %v281 = vunpack.c.h.b16 %v73
  %v282 = vunpack.c.l.b16 %v74
  %v283 = vunpack.c.h.b16 %v74
  %v284 = vunpack.c.l.b16 %v75
  %v285 = vunpack.c.h.b16 %v75
  %v286 = vunpack.c.l.b16 %v76
  %v287 = vunpack.c.h.b16 %v76
  %v288 = vunpack.c.l.b16 %v77
  %v289 = vunpack.c.h.b16 %v77
  %v290 = vunpack.c.l.b16 %v78
  %v291 = vunpack.c.h.b16 %v78
  %v292 = vunpack.c.l.b16 %v79
  %v293 = vunpack.c.h.b16 %v79
  %v294 = vunpack.c.l.b16 %v80
  %v295 = vunpack.c.h.b16 %v80
  %v296 = vunpack.c.l.b16 %v81
  %v297 = vunpack.c.h.b16 %v81
  %v298 = vunpack.c.l.b16 %v82
  %v299 = vunpack.c.h.b16 %v82
  %v300 = vunpack.c.l.b16 %v83
  %v301 = vunpack.c.h.b16 %v83
  %v302 = vunpack.c.l.b16 %v84
  %v303 = vunpack.c.h.b16 %v84
  %v304 = vunpack.c.l.b16 %v85
  %v305 = vunpack.c.h.b16 %v85
  %v306 = vunpack.c.l.b16 %v86
  %v307 = vunpack.c.h.b16 %v86
  %v308 = vunpack.c.l.b16 %v87
  %v309 = vunpack.c.h.b16 %v87
  %v310 = vunpack.c.l.b16 %v88
  %v311 = vunpack.c.h.b16 %v88
  %v312 = vunpack.c.l.b16 %v89
  %v313 = vunpack.c.h.b16 %v89
  %v314 = vunpack.c.l.b16 %v90
  %v315 = vunpack.c.h.b16 %v90
  %v316 = vunpack.c.l.b16 %v91
  %v317 = vunpack.c.h.b16 %v91
  %v318 = vunpack.c.l.b16 %v92
  %v319 = vunpack.c.h.b16 %v92
  %v320 = vunpack.c.l.b16 %v93
  %v321 = vunpack.c.h.b16 %v93
  %v322 = vunpack.c.l.b16 %v94
  %v323 = vunpack.c.h.b16 %v94
  %v324 = vunpack.c.l.b16 %v95
  %v325 = vunpack.c.h.b16 %v95
  %v326 = vunpack.c.l.b16 %v96
  %v327 = vunpack.c.h.b16 %v96
  %v328 = vpack.c.b16 %v202, %v200
  %v329 = vpack.c.b16 %v203, %v201
  %v330 = vpack.c.b16 %v206, %v204
  %v331 = vpack.c.b16 %v207, %v205
  %v332 = vpack.c.b16 %v210, %v208
  %v333 = vpack.c.b16 %v211, %v209
  %v334 = vpack.c.b16 %v214, %v212
  %v335 = vpack.c.b16 %v215, %v213
  %v336 = vpack.c.b16 %v218, %v216
  %v337 = vpack.c.b16 %v219, %v217
  %v338 = vpack.c.b16 %v222, %v220
  %v339 = vpack.c.b16 %v223, %v221
  %v340 = vpack.c.b16 %v226, %v224
  %v341 = vpack.c.b16 %v227, %v225
  %v342 = vpack.c.b16 %v230, %v228
  %v343 = vpack.c.b16 %v231, %v229
  %v344 = vpack.c.b16 %v234, %v232
  %v345 = vpack.c.b16 %v235, %v233
  %v346 = vpack.c.b16 %v238, %v236
  %v347 = vpack.c.b16 %v239, %v237
  %v348 = vpack.c.b16 %v242, %v240
  %v349 = vpack.c.b16 %v243, %v241
  %v350 = vpack.c.b16 %v246, %v244
  %v351 = vpack.c.b16 %v247, %v245
  %v352 = vpack.c.b16 %v250, %v248
  %v353 = vpack.c.b16 %v251, %v249
  %v354 = vpack.c.b16 %v254, %v252
  %v355 = vpack.c.b16 %v255, %v253
  %v356 = vpack.c.b16 %v258, %v256
  %v357 = vpack.c.b16 %v259, %v257
  %v358 = vpack.c.b16 %v262, %v260
  %v359 = vpack.c.b16 %v263, %v261
  %v360 = vpack.c.b16 %v266, %v264
  %v361 = vpack.c.b16 %v267, %v265
  %v362 = vpack.c.b16 %v270, %v268
  %v363 = vpack.c.b16 %v271, %v269
  %v364 = vpack.c.b16 %v274, %v272
  %v365 = vpack.c.b16 %v275, %v273
  %v366 = vpack.c.b16 %v278, %v276
  %v367 = vpack.c.b16 %v279, %v277
  %v368 = vpack.c.b16 %v282, %v280
  %v369 = vpack.c.b16 %v283, %v281
  %v370 = vpack.c.b16 %v286, %v284
  %v371 = vpack.c.b16 %v287, %v285
  %v372 = vpack.c.b16 %v290, %v288
  %v373 = vpack.c.b16 %v291, %v289
  %v374 = vpack.c.b16 %v294, %v292
  %v375 = vpack.c.b16 %v295, %v293
  %v376 = vpack.c.b16 %v298, %v296
  %v377 = vpack.c.b16 %v299, %v297
  %v378 = vpack.c.b16 %v302, %v300
  %v379 = vpack.c.b16 %v303, %v301
  %v380 = vpack.c.b16 %v306, %v304
  %v381 = vpack.c.b16 %v307, %v305
  %v382 = vpack.c.b16 %v310, %v308
  %v383 = vpack.c.b16 %v311, %v309
  %v384 = vpack.c.b16 %v314, %v312
  %v385 = vpack.c.b16 %v315, %v313
  %v386 = vpack.c.b16 %v318, %v316
  %v387 = vpack.c.b16 %v319, %v317
  %v388 = vpack.c.b16 %v322, %v320
  %v389 = vpack.c.b16 %v323, %v321
  %v390 = vpack.c.b16 %v326, %v324
  %v391 = vpack.c.b16 %v327, %v325
  %v488 = vunpack.c.l.b16 %v97
  %v489 = vunpack.c.l.b16 %v98
  %v490 = vunpack.c.l.b16 %v99
  %v491 = vunpack.c.l.b16 %v100
  %v492 = vunpack.c.l.b16 %v101
  %v493 = vunpack.c.l.b16 %v102
  %v494 = vunpack.c.l.b16 %v103
  %v495 = vunpack.c.l.b16 %v104
  %v496 = vunpack.c.l.b16 %v105
  %v497 = vunpack.c.l.b16 %v106
  %v498 = vunpack.c.l.b16 %v107
  %v499 = vunpack.c.l.b16 %v108
  %v500 = vunpack.c.l.b16 %v109
  %v501 = vunpack.c.l.b16 %v110
  %v502 = vunpack.c.l.b16 %v111
  %v503 = vunpack.c.l.b16 %v112
  %v504 = vunpack.c.l.b16 %v113
  %v505 = vunpack.c.l.b16 %v114
  %v506 = vunpack.c.l.b16 %v115
  %v507 = vunpack.c.l.b16 %v116
  %v508 = vunpack.c.l.b16 %v117
  %v509 = vunpack.c.l.b16 %v118
  %v510 = vunpack.c.l.b16 %v119
  %v511 = vunpack.c.l.b16 %v120
  %v512 = vunpack.c.l.b16 %v121
  %v513 = vunpack.c.l.b16 %v122
  %v514 = vunpack.c.l.b16 %v123
  %v515 = vunpack.c.l.b16 %v124
  %v516 = vunpack.c.l.b16 %v125
  %v517 = vunpack.c.l.b16 %v126
  %v518 = vunpack.c.l.b16 %v127
  %v519 = vunpack.c.l.b16 %v128
  %v520 = vpack.c.b16 %v489, %v488
  %v521 = vpack.c.b16 %v491, %v490
  %v522 = vpack.c.b16 %v493, %v492
  %v523 = vpack.c.b16 %v495, %v494
  %v524 = vpack.c.b16 %v497, %v496
  %v525 = vpack.c.b16 %v499, %v498
  %v526 = vpack.c.b16 %v501, %v500
  %v527 = vpack.c.b16 %v503, %v502
  %v528 = vpack.c.b16 %v505, %v504
  %v529 = vpack.c.b16 %v507, %v506
  %v530 = vpack.c.b16 %v509, %v508
  %v531 = vpack.c.b16 %v511, %v510
  %v532 = vpack.c.b16 %v513, %v512
  %v533 = vpack.c.b16 %v515, %v514
  %v534 = vpack.c.b16 %v517, %v516
  %v535 = vpack.c.b16 %v519, %v518
  %552 = vmatprep.subr.bf16.mxu0 0
  %553 = vmatpush1.bf16.msra.mxu0 %v520
  %554 = vmatprep.subr.bf16.mxu0 0
  %555 = vmatpush1.bf16.msra.mxu0 %v521
  %556 = vmatprep.subr.bf16.mxu0 0
  %557 = vmatpush1.bf16.msra.mxu0 %v522
  %558 = vmatprep.subr.bf16.mxu0 0
  %559 = vmatpush1.bf16.msra.mxu0 %v523
  %560 = vmatprep.subr.bf16.mxu0 0
  %561 = vmatpush1.bf16.msra.mxu0 %v524
  %562 = vmatprep.subr.bf16.mxu0 0
  %563 = vmatpush1.bf16.msra.mxu0 %v525
  %564 = vmatprep.subr.bf16.mxu0 0
  %565 = vmatpush1.bf16.msra.mxu0 %v526
  %566 = vmatprep.subr.bf16.mxu0 0
  %567 = vmatpush1.bf16.msra.mxu0 %v527
  %568 = vmatprep.subr.bf16.mxu0 0
  %569 = vmatpush1.bf16.msra.mxu0 %v528
  %570 = vmatprep.subr.bf16.mxu0 0
  %571 = vmatpush1.bf16.msra.mxu0 %v529
  %572 = vmatprep.subr.bf16.mxu0 0
  %573 = vmatpush1.bf16.msra.mxu0 %v530
  %574 = vmatprep.subr.bf16.mxu0 0
  %575 = vmatpush1.bf16.msra.mxu0 %v531
  %576 = vmatprep.subr.bf16.mxu0 0
  %577 = vmatpush1.bf16.msra.mxu0 %v532
  %578 = vmatprep.subr.bf16.mxu0 0
  %579 = vmatpush1.bf16.msra.mxu0 %v533
  %580 = vmatprep.subr.bf16.mxu0 0
  %581 = vmatpush1.bf16.msra.mxu0 %v534
  %582 = vmatprep.subr.bf16.mxu0 0
  %583 = vmatpush1.bf16.msra.mxu0 %v535
  %584 = vmatprep.mubr.bf16.mxu0 %v329
  %585 = vmatmul.mubr.bf16.gmra.mrb[0].mxu0 %v328
  %v586 = vpop.f32.mrb[0].mxu0
  %v587 = vadd.f32 %v134, %v586
  %v588 = vpop.f32.mrb[0].mxu0
  %v589 = vpop.f32.mrb[0].mxu0
  %v590 = vadd.f32 %v134, %v589
  %v591 = vpop.f32.mrb[0].mxu0
  %592 = vmatprep.mubr.bf16.mxu0 %v331
  %593 = vmatmul.mubr.bf16.gmra.mrb[0].mxu0 %v330
  %v594 = vpop.f32.mrb[0].mxu0
  %v595 = vadd.f32 %v134, %v594
  %v596 = vpop.f32.mrb[0].mxu0
  %v597 = vpop.f32.mrb[0].mxu0
  %v598 = vadd.f32 %v134, %v597
  %v599 = vpop.f32.mrb[0].mxu0
  %600 = vmatprep.mubr.bf16.mxu0 %v333
  %601 = vmatmul.mubr.bf16.gmra.mrb[0].mxu0 %v332
  %v602 = vpop.f32.mrb[0].mxu0
  %v603 = vadd.f32 %v134, %v602
  %v604 = vpop.f32.mrb[0].mxu0
  %v605 = vpop.f32.mrb[0].mxu0
  %v606 = vadd.f32 %v134, %v605
  %v607 = vpop.f32.mrb[0].mxu0
  %608 = vmatprep.mubr.bf16.mxu0 %v335
  %609 = vmatmul.mubr.bf16.gmra.mrb[0].mxu0 %v334
  %v610 = vpop.f32.mrb[0].mxu0
  %v611 = vadd.f32 %v134, %v610
  %v612 = vpop.f32.mrb[0].mxu0
  %v613 = vpop.f32.mrb[0].mxu0
  %v614 = vadd.f32 %v134, %v613
  %v615 = vpop.f32.mrb[0].mxu0
  %616 = vmatprep.mubr.bf16.mxu0 %v337
  %617 = vmatmul.mubr.bf16.gmra.mrb[0].mxu0 %v336
  %v618 = vpop.f32.mrb[0].mxu0
  %v619 = vadd.f32 %v134, %v618
  %v620 = vpop.f32.mrb[0].mxu0
  %v621 = vpop.f32.mrb[0].mxu0
  %v622 = vadd.f32 %v134, %v621
  %v623 = vpop.f32.mrb[0].mxu0
  %624 = vmatprep.mubr.bf16.mxu0 %v339
  %625 = vmatmul.mubr.bf16.gmra.mrb[0].mxu0 %v338
  %v626 = vpop.f32.mrb[0].mxu0
  %v627 = vadd.f32 %v134, %v626
  %v628 = vpop.f32.mrb[0].mxu0
  %v629 = vpop.f32.mrb[0].mxu0
  %v630 = vadd.f32 %v134, %v629
  %v631 = vpop.f32.mrb[0].mxu0
  %632 = vmatprep.mubr.bf16.mxu0 %v341
  %633 = vmatmul.mubr.bf16.gmra.mrb[0].mxu0 %v340
  %v634 = vpop.f32.mrb[0].mxu0
  %v635 = vadd.f32 %v134, %v634
  %v636 = vpop.f32.mrb[0].mxu0
  %v637 = vpop.f32.mrb[0].mxu0
  %v638 = vadd.f32 %v134, %v637
  %v639 = vpop.f32.mrb[0].mxu0
  %640 = vmatprep.mubr.bf16.mxu0 %v343
  %641 = vmatmul.mubr.bf16.gmra.mrb[0].mxu0 %v342
  %v642 = vpop.f32.mrb[0].mxu0
  %v643 = vadd.f32 %v134, %v642
  %v644 = vpop.f32.mrb[0].mxu0
  %v645 = vpop.f32.mrb[0].mxu0
  %v646 = vadd.f32 %v134, %v645
  %v647 = vpop.f32.mrb[0].mxu0
  %648 = vmatprep.mubr.bf16.mxu0 %v345
  %649 = vmatmul.mubr.bf16.gmra.mrb[0].mxu0 %v344
  %v650 = vpop.f32.mrb[0].mxu0
  %v651 = vadd.f32 %v134, %v650
  %v652 = vpop.f32.mrb[0].mxu0
  %v653 = vpop.f32.mrb[0].mxu0
  %v654 = vadd.f32 %v134, %v653
  %v655 = vpop.f32.mrb[0].mxu0
  %656 = vmatprep.mubr.bf16.mxu0 %v347
  %657 = vmatmul.mubr.bf16.gmra.mrb[0].mxu0 %v346
  %v658 = vpop.f32.mrb[0].mxu0
  %v659 = vadd.f32 %v134, %v658
  %v660 = vpop.f32.mrb[0].mxu0
  %v661 = vpop.f32.mrb[0].mxu0
  %v662 = vadd.f32 %v134, %v661
  %v663 = vpop.f32.mrb[0].mxu0
  %664 = vmatprep.mubr.bf16.mxu0 %v349
  %665 = vmatmul.mubr.bf16.gmra.mrb[0].mxu0 %v348
  %v666 = vpop.f32.mrb[0].mxu0
  %v667 = vadd.f32 %v134, %v666
  %v668 = vpop.f32.mrb[0].mxu0
  %v669 = vpop.f32.mrb[0].mxu0
  %v670 = vadd.f32 %v134, %v669
  %v671 = vpop.f32.mrb[0].mxu0
  %672 = vmatprep.mubr.bf16.mxu0 %v351
  %673 = vmatmul.mubr.bf16.gmra.mrb[0].mxu0 %v350
  %v674 = vpop.f32.mrb[0].mxu0
  %v675 = vadd.f32 %v134, %v674
  %v676 = vpop.f32.mrb[0].mxu0
  %v677 = vpop.f32.mrb[0].mxu0
  %v678 = vadd.f32 %v134, %v677
  %v679 = vpop.f32.mrb[0].mxu0
  %680 = vmatprep.mubr.bf16.mxu0 %v353
  %681 = vmatmul.mubr.bf16.gmra.mrb[0].mxu0 %v352
  %v682 = vpop.f32.mrb[0].mxu0
  %v683 = vadd.f32 %v134, %v682
  %v684 = vpop.f32.mrb[0].mxu0
  %v685 = vpop.f32.mrb[0].mxu0
  %v686 = vadd.f32 %v134, %v685
  %v687 = vpop.f32.mrb[0].mxu0
  %688 = vmatprep.mubr.bf16.mxu0 %v355
  %689 = vmatmul.mubr.bf16.gmra.mrb[0].mxu0 %v354
  %v690 = vpop.f32.mrb[0].mxu0
  %v691 = vadd.f32 %v134, %v690
  %v692 = vpop.f32.mrb[0].mxu0
  %v693 = vpop.f32.mrb[0].mxu0
  %v694 = vadd.f32 %v134, %v693
  %v695 = vpop.f32.mrb[0].mxu0
  %696 = vmatprep.mubr.bf16.mxu0 %v357
  %697 = vmatmul.mubr.bf16.gmra.mrb[0].mxu0 %v356
  %v698 = vpop.f32.mrb[0].mxu0
  %v699 = vadd.f32 %v134, %v698
  %v700 = vpop.f32.mrb[0].mxu0
  %v701 = vpop.f32.mrb[0].mxu0
  %v702 = vadd.f32 %v134, %v701
  %v703 = vpop.f32.mrb[0].mxu0
  %704 = vmatprep.mubr.bf16.mxu0 %v359
  %705 = vmatmul.mubr.bf16.gmra.mrb[0].mxu0 %v358
  %v706 = vpop.f32.mrb[0].mxu0
  %v707 = vadd.f32 %v134, %v706
  %v708 = vpop.f32.mrb[0].mxu0
  %v709 = vpop.f32.mrb[0].mxu0
  %v710 = vadd.f32 %v134, %v709
  %v711 = vpop.f32.mrb[0].mxu0
  %712 = vmatprep.mubr.bf16.mxu0 %v361
  %713 = vmatmul.mubr.bf16.gmra.mrb[0].mxu0 %v360
  %v714 = vpop.f32.mrb[0].mxu0
  %v715 = vadd.f32 %v134, %v714
  %v716 = vpop.f32.mrb[0].mxu0
  %v717 = vpop.f32.mrb[0].mxu0
  %v718 = vadd.f32 %v134, %v717
  %v719 = vpop.f32.mrb[0].mxu0
  %720 = vmatprep.mubr.bf16.mxu0 %v363
  %721 = vmatmul.mubr.bf16.gmra.mrb[0].mxu0 %v362
  %v722 = vpop.f32.mrb[0].mxu0
  %v723 = vadd.f32 %v134, %v722
  %v724 = vpop.f32.mrb[0].mxu0
  %v725 = vpop.f32.mrb[0].mxu0
  %v726 = vadd.f32 %v134, %v725
  %v727 = vpop.f32.mrb[0].mxu0
  %728 = vmatprep.mubr.bf16.mxu0 %v365
  %729 = vmatmul.mubr.bf16.gmra.mrb[0].mxu0 %v364
  %v730 = vpop.f32.mrb[0].mxu0
  %v731 = vadd.f32 %v134, %v730
  %v732 = vpop.f32.mrb[0].mxu0
  %v733 = vpop.f32.mrb[0].mxu0
  %v734 = vadd.f32 %v134, %v733
  %v735 = vpop.f32.mrb[0].mxu0
  %736 = vmatprep.mubr.bf16.mxu0 %v367
  %737 = vmatmul.mubr.bf16.gmra.mrb[0].mxu0 %v366
  %v738 = vpop.f32.mrb[0].mxu0
  %v739 = vadd.f32 %v134, %v738
  %v740 = vpop.f32.mrb[0].mxu0
  %v741 = vpop.f32.mrb[0].mxu0
  %v742 = vadd.f32 %v134, %v741
  %v743 = vpop.f32.mrb[0].mxu0
  %744 = vmatprep.mubr.bf16.mxu0 %v369
  %745 = vmatmul.mubr.bf16.gmra.mrb[0].mxu0 %v368
  %v746 = vpop.f32.mrb[0].mxu0
  %v747 = vadd.f32 %v134, %v746
  %v748 = vpop.f32.mrb[0].mxu0
  %v749 = vpop.f32.mrb[0].mxu0
  %v750 = vadd.f32 %v134, %v749
  %v751 = vpop.f32.mrb[0].mxu0
  %752 = vmatprep.mubr.bf16.mxu0 %v371
  %753 = vmatmul.mubr.bf16.gmra.mrb[0].mxu0 %v370
  %v754 = vpop.f32.mrb[0].mxu0
  %v755 = vadd.f32 %v134, %v754
  %v756 = vpop.f32.mrb[0].mxu0
  %v757 = vpop.f32.mrb[0].mxu0
  %v758 = vadd.f32 %v134, %v757
  %v759 = vpop.f32.mrb[0].mxu0
  %760 = vmatprep.mubr.bf16.mxu0 %v373
  %761 = vmatmul.mubr.bf16.gmra.mrb[0].mxu0 %v372
  %v762 = vpop.f32.mrb[0].mxu0
  %v763 = vadd.f32 %v134, %v762
  %v764 = vpop.f32.mrb[0].mxu0
  %v765 = vpop.f32.mrb[0].mxu0
  %v766 = vadd.f32 %v134, %v765
  %v767 = vpop.f32.mrb[0].mxu0
  %768 = vmatprep.mubr.bf16.mxu0 %v375
  %769 = vmatmul.mubr.bf16.gmra.mrb[0].mxu0 %v374
  %v770 = vpop.f32.mrb[0].mxu0
  %v771 = vadd.f32 %v134, %v770
  %v772 = vpop.f32.mrb[0].mxu0
  %v773 = vpop.f32.mrb[0].mxu0
  %v774 = vadd.f32 %v134, %v773
  %v775 = vpop.f32.mrb[0].mxu0
  %776 = vmatprep.mubr.bf16.mxu0 %v377
  %777 = vmatmul.mubr.bf16.gmra.mrb[0].mxu0 %v376
  %v778 = vpop.f32.mrb[0].mxu0
  %v779 = vadd.f32 %v134, %v778
  %v780 = vpop.f32.mrb[0].mxu0
  %v781 = vpop.f32.mrb[0].mxu0
  %v782 = vadd.f32 %v134, %v781
  %v783 = vpop.f32.mrb[0].mxu0
  %784 = vmatprep.mubr.bf16.mxu0 %v379
  %785 = vmatmul.mubr.bf16.gmra.mrb[0].mxu0 %v378
  %v786 = vpop.f32.mrb[0].mxu0
  %v787 = vadd.f32 %v134, %v786
  %v788 = vpop.f32.mrb[0].mxu0
  %v789 = vpop.f32.mrb[0].mxu0
  %v790 = vadd.f32 %v134, %v789
  %v791 = vpop.f32.mrb[0].mxu0
  %792 = vmatprep.mubr.bf16.mxu0 %v381
  %793 = vmatmul.mubr.bf16.gmra.mrb[0].mxu0 %v380
  %v794 = vpop.f32.mrb[0].mxu0
  %v795 = vadd.f32 %v134, %v794
  %v796 = vpop.f32.mrb[0].mxu0
  %v797 = vpop.f32.mrb[0].mxu0
  %v798 = vadd.f32 %v134, %v797
  %v799 = vpop.f32.mrb[0].mxu0
  %800 = vmatprep.mubr.bf16.mxu0 %v383
  %801 = vmatmul.mubr.bf16.gmra.mrb[0].mxu0 %v382
  %v802 = vpop.f32.mrb[0].mxu0
  %v803 = vadd.f32 %v134, %v802
  %v804 = vpop.f32.mrb[0].mxu0
  %v805 = vpop.f32.mrb[0].mxu0
  %v806 = vadd.f32 %v134, %v805
  %v807 = vpop.f32.mrb[0].mxu0
  %808 = vmatprep.mubr.bf16.mxu0 %v385
  %809 = vmatmul.mubr.bf16.gmra.mrb[0].mxu0 %v384
  %v810 = vpop.f32.mrb[0].mxu0
  %v811 = vadd.f32 %v134, %v810
  %v812 = vpop.f32.mrb[0].mxu0
  %v813 = vpop.f32.mrb[0].mxu0
  %v814 = vadd.f32 %v134, %v813
  %v815 = vpop.f32.mrb[0].mxu0
  %816 = vmatprep.mubr.bf16.mxu0 %v387
  %817 = vmatmul.mubr.bf16.gmra.mrb[0].mxu0 %v386
  %v818 = vpop.f32.mrb[0].mxu0
  %v819 = vadd.f32 %v134, %v818
  %v820 = vpop.f32.mrb[0].mxu0
  %v821 = vpop.f32.mrb[0].mxu0
  %v822 = vadd.f32 %v134, %v821
  %v823 = vpop.f32.mrb[0].mxu0
  %824 = vmatprep.mubr.bf16.mxu0 %v389
  %825 = vmatmul.mubr.bf16.gmra.mrb[0].mxu0 %v388
  %v826 = vpop.f32.mrb[0].mxu0
  %v827 = vadd.f32 %v134, %v826
  %v828 = vpop.f32.mrb[0].mxu0
  %v829 = vpop.f32.mrb[0].mxu0
  %v830 = vadd.f32 %v134, %v829
  %v831 = vpop.f32.mrb[0].mxu0
  %832 = vmatprep.mubr.bf16.mxu0 %v391
  %833 = vmatmul.mubr.bf16.gmra.mrb[0].mxu0 %v390
  %v834 = vpop.f32.mrb[0].mxu0
  %v835 = vadd.f32 %v134, %v834
  %v836 = vpop.f32.mrb[0].mxu0
  %v837 = vpop.f32.mrb[0].mxu0
  %v838 = vadd.f32 %v134, %v837
  %v839 = vpop.f32.mrb[0].mxu0
  %840 = vdwg.mxu0
  %v841 = vmax.f32 %v587, 0.0
  %v842 = vmax.f32 %v590, 0.0
  %v843 = vmax.f32 %v595, 0.0
  %v844 = vmax.f32 %v598, 0.0
  %v845 = vmax.f32 %v603, 0.0
  %v846 = vmax.f32 %v606, 0.0
  %v847 = vmax.f32 %v611, 0.0
  %v848 = vmax.f32 %v614, 0.0
  %v849 = vmax.f32 %v619, 0.0
  %v850 = vmax.f32 %v622, 0.0
  %v851 = vmax.f32 %v627, 0.0
  %v852 = vmax.f32 %v630, 0.0
  %v853 = vmax.f32 %v635, 0.0
  %v854 = vmax.f32 %v638, 0.0
  %v855 = vmax.f32 %v643, 0.0
  %v856 = vmax.f32 %v646, 0.0
  %v857 = vmax.f32 %v651, 0.0
  %v858 = vmax.f32 %v654, 0.0
  %v859 = vmax.f32 %v659, 0.0
  %v860 = vmax.f32 %v662, 0.0
  %v861 = vmax.f32 %v667, 0.0
  %v862 = vmax.f32 %v670, 0.0
  %v863 = vmax.f32 %v675, 0.0
  %v864 = vmax.f32 %v678, 0.0
  %v865 = vmax.f32 %v683, 0.0
  %v866 = vmax.f32 %v686, 0.0
  %v867 = vmax.f32 %v691, 0.0
  %v868 = vmax.f32 %v694, 0.0
  %v869 = vmax.f32 %v699, 0.0
  %v870 = vmax.f32 %v702, 0.0
  %v871 = vmax.f32 %v707, 0.0
  %v872 = vmax.f32 %v710, 0.0
  %v873 = vmax.f32 %v715, 0.0
  %v874 = vmax.f32 %v718, 0.0
  %v875 = vmax.f32 %v723, 0.0
  %v876 = vmax.f32 %v726, 0.0
  %v877 = vmax.f32 %v731, 0.0
  %v878 = vmax.f32 %v734, 0.0
  %v879 = vmax.f32 %v739, 0.0
  %v880 = vmax.f32 %v742, 0.0
  %v881 = vmax.f32 %v747, 0.0
  %v882 = vmax.f32 %v750, 0.0
  %v883 = vmax.f32 %v755, 0.0
  %v884 = vmax.f32 %v758, 0.0
  %v885 = vmax.f32 %v763, 0.0
  %v886 = vmax.f32 %v766, 0.0
  %v887 = vmax.f32 %v771, 0.0
  %v888 = vmax.f32 %v774, 0.0
  %v889 = vmax.f32 %v779, 0.0
  %v890 = vmax.f32 %v782, 0.0
  %v891 = vmax.f32 %v787, 0.0
  %v892 = vmax.f32 %v790, 0.0
  %v893 = vmax.f32 %v795, 0.0
  %v894 = vmax.f32 %v798, 0.0
  %v895 = vmax.f32 %v803, 0.0
  %v896 = vmax.f32 %v806, 0.0
  %v897 = vmax.f32 %v811, 0.0
  %v898 = vmax.f32 %v814, 0.0
  %v899 = vmax.f32 %v819, 0.0
  %v900 = vmax.f32 %v822, 0.0
  %v901 = vmax.f32 %v827, 0.0
  %v902 = vmax.f32 %v830, 0.0
  %v903 = vmax.f32 %v835, 0.0
  %v904 = vmax.f32 %v838, 0.0
  %v969 = vcombine.high %v841, %v841
  %v971 = vunpack.c.l.s4 1983009808
  %v972 = vunpack.c.0.s8 %v971
  %v973 = vlaneseq
  %v974 = vshrl.u32 %v973, 7
  %v975 = vsub.s32 %v972, %v974
  %v976 = vrot.slane %v841, %v975
  %v978 = vunpack.c.l.s4 1983009808
  %v979 = vunpack.c.0.s8 %v978
  %v980 = vlaneseq
  %v981 = vshrl.u32 %v980, 7
  %v982 = vsub.s32 %v979, %v981
  %v983 = vrot.slane %v969, %v982
  %v984 = vcombine.high %v976, %v976
  %v985 = vcombine.high %v983, %v983
  %v986 = vcombine.high %v842, %v842
  %v988 = vunpack.c.l.s4 1983009808
  %v989 = vunpack.c.0.s8 %v988
  %v990 = vlaneseq
  %v991 = vshrl.u32 %v990, 7
  %v992 = vsub.s32 %v989, %v991
  %v993 = vrot.slane %v842, %v992
  %v995 = vunpack.c.l.s4 1983009808
  %v996 = vunpack.c.0.s8 %v995
  %v997 = vlaneseq
  %v998 = vshrl.u32 %v997, 7
  %v999 = vsub.s32 %v996, %v998
  %v1000 = vrot.slane %v986, %v999
  %v1001 = vcombine.high %v993, %v993
  %v1002 = vcombine.high %v1000, %v1000
  %v1003 = vcombine.high %v843, %v843
  %v1005 = vunpack.c.l.s4 1983009808
  %v1006 = vunpack.c.0.s8 %v1005
  %v1007 = vlaneseq
  %v1008 = vshrl.u32 %v1007, 7
  %v1009 = vsub.s32 %v1006, %v1008
  %v1010 = vrot.slane %v843, %v1009
  %v1012 = vunpack.c.l.s4 1983009808
  %v1013 = vunpack.c.0.s8 %v1012
  %v1014 = vlaneseq
  %v1015 = vshrl.u32 %v1014, 7
  %v1016 = vsub.s32 %v1013, %v1015
  %v1017 = vrot.slane %v1003, %v1016
  %v1018 = vcombine.high %v1010, %v1010
  %v1019 = vcombine.high %v1017, %v1017
  %v1020 = vcombine.high %v844, %v844
  %v1022 = vunpack.c.l.s4 1983009808
  %v1023 = vunpack.c.0.s8 %v1022
  %v1024 = vlaneseq
  %v1025 = vshrl.u32 %v1024, 7
  %v1026 = vsub.s32 %v1023, %v1025
  %v1027 = vrot.slane %v844, %v1026
  %v1029 = vunpack.c.l.s4 1983009808
  %v1030 = vunpack.c.0.s8 %v1029
  %v1031 = vlaneseq
  %v1032 = vshrl.u32 %v1031, 7
  %v1033 = vsub.s32 %v1030, %v1032
  %v1034 = vrot.slane %v1020, %v1033
  %v1035 = vcombine.high %v1027, %v1027
  %v1036 = vcombine.high %v1034, %v1034
  %v1037 = vcombine.high %v845, %v845
  %v1039 = vunpack.c.l.s4 1983009808
  %v1040 = vunpack.c.0.s8 %v1039
  %v1041 = vlaneseq
  %v1042 = vshrl.u32 %v1041, 7
  %v1043 = vsub.s32 %v1040, %v1042
  %v1044 = vrot.slane %v845, %v1043
  %v1046 = vunpack.c.l.s4 1983009808
  %v1047 = vunpack.c.0.s8 %v1046
  %v1048 = vlaneseq
  %v1049 = vshrl.u32 %v1048, 7
  %v1050 = vsub.s32 %v1047, %v1049
  %v1051 = vrot.slane %v1037, %v1050
  %v1052 = vcombine.high %v1044, %v1044
  %v1053 = vcombine.high %v1051, %v1051
  %v1054 = vcombine.high %v846, %v846
  %v1056 = vunpack.c.l.s4 1983009808
  %v1057 = vunpack.c.0.s8 %v1056
  %v1058 = vlaneseq
  %v1059 = vshrl.u32 %v1058, 7
  %v1060 = vsub.s32 %v1057, %v1059
  %v1061 = vrot.slane %v846, %v1060
  %v1063 = vunpack.c.l.s4 1983009808
  %v1064 = vunpack.c.0.s8 %v1063
  %v1065 = vlaneseq
  %v1066 = vshrl.u32 %v1065, 7
  %v1067 = vsub.s32 %v1064, %v1066
  %v1068 = vrot.slane %v1054, %v1067
  %v1069 = vcombine.high %v1061, %v1061
  %v1070 = vcombine.high %v1068, %v1068
  %v1071 = vcombine.high %v847, %v847
  %v1073 = vunpack.c.l.s4 1983009808
  %v1074 = vunpack.c.0.s8 %v1073
  %v1075 = vlaneseq
  %v1076 = vshrl.u32 %v1075, 7
  %v1077 = vsub.s32 %v1074, %v1076
  %v1078 = vrot.slane %v847, %v1077
  %v1080 = vunpack.c.l.s4 1983009808
  %v1081 = vunpack.c.0.s8 %v1080
  %v1082 = vlaneseq
  %v1083 = vshrl.u32 %v1082, 7
  %v1084 = vsub.s32 %v1081, %v1083
  %v1085 = vrot.slane %v1071, %v1084
  %v1086 = vcombine.high %v1078, %v1078
  %v1087 = vcombine.high %v1085, %v1085
  %v1088 = vcombine.high %v848, %v848
  %v1090 = vunpack.c.l.s4 1983009808
  %v1091 = vunpack.c.0.s8 %v1090
  %v1092 = vlaneseq
  %v1093 = vshrl.u32 %v1092, 7
  %v1094 = vsub.s32 %v1091, %v1093
  %v1095 = vrot.slane %v848, %v1094
  %v1097 = vunpack.c.l.s4 1983009808
  %v1098 = vunpack.c.0.s8 %v1097
  %v1099 = vlaneseq
  %v1100 = vshrl.u32 %v1099, 7
  %v1101 = vsub.s32 %v1098, %v1100
  %v1102 = vrot.slane %v1088, %v1101
  %v1103 = vcombine.high %v1095, %v1095
  %v1104 = vcombine.high %v1102, %v1102
  %v1105 = vcombine.high %v849, %v849
  %v1107 = vunpack.c.l.s4 1983009808
  %v1108 = vunpack.c.0.s8 %v1107
  %v1109 = vlaneseq
  %v1110 = vshrl.u32 %v1109, 7
  %v1111 = vsub.s32 %v1108, %v1110
  %v1112 = vrot.slane %v849, %v1111
  %v1114 = vunpack.c.l.s4 1983009808
  %v1115 = vunpack.c.0.s8 %v1114
  %v1116 = vlaneseq
  %v1117 = vshrl.u32 %v1116, 7
  %v1118 = vsub.s32 %v1115, %v1117
  %v1119 = vrot.slane %v1105, %v1118
  %v1120 = vcombine.high %v1112, %v1112
  %v1121 = vcombine.high %v1119, %v1119
  %v1122 = vcombine.high %v850, %v850
  %v1124 = vunpack.c.l.s4 1983009808
  %v1125 = vunpack.c.0.s8 %v1124
  %v1126 = vlaneseq
  %v1127 = vshrl.u32 %v1126, 7
  %v1128 = vsub.s32 %v1125, %v1127
  %v1129 = vrot.slane %v850, %v1128
  %v1131 = vunpack.c.l.s4 1983009808
  %v1132 = vunpack.c.0.s8 %v1131
  %v1133 = vlaneseq
  %v1134 = vshrl.u32 %v1133, 7
  %v1135 = vsub.s32 %v1132, %v1134
  %v1136 = vrot.slane %v1122, %v1135
  %v1137 = vcombine.high %v1129, %v1129
  %v1138 = vcombine.high %v1136, %v1136
  %v1139 = vcombine.high %v851, %v851
  %v1141 = vunpack.c.l.s4 1983009808
  %v1142 = vunpack.c.0.s8 %v1141
  %v1143 = vlaneseq
  %v1144 = vshrl.u32 %v1143, 7
  %v1145 = vsub.s32 %v1142, %v1144
  %v1146 = vrot.slane %v851, %v1145
  %v1148 = vunpack.c.l.s4 1983009808
  %v1149 = vunpack.c.0.s8 %v1148
  %v1150 = vlaneseq
  %v1151 = vshrl.u32 %v1150, 7
  %v1152 = vsub.s32 %v1149, %v1151
  %v1153 = vrot.slane %v1139, %v1152
  %v1154 = vcombine.high %v1146, %v1146
  %v1155 = vcombine.high %v1153, %v1153
  %v1156 = vcombine.high %v852, %v852
  %v1158 = vunpack.c.l.s4 1983009808
  %v1159 = vunpack.c.0.s8 %v1158
  %v1160 = vlaneseq
  %v1161 = vshrl.u32 %v1160, 7
  %v1162 = vsub.s32 %v1159, %v1161
  %v1163 = vrot.slane %v852, %v1162
  %v1165 = vunpack.c.l.s4 1983009808
  %v1166 = vunpack.c.0.s8 %v1165
  %v1167 = vlaneseq
  %v1168 = vshrl.u32 %v1167, 7
  %v1169 = vsub.s32 %v1166, %v1168
  %v1170 = vrot.slane %v1156, %v1169
  %v1171 = vcombine.high %v1163, %v1163
  %v1172 = vcombine.high %v1170, %v1170
  %v1173 = vcombine.high %v853, %v853
  %v1175 = vunpack.c.l.s4 1983009808
  %v1176 = vunpack.c.0.s8 %v1175
  %v1177 = vlaneseq
  %v1178 = vshrl.u32 %v1177, 7
  %v1179 = vsub.s32 %v1176, %v1178
  %v1180 = vrot.slane %v853, %v1179
  %v1182 = vunpack.c.l.s4 1983009808
  %v1183 = vunpack.c.0.s8 %v1182
  %v1184 = vlaneseq
  %v1185 = vshrl.u32 %v1184, 7
  %v1186 = vsub.s32 %v1183, %v1185
  %v1187 = vrot.slane %v1173, %v1186
  %v1188 = vcombine.high %v1180, %v1180
  %v1189 = vcombine.high %v1187, %v1187
  %v1190 = vcombine.high %v854, %v854
  %v1192 = vunpack.c.l.s4 1983009808
  %v1193 = vunpack.c.0.s8 %v1192
  %v1194 = vlaneseq
  %v1195 = vshrl.u32 %v1194, 7
  %v1196 = vsub.s32 %v1193, %v1195
  %v1197 = vrot.slane %v854, %v1196
  %v1199 = vunpack.c.l.s4 1983009808
  %v1200 = vunpack.c.0.s8 %v1199
  %v1201 = vlaneseq
  %v1202 = vshrl.u32 %v1201, 7
  %v1203 = vsub.s32 %v1200, %v1202
  %v1204 = vrot.slane %v1190, %v1203
  %v1205 = vcombine.high %v1197, %v1197
  %v1206 = vcombine.high %v1204, %v1204
  %v1207 = vcombine.high %v855, %v855
  %v1209 = vunpack.c.l.s4 1983009808
  %v1210 = vunpack.c.0.s8 %v1209
  %v1211 = vlaneseq
  %v1212 = vshrl.u32 %v1211, 7
  %v1213 = vsub.s32 %v1210, %v1212
  %v1214 = vrot.slane %v855, %v1213
  %v1216 = vunpack.c.l.s4 1983009808
  %v1217 = vunpack.c.0.s8 %v1216
  %v1218 = vlaneseq
  %v1219 = vshrl.u32 %v1218, 7
  %v1220 = vsub.s32 %v1217, %v1219
  %v1221 = vrot.slane %v1207, %v1220
  %v1222 = vcombine.high %v1214, %v1214
  %v1223 = vcombine.high %v1221, %v1221
  %v1224 = vcombine.high %v856, %v856
  %v1226 = vunpack.c.l.s4 1983009808
  %v1227 = vunpack.c.0.s8 %v1226
  %v1228 = vlaneseq
  %v1229 = vshrl.u32 %v1228, 7
  %v1230 = vsub.s32 %v1227, %v1229
  %v1231 = vrot.slane %v856, %v1230
  %v1233 = vunpack.c.l.s4 1983009808
  %v1234 = vunpack.c.0.s8 %v1233
  %v1235 = vlaneseq
  %v1236 = vshrl.u32 %v1235, 7
  %v1237 = vsub.s32 %v1234, %v1236
  %v1238 = vrot.slane %v1224, %v1237
  %v1239 = vcombine.high %v1231, %v1231
  %v1240 = vcombine.high %v1238, %v1238
  %v1241 = vcombine.high %v857, %v857
  %v1243 = vunpack.c.l.s4 1983009808
  %v1244 = vunpack.c.0.s8 %v1243
  %v1245 = vlaneseq
  %v1246 = vshrl.u32 %v1245, 7
  %v1247 = vsub.s32 %v1244, %v1246
  %v1248 = vrot.slane %v857, %v1247
  %v1250 = vunpack.c.l.s4 1983009808
  %v1251 = vunpack.c.0.s8 %v1250
  %v1252 = vlaneseq
  %v1253 = vshrl.u32 %v1252, 7
  %v1254 = vsub.s32 %v1251, %v1253
  %v1255 = vrot.slane %v1241, %v1254
  %v1256 = vcombine.high %v1248, %v1248
  %v1257 = vcombine.high %v1255, %v1255
  %v1258 = vcombine.high %v858, %v858
  %v1260 = vunpack.c.l.s4 1983009808
  %v1261 = vunpack.c.0.s8 %v1260
  %v1262 = vlaneseq
  %v1263 = vshrl.u32 %v1262, 7
  %v1264 = vsub.s32 %v1261, %v1263
  %v1265 = vrot.slane %v858, %v1264
  %v1267 = vunpack.c.l.s4 1983009808
  %v1268 = vunpack.c.0.s8 %v1267
  %v1269 = vlaneseq
  %v1270 = vshrl.u32 %v1269, 7
  %v1271 = vsub.s32 %v1268, %v1270
  %v1272 = vrot.slane %v1258, %v1271
  %v1273 = vcombine.high %v1265, %v1265
  %v1274 = vcombine.high %v1272, %v1272
  %v1275 = vcombine.high %v859, %v859
  %v1277 = vunpack.c.l.s4 1983009808
  %v1278 = vunpack.c.0.s8 %v1277
  %v1279 = vlaneseq
  %v1280 = vshrl.u32 %v1279, 7
  %v1281 = vsub.s32 %v1278, %v1280
  %v1282 = vrot.slane %v859, %v1281
  %v1284 = vunpack.c.l.s4 1983009808
  %v1285 = vunpack.c.0.s8 %v1284
  %v1286 = vlaneseq
  %v1287 = vshrl.u32 %v1286, 7
  %v1288 = vsub.s32 %v1285, %v1287
  %v1289 = vrot.slane %v1275, %v1288
  %v1290 = vcombine.high %v1282, %v1282
  %v1291 = vcombine.high %v1289, %v1289
  %v1292 = vcombine.high %v860, %v860
  %v1294 = vunpack.c.l.s4 1983009808
  %v1295 = vunpack.c.0.s8 %v1294
  %v1296 = vlaneseq
  %v1297 = vshrl.u32 %v1296, 7
  %v1298 = vsub.s32 %v1295, %v1297
  %v1299 = vrot.slane %v860, %v1298
  %v1301 = vunpack.c.l.s4 1983009808
  %v1302 = vunpack.c.0.s8 %v1301
  %v1303 = vlaneseq
  %v1304 = vshrl.u32 %v1303, 7
  %v1305 = vsub.s32 %v1302, %v1304
  %v1306 = vrot.slane %v1292, %v1305
  %v1307 = vcombine.high %v1299, %v1299
  %v1308 = vcombine.high %v1306, %v1306
  %v1309 = vcombine.high %v861, %v861
  %v1311 = vunpack.c.l.s4 1983009808
  %v1312 = vunpack.c.0.s8 %v1311
  %v1313 = vlaneseq
  %v1314 = vshrl.u32 %v1313, 7
  %v1315 = vsub.s32 %v1312, %v1314
  %v1316 = vrot.slane %v861, %v1315
  %v1318 = vunpack.c.l.s4 1983009808
  %v1319 = vunpack.c.0.s8 %v1318
  %v1320 = vlaneseq
  %v1321 = vshrl.u32 %v1320, 7
  %v1322 = vsub.s32 %v1319, %v1321
  %v1323 = vrot.slane %v1309, %v1322
  %v1324 = vcombine.high %v1316, %v1316
  %v1325 = vcombine.high %v1323, %v1323
  %v1326 = vcombine.high %v862, %v862
  %v1328 = vunpack.c.l.s4 1983009808
  %v1329 = vunpack.c.0.s8 %v1328
  %v1330 = vlaneseq
  %v1331 = vshrl.u32 %v1330, 7
  %v1332 = vsub.s32 %v1329, %v1331
  %v1333 = vrot.slane %v862, %v1332
  %v1335 = vunpack.c.l.s4 1983009808
  %v1336 = vunpack.c.0.s8 %v1335
  %v1337 = vlaneseq
  %v1338 = vshrl.u32 %v1337, 7
  %v1339 = vsub.s32 %v1336, %v1338
  %v1340 = vrot.slane %v1326, %v1339
  %v1341 = vcombine.high %v1333, %v1333
  %v1342 = vcombine.high %v1340, %v1340
  %v1343 = vcombine.high %v863, %v863
  %v1345 = vunpack.c.l.s4 1983009808
  %v1346 = vunpack.c.0.s8 %v1345
  %v1347 = vlaneseq
  %v1348 = vshrl.u32 %v1347, 7
  %v1349 = vsub.s32 %v1346, %v1348
  %v1350 = vrot.slane %v863, %v1349
  %v1352 = vunpack.c.l.s4 1983009808
  %v1353 = vunpack.c.0.s8 %v1352
  %v1354 = vlaneseq
  %v1355 = vshrl.u32 %v1354, 7
  %v1356 = vsub.s32 %v1353, %v1355
  %v1357 = vrot.slane %v1343, %v1356
  %v1358 = vcombine.high %v1350, %v1350
  %v1359 = vcombine.high %v1357, %v1357
  %v1360 = vcombine.high %v864, %v864
  %v1362 = vunpack.c.l.s4 1983009808
  %v1363 = vunpack.c.0.s8 %v1362
  %v1364 = vlaneseq
  %v1365 = vshrl.u32 %v1364, 7
  %v1366 = vsub.s32 %v1363, %v1365
  %v1367 = vrot.slane %v864, %v1366
  %v1369 = vunpack.c.l.s4 1983009808
  %v1370 = vunpack.c.0.s8 %v1369
  %v1371 = vlaneseq
  %v1372 = vshrl.u32 %v1371, 7
  %v1373 = vsub.s32 %v1370, %v1372
  %v1374 = vrot.slane %v1360, %v1373
  %v1375 = vcombine.high %v1367, %v1367
  %v1376 = vcombine.high %v1374, %v1374
  %v1377 = vcombine.high %v865, %v865
  %v1379 = vunpack.c.l.s4 1983009808
  %v1380 = vunpack.c.0.s8 %v1379
  %v1381 = vlaneseq
  %v1382 = vshrl.u32 %v1381, 7
  %v1383 = vsub.s32 %v1380, %v1382
  %v1384 = vrot.slane %v865, %v1383
  %v1386 = vunpack.c.l.s4 1983009808
  %v1387 = vunpack.c.0.s8 %v1386
  %v1388 = vlaneseq
  %v1389 = vshrl.u32 %v1388, 7
  %v1390 = vsub.s32 %v1387, %v1389
  %v1391 = vrot.slane %v1377, %v1390
  %v1392 = vcombine.high %v1384, %v1384
  %v1393 = vcombine.high %v1391, %v1391
  %v1394 = vcombine.high %v866, %v866
  %v1396 = vunpack.c.l.s4 1983009808
  %v1397 = vunpack.c.0.s8 %v1396
  %v1398 = vlaneseq
  %v1399 = vshrl.u32 %v1398, 7
  %v1400 = vsub.s32 %v1397, %v1399
  %v1401 = vrot.slane %v866, %v1400
  %v1403 = vunpack.c.l.s4 1983009808
  %v1404 = vunpack.c.0.s8 %v1403
  %v1405 = vlaneseq
  %v1406 = vshrl.u32 %v1405, 7
  %v1407 = vsub.s32 %v1404, %v1406
  %v1408 = vrot.slane %v1394, %v1407
  %v1409 = vcombine.high %v1401, %v1401
  %v1410 = vcombine.high %v1408, %v1408
  %v1411 = vcombine.high %v867, %v867
  %v1413 = vunpack.c.l.s4 1983009808
  %v1414 = vunpack.c.0.s8 %v1413
  %v1415 = vlaneseq
  %v1416 = vshrl.u32 %v1415, 7
  %v1417 = vsub.s32 %v1414, %v1416
  %v1418 = vrot.slane %v867, %v1417
  %v1420 = vunpack.c.l.s4 1983009808
  %v1421 = vunpack.c.0.s8 %v1420
  %v1422 = vlaneseq
  %v1423 = vshrl.u32 %v1422, 7
  %v1424 = vsub.s32 %v1421, %v1423
  %v1425 = vrot.slane %v1411, %v1424
  %v1426 = vcombine.high %v1418, %v1418
  %v1427 = vcombine.high %v1425, %v1425
  %v1428 = vcombine.high %v868, %v868
  %v1430 = vunpack.c.l.s4 1983009808
  %v1431 = vunpack.c.0.s8 %v1430
  %v1432 = vlaneseq
  %v1433 = vshrl.u32 %v1432, 7
  %v1434 = vsub.s32 %v1431, %v1433
  %v1435 = vrot.slane %v868, %v1434
  %v1437 = vunpack.c.l.s4 1983009808
  %v1438 = vunpack.c.0.s8 %v1437
  %v1439 = vlaneseq
  %v1440 = vshrl.u32 %v1439, 7
  %v1441 = vsub.s32 %v1438, %v1440
  %v1442 = vrot.slane %v1428, %v1441
  %v1443 = vcombine.high %v1435, %v1435
  %v1444 = vcombine.high %v1442, %v1442
  %v1445 = vcombine.high %v869, %v869
  %v1447 = vunpack.c.l.s4 1983009808
  %v1448 = vunpack.c.0.s8 %v1447
  %v1449 = vlaneseq
  %v1450 = vshrl.u32 %v1449, 7
  %v1451 = vsub.s32 %v1448, %v1450
  %v1452 = vrot.slane %v869, %v1451
  %v1454 = vunpack.c.l.s4 1983009808
  %v1455 = vunpack.c.0.s8 %v1454
  %v1456 = vlaneseq
  %v1457 = vshrl.u32 %v1456, 7
  %v1458 = vsub.s32 %v1455, %v1457
  %v1459 = vrot.slane %v1445, %v1458
  %v1460 = vcombine.high %v1452, %v1452
  %v1461 = vcombine.high %v1459, %v1459
  %v1462 = vcombine.high %v870, %v870
  %v1464 = vunpack.c.l.s4 1983009808
  %v1465 = vunpack.c.0.s8 %v1464
  %v1466 = vlaneseq
  %v1467 = vshrl.u32 %v1466, 7
  %v1468 = vsub.s32 %v1465, %v1467
  %v1469 = vrot.slane %v870, %v1468
  %v1471 = vunpack.c.l.s4 1983009808
  %v1472 = vunpack.c.0.s8 %v1471
  %v1473 = vlaneseq
  %v1474 = vshrl.u32 %v1473, 7
  %v1475 = vsub.s32 %v1472, %v1474
  %v1476 = vrot.slane %v1462, %v1475
  %v1477 = vcombine.high %v1469, %v1469
  %v1478 = vcombine.high %v1476, %v1476
  %v1479 = vcombine.high %v871, %v871
  %v1481 = vunpack.c.l.s4 1983009808
  %v1482 = vunpack.c.0.s8 %v1481
  %v1483 = vlaneseq
  %v1484 = vshrl.u32 %v1483, 7
  %v1485 = vsub.s32 %v1482, %v1484
  %v1486 = vrot.slane %v871, %v1485
  %v1488 = vunpack.c.l.s4 1983009808
  %v1489 = vunpack.c.0.s8 %v1488
  %v1490 = vlaneseq
  %v1491 = vshrl.u32 %v1490, 7
  %v1492 = vsub.s32 %v1489, %v1491
  %v1493 = vrot.slane %v1479, %v1492
  %v1494 = vcombine.high %v1486, %v1486
  %v1495 = vcombine.high %v1493, %v1493
  %v1496 = vcombine.high %v872, %v872
  %v1498 = vunpack.c.l.s4 1983009808
  %v1499 = vunpack.c.0.s8 %v1498
  %v1500 = vlaneseq
  %v1501 = vshrl.u32 %v1500, 7
  %v1502 = vsub.s32 %v1499, %v1501
  %v1503 = vrot.slane %v872, %v1502
  %v1505 = vunpack.c.l.s4 1983009808
  %v1506 = vunpack.c.0.s8 %v1505
  %v1507 = vlaneseq
  %v1508 = vshrl.u32 %v1507, 7
  %v1509 = vsub.s32 %v1506, %v1508
  %v1510 = vrot.slane %v1496, %v1509
  %v1511 = vcombine.high %v1503, %v1503
  %v1512 = vcombine.high %v1510, %v1510
  %v1513 = vcombine.high %v873, %v873
  %v1515 = vunpack.c.l.s4 1983009808
  %v1516 = vunpack.c.0.s8 %v1515
  %v1517 = vlaneseq
  %v1518 = vshrl.u32 %v1517, 7
  %v1519 = vsub.s32 %v1516, %v1518
  %v1520 = vrot.slane %v873, %v1519
  %v1522 = vunpack.c.l.s4 1983009808
  %v1523 = vunpack.c.0.s8 %v1522
  %v1524 = vlaneseq
  %v1525 = vshrl.u32 %v1524, 7
  %v1526 = vsub.s32 %v1523, %v1525
  %v1527 = vrot.slane %v1513, %v1526
  %v1528 = vcombine.high %v1520, %v1520
  %v1529 = vcombine.high %v1527, %v1527
  %v1530 = vcombine.high %v874, %v874
  %v1532 = vunpack.c.l.s4 1983009808
  %v1533 = vunpack.c.0.s8 %v1532
  %v1534 = vlaneseq
  %v1535 = vshrl.u32 %v1534, 7
  %v1536 = vsub.s32 %v1533, %v1535
  %v1537 = vrot.slane %v874, %v1536
  %v1539 = vunpack.c.l.s4 1983009808
  %v1540 = vunpack.c.0.s8 %v1539
  %v1541 = vlaneseq
  %v1542 = vshrl.u32 %v1541, 7
  %v1543 = vsub.s32 %v1540, %v1542
  %v1544 = vrot.slane %v1530, %v1543
  %v1545 = vcombine.high %v1537, %v1537
  %v1546 = vcombine.high %v1544, %v1544
  %v1547 = vcombine.high %v875, %v875
  %v1549 = vunpack.c.l.s4 1983009808
  %v1550 = vunpack.c.0.s8 %v1549
  %v1551 = vlaneseq
  %v1552 = vshrl.u32 %v1551, 7
  %v1553 = vsub.s32 %v1550, %v1552
  %v1554 = vrot.slane %v875, %v1553
  %v1556 = vunpack.c.l.s4 1983009808
  %v1557 = vunpack.c.0.s8 %v1556
  %v1558 = vlaneseq
  %v1559 = vshrl.u32 %v1558, 7
  %v1560 = vsub.s32 %v1557, %v1559
  %v1561 = vrot.slane %v1547, %v1560
  %v1562 = vcombine.high %v1554, %v1554
  %v1563 = vcombine.high %v1561, %v1561
  %v1564 = vcombine.high %v876, %v876
  %v1566 = vunpack.c.l.s4 1983009808
  %v1567 = vunpack.c.0.s8 %v1566
  %v1568 = vlaneseq
  %v1569 = vshrl.u32 %v1568, 7
  %v1570 = vsub.s32 %v1567, %v1569
  %v1571 = vrot.slane %v876, %v1570
  %v1573 = vunpack.c.l.s4 1983009808
  %v1574 = vunpack.c.0.s8 %v1573
  %v1575 = vlaneseq
  %v1576 = vshrl.u32 %v1575, 7
  %v1577 = vsub.s32 %v1574, %v1576
  %v1578 = vrot.slane %v1564, %v1577
  %v1579 = vcombine.high %v1571, %v1571
  %v1580 = vcombine.high %v1578, %v1578
  %v1581 = vcombine.high %v877, %v877
  %v1583 = vunpack.c.l.s4 1983009808
  %v1584 = vunpack.c.0.s8 %v1583
  %v1585 = vlaneseq
  %v1586 = vshrl.u32 %v1585, 7
  %v1587 = vsub.s32 %v1584, %v1586
  %v1588 = vrot.slane %v877, %v1587
  %v1590 = vunpack.c.l.s4 1983009808
  %v1591 = vunpack.c.0.s8 %v1590
  %v1592 = vlaneseq
  %v1593 = vshrl.u32 %v1592, 7
  %v1594 = vsub.s32 %v1591, %v1593
  %v1595 = vrot.slane %v1581, %v1594
  %v1596 = vcombine.high %v1588, %v1588
  %v1597 = vcombine.high %v1595, %v1595
  %v1598 = vcombine.high %v878, %v878
  %v1600 = vunpack.c.l.s4 1983009808
  %v1601 = vunpack.c.0.s8 %v1600
  %v1602 = vlaneseq
  %v1603 = vshrl.u32 %v1602, 7
  %v1604 = vsub.s32 %v1601, %v1603
  %v1605 = vrot.slane %v878, %v1604
  %v1607 = vunpack.c.l.s4 1983009808
  %v1608 = vunpack.c.0.s8 %v1607
  %v1609 = vlaneseq
  %v1610 = vshrl.u32 %v1609, 7
  %v1611 = vsub.s32 %v1608, %v1610
  %v1612 = vrot.slane %v1598, %v1611
  %v1613 = vcombine.high %v1605, %v1605
  %v1614 = vcombine.high %v1612, %v1612
  %v1615 = vcombine.high %v879, %v879
  %v1617 = vunpack.c.l.s4 1983009808
  %v1618 = vunpack.c.0.s8 %v1617
  %v1619 = vlaneseq
  %v1620 = vshrl.u32 %v1619, 7
  %v1621 = vsub.s32 %v1618, %v1620
  %v1622 = vrot.slane %v879, %v1621
  %v1624 = vunpack.c.l.s4 1983009808
  %v1625 = vunpack.c.0.s8 %v1624
  %v1626 = vlaneseq
  %v1627 = vshrl.u32 %v1626, 7
  %v1628 = vsub.s32 %v1625, %v1627
  %v1629 = vrot.slane %v1615, %v1628
  %v1630 = vcombine.high %v1622, %v1622
  %v1631 = vcombine.high %v1629, %v1629
  %v1632 = vcombine.high %v880, %v880
  %v1634 = vunpack.c.l.s4 1983009808
  %v1635 = vunpack.c.0.s8 %v1634
  %v1636 = vlaneseq
  %v1637 = vshrl.u32 %v1636, 7
  %v1638 = vsub.s32 %v1635, %v1637
  %v1639 = vrot.slane %v880, %v1638
  %v1641 = vunpack.c.l.s4 1983009808
  %v1642 = vunpack.c.0.s8 %v1641
  %v1643 = vlaneseq
  %v1644 = vshrl.u32 %v1643, 7
  %v1645 = vsub.s32 %v1642, %v1644
  %v1646 = vrot.slane %v1632, %v1645
  %v1647 = vcombine.high %v1639, %v1639
  %v1648 = vcombine.high %v1646, %v1646
  %v1649 = vcombine.high %v881, %v881
  %v1651 = vunpack.c.l.s4 1983009808
  %v1652 = vunpack.c.0.s8 %v1651
  %v1653 = vlaneseq
  %v1654 = vshrl.u32 %v1653, 7
  %v1655 = vsub.s32 %v1652, %v1654
  %v1656 = vrot.slane %v881, %v1655
  %v1658 = vunpack.c.l.s4 1983009808
  %v1659 = vunpack.c.0.s8 %v1658
  %v1660 = vlaneseq
  %v1661 = vshrl.u32 %v1660, 7
  %v1662 = vsub.s32 %v1659, %v1661
  %v1663 = vrot.slane %v1649, %v1662
  %v1664 = vcombine.high %v1656, %v1656
  %v1665 = vcombine.high %v1663, %v1663
  %v1666 = vcombine.high %v882, %v882
  %v1668 = vunpack.c.l.s4 1983009808
  %v1669 = vunpack.c.0.s8 %v1668
  %v1670 = vlaneseq
  %v1671 = vshrl.u32 %v1670, 7
  %v1672 = vsub.s32 %v1669, %v1671
  %v1673 = vrot.slane %v882, %v1672
  %v1675 = vunpack.c.l.s4 1983009808
  %v1676 = vunpack.c.0.s8 %v1675
  %v1677 = vlaneseq
  %v1678 = vshrl.u32 %v1677, 7
  %v1679 = vsub.s32 %v1676, %v1678
  %v1680 = vrot.slane %v1666, %v1679
  %v1681 = vcombine.high %v1673, %v1673
  %v1682 = vcombine.high %v1680, %v1680
  %v1683 = vcombine.high %v883, %v883
  %v1685 = vunpack.c.l.s4 1983009808
  %v1686 = vunpack.c.0.s8 %v1685
  %v1687 = vlaneseq
  %v1688 = vshrl.u32 %v1687, 7
  %v1689 = vsub.s32 %v1686, %v1688
  %v1690 = vrot.slane %v883, %v1689
  %v1692 = vunpack.c.l.s4 1983009808
  %v1693 = vunpack.c.0.s8 %v1692
  %v1694 = vlaneseq
  %v1695 = vshrl.u32 %v1694, 7
  %v1696 = vsub.s32 %v1693, %v1695
  %v1697 = vrot.slane %v1683, %v1696
  %v1698 = vcombine.high %v1690, %v1690
  %v1699 = vcombine.high %v1697, %v1697
  %v1700 = vcombine.high %v884, %v884
  %v1702 = vunpack.c.l.s4 1983009808
  %v1703 = vunpack.c.0.s8 %v1702
  %v1704 = vlaneseq
  %v1705 = vshrl.u32 %v1704, 7
  %v1706 = vsub.s32 %v1703, %v1705
  %v1707 = vrot.slane %v884, %v1706
  %v1709 = vunpack.c.l.s4 1983009808
  %v1710 = vunpack.c.0.s8 %v1709
  %v1711 = vlaneseq
  %v1712 = vshrl.u32 %v1711, 7
  %v1713 = vsub.s32 %v1710, %v1712
  %v1714 = vrot.slane %v1700, %v1713
  %v1715 = vcombine.high %v1707, %v1707
  %v1716 = vcombine.high %v1714, %v1714
  %v1717 = vcombine.high %v885, %v885
  %v1719 = vunpack.c.l.s4 1983009808
  %v1720 = vunpack.c.0.s8 %v1719
  %v1721 = vlaneseq
  %v1722 = vshrl.u32 %v1721, 7
  %v1723 = vsub.s32 %v1720, %v1722
  %v1724 = vrot.slane %v885, %v1723
  %v1726 = vunpack.c.l.s4 1983009808
  %v1727 = vunpack.c.0.s8 %v1726
  %v1728 = vlaneseq
  %v1729 = vshrl.u32 %v1728, 7
  %v1730 = vsub.s32 %v1727, %v1729
  %v1731 = vrot.slane %v1717, %v1730
  %v1732 = vcombine.high %v1724, %v1724
  %v1733 = vcombine.high %v1731, %v1731
  %v1734 = vcombine.high %v886, %v886
  %v1736 = vunpack.c.l.s4 1983009808
  %v1737 = vunpack.c.0.s8 %v1736
  %v1738 = vlaneseq
  %v1739 = vshrl.u32 %v1738, 7
  %v1740 = vsub.s32 %v1737, %v1739
  %v1741 = vrot.slane %v886, %v1740
  %v1743 = vunpack.c.l.s4 1983009808
  %v1744 = vunpack.c.0.s8 %v1743
  %v1745 = vlaneseq
  %v1746 = vshrl.u32 %v1745, 7
  %v1747 = vsub.s32 %v1744, %v1746
  %v1748 = vrot.slane %v1734, %v1747
  %v1749 = vcombine.high %v1741, %v1741
  %v1750 = vcombine.high %v1748, %v1748
  %v1751 = vcombine.high %v887, %v887
  %v1753 = vunpack.c.l.s4 1983009808
  %v1754 = vunpack.c.0.s8 %v1753
  %v1755 = vlaneseq
  %v1756 = vshrl.u32 %v1755, 7
  %v1757 = vsub.s32 %v1754, %v1756
  %v1758 = vrot.slane %v887, %v1757
  %v1760 = vunpack.c.l.s4 1983009808
  %v1761 = vunpack.c.0.s8 %v1760
  %v1762 = vlaneseq
  %v1763 = vshrl.u32 %v1762, 7
  %v1764 = vsub.s32 %v1761, %v1763
  %v1765 = vrot.slane %v1751, %v1764
  %v1766 = vcombine.high %v1758, %v1758
  %v1767 = vcombine.high %v1765, %v1765
  %v1768 = vcombine.high %v888, %v888
  %v1770 = vunpack.c.l.s4 1983009808
  %v1771 = vunpack.c.0.s8 %v1770
  %v1772 = vlaneseq
  %v1773 = vshrl.u32 %v1772, 7
  %v1774 = vsub.s32 %v1771, %v1773
  %v1775 = vrot.slane %v888, %v1774
  %v1777 = vunpack.c.l.s4 1983009808
  %v1778 = vunpack.c.0.s8 %v1777
  %v1779 = vlaneseq
  %v1780 = vshrl.u32 %v1779, 7
  %v1781 = vsub.s32 %v1778, %v1780
  %v1782 = vrot.slane %v1768, %v1781
  %v1783 = vcombine.high %v1775, %v1775
  %v1784 = vcombine.high %v1782, %v1782
  %v1785 = vcombine.high %v889, %v889
  %v1787 = vunpack.c.l.s4 1983009808
  %v1788 = vunpack.c.0.s8 %v1787
  %v1789 = vlaneseq
  %v1790 = vshrl.u32 %v1789, 7
  %v1791 = vsub.s32 %v1788, %v1790
  %v1792 = vrot.slane %v889, %v1791
  %v1794 = vunpack.c.l.s4 1983009808
  %v1795 = vunpack.c.0.s8 %v1794
  %v1796 = vlaneseq
  %v1797 = vshrl.u32 %v1796, 7
  %v1798 = vsub.s32 %v1795, %v1797
  %v1799 = vrot.slane %v1785, %v1798
  %v1800 = vcombine.high %v1792, %v1792
  %v1801 = vcombine.high %v1799, %v1799
  %v1802 = vcombine.high %v890, %v890
  %v1804 = vunpack.c.l.s4 1983009808
  %v1805 = vunpack.c.0.s8 %v1804
  %v1806 = vlaneseq
  %v1807 = vshrl.u32 %v1806, 7
  %v1808 = vsub.s32 %v1805, %v1807
  %v1809 = vrot.slane %v890, %v1808
  %v1811 = vunpack.c.l.s4 1983009808
  %v1812 = vunpack.c.0.s8 %v1811
  %v1813 = vlaneseq
  %v1814 = vshrl.u32 %v1813, 7
  %v1815 = vsub.s32 %v1812, %v1814
  %v1816 = vrot.slane %v1802, %v1815
  %v1817 = vcombine.high %v1809, %v1809
  %v1818 = vcombine.high %v1816, %v1816
  %v1819 = vcombine.high %v891, %v891
  %v1821 = vunpack.c.l.s4 1983009808
  %v1822 = vunpack.c.0.s8 %v1821
  %v1823 = vlaneseq
  %v1824 = vshrl.u32 %v1823, 7
  %v1825 = vsub.s32 %v1822, %v1824
  %v1826 = vrot.slane %v891, %v1825
  %v1828 = vunpack.c.l.s4 1983009808
  %v1829 = vunpack.c.0.s8 %v1828
  %v1830 = vlaneseq
  %v1831 = vshrl.u32 %v1830, 7
  %v1832 = vsub.s32 %v1829, %v1831
  %v1833 = vrot.slane %v1819, %v1832
  %v1834 = vcombine.high %v1826, %v1826
  %v1835 = vcombine.high %v1833, %v1833
  %v1836 = vcombine.high %v892, %v892
  %v1838 = vunpack.c.l.s4 1983009808
  %v1839 = vunpack.c.0.s8 %v1838
  %v1840 = vlaneseq
  %v1841 = vshrl.u32 %v1840, 7
  %v1842 = vsub.s32 %v1839, %v1841
  %v1843 = vrot.slane %v892, %v1842
  %v1845 = vunpack.c.l.s4 1983009808
  %v1846 = vunpack.c.0.s8 %v1845
  %v1847 = vlaneseq
  %v1848 = vshrl.u32 %v1847, 7
  %v1849 = vsub.s32 %v1846, %v1848
  %v1850 = vrot.slane %v1836, %v1849
  %v1851 = vcombine.high %v1843, %v1843
  %v1852 = vcombine.high %v1850, %v1850
  %v1853 = vcombine.high %v893, %v893
  %v1855 = vunpack.c.l.s4 1983009808
  %v1856 = vunpack.c.0.s8 %v1855
  %v1857 = vlaneseq
  %v1858 = vshrl.u32 %v1857, 7
  %v1859 = vsub.s32 %v1856, %v1858
  %v1860 = vrot.slane %v893, %v1859
  %v1862 = vunpack.c.l.s4 1983009808
  %v1863 = vunpack.c.0.s8 %v1862
  %v1864 = vlaneseq
  %v1865 = vshrl.u32 %v1864, 7
  %v1866 = vsub.s32 %v1863, %v1865
  %v1867 = vrot.slane %v1853, %v1866
  %v1868 = vcombine.high %v1860, %v1860
  %v1869 = vcombine.high %v1867, %v1867
  %v1870 = vcombine.high %v894, %v894
  %v1872 = vunpack.c.l.s4 1983009808
  %v1873 = vunpack.c.0.s8 %v1872
  %v1874 = vlaneseq
  %v1875 = vshrl.u32 %v1874, 7
  %v1876 = vsub.s32 %v1873, %v1875
  %v1877 = vrot.slane %v894, %v1876
  %v1879 = vunpack.c.l.s4 1983009808
  %v1880 = vunpack.c.0.s8 %v1879
  %v1881 = vlaneseq
  %v1882 = vshrl.u32 %v1881, 7
  %v1883 = vsub.s32 %v1880, %v1882
  %v1884 = vrot.slane %v1870, %v1883
  %v1885 = vcombine.high %v1877, %v1877
  %v1886 = vcombine.high %v1884, %v1884
  %v1887 = vcombine.high %v895, %v895
  %v1889 = vunpack.c.l.s4 1983009808
  %v1890 = vunpack.c.0.s8 %v1889
  %v1891 = vlaneseq
  %v1892 = vshrl.u32 %v1891, 7
  %v1893 = vsub.s32 %v1890, %v1892
  %v1894 = vrot.slane %v895, %v1893
  %v1896 = vunpack.c.l.s4 1983009808
  %v1897 = vunpack.c.0.s8 %v1896
  %v1898 = vlaneseq
  %v1899 = vshrl.u32 %v1898, 7
  %v1900 = vsub.s32 %v1897, %v1899
  %v1901 = vrot.slane %v1887, %v1900
  %v1902 = vcombine.high %v1894, %v1894
  %v1903 = vcombine.high %v1901, %v1901
  %v1904 = vcombine.high %v896, %v896
  %v1906 = vunpack.c.l.s4 1983009808
  %v1907 = vunpack.c.0.s8 %v1906
  %v1908 = vlaneseq
  %v1909 = vshrl.u32 %v1908, 7
  %v1910 = vsub.s32 %v1907, %v1909
  %v1911 = vrot.slane %v896, %v1910
  %v1913 = vunpack.c.l.s4 1983009808
  %v1914 = vunpack.c.0.s8 %v1913
  %v1915 = vlaneseq
  %v1916 = vshrl.u32 %v1915, 7
  %v1917 = vsub.s32 %v1914, %v1916
  %v1918 = vrot.slane %v1904, %v1917
  %v1919 = vcombine.high %v1911, %v1911
  %v1920 = vcombine.high %v1918, %v1918
  %v1921 = vcombine.high %v897, %v897
  %v1923 = vunpack.c.l.s4 1983009808
  %v1924 = vunpack.c.0.s8 %v1923
  %v1925 = vlaneseq
  %v1926 = vshrl.u32 %v1925, 7
  %v1927 = vsub.s32 %v1924, %v1926
  %v1928 = vrot.slane %v897, %v1927
  %v1930 = vunpack.c.l.s4 1983009808
  %v1931 = vunpack.c.0.s8 %v1930
  %v1932 = vlaneseq
  %v1933 = vshrl.u32 %v1932, 7
  %v1934 = vsub.s32 %v1931, %v1933
  %v1935 = vrot.slane %v1921, %v1934
  %v1936 = vcombine.high %v1928, %v1928
  %v1937 = vcombine.high %v1935, %v1935
  %v1938 = vcombine.high %v898, %v898
  %v1940 = vunpack.c.l.s4 1983009808
  %v1941 = vunpack.c.0.s8 %v1940
  %v1942 = vlaneseq
  %v1943 = vshrl.u32 %v1942, 7
  %v1944 = vsub.s32 %v1941, %v1943
  %v1945 = vrot.slane %v898, %v1944
  %v1947 = vunpack.c.l.s4 1983009808
  %v1948 = vunpack.c.0.s8 %v1947
  %v1949 = vlaneseq
  %v1950 = vshrl.u32 %v1949, 7
  %v1951 = vsub.s32 %v1948, %v1950
  %v1952 = vrot.slane %v1938, %v1951
  %v1953 = vcombine.high %v1945, %v1945
  %v1954 = vcombine.high %v1952, %v1952
  %v1955 = vcombine.high %v899, %v899
  %v1957 = vunpack.c.l.s4 1983009808
  %v1958 = vunpack.c.0.s8 %v1957
  %v1959 = vlaneseq
  %v1960 = vshrl.u32 %v1959, 7
  %v1961 = vsub.s32 %v1958, %v1960
  %v1962 = vrot.slane %v899, %v1961
  %v1964 = vunpack.c.l.s4 1983009808
  %v1965 = vunpack.c.0.s8 %v1964
  %v1966 = vlaneseq
  %v1967 = vshrl.u32 %v1966, 7
  %v1968 = vsub.s32 %v1965, %v1967
  %v1969 = vrot.slane %v1955, %v1968
  %v1970 = vcombine.high %v1962, %v1962
  %v1971 = vcombine.high %v1969, %v1969
  %v1972 = vcombine.high %v900, %v900
  %v1974 = vunpack.c.l.s4 1983009808
  %v1975 = vunpack.c.0.s8 %v1974
  %v1976 = vlaneseq
  %v1977 = vshrl.u32 %v1976, 7
  %v1978 = vsub.s32 %v1975, %v1977
  %v1979 = vrot.slane %v900, %v1978
  %v1981 = vunpack.c.l.s4 1983009808
  %v1982 = vunpack.c.0.s8 %v1981
  %v1983 = vlaneseq
  %v1984 = vshrl.u32 %v1983, 7
  %v1985 = vsub.s32 %v1982, %v1984
  %v1986 = vrot.slane %v1972, %v1985
  %v1987 = vcombine.high %v1979, %v1979
  %v1988 = vcombine.high %v1986, %v1986
  %v1989 = vcombine.high %v901, %v901
  %v1991 = vunpack.c.l.s4 1983009808
  %v1992 = vunpack.c.0.s8 %v1991
  %v1993 = vlaneseq
  %v1994 = vshrl.u32 %v1993, 7
  %v1995 = vsub.s32 %v1992, %v1994
  %v1996 = vrot.slane %v901, %v1995
  %v1998 = vunpack.c.l.s4 1983009808
  %v1999 = vunpack.c.0.s8 %v1998
  %v2000 = vlaneseq
  %v2001 = vshrl.u32 %v2000, 7
  %v2002 = vsub.s32 %v1999, %v2001
  %v2003 = vrot.slane %v1989, %v2002
  %v2004 = vcombine.high %v1996, %v1996
  %v2005 = vcombine.high %v2003, %v2003
  %v2006 = vcombine.high %v902, %v902
  %v2008 = vunpack.c.l.s4 1983009808
  %v2009 = vunpack.c.0.s8 %v2008
  %v2010 = vlaneseq
  %v2011 = vshrl.u32 %v2010, 7
  %v2012 = vsub.s32 %v2009, %v2011
  %v2013 = vrot.slane %v902, %v2012
  %v2015 = vunpack.c.l.s4 1983009808
  %v2016 = vunpack.c.0.s8 %v2015
  %v2017 = vlaneseq
  %v2018 = vshrl.u32 %v2017, 7
  %v2019 = vsub.s32 %v2016, %v2018
  %v2020 = vrot.slane %v2006, %v2019
  %v2021 = vcombine.high %v2013, %v2013
  %v2022 = vcombine.high %v2020, %v2020
  %v2023 = vcombine.high %v903, %v903
  %v2025 = vunpack.c.l.s4 1983009808
  %v2026 = vunpack.c.0.s8 %v2025
  %v2027 = vlaneseq
  %v2028 = vshrl.u32 %v2027, 7
  %v2029 = vsub.s32 %v2026, %v2028
  %v2030 = vrot.slane %v903, %v2029
  %v2032 = vunpack.c.l.s4 1983009808
  %v2033 = vunpack.c.0.s8 %v2032
  %v2034 = vlaneseq
  %v2035 = vshrl.u32 %v2034, 7
  %v2036 = vsub.s32 %v2033, %v2035
  %v2037 = vrot.slane %v2023, %v2036
  %v2038 = vcombine.high %v2030, %v2030
  %v2039 = vcombine.high %v2037, %v2037
  %v2040 = vcombine.high %v904, %v904
  %v2042 = vunpack.c.l.s4 1983009808
  %v2043 = vunpack.c.0.s8 %v2042
  %v2044 = vlaneseq
  %v2045 = vshrl.u32 %v2044, 7
  %v2046 = vsub.s32 %v2043, %v2045
  %v2047 = vrot.slane %v904, %v2046
  %v2049 = vunpack.c.l.s4 1983009808
  %v2050 = vunpack.c.0.s8 %v2049
  %v2051 = vlaneseq
  %v2052 = vshrl.u32 %v2051, 7
  %v2053 = vsub.s32 %v2050, %v2052
  %v2054 = vrot.slane %v2040, %v2053
  %v2055 = vcombine.high %v2047, %v2047
  %v2056 = vcombine.high %v2054, %v2054
  %vm2313 = vcmask 1041408
  %v2314 = vsel %vm2313, %v976, -inf
  %v2315 = vrot.slane %v2314, 4
  %v2316 = vmax.f32 %v2314, %v2315
  %v2317 = vrot.slane %v2316, 2
  %v2318 = vmax.f32 %v2316, %v2317
  %v2319 = vrot.slane %v2318, 1
  %v2320 = vmax.f32 %v2318, %v2319
  %v2321 = vsel %vm2313, %v984, -inf
  %v2322 = vrot.slane %v2321, 4
  %v2323 = vmax.f32 %v2321, %v2322
  %v2324 = vrot.slane %v2323, 2
  %v2325 = vmax.f32 %v2323, %v2324
  %v2326 = vrot.slane %v2325, 1
  %v2327 = vmax.f32 %v2325, %v2326
  %v2328 = vsel %vm2313, %v983, -inf
  %v2329 = vrot.slane %v2328, 4
  %v2330 = vmax.f32 %v2328, %v2329
  %v2331 = vrot.slane %v2330, 2
  %v2332 = vmax.f32 %v2330, %v2331
  %v2333 = vrot.slane %v2332, 1
  %v2334 = vmax.f32 %v2332, %v2333
  %v2335 = vsel %vm2313, %v985, -inf
  %v2336 = vrot.slane %v2335, 4
  %v2337 = vmax.f32 %v2335, %v2336
  %v2338 = vrot.slane %v2337, 2
  %v2339 = vmax.f32 %v2337, %v2338
  %v2340 = vrot.slane %v2339, 1
  %v2341 = vmax.f32 %v2339, %v2340
  %v2342 = vsel %vm2313, %v993, -inf
  %v2343 = vrot.slane %v2342, 4
  %v2344 = vmax.f32 %v2342, %v2343
  %v2345 = vrot.slane %v2344, 2
  %v2346 = vmax.f32 %v2344, %v2345
  %v2347 = vrot.slane %v2346, 1
  %v2348 = vmax.f32 %v2346, %v2347
  %v2349 = vsel %vm2313, %v1001, -inf
  %v2350 = vrot.slane %v2349, 4
  %v2351 = vmax.f32 %v2349, %v2350
  %v2352 = vrot.slane %v2351, 2
  %v2353 = vmax.f32 %v2351, %v2352
  %v2354 = vrot.slane %v2353, 1
  %v2355 = vmax.f32 %v2353, %v2354
  %v2356 = vsel %vm2313, %v1000, -inf
  %v2357 = vrot.slane %v2356, 4
  %v2358 = vmax.f32 %v2356, %v2357
  %v2359 = vrot.slane %v2358, 2
  %v2360 = vmax.f32 %v2358, %v2359
  %v2361 = vrot.slane %v2360, 1
  %v2362 = vmax.f32 %v2360, %v2361
  %v2363 = vsel %vm2313, %v1002, -inf
  %v2364 = vrot.slane %v2363, 4
  %v2365 = vmax.f32 %v2363, %v2364
  %v2366 = vrot.slane %v2365, 2
  %v2367 = vmax.f32 %v2365, %v2366
  %v2368 = vrot.slane %v2367, 1
  %v2369 = vmax.f32 %v2367, %v2368
  %v2370 = vsel %vm2313, %v1010, -inf
  %v2371 = vrot.slane %v2370, 4
  %v2372 = vmax.f32 %v2370, %v2371
  %v2373 = vrot.slane %v2372, 2
  %v2374 = vmax.f32 %v2372, %v2373
  %v2375 = vrot.slane %v2374, 1
  %v2376 = vmax.f32 %v2374, %v2375
  %v2377 = vsel %vm2313, %v1018, -inf
  %v2378 = vrot.slane %v2377, 4
  %v2379 = vmax.f32 %v2377, %v2378
  %v2380 = vrot.slane %v2379, 2
  %v2381 = vmax.f32 %v2379, %v2380
  %v2382 = vrot.slane %v2381, 1
  %v2383 = vmax.f32 %v2381, %v2382
  %v2384 = vsel %vm2313, %v1017, -inf
  %v2385 = vrot.slane %v2384, 4
  %v2386 = vmax.f32 %v2384, %v2385
  %v2387 = vrot.slane %v2386, 2
  %v2388 = vmax.f32 %v2386, %v2387
  %v2389 = vrot.slane %v2388, 1
  %v2390 = vmax.f32 %v2388, %v2389
  %v2391 = vsel %vm2313, %v1019, -inf
  %v2392 = vrot.slane %v2391, 4
  %v2393 = vmax.f32 %v2391, %v2392
  %v2394 = vrot.slane %v2393, 2
  %v2395 = vmax.f32 %v2393, %v2394
  %v2396 = vrot.slane %v2395, 1
  %v2397 = vmax.f32 %v2395, %v2396
  %v2398 = vsel %vm2313, %v1027, -inf
  %v2399 = vrot.slane %v2398, 4
  %v2400 = vmax.f32 %v2398, %v2399
  %v2401 = vrot.slane %v2400, 2
  %v2402 = vmax.f32 %v2400, %v2401
  %v2403 = vrot.slane %v2402, 1
  %v2404 = vmax.f32 %v2402, %v2403
  %v2405 = vsel %vm2313, %v1035, -inf
  %v2406 = vrot.slane %v2405, 4
  %v2407 = vmax.f32 %v2405, %v2406
  %v2408 = vrot.slane %v2407, 2
  %v2409 = vmax.f32 %v2407, %v2408
  %v2410 = vrot.slane %v2409, 1
  %v2411 = vmax.f32 %v2409, %v2410
  %v2412 = vsel %vm2313, %v1034, -inf
  %v2413 = vrot.slane %v2412, 4
  %v2414 = vmax.f32 %v2412, %v2413
  %v2415 = vrot.slane %v2414, 2
  %v2416 = vmax.f32 %v2414, %v2415
  %v2417 = vrot.slane %v2416, 1
  %v2418 = vmax.f32 %v2416, %v2417
  %v2419 = vsel %vm2313, %v1036, -inf
  %v2420 = vrot.slane %v2419, 4
  %v2421 = vmax.f32 %v2419, %v2420
  %v2422 = vrot.slane %v2421, 2
  %v2423 = vmax.f32 %v2421, %v2422
  %v2424 = vrot.slane %v2423, 1
  %v2425 = vmax.f32 %v2423, %v2424
  %v2426 = vsel %vm2313, %v1044, -inf
  %v2427 = vrot.slane %v2426, 4
  %v2428 = vmax.f32 %v2426, %v2427
  %v2429 = vrot.slane %v2428, 2
  %v2430 = vmax.f32 %v2428, %v2429
  %v2431 = vrot.slane %v2430, 1
  %v2432 = vmax.f32 %v2430, %v2431
  %v2433 = vsel %vm2313, %v1052, -inf
  %v2434 = vrot.slane %v2433, 4
  %v2435 = vmax.f32 %v2433, %v2434
  %v2436 = vrot.slane %v2435, 2
  %v2437 = vmax.f32 %v2435, %v2436
  %v2438 = vrot.slane %v2437, 1
  %v2439 = vmax.f32 %v2437, %v2438
  %v2440 = vsel %vm2313, %v1051, -inf
  %v2441 = vrot.slane %v2440, 4
  %v2442 = vmax.f32 %v2440, %v2441
  %v2443 = vrot.slane %v2442, 2
  %v2444 = vmax.f32 %v2442, %v2443
  %v2445 = vrot.slane %v2444, 1
  %v2446 = vmax.f32 %v2444, %v2445
  %v2447 = vsel %vm2313, %v1053, -inf
  %v2448 = vrot.slane %v2447, 4
  %v2449 = vmax.f32 %v2447, %v2448
  %v2450 = vrot.slane %v2449, 2
  %v2451 = vmax.f32 %v2449, %v2450
  %v2452 = vrot.slane %v2451, 1
  %v2453 = vmax.f32 %v2451, %v2452
  %v2454 = vsel %vm2313, %v1061, -inf
  %v2455 = vrot.slane %v2454, 4
  %v2456 = vmax.f32 %v2454, %v2455
  %v2457 = vrot.slane %v2456, 2
  %v2458 = vmax.f32 %v2456, %v2457
  %v2459 = vrot.slane %v2458, 1
  %v2460 = vmax.f32 %v2458, %v2459
  %v2461 = vsel %vm2313, %v1069, -inf
  %v2462 = vrot.slane %v2461, 4
  %v2463 = vmax.f32 %v2461, %v2462
  %v2464 = vrot.slane %v2463, 2
  %v2465 = vmax.f32 %v2463, %v2464
  %v2466 = vrot.slane %v2465, 1
  %v2467 = vmax.f32 %v2465, %v2466
  %v2468 = vsel %vm2313, %v1068, -inf
  %v2469 = vrot.slane %v2468, 4
  %v2470 = vmax.f32 %v2468, %v2469
  %v2471 = vrot.slane %v2470, 2
  %v2472 = vmax.f32 %v2470, %v2471
  %v2473 = vrot.slane %v2472, 1
  %v2474 = vmax.f32 %v2472, %v2473
  %v2475 = vsel %vm2313, %v1070, -inf
  %v2476 = vrot.slane %v2475, 4
  %v2477 = vmax.f32 %v2475, %v2476
  %v2478 = vrot.slane %v2477, 2
  %v2479 = vmax.f32 %v2477, %v2478
  %v2480 = vrot.slane %v2479, 1
  %v2481 = vmax.f32 %v2479, %v2480
  %v2482 = vsel %vm2313, %v1078, -inf
  %v2483 = vrot.slane %v2482, 4
  %v2484 = vmax.f32 %v2482, %v2483
  %v2485 = vrot.slane %v2484, 2
  %v2486 = vmax.f32 %v2484, %v2485
  %v2487 = vrot.slane %v2486, 1
  %v2488 = vmax.f32 %v2486, %v2487
  %v2489 = vsel %vm2313, %v1086, -inf
  %v2490 = vrot.slane %v2489, 4
  %v2491 = vmax.f32 %v2489, %v2490
  %v2492 = vrot.slane %v2491, 2
  %v2493 = vmax.f32 %v2491, %v2492
  %v2494 = vrot.slane %v2493, 1
  %v2495 = vmax.f32 %v2493, %v2494
  %v2496 = vsel %vm2313, %v1085, -inf
  %v2497 = vrot.slane %v2496, 4
  %v2498 = vmax.f32 %v2496, %v2497
  %v2499 = vrot.slane %v2498, 2
  %v2500 = vmax.f32 %v2498, %v2499
  %v2501 = vrot.slane %v2500, 1
  %v2502 = vmax.f32 %v2500, %v2501
  %v2503 = vsel %vm2313, %v1087, -inf
  %v2504 = vrot.slane %v2503, 4
  %v2505 = vmax.f32 %v2503, %v2504
  %v2506 = vrot.slane %v2505, 2
  %v2507 = vmax.f32 %v2505, %v2506
  %v2508 = vrot.slane %v2507, 1
  %v2509 = vmax.f32 %v2507, %v2508
  %v2510 = vsel %vm2313, %v1095, -inf
  %v2511 = vrot.slane %v2510, 4
  %v2512 = vmax.f32 %v2510, %v2511
  %v2513 = vrot.slane %v2512, 2
  %v2514 = vmax.f32 %v2512, %v2513
  %v2515 = vrot.slane %v2514, 1
  %v2516 = vmax.f32 %v2514, %v2515
  %v2517 = vsel %vm2313, %v1103, -inf
  %v2518 = vrot.slane %v2517, 4
  %v2519 = vmax.f32 %v2517, %v2518
  %v2520 = vrot.slane %v2519, 2
  %v2521 = vmax.f32 %v2519, %v2520
  %v2522 = vrot.slane %v2521, 1
  %v2523 = vmax.f32 %v2521, %v2522
  %v2524 = vsel %vm2313, %v1102, -inf
  %v2525 = vrot.slane %v2524, 4
  %v2526 = vmax.f32 %v2524, %v2525
  %v2527 = vrot.slane %v2526, 2
  %v2528 = vmax.f32 %v2526, %v2527
  %v2529 = vrot.slane %v2528, 1
  %v2530 = vmax.f32 %v2528, %v2529
  %v2531 = vsel %vm2313, %v1104, -inf
  %v2532 = vrot.slane %v2531, 4
  %v2533 = vmax.f32 %v2531, %v2532
  %v2534 = vrot.slane %v2533, 2
  %v2535 = vmax.f32 %v2533, %v2534
  %v2536 = vrot.slane %v2535, 1
  %v2537 = vmax.f32 %v2535, %v2536
  %v2538 = vsel %vm2313, %v1112, -inf
  %v2539 = vrot.slane %v2538, 4
  %v2540 = vmax.f32 %v2538, %v2539
  %v2541 = vrot.slane %v2540, 2
  %v2542 = vmax.f32 %v2540, %v2541
  %v2543 = vrot.slane %v2542, 1
  %v2544 = vmax.f32 %v2542, %v2543
  %v2545 = vsel %vm2313, %v1120, -inf
  %v2546 = vrot.slane %v2545, 4
  %v2547 = vmax.f32 %v2545, %v2546
  %v2548 = vrot.slane %v2547, 2
  %v2549 = vmax.f32 %v2547, %v2548
  %v2550 = vrot.slane %v2549, 1
  %v2551 = vmax.f32 %v2549, %v2550
  %v2552 = vsel %vm2313, %v1119, -inf
  %v2553 = vrot.slane %v2552, 4
  %v2554 = vmax.f32 %v2552, %v2553
  %v2555 = vrot.slane %v2554, 2
  %v2556 = vmax.f32 %v2554, %v2555
  %v2557 = vrot.slane %v2556, 1
  %v2558 = vmax.f32 %v2556, %v2557
  %v2559 = vsel %vm2313, %v1121, -inf
  %v2560 = vrot.slane %v2559, 4
  %v2561 = vmax.f32 %v2559, %v2560
  %v2562 = vrot.slane %v2561, 2
  %v2563 = vmax.f32 %v2561, %v2562
  %v2564 = vrot.slane %v2563, 1
  %v2565 = vmax.f32 %v2563, %v2564
  %v2566 = vsel %vm2313, %v1129, -inf
  %v2567 = vrot.slane %v2566, 4
  %v2568 = vmax.f32 %v2566, %v2567
  %v2569 = vrot.slane %v2568, 2
  %v2570 = vmax.f32 %v2568, %v2569
  %v2571 = vrot.slane %v2570, 1
  %v2572 = vmax.f32 %v2570, %v2571
  %v2573 = vsel %vm2313, %v1137, -inf
  %v2574 = vrot.slane %v2573, 4
  %v2575 = vmax.f32 %v2573, %v2574
  %v2576 = vrot.slane %v2575, 2
  %v2577 = vmax.f32 %v2575, %v2576
  %v2578 = vrot.slane %v2577, 1
  %v2579 = vmax.f32 %v2577, %v2578
  %v2580 = vsel %vm2313, %v1136, -inf
  %v2581 = vrot.slane %v2580, 4
  %v2582 = vmax.f32 %v2580, %v2581
  %v2583 = vrot.slane %v2582, 2
  %v2584 = vmax.f32 %v2582, %v2583
  %v2585 = vrot.slane %v2584, 1
  %v2586 = vmax.f32 %v2584, %v2585
  %v2587 = vsel %vm2313, %v1138, -inf
  %v2588 = vrot.slane %v2587, 4
  %v2589 = vmax.f32 %v2587, %v2588
  %v2590 = vrot.slane %v2589, 2
  %v2591 = vmax.f32 %v2589, %v2590
  %v2592 = vrot.slane %v2591, 1
  %v2593 = vmax.f32 %v2591, %v2592
  %v2594 = vsel %vm2313, %v1146, -inf
  %v2595 = vrot.slane %v2594, 4
  %v2596 = vmax.f32 %v2594, %v2595
  %v2597 = vrot.slane %v2596, 2
  %v2598 = vmax.f32 %v2596, %v2597
  %v2599 = vrot.slane %v2598, 1
  %v2600 = vmax.f32 %v2598, %v2599
  %v2601 = vsel %vm2313, %v1154, -inf
  %v2602 = vrot.slane %v2601, 4
  %v2603 = vmax.f32 %v2601, %v2602
  %v2604 = vrot.slane %v2603, 2
  %v2605 = vmax.f32 %v2603, %v2604
  %v2606 = vrot.slane %v2605, 1
  %v2607 = vmax.f32 %v2605, %v2606
  %v2608 = vsel %vm2313, %v1153, -inf
  %v2609 = vrot.slane %v2608, 4
  %v2610 = vmax.f32 %v2608, %v2609
  %v2611 = vrot.slane %v2610, 2
  %v2612 = vmax.f32 %v2610, %v2611
  %v2613 = vrot.slane %v2612, 1
  %v2614 = vmax.f32 %v2612, %v2613
  %v2615 = vsel %vm2313, %v1155, -inf
  %v2616 = vrot.slane %v2615, 4
  %v2617 = vmax.f32 %v2615, %v2616
  %v2618 = vrot.slane %v2617, 2
  %v2619 = vmax.f32 %v2617, %v2618
  %v2620 = vrot.slane %v2619, 1
  %v2621 = vmax.f32 %v2619, %v2620
  %v2622 = vsel %vm2313, %v1163, -inf
  %v2623 = vrot.slane %v2622, 4
  %v2624 = vmax.f32 %v2622, %v2623
  %v2625 = vrot.slane %v2624, 2
  %v2626 = vmax.f32 %v2624, %v2625
  %v2627 = vrot.slane %v2626, 1
  %v2628 = vmax.f32 %v2626, %v2627
  %v2629 = vsel %vm2313, %v1171, -inf
  %v2630 = vrot.slane %v2629, 4
  %v2631 = vmax.f32 %v2629, %v2630
  %v2632 = vrot.slane %v2631, 2
  %v2633 = vmax.f32 %v2631, %v2632
  %v2634 = vrot.slane %v2633, 1
  %v2635 = vmax.f32 %v2633, %v2634
  %v2636 = vsel %vm2313, %v1170, -inf
  %v2637 = vrot.slane %v2636, 4
  %v2638 = vmax.f32 %v2636, %v2637
  %v2639 = vrot.slane %v2638, 2
  %v2640 = vmax.f32 %v2638, %v2639
  %v2641 = vrot.slane %v2640, 1
  %v2642 = vmax.f32 %v2640, %v2641
  %v2643 = vsel %vm2313, %v1172, -inf
  %v2644 = vrot.slane %v2643, 4
  %v2645 = vmax.f32 %v2643, %v2644
  %v2646 = vrot.slane %v2645, 2
  %v2647 = vmax.f32 %v2645, %v2646
  %v2648 = vrot.slane %v2647, 1
  %v2649 = vmax.f32 %v2647, %v2648
  %v2650 = vsel %vm2313, %v1180, -inf
  %v2651 = vrot.slane %v2650, 4
  %v2652 = vmax.f32 %v2650, %v2651
  %v2653 = vrot.slane %v2652, 2
  %v2654 = vmax.f32 %v2652, %v2653
  %v2655 = vrot.slane %v2654, 1
  %v2656 = vmax.f32 %v2654, %v2655
  %v2657 = vsel %vm2313, %v1188, -inf
  %v2658 = vrot.slane %v2657, 4
  %v2659 = vmax.f32 %v2657, %v2658
  %v2660 = vrot.slane %v2659, 2
  %v2661 = vmax.f32 %v2659, %v2660
  %v2662 = vrot.slane %v2661, 1
  %v2663 = vmax.f32 %v2661, %v2662
  %v2664 = vsel %vm2313, %v1187, -inf
  %v2665 = vrot.slane %v2664, 4
  %v2666 = vmax.f32 %v2664, %v2665
  %v2667 = vrot.slane %v2666, 2
  %v2668 = vmax.f32 %v2666, %v2667
  %v2669 = vrot.slane %v2668, 1
  %v2670 = vmax.f32 %v2668, %v2669
  %v2671 = vsel %vm2313, %v1189, -inf
  %v2672 = vrot.slane %v2671, 4
  %v2673 = vmax.f32 %v2671, %v2672
  %v2674 = vrot.slane %v2673, 2
  %v2675 = vmax.f32 %v2673, %v2674
  %v2676 = vrot.slane %v2675, 1
  %v2677 = vmax.f32 %v2675, %v2676
  %v2678 = vsel %vm2313, %v1197, -inf
  %v2679 = vrot.slane %v2678, 4
  %v2680 = vmax.f32 %v2678, %v2679
  %v2681 = vrot.slane %v2680, 2
  %v2682 = vmax.f32 %v2680, %v2681
  %v2683 = vrot.slane %v2682, 1
  %v2684 = vmax.f32 %v2682, %v2683
  %v2685 = vsel %vm2313, %v1205, -inf
  %v2686 = vrot.slane %v2685, 4
  %v2687 = vmax.f32 %v2685, %v2686
  %v2688 = vrot.slane %v2687, 2
  %v2689 = vmax.f32 %v2687, %v2688
  %v2690 = vrot.slane %v2689, 1
  %v2691 = vmax.f32 %v2689, %v2690
  %v2692 = vsel %vm2313, %v1204, -inf
  %v2693 = vrot.slane %v2692, 4
  %v2694 = vmax.f32 %v2692, %v2693
  %v2695 = vrot.slane %v2694, 2
  %v2696 = vmax.f32 %v2694, %v2695
  %v2697 = vrot.slane %v2696, 1
  %v2698 = vmax.f32 %v2696, %v2697
  %v2699 = vsel %vm2313, %v1206, -inf
  %v2700 = vrot.slane %v2699, 4
  %v2701 = vmax.f32 %v2699, %v2700
  %v2702 = vrot.slane %v2701, 2
  %v2703 = vmax.f32 %v2701, %v2702
  %v2704 = vrot.slane %v2703, 1
  %v2705 = vmax.f32 %v2703, %v2704
  %v2706 = vsel %vm2313, %v1214, -inf
  %v2707 = vrot.slane %v2706, 4
  %v2708 = vmax.f32 %v2706, %v2707
  %v2709 = vrot.slane %v2708, 2
  %v2710 = vmax.f32 %v2708, %v2709
  %v2711 = vrot.slane %v2710, 1
  %v2712 = vmax.f32 %v2710, %v2711
  %v2713 = vsel %vm2313, %v1222, -inf
  %v2714 = vrot.slane %v2713, 4
  %v2715 = vmax.f32 %v2713, %v2714
  %v2716 = vrot.slane %v2715, 2
  %v2717 = vmax.f32 %v2715, %v2716
  %v2718 = vrot.slane %v2717, 1
  %v2719 = vmax.f32 %v2717, %v2718
  %v2720 = vsel %vm2313, %v1221, -inf
  %v2721 = vrot.slane %v2720, 4
  %v2722 = vmax.f32 %v2720, %v2721
  %v2723 = vrot.slane %v2722, 2
  %v2724 = vmax.f32 %v2722, %v2723
  %v2725 = vrot.slane %v2724, 1
  %v2726 = vmax.f32 %v2724, %v2725
  %v2727 = vsel %vm2313, %v1223, -inf
  %v2728 = vrot.slane %v2727, 4
  %v2729 = vmax.f32 %v2727, %v2728
  %v2730 = vrot.slane %v2729, 2
  %v2731 = vmax.f32 %v2729, %v2730
  %v2732 = vrot.slane %v2731, 1
  %v2733 = vmax.f32 %v2731, %v2732
  %v2734 = vsel %vm2313, %v1231, -inf
  %v2735 = vrot.slane %v2734, 4
  %v2736 = vmax.f32 %v2734, %v2735
  %v2737 = vrot.slane %v2736, 2
  %v2738 = vmax.f32 %v2736, %v2737
  %v2739 = vrot.slane %v2738, 1
  %v2740 = vmax.f32 %v2738, %v2739
  %v2741 = vsel %vm2313, %v1239, -inf
  %v2742 = vrot.slane %v2741, 4
  %v2743 = vmax.f32 %v2741, %v2742
  %v2744 = vrot.slane %v2743, 2
  %v2745 = vmax.f32 %v2743, %v2744
  %v2746 = vrot.slane %v2745, 1
  %v2747 = vmax.f32 %v2745, %v2746
  %v2748 = vsel %vm2313, %v1238, -inf
  %v2749 = vrot.slane %v2748, 4
  %v2750 = vmax.f32 %v2748, %v2749
  %v2751 = vrot.slane %v2750, 2
  %v2752 = vmax.f32 %v2750, %v2751
  %v2753 = vrot.slane %v2752, 1
  %v2754 = vmax.f32 %v2752, %v2753
  %v2755 = vsel %vm2313, %v1240, -inf
  %v2756 = vrot.slane %v2755, 4
  %v2757 = vmax.f32 %v2755, %v2756
  %v2758 = vrot.slane %v2757, 2
  %v2759 = vmax.f32 %v2757, %v2758
  %v2760 = vrot.slane %v2759, 1
  %v2761 = vmax.f32 %v2759, %v2760
  %v2762 = vsel %vm2313, %v1248, -inf
  %v2763 = vrot.slane %v2762, 4
  %v2764 = vmax.f32 %v2762, %v2763
  %v2765 = vrot.slane %v2764, 2
  %v2766 = vmax.f32 %v2764, %v2765
  %v2767 = vrot.slane %v2766, 1
  %v2768 = vmax.f32 %v2766, %v2767
  %v2769 = vsel %vm2313, %v1256, -inf
  %v2770 = vrot.slane %v2769, 4
  %v2771 = vmax.f32 %v2769, %v2770
  %v2772 = vrot.slane %v2771, 2
  %v2773 = vmax.f32 %v2771, %v2772
  %v2774 = vrot.slane %v2773, 1
  %v2775 = vmax.f32 %v2773, %v2774
  %v2776 = vsel %vm2313, %v1255, -inf
  %v2777 = vrot.slane %v2776, 4
  %v2778 = vmax.f32 %v2776, %v2777
  %v2779 = vrot.slane %v2778, 2
  %v2780 = vmax.f32 %v2778, %v2779
  %v2781 = vrot.slane %v2780, 1
  %v2782 = vmax.f32 %v2780, %v2781
  %v2783 = vsel %vm2313, %v1257, -inf
  %v2784 = vrot.slane %v2783, 4
  %v2785 = vmax.f32 %v2783, %v2784
  %v2786 = vrot.slane %v2785, 2
  %v2787 = vmax.f32 %v2785, %v2786
  %v2788 = vrot.slane %v2787, 1
  %v2789 = vmax.f32 %v2787, %v2788
  %v2790 = vsel %vm2313, %v1265, -inf
  %v2791 = vrot.slane %v2790, 4
  %v2792 = vmax.f32 %v2790, %v2791
  %v2793 = vrot.slane %v2792, 2
  %v2794 = vmax.f32 %v2792, %v2793
  %v2795 = vrot.slane %v2794, 1
  %v2796 = vmax.f32 %v2794, %v2795
  %v2797 = vsel %vm2313, %v1273, -inf
  %v2798 = vrot.slane %v2797, 4
  %v2799 = vmax.f32 %v2797, %v2798
  %v2800 = vrot.slane %v2799, 2
  %v2801 = vmax.f32 %v2799, %v2800
  %v2802 = vrot.slane %v2801, 1
  %v2803 = vmax.f32 %v2801, %v2802
  %v2804 = vsel %vm2313, %v1272, -inf
  %v2805 = vrot.slane %v2804, 4
  %v2806 = vmax.f32 %v2804, %v2805
  %v2807 = vrot.slane %v2806, 2
  %v2808 = vmax.f32 %v2806, %v2807
  %v2809 = vrot.slane %v2808, 1
  %v2810 = vmax.f32 %v2808, %v2809
  %v2811 = vsel %vm2313, %v1274, -inf
  %v2812 = vrot.slane %v2811, 4
  %v2813 = vmax.f32 %v2811, %v2812
  %v2814 = vrot.slane %v2813, 2
  %v2815 = vmax.f32 %v2813, %v2814
  %v2816 = vrot.slane %v2815, 1
  %v2817 = vmax.f32 %v2815, %v2816
  %v2818 = vsel %vm2313, %v1282, -inf
  %v2819 = vrot.slane %v2818, 4
  %v2820 = vmax.f32 %v2818, %v2819
  %v2821 = vrot.slane %v2820, 2
  %v2822 = vmax.f32 %v2820, %v2821
  %v2823 = vrot.slane %v2822, 1
  %v2824 = vmax.f32 %v2822, %v2823
  %v2825 = vsel %vm2313, %v1290, -inf
  %v2826 = vrot.slane %v2825, 4
  %v2827 = vmax.f32 %v2825, %v2826
  %v2828 = vrot.slane %v2827, 2
  %v2829 = vmax.f32 %v2827, %v2828
  %v2830 = vrot.slane %v2829, 1
  %v2831 = vmax.f32 %v2829, %v2830
  %v2832 = vsel %vm2313, %v1289, -inf
  %v2833 = vrot.slane %v2832, 4
  %v2834 = vmax.f32 %v2832, %v2833
  %v2835 = vrot.slane %v2834, 2
  %v2836 = vmax.f32 %v2834, %v2835
  %v2837 = vrot.slane %v2836, 1
  %v2838 = vmax.f32 %v2836, %v2837
  %v2839 = vsel %vm2313, %v1291, -inf
  %v2840 = vrot.slane %v2839, 4
  %v2841 = vmax.f32 %v2839, %v2840
  %v2842 = vrot.slane %v2841, 2
  %v2843 = vmax.f32 %v2841, %v2842
  %v2844 = vrot.slane %v2843, 1
  %v2845 = vmax.f32 %v2843, %v2844
  %v2846 = vsel %vm2313, %v1299, -inf
  %v2847 = vrot.slane %v2846, 4
  %v2848 = vmax.f32 %v2846, %v2847
  %v2849 = vrot.slane %v2848, 2
  %v2850 = vmax.f32 %v2848, %v2849
  %v2851 = vrot.slane %v2850, 1
  %v2852 = vmax.f32 %v2850, %v2851
  %v2853 = vsel %vm2313, %v1307, -inf
  %v2854 = vrot.slane %v2853, 4
  %v2855 = vmax.f32 %v2853, %v2854
  %v2856 = vrot.slane %v2855, 2
  %v2857 = vmax.f32 %v2855, %v2856
  %v2858 = vrot.slane %v2857, 1
  %v2859 = vmax.f32 %v2857, %v2858
  %v2860 = vsel %vm2313, %v1306, -inf
  %v2861 = vrot.slane %v2860, 4
  %v2862 = vmax.f32 %v2860, %v2861
  %v2863 = vrot.slane %v2862, 2
  %v2864 = vmax.f32 %v2862, %v2863
  %v2865 = vrot.slane %v2864, 1
  %v2866 = vmax.f32 %v2864, %v2865
  %v2867 = vsel %vm2313, %v1308, -inf
  %v2868 = vrot.slane %v2867, 4
  %v2869 = vmax.f32 %v2867, %v2868
  %v2870 = vrot.slane %v2869, 2
  %v2871 = vmax.f32 %v2869, %v2870
  %v2872 = vrot.slane %v2871, 1
  %v2873 = vmax.f32 %v2871, %v2872
  %v2874 = vsel %vm2313, %v1316, -inf
  %v2875 = vrot.slane %v2874, 4
  %v2876 = vmax.f32 %v2874, %v2875
  %v2877 = vrot.slane %v2876, 2
  %v2878 = vmax.f32 %v2876, %v2877
  %v2879 = vrot.slane %v2878, 1
  %v2880 = vmax.f32 %v2878, %v2879
  %v2881 = vsel %vm2313, %v1324, -inf
  %v2882 = vrot.slane %v2881, 4
  %v2883 = vmax.f32 %v2881, %v2882
  %v2884 = vrot.slane %v2883, 2
  %v2885 = vmax.f32 %v2883, %v2884
  %v2886 = vrot.slane %v2885, 1
  %v2887 = vmax.f32 %v2885, %v2886
  %v2888 = vsel %vm2313, %v1323, -inf
  %v2889 = vrot.slane %v2888, 4
  %v2890 = vmax.f32 %v2888, %v2889
  %v2891 = vrot.slane %v2890, 2
  %v2892 = vmax.f32 %v2890, %v2891
  %v2893 = vrot.slane %v2892, 1
  %v2894 = vmax.f32 %v2892, %v2893
  %v2895 = vsel %vm2313, %v1325, -inf
  %v2896 = vrot.slane %v2895, 4
  %v2897 = vmax.f32 %v2895, %v2896
  %v2898 = vrot.slane %v2897, 2
  %v2899 = vmax.f32 %v2897, %v2898
  %v2900 = vrot.slane %v2899, 1
  %v2901 = vmax.f32 %v2899, %v2900
  %v2902 = vsel %vm2313, %v1333, -inf
  %v2903 = vrot.slane %v2902, 4
  %v2904 = vmax.f32 %v2902, %v2903
  %v2905 = vrot.slane %v2904, 2
  %v2906 = vmax.f32 %v2904, %v2905
  %v2907 = vrot.slane %v2906, 1
  %v2908 = vmax.f32 %v2906, %v2907
  %v2909 = vsel %vm2313, %v1341, -inf
  %v2910 = vrot.slane %v2909, 4
  %v2911 = vmax.f32 %v2909, %v2910
  %v2912 = vrot.slane %v2911, 2
  %v2913 = vmax.f32 %v2911, %v2912
  %v2914 = vrot.slane %v2913, 1
  %v2915 = vmax.f32 %v2913, %v2914
  %v2916 = vsel %vm2313, %v1340, -inf
  %v2917 = vrot.slane %v2916, 4
  %v2918 = vmax.f32 %v2916, %v2917
  %v2919 = vrot.slane %v2918, 2
  %v2920 = vmax.f32 %v2918, %v2919
  %v2921 = vrot.slane %v2920, 1
  %v2922 = vmax.f32 %v2920, %v2921
  %v2923 = vsel %vm2313, %v1342, -inf
  %v2924 = vrot.slane %v2923, 4
  %v2925 = vmax.f32 %v2923, %v2924
  %v2926 = vrot.slane %v2925, 2
  %v2927 = vmax.f32 %v2925, %v2926
  %v2928 = vrot.slane %v2927, 1
  %v2929 = vmax.f32 %v2927, %v2928
  %v2930 = vsel %vm2313, %v1350, -inf
  %v2931 = vrot.slane %v2930, 4
  %v2932 = vmax.f32 %v2930, %v2931
  %v2933 = vrot.slane %v2932, 2
  %v2934 = vmax.f32 %v2932, %v2933
  %v2935 = vrot.slane %v2934, 1
  %v2936 = vmax.f32 %v2934, %v2935
  %v2937 = vsel %vm2313, %v1358, -inf
  %v2938 = vrot.slane %v2937, 4
  %v2939 = vmax.f32 %v2937, %v2938
  %v2940 = vrot.slane %v2939, 2
  %v2941 = vmax.f32 %v2939, %v2940
  %v2942 = vrot.slane %v2941, 1
  %v2943 = vmax.f32 %v2941, %v2942
  %v2944 = vsel %vm2313, %v1357, -inf
  %v2945 = vrot.slane %v2944, 4
  %v2946 = vmax.f32 %v2944, %v2945
  %v2947 = vrot.slane %v2946, 2
  %v2948 = vmax.f32 %v2946, %v2947
  %v2949 = vrot.slane %v2948, 1
  %v2950 = vmax.f32 %v2948, %v2949
  %v2951 = vsel %vm2313, %v1359, -inf
  %v2952 = vrot.slane %v2951, 4
  %v2953 = vmax.f32 %v2951, %v2952
  %v2954 = vrot.slane %v2953, 2
  %v2955 = vmax.f32 %v2953, %v2954
  %v2956 = vrot.slane %v2955, 1
  %v2957 = vmax.f32 %v2955, %v2956
  %v2958 = vsel %vm2313, %v1367, -inf
  %v2959 = vrot.slane %v2958, 4
  %v2960 = vmax.f32 %v2958, %v2959
  %v2961 = vrot.slane %v2960, 2
  %v2962 = vmax.f32 %v2960, %v2961
  %v2963 = vrot.slane %v2962, 1
  %v2964 = vmax.f32 %v2962, %v2963
  %v2965 = vsel %vm2313, %v1375, -inf
  %v2966 = vrot.slane %v2965, 4
  %v2967 = vmax.f32 %v2965, %v2966
  %v2968 = vrot.slane %v2967, 2
  %v2969 = vmax.f32 %v2967, %v2968
  %v2970 = vrot.slane %v2969, 1
  %v2971 = vmax.f32 %v2969, %v2970
  %v2972 = vsel %vm2313, %v1374, -inf
  %v2973 = vrot.slane %v2972, 4
  %v2974 = vmax.f32 %v2972, %v2973
  %v2975 = vrot.slane %v2974, 2
  %v2976 = vmax.f32 %v2974, %v2975
  %v2977 = vrot.slane %v2976, 1
  %v2978 = vmax.f32 %v2976, %v2977
  %v2979 = vsel %vm2313, %v1376, -inf
  %v2980 = vrot.slane %v2979, 4
  %v2981 = vmax.f32 %v2979, %v2980
  %v2982 = vrot.slane %v2981, 2
  %v2983 = vmax.f32 %v2981, %v2982
  %v2984 = vrot.slane %v2983, 1
  %v2985 = vmax.f32 %v2983, %v2984
  %v2986 = vsel %vm2313, %v1384, -inf
  %v2987 = vrot.slane %v2986, 4
  %v2988 = vmax.f32 %v2986, %v2987
  %v2989 = vrot.slane %v2988, 2
  %v2990 = vmax.f32 %v2988, %v2989
  %v2991 = vrot.slane %v2990, 1
  %v2992 = vmax.f32 %v2990, %v2991
  %v2993 = vsel %vm2313, %v1392, -inf
  %v2994 = vrot.slane %v2993, 4
  %v2995 = vmax.f32 %v2993, %v2994
  %v2996 = vrot.slane %v2995, 2
  %v2997 = vmax.f32 %v2995, %v2996
  %v2998 = vrot.slane %v2997, 1
  %v2999 = vmax.f32 %v2997, %v2998
  %v3000 = vsel %vm2313, %v1391, -inf
  %v3001 = vrot.slane %v3000, 4
  %v3002 = vmax.f32 %v3000, %v3001
  %v3003 = vrot.slane %v3002, 2
  %v3004 = vmax.f32 %v3002, %v3003
  %v3005 = vrot.slane %v3004, 1
  %v3006 = vmax.f32 %v3004, %v3005
  %v3007 = vsel %vm2313, %v1393, -inf
  %v3008 = vrot.slane %v3007, 4
  %v3009 = vmax.f32 %v3007, %v3008
  %v3010 = vrot.slane %v3009, 2
  %v3011 = vmax.f32 %v3009, %v3010
  %v3012 = vrot.slane %v3011, 1
  %v3013 = vmax.f32 %v3011, %v3012
  %v3014 = vsel %vm2313, %v1401, -inf
  %v3015 = vrot.slane %v3014, 4
  %v3016 = vmax.f32 %v3014, %v3015
  %v3017 = vrot.slane %v3016, 2
  %v3018 = vmax.f32 %v3016, %v3017
  %v3019 = vrot.slane %v3018, 1
  %v3020 = vmax.f32 %v3018, %v3019
  %v3021 = vsel %vm2313, %v1409, -inf
  %v3022 = vrot.slane %v3021, 4
  %v3023 = vmax.f32 %v3021, %v3022
  %v3024 = vrot.slane %v3023, 2
  %v3025 = vmax.f32 %v3023, %v3024
  %v3026 = vrot.slane %v3025, 1
  %v3027 = vmax.f32 %v3025, %v3026
  %v3028 = vsel %vm2313, %v1408, -inf
  %v3029 = vrot.slane %v3028, 4
  %v3030 = vmax.f32 %v3028, %v3029
  %v3031 = vrot.slane %v3030, 2
  %v3032 = vmax.f32 %v3030, %v3031
  %v3033 = vrot.slane %v3032, 1
  %v3034 = vmax.f32 %v3032, %v3033
  %v3035 = vsel %vm2313, %v1410, -inf
  %v3036 = vrot.slane %v3035, 4
  %v3037 = vmax.f32 %v3035, %v3036
  %v3038 = vrot.slane %v3037, 2
  %v3039 = vmax.f32 %v3037, %v3038
  %v3040 = vrot.slane %v3039, 1
  %v3041 = vmax.f32 %v3039, %v3040
  %v3042 = vsel %vm2313, %v1418, -inf
  %v3043 = vrot.slane %v3042, 4
  %v3044 = vmax.f32 %v3042, %v3043
  %v3045 = vrot.slane %v3044, 2
  %v3046 = vmax.f32 %v3044, %v3045
  %v3047 = vrot.slane %v3046, 1
  %v3048 = vmax.f32 %v3046, %v3047
  %v3049 = vsel %vm2313, %v1426, -inf
  %v3050 = vrot.slane %v3049, 4
  %v3051 = vmax.f32 %v3049, %v3050
  %v3052 = vrot.slane %v3051, 2
  %v3053 = vmax.f32 %v3051, %v3052
  %v3054 = vrot.slane %v3053, 1
  %v3055 = vmax.f32 %v3053, %v3054
  %v3056 = vsel %vm2313, %v1425, -inf
  %v3057 = vrot.slane %v3056, 4
  %v3058 = vmax.f32 %v3056, %v3057
  %v3059 = vrot.slane %v3058, 2
  %v3060 = vmax.f32 %v3058, %v3059
  %v3061 = vrot.slane %v3060, 1
  %v3062 = vmax.f32 %v3060, %v3061
  %v3063 = vsel %vm2313, %v1427, -inf
  %v3064 = vrot.slane %v3063, 4
  %v3065 = vmax.f32 %v3063, %v3064
  %v3066 = vrot.slane %v3065, 2
  %v3067 = vmax.f32 %v3065, %v3066
  %v3068 = vrot.slane %v3067, 1
  %v3069 = vmax.f32 %v3067, %v3068
  %v3070 = vsel %vm2313, %v1435, -inf
  %v3071 = vrot.slane %v3070, 4
  %v3072 = vmax.f32 %v3070, %v3071
  %v3073 = vrot.slane %v3072, 2
  %v3074 = vmax.f32 %v3072, %v3073
  %v3075 = vrot.slane %v3074, 1
  %v3076 = vmax.f32 %v3074, %v3075
  %v3077 = vsel %vm2313, %v1443, -inf
  %v3078 = vrot.slane %v3077, 4
  %v3079 = vmax.f32 %v3077, %v3078
  %v3080 = vrot.slane %v3079, 2
  %v3081 = vmax.f32 %v3079, %v3080
  %v3082 = vrot.slane %v3081, 1
  %v3083 = vmax.f32 %v3081, %v3082
  %v3084 = vsel %vm2313, %v1442, -inf
  %v3085 = vrot.slane %v3084, 4
  %v3086 = vmax.f32 %v3084, %v3085
  %v3087 = vrot.slane %v3086, 2
  %v3088 = vmax.f32 %v3086, %v3087
  %v3089 = vrot.slane %v3088, 1
  %v3090 = vmax.f32 %v3088, %v3089
  %v3091 = vsel %vm2313, %v1444, -inf
  %v3092 = vrot.slane %v3091, 4
  %v3093 = vmax.f32 %v3091, %v3092
  %v3094 = vrot.slane %v3093, 2
  %v3095 = vmax.f32 %v3093, %v3094
  %v3096 = vrot.slane %v3095, 1
  %v3097 = vmax.f32 %v3095, %v3096
  %v3098 = vsel %vm2313, %v1452, -inf
  %v3099 = vrot.slane %v3098, 4
  %v3100 = vmax.f32 %v3098, %v3099
  %v3101 = vrot.slane %v3100, 2
  %v3102 = vmax.f32 %v3100, %v3101
  %v3103 = vrot.slane %v3102, 1
  %v3104 = vmax.f32 %v3102, %v3103
  %v3105 = vsel %vm2313, %v1460, -inf
  %v3106 = vrot.slane %v3105, 4
  %v3107 = vmax.f32 %v3105, %v3106
  %v3108 = vrot.slane %v3107, 2
  %v3109 = vmax.f32 %v3107, %v3108
  %v3110 = vrot.slane %v3109, 1
  %v3111 = vmax.f32 %v3109, %v3110
  %v3112 = vsel %vm2313, %v1459, -inf
  %v3113 = vrot.slane %v3112, 4
  %v3114 = vmax.f32 %v3112, %v3113
  %v3115 = vrot.slane %v3114, 2
  %v3116 = vmax.f32 %v3114, %v3115
  %v3117 = vrot.slane %v3116, 1
  %v3118 = vmax.f32 %v3116, %v3117
  %v3119 = vsel %vm2313, %v1461, -inf
  %v3120 = vrot.slane %v3119, 4
  %v3121 = vmax.f32 %v3119, %v3120
  %v3122 = vrot.slane %v3121, 2
  %v3123 = vmax.f32 %v3121, %v3122
  %v3124 = vrot.slane %v3123, 1
  %v3125 = vmax.f32 %v3123, %v3124
  %v3126 = vsel %vm2313, %v1469, -inf
  %v3127 = vrot.slane %v3126, 4
  %v3128 = vmax.f32 %v3126, %v3127
  %v3129 = vrot.slane %v3128, 2
  %v3130 = vmax.f32 %v3128, %v3129
  %v3131 = vrot.slane %v3130, 1
  %v3132 = vmax.f32 %v3130, %v3131
  %v3133 = vsel %vm2313, %v1477, -inf
  %v3134 = vrot.slane %v3133, 4
  %v3135 = vmax.f32 %v3133, %v3134
  %v3136 = vrot.slane %v3135, 2
  %v3137 = vmax.f32 %v3135, %v3136
  %v3138 = vrot.slane %v3137, 1
  %v3139 = vmax.f32 %v3137, %v3138
  %v3140 = vsel %vm2313, %v1476, -inf
  %v3141 = vrot.slane %v3140, 4
  %v3142 = vmax.f32 %v3140, %v3141
  %v3143 = vrot.slane %v3142, 2
  %v3144 = vmax.f32 %v3142, %v3143
  %v3145 = vrot.slane %v3144, 1
  %v3146 = vmax.f32 %v3144, %v3145
  %v3147 = vsel %vm2313, %v1478, -inf
  %v3148 = vrot.slane %v3147, 4
  %v3149 = vmax.f32 %v3147, %v3148
  %v3150 = vrot.slane %v3149, 2
  %v3151 = vmax.f32 %v3149, %v3150
  %v3152 = vrot.slane %v3151, 1
  %v3153 = vmax.f32 %v3151, %v3152
  %v3154 = vsel %vm2313, %v1486, -inf
  %v3155 = vrot.slane %v3154, 4
  %v3156 = vmax.f32 %v3154, %v3155
  %v3157 = vrot.slane %v3156, 2
  %v3158 = vmax.f32 %v3156, %v3157
  %v3159 = vrot.slane %v3158, 1
  %v3160 = vmax.f32 %v3158, %v3159
  %v3161 = vsel %vm2313, %v1494, -inf
  %v3162 = vrot.slane %v3161, 4
  %v3163 = vmax.f32 %v3161, %v3162
  %v3164 = vrot.slane %v3163, 2
  %v3165 = vmax.f32 %v3163, %v3164
  %v3166 = vrot.slane %v3165, 1
  %v3167 = vmax.f32 %v3165, %v3166
  %v3168 = vsel %vm2313, %v1493, -inf
  %v3169 = vrot.slane %v3168, 4
  %v3170 = vmax.f32 %v3168, %v3169
  %v3171 = vrot.slane %v3170, 2
  %v3172 = vmax.f32 %v3170, %v3171
  %v3173 = vrot.slane %v3172, 1
  %v3174 = vmax.f32 %v3172, %v3173
  %v3175 = vsel %vm2313, %v1495, -inf
  %v3176 = vrot.slane %v3175, 4
  %v3177 = vmax.f32 %v3175, %v3176
  %v3178 = vrot.slane %v3177, 2
  %v3179 = vmax.f32 %v3177, %v3178
  %v3180 = vrot.slane %v3179, 1
  %v3181 = vmax.f32 %v3179, %v3180
  %v3182 = vsel %vm2313, %v1503, -inf
  %v3183 = vrot.slane %v3182, 4
  %v3184 = vmax.f32 %v3182, %v3183
  %v3185 = vrot.slane %v3184, 2
  %v3186 = vmax.f32 %v3184, %v3185
  %v3187 = vrot.slane %v3186, 1
  %v3188 = vmax.f32 %v3186, %v3187
  %v3189 = vsel %vm2313, %v1511, -inf
  %v3190 = vrot.slane %v3189, 4
  %v3191 = vmax.f32 %v3189, %v3190
  %v3192 = vrot.slane %v3191, 2
  %v3193 = vmax.f32 %v3191, %v3192
  %v3194 = vrot.slane %v3193, 1
  %v3195 = vmax.f32 %v3193, %v3194
  %v3196 = vsel %vm2313, %v1510, -inf
  %v3197 = vrot.slane %v3196, 4
  %v3198 = vmax.f32 %v3196, %v3197
  %v3199 = vrot.slane %v3198, 2
  %v3200 = vmax.f32 %v3198, %v3199
  %v3201 = vrot.slane %v3200, 1
  %v3202 = vmax.f32 %v3200, %v3201
  %v3203 = vsel %vm2313, %v1512, -inf
  %v3204 = vrot.slane %v3203, 4
  %v3205 = vmax.f32 %v3203, %v3204
  %v3206 = vrot.slane %v3205, 2
  %v3207 = vmax.f32 %v3205, %v3206
  %v3208 = vrot.slane %v3207, 1
  %v3209 = vmax.f32 %v3207, %v3208
  %v3210 = vsel %vm2313, %v1520, -inf
  %v3211 = vrot.slane %v3210, 4
  %v3212 = vmax.f32 %v3210, %v3211
  %v3213 = vrot.slane %v3212, 2
  %v3214 = vmax.f32 %v3212, %v3213
  %v3215 = vrot.slane %v3214, 1
  %v3216 = vmax.f32 %v3214, %v3215
  %v3217 = vsel %vm2313, %v1528, -inf
  %v3218 = vrot.slane %v3217, 4
  %v3219 = vmax.f32 %v3217, %v3218
  %v3220 = vrot.slane %v3219, 2
  %v3221 = vmax.f32 %v3219, %v3220
  %v3222 = vrot.slane %v3221, 1
  %v3223 = vmax.f32 %v3221, %v3222
  %v3224 = vsel %vm2313, %v1527, -inf
  %v3225 = vrot.slane %v3224, 4
  %v3226 = vmax.f32 %v3224, %v3225
  %v3227 = vrot.slane %v3226, 2
  %v3228 = vmax.f32 %v3226, %v3227
  %v3229 = vrot.slane %v3228, 1
  %v3230 = vmax.f32 %v3228, %v3229
  %v3231 = vsel %vm2313, %v1529, -inf
  %v3232 = vrot.slane %v3231, 4
  %v3233 = vmax.f32 %v3231, %v3232
  %v3234 = vrot.slane %v3233, 2
  %v3235 = vmax.f32 %v3233, %v3234
  %v3236 = vrot.slane %v3235, 1
  %v3237 = vmax.f32 %v3235, %v3236
  %v3238 = vsel %vm2313, %v1537, -inf
  %v3239 = vrot.slane %v3238, 4
  %v3240 = vmax.f32 %v3238, %v3239
  %v3241 = vrot.slane %v3240, 2
  %v3242 = vmax.f32 %v3240, %v3241
  %v3243 = vrot.slane %v3242, 1
  %v3244 = vmax.f32 %v3242, %v3243
  %v3245 = vsel %vm2313, %v1545, -inf
  %v3246 = vrot.slane %v3245, 4
  %v3247 = vmax.f32 %v3245, %v3246
  %v3248 = vrot.slane %v3247, 2
  %v3249 = vmax.f32 %v3247, %v3248
  %v3250 = vrot.slane %v3249, 1
  %v3251 = vmax.f32 %v3249, %v3250
  %v3252 = vsel %vm2313, %v1544, -inf
  %v3253 = vrot.slane %v3252, 4
  %v3254 = vmax.f32 %v3252, %v3253
  %v3255 = vrot.slane %v3254, 2
  %v3256 = vmax.f32 %v3254, %v3255
  %v3257 = vrot.slane %v3256, 1
  %v3258 = vmax.f32 %v3256, %v3257
  %v3259 = vsel %vm2313, %v1546, -inf
  %v3260 = vrot.slane %v3259, 4
  %v3261 = vmax.f32 %v3259, %v3260
  %v3262 = vrot.slane %v3261, 2
  %v3263 = vmax.f32 %v3261, %v3262
  %v3264 = vrot.slane %v3263, 1
  %v3265 = vmax.f32 %v3263, %v3264
  %v3266 = vsel %vm2313, %v1554, -inf
  %v3267 = vrot.slane %v3266, 4
  %v3268 = vmax.f32 %v3266, %v3267
  %v3269 = vrot.slane %v3268, 2
  %v3270 = vmax.f32 %v3268, %v3269
  %v3271 = vrot.slane %v3270, 1
  %v3272 = vmax.f32 %v3270, %v3271
  %v3273 = vsel %vm2313, %v1562, -inf
  %v3274 = vrot.slane %v3273, 4
  %v3275 = vmax.f32 %v3273, %v3274
  %v3276 = vrot.slane %v3275, 2
  %v3277 = vmax.f32 %v3275, %v3276
  %v3278 = vrot.slane %v3277, 1
  %v3279 = vmax.f32 %v3277, %v3278
  %v3280 = vsel %vm2313, %v1561, -inf
  %v3281 = vrot.slane %v3280, 4
  %v3282 = vmax.f32 %v3280, %v3281
  %v3283 = vrot.slane %v3282, 2
  %v3284 = vmax.f32 %v3282, %v3283
  %v3285 = vrot.slane %v3284, 1
  %v3286 = vmax.f32 %v3284, %v3285
  %v3287 = vsel %vm2313, %v1563, -inf
  %v3288 = vrot.slane %v3287, 4
  %v3289 = vmax.f32 %v3287, %v3288
  %v3290 = vrot.slane %v3289, 2
  %v3291 = vmax.f32 %v3289, %v3290
  %v3292 = vrot.slane %v3291, 1
  %v3293 = vmax.f32 %v3291, %v3292
  %v3294 = vsel %vm2313, %v1571, -inf
  %v3295 = vrot.slane %v3294, 4
  %v3296 = vmax.f32 %v3294, %v3295
  %v3297 = vrot.slane %v3296, 2
  %v3298 = vmax.f32 %v3296, %v3297
  %v3299 = vrot.slane %v3298, 1
  %v3300 = vmax.f32 %v3298, %v3299
  %v3301 = vsel %vm2313, %v1579, -inf
  %v3302 = vrot.slane %v3301, 4
  %v3303 = vmax.f32 %v3301, %v3302
  %v3304 = vrot.slane %v3303, 2
  %v3305 = vmax.f32 %v3303, %v3304
  %v3306 = vrot.slane %v3305, 1
  %v3307 = vmax.f32 %v3305, %v3306
  %v3308 = vsel %vm2313, %v1578, -inf
  %v3309 = vrot.slane %v3308, 4
  %v3310 = vmax.f32 %v3308, %v3309
  %v3311 = vrot.slane %v3310, 2
  %v3312 = vmax.f32 %v3310, %v3311
  %v3313 = vrot.slane %v3312, 1
  %v3314 = vmax.f32 %v3312, %v3313
  %v3315 = vsel %vm2313, %v1580, -inf
  %v3316 = vrot.slane %v3315, 4
  %v3317 = vmax.f32 %v3315, %v3316
  %v3318 = vrot.slane %v3317, 2
  %v3319 = vmax.f32 %v3317, %v3318
  %v3320 = vrot.slane %v3319, 1
  %v3321 = vmax.f32 %v3319, %v3320
  %v3322 = vsel %vm2313, %v1588, -inf
  %v3323 = vrot.slane %v3322, 4
  %v3324 = vmax.f32 %v3322, %v3323
  %v3325 = vrot.slane %v3324, 2
  %v3326 = vmax.f32 %v3324, %v3325
  %v3327 = vrot.slane %v3326, 1
  %v3328 = vmax.f32 %v3326, %v3327
  %v3329 = vsel %vm2313, %v1596, -inf
  %v3330 = vrot.slane %v3329, 4
  %v3331 = vmax.f32 %v3329, %v3330
  %v3332 = vrot.slane %v3331, 2
  %v3333 = vmax.f32 %v3331, %v3332
  %v3334 = vrot.slane %v3333, 1
  %v3335 = vmax.f32 %v3333, %v3334
  %v3336 = vsel %vm2313, %v1595, -inf
  %v3337 = vrot.slane %v3336, 4
  %v3338 = vmax.f32 %v3336, %v3337
  %v3339 = vrot.slane %v3338, 2
  %v3340 = vmax.f32 %v3338, %v3339
  %v3341 = vrot.slane %v3340, 1
  %v3342 = vmax.f32 %v3340, %v3341
  %v3343 = vsel %vm2313, %v1597, -inf
  %v3344 = vrot.slane %v3343, 4
  %v3345 = vmax.f32 %v3343, %v3344
  %v3346 = vrot.slane %v3345, 2
  %v3347 = vmax.f32 %v3345, %v3346
  %v3348 = vrot.slane %v3347, 1
  %v3349 = vmax.f32 %v3347, %v3348
  %v3350 = vsel %vm2313, %v1605, -inf
  %v3351 = vrot.slane %v3350, 4
  %v3352 = vmax.f32 %v3350, %v3351
  %v3353 = vrot.slane %v3352, 2
  %v3354 = vmax.f32 %v3352, %v3353
  %v3355 = vrot.slane %v3354, 1
  %v3356 = vmax.f32 %v3354, %v3355
  %v3357 = vsel %vm2313, %v1613, -inf
  %v3358 = vrot.slane %v3357, 4
  %v3359 = vmax.f32 %v3357, %v3358
  %v3360 = vrot.slane %v3359, 2
  %v3361 = vmax.f32 %v3359, %v3360
  %v3362 = vrot.slane %v3361, 1
  %v3363 = vmax.f32 %v3361, %v3362
  %v3364 = vsel %vm2313, %v1612, -inf
  %v3365 = vrot.slane %v3364, 4
  %v3366 = vmax.f32 %v3364, %v3365
  %v3367 = vrot.slane %v3366, 2
  %v3368 = vmax.f32 %v3366, %v3367
  %v3369 = vrot.slane %v3368, 1
  %v3370 = vmax.f32 %v3368, %v3369
  %v3371 = vsel %vm2313, %v1614, -inf
  %v3372 = vrot.slane %v3371, 4
  %v3373 = vmax.f32 %v3371, %v3372
  %v3374 = vrot.slane %v3373, 2
  %v3375 = vmax.f32 %v3373, %v3374
  %v3376 = vrot.slane %v3375, 1
  %v3377 = vmax.f32 %v3375, %v3376
  %v3378 = vsel %vm2313, %v1622, -inf
  %v3379 = vrot.slane %v3378, 4
  %v3380 = vmax.f32 %v3378, %v3379
  %v3381 = vrot.slane %v3380, 2
  %v3382 = vmax.f32 %v3380, %v3381
  %v3383 = vrot.slane %v3382, 1
  %v3384 = vmax.f32 %v3382, %v3383
  %v3385 = vsel %vm2313, %v1630, -inf
  %v3386 = vrot.slane %v3385, 4
  %v3387 = vmax.f32 %v3385, %v3386
  %v3388 = vrot.slane %v3387, 2
  %v3389 = vmax.f32 %v3387, %v3388
  %v3390 = vrot.slane %v3389, 1
  %v3391 = vmax.f32 %v3389, %v3390
  %v3392 = vsel %vm2313, %v1629, -inf
  %v3393 = vrot.slane %v3392, 4
  %v3394 = vmax.f32 %v3392, %v3393
  %v3395 = vrot.slane %v3394, 2
  %v3396 = vmax.f32 %v3394, %v3395
  %v3397 = vrot.slane %v3396, 1
  %v3398 = vmax.f32 %v3396, %v3397
  %v3399 = vsel %vm2313, %v1631, -inf
  %v3400 = vrot.slane %v3399, 4
  %v3401 = vmax.f32 %v3399, %v3400
  %v3402 = vrot.slane %v3401, 2
  %v3403 = vmax.f32 %v3401, %v3402
  %v3404 = vrot.slane %v3403, 1
  %v3405 = vmax.f32 %v3403, %v3404
  %v3406 = vsel %vm2313, %v1639, -inf
  %v3407 = vrot.slane %v3406, 4
  %v3408 = vmax.f32 %v3406, %v3407
  %v3409 = vrot.slane %v3408, 2
  %v3410 = vmax.f32 %v3408, %v3409
  %v3411 = vrot.slane %v3410, 1
  %v3412 = vmax.f32 %v3410, %v3411
  %v3413 = vsel %vm2313, %v1647, -inf
  %v3414 = vrot.slane %v3413, 4
  %v3415 = vmax.f32 %v3413, %v3414
  %v3416 = vrot.slane %v3415, 2
  %v3417 = vmax.f32 %v3415, %v3416
  %v3418 = vrot.slane %v3417, 1
  %v3419 = vmax.f32 %v3417, %v3418
  %v3420 = vsel %vm2313, %v1646, -inf
  %v3421 = vrot.slane %v3420, 4
  %v3422 = vmax.f32 %v3420, %v3421
  %v3423 = vrot.slane %v3422, 2
  %v3424 = vmax.f32 %v3422, %v3423
  %v3425 = vrot.slane %v3424, 1
  %v3426 = vmax.f32 %v3424, %v3425
  %v3427 = vsel %vm2313, %v1648, -inf
  %v3428 = vrot.slane %v3427, 4
  %v3429 = vmax.f32 %v3427, %v3428
  %v3430 = vrot.slane %v3429, 2
  %v3431 = vmax.f32 %v3429, %v3430
  %v3432 = vrot.slane %v3431, 1
  %v3433 = vmax.f32 %v3431, %v3432
  %v3434 = vsel %vm2313, %v1656, -inf
  %v3435 = vrot.slane %v3434, 4
  %v3436 = vmax.f32 %v3434, %v3435
  %v3437 = vrot.slane %v3436, 2
  %v3438 = vmax.f32 %v3436, %v3437
  %v3439 = vrot.slane %v3438, 1
  %v3440 = vmax.f32 %v3438, %v3439
  %v3441 = vsel %vm2313, %v1664, -inf
  %v3442 = vrot.slane %v3441, 4
  %v3443 = vmax.f32 %v3441, %v3442
  %v3444 = vrot.slane %v3443, 2
  %v3445 = vmax.f32 %v3443, %v3444
  %v3446 = vrot.slane %v3445, 1
  %v3447 = vmax.f32 %v3445, %v3446
  %v3448 = vsel %vm2313, %v1663, -inf
  %v3449 = vrot.slane %v3448, 4
  %v3450 = vmax.f32 %v3448, %v3449
  %v3451 = vrot.slane %v3450, 2
  %v3452 = vmax.f32 %v3450, %v3451
  %v3453 = vrot.slane %v3452, 1
  %v3454 = vmax.f32 %v3452, %v3453
  %v3455 = vsel %vm2313, %v1665, -inf
  %v3456 = vrot.slane %v3455, 4
  %v3457 = vmax.f32 %v3455, %v3456
  %v3458 = vrot.slane %v3457, 2
  %v3459 = vmax.f32 %v3457, %v3458
  %v3460 = vrot.slane %v3459, 1
  %v3461 = vmax.f32 %v3459, %v3460
  %v3462 = vsel %vm2313, %v1673, -inf
  %v3463 = vrot.slane %v3462, 4
  %v3464 = vmax.f32 %v3462, %v3463
  %v3465 = vrot.slane %v3464, 2
  %v3466 = vmax.f32 %v3464, %v3465
  %v3467 = vrot.slane %v3466, 1
  %v3468 = vmax.f32 %v3466, %v3467
  %v3469 = vsel %vm2313, %v1681, -inf
  %v3470 = vrot.slane %v3469, 4
  %v3471 = vmax.f32 %v3469, %v3470
  %v3472 = vrot.slane %v3471, 2
  %v3473 = vmax.f32 %v3471, %v3472
  %v3474 = vrot.slane %v3473, 1
  %v3475 = vmax.f32 %v3473, %v3474
  %v3476 = vsel %vm2313, %v1680, -inf
  %v3477 = vrot.slane %v3476, 4
  %v3478 = vmax.f32 %v3476, %v3477
  %v3479 = vrot.slane %v3478, 2
  %v3480 = vmax.f32 %v3478, %v3479
  %v3481 = vrot.slane %v3480, 1
  %v3482 = vmax.f32 %v3480, %v3481
  %v3483 = vsel %vm2313, %v1682, -inf
  %v3484 = vrot.slane %v3483, 4
  %v3485 = vmax.f32 %v3483, %v3484
  %v3486 = vrot.slane %v3485, 2
  %v3487 = vmax.f32 %v3485, %v3486
  %v3488 = vrot.slane %v3487, 1
  %v3489 = vmax.f32 %v3487, %v3488
  %v3490 = vsel %vm2313, %v1690, -inf
  %v3491 = vrot.slane %v3490, 4
  %v3492 = vmax.f32 %v3490, %v3491
  %v3493 = vrot.slane %v3492, 2
  %v3494 = vmax.f32 %v3492, %v3493
  %v3495 = vrot.slane %v3494, 1
  %v3496 = vmax.f32 %v3494, %v3495
  %v3497 = vsel %vm2313, %v1698, -inf
  %v3498 = vrot.slane %v3497, 4
  %v3499 = vmax.f32 %v3497, %v3498
  %v3500 = vrot.slane %v3499, 2
  %v3501 = vmax.f32 %v3499, %v3500
  %v3502 = vrot.slane %v3501, 1
  %v3503 = vmax.f32 %v3501, %v3502
  %v3504 = vsel %vm2313, %v1697, -inf
  %v3505 = vrot.slane %v3504, 4
  %v3506 = vmax.f32 %v3504, %v3505
  %v3507 = vrot.slane %v3506, 2
  %v3508 = vmax.f32 %v3506, %v3507
  %v3509 = vrot.slane %v3508, 1
  %v3510 = vmax.f32 %v3508, %v3509
  %v3511 = vsel %vm2313, %v1699, -inf
  %v3512 = vrot.slane %v3511, 4
  %v3513 = vmax.f32 %v3511, %v3512
  %v3514 = vrot.slane %v3513, 2
  %v3515 = vmax.f32 %v3513, %v3514
  %v3516 = vrot.slane %v3515, 1
  %v3517 = vmax.f32 %v3515, %v3516
  %v3518 = vsel %vm2313, %v1707, -inf
  %v3519 = vrot.slane %v3518, 4
  %v3520 = vmax.f32 %v3518, %v3519
  %v3521 = vrot.slane %v3520, 2
  %v3522 = vmax.f32 %v3520, %v3521
  %v3523 = vrot.slane %v3522, 1
  %v3524 = vmax.f32 %v3522, %v3523
  %v3525 = vsel %vm2313, %v1715, -inf
  %v3526 = vrot.slane %v3525, 4
  %v3527 = vmax.f32 %v3525, %v3526
  %v3528 = vrot.slane %v3527, 2
  %v3529 = vmax.f32 %v3527, %v3528
  %v3530 = vrot.slane %v3529, 1
  %v3531 = vmax.f32 %v3529, %v3530
  %v3532 = vsel %vm2313, %v1714, -inf
  %v3533 = vrot.slane %v3532, 4
  %v3534 = vmax.f32 %v3532, %v3533
  %v3535 = vrot.slane %v3534, 2
  %v3536 = vmax.f32 %v3534, %v3535
  %v3537 = vrot.slane %v3536, 1
  %v3538 = vmax.f32 %v3536, %v3537
  %v3539 = vsel %vm2313, %v1716, -inf
  %v3540 = vrot.slane %v3539, 4
  %v3541 = vmax.f32 %v3539, %v3540
  %v3542 = vrot.slane %v3541, 2
  %v3543 = vmax.f32 %v3541, %v3542
  %v3544 = vrot.slane %v3543, 1
  %v3545 = vmax.f32 %v3543, %v3544
  %v3546 = vsel %vm2313, %v1724, -inf
  %v3547 = vrot.slane %v3546, 4
  %v3548 = vmax.f32 %v3546, %v3547
  %v3549 = vrot.slane %v3548, 2
  %v3550 = vmax.f32 %v3548, %v3549
  %v3551 = vrot.slane %v3550, 1
  %v3552 = vmax.f32 %v3550, %v3551
  %v3553 = vsel %vm2313, %v1732, -inf
  %v3554 = vrot.slane %v3553, 4
  %v3555 = vmax.f32 %v3553, %v3554
  %v3556 = vrot.slane %v3555, 2
  %v3557 = vmax.f32 %v3555, %v3556
  %v3558 = vrot.slane %v3557, 1
  %v3559 = vmax.f32 %v3557, %v3558
  %v3560 = vsel %vm2313, %v1731, -inf
  %v3561 = vrot.slane %v3560, 4
  %v3562 = vmax.f32 %v3560, %v3561
  %v3563 = vrot.slane %v3562, 2
  %v3564 = vmax.f32 %v3562, %v3563
  %v3565 = vrot.slane %v3564, 1
  %v3566 = vmax.f32 %v3564, %v3565
  %v3567 = vsel %vm2313, %v1733, -inf
  %v3568 = vrot.slane %v3567, 4
  %v3569 = vmax.f32 %v3567, %v3568
  %v3570 = vrot.slane %v3569, 2
  %v3571 = vmax.f32 %v3569, %v3570
  %v3572 = vrot.slane %v3571, 1
  %v3573 = vmax.f32 %v3571, %v3572
  %v3574 = vsel %vm2313, %v1741, -inf
  %v3575 = vrot.slane %v3574, 4
  %v3576 = vmax.f32 %v3574, %v3575
  %v3577 = vrot.slane %v3576, 2
  %v3578 = vmax.f32 %v3576, %v3577
  %v3579 = vrot.slane %v3578, 1
  %v3580 = vmax.f32 %v3578, %v3579
  %v3581 = vsel %vm2313, %v1749, -inf
  %v3582 = vrot.slane %v3581, 4
  %v3583 = vmax.f32 %v3581, %v3582
  %v3584 = vrot.slane %v3583, 2
  %v3585 = vmax.f32 %v3583, %v3584
  %v3586 = vrot.slane %v3585, 1
  %v3587 = vmax.f32 %v3585, %v3586
  %v3588 = vsel %vm2313, %v1748, -inf
  %v3589 = vrot.slane %v3588, 4
  %v3590 = vmax.f32 %v3588, %v3589
  %v3591 = vrot.slane %v3590, 2
  %v3592 = vmax.f32 %v3590, %v3591
  %v3593 = vrot.slane %v3592, 1
  %v3594 = vmax.f32 %v3592, %v3593
  %v3595 = vsel %vm2313, %v1750, -inf
  %v3596 = vrot.slane %v3595, 4
  %v3597 = vmax.f32 %v3595, %v3596
  %v3598 = vrot.slane %v3597, 2
  %v3599 = vmax.f32 %v3597, %v3598
  %v3600 = vrot.slane %v3599, 1
  %v3601 = vmax.f32 %v3599, %v3600
  %v3602 = vsel %vm2313, %v1758, -inf
  %v3603 = vrot.slane %v3602, 4
  %v3604 = vmax.f32 %v3602, %v3603
  %v3605 = vrot.slane %v3604, 2
  %v3606 = vmax.f32 %v3604, %v3605
  %v3607 = vrot.slane %v3606, 1
  %v3608 = vmax.f32 %v3606, %v3607
  %v3609 = vsel %vm2313, %v1766, -inf
  %v3610 = vrot.slane %v3609, 4
  %v3611 = vmax.f32 %v3609, %v3610
  %v3612 = vrot.slane %v3611, 2
  %v3613 = vmax.f32 %v3611, %v3612
  %v3614 = vrot.slane %v3613, 1
  %v3615 = vmax.f32 %v3613, %v3614
  %v3616 = vsel %vm2313, %v1765, -inf
  %v3617 = vrot.slane %v3616, 4
  %v3618 = vmax.f32 %v3616, %v3617
  %v3619 = vrot.slane %v3618, 2
  %v3620 = vmax.f32 %v3618, %v3619
  %v3621 = vrot.slane %v3620, 1
  %v3622 = vmax.f32 %v3620, %v3621
  %v3623 = vsel %vm2313, %v1767, -inf
  %v3624 = vrot.slane %v3623, 4
  %v3625 = vmax.f32 %v3623, %v3624
  %v3626 = vrot.slane %v3625, 2
  %v3627 = vmax.f32 %v3625, %v3626
  %v3628 = vrot.slane %v3627, 1
  %v3629 = vmax.f32 %v3627, %v3628
  %v3630 = vsel %vm2313, %v1775, -inf
  %v3631 = vrot.slane %v3630, 4
  %v3632 = vmax.f32 %v3630, %v3631
  %v3633 = vrot.slane %v3632, 2
  %v3634 = vmax.f32 %v3632, %v3633
  %v3635 = vrot.slane %v3634, 1
  %v3636 = vmax.f32 %v3634, %v3635
  %v3637 = vsel %vm2313, %v1783, -inf
  %v3638 = vrot.slane %v3637, 4
  %v3639 = vmax.f32 %v3637, %v3638
  %v3640 = vrot.slane %v3639, 2
  %v3641 = vmax.f32 %v3639, %v3640
  %v3642 = vrot.slane %v3641, 1
  %v3643 = vmax.f32 %v3641, %v3642
  %v3644 = vsel %vm2313, %v1782, -inf
  %v3645 = vrot.slane %v3644, 4
  %v3646 = vmax.f32 %v3644, %v3645
  %v3647 = vrot.slane %v3646, 2
  %v3648 = vmax.f32 %v3646, %v3647
  %v3649 = vrot.slane %v3648, 1
  %v3650 = vmax.f32 %v3648, %v3649
  %v3651 = vsel %vm2313, %v1784, -inf
  %v3652 = vrot.slane %v3651, 4
  %v3653 = vmax.f32 %v3651, %v3652
  %v3654 = vrot.slane %v3653, 2
  %v3655 = vmax.f32 %v3653, %v3654
  %v3656 = vrot.slane %v3655, 1
  %v3657 = vmax.f32 %v3655, %v3656
  %v3658 = vsel %vm2313, %v1792, -inf
  %v3659 = vrot.slane %v3658, 4
  %v3660 = vmax.f32 %v3658, %v3659
  %v3661 = vrot.slane %v3660, 2
  %v3662 = vmax.f32 %v3660, %v3661
  %v3663 = vrot.slane %v3662, 1
  %v3664 = vmax.f32 %v3662, %v3663
  %v3665 = vsel %vm2313, %v1800, -inf
  %v3666 = vrot.slane %v3665, 4
  %v3667 = vmax.f32 %v3665, %v3666
  %v3668 = vrot.slane %v3667, 2
  %v3669 = vmax.f32 %v3667, %v3668
  %v3670 = vrot.slane %v3669, 1
  %v3671 = vmax.f32 %v3669, %v3670
  %v3672 = vsel %vm2313, %v1799, -inf
  %v3673 = vrot.slane %v3672, 4
  %v3674 = vmax.f32 %v3672, %v3673
  %v3675 = vrot.slane %v3674, 2
  %v3676 = vmax.f32 %v3674, %v3675
  %v3677 = vrot.slane %v3676, 1
  %v3678 = vmax.f32 %v3676, %v3677
  %v3679 = vsel %vm2313, %v1801, -inf
  %v3680 = vrot.slane %v3679, 4
  %v3681 = vmax.f32 %v3679, %v3680
  %v3682 = vrot.slane %v3681, 2
  %v3683 = vmax.f32 %v3681, %v3682
  %v3684 = vrot.slane %v3683, 1
  %v3685 = vmax.f32 %v3683, %v3684
  %v3686 = vsel %vm2313, %v1809, -inf
  %v3687 = vrot.slane %v3686, 4
  %v3688 = vmax.f32 %v3686, %v3687
  %v3689 = vrot.slane %v3688, 2
  %v3690 = vmax.f32 %v3688, %v3689
  %v3691 = vrot.slane %v3690, 1
  %v3692 = vmax.f32 %v3690, %v3691
  %v3693 = vsel %vm2313, %v1817, -inf
  %v3694 = vrot.slane %v3693, 4
  %v3695 = vmax.f32 %v3693, %v3694
  %v3696 = vrot.slane %v3695, 2
  %v3697 = vmax.f32 %v3695, %v3696
  %v3698 = vrot.slane %v3697, 1
  %v3699 = vmax.f32 %v3697, %v3698
  %v3700 = vsel %vm2313, %v1816, -inf
  %v3701 = vrot.slane %v3700, 4
  %v3702 = vmax.f32 %v3700, %v3701
  %v3703 = vrot.slane %v3702, 2
  %v3704 = vmax.f32 %v3702, %v3703
  %v3705 = vrot.slane %v3704, 1
  %v3706 = vmax.f32 %v3704, %v3705
  %v3707 = vsel %vm2313, %v1818, -inf
  %v3708 = vrot.slane %v3707, 4
  %v3709 = vmax.f32 %v3707, %v3708
  %v3710 = vrot.slane %v3709, 2
  %v3711 = vmax.f32 %v3709, %v3710
  %v3712 = vrot.slane %v3711, 1
  %v3713 = vmax.f32 %v3711, %v3712
  %v3714 = vsel %vm2313, %v1826, -inf
  %v3715 = vrot.slane %v3714, 4
  %v3716 = vmax.f32 %v3714, %v3715
  %v3717 = vrot.slane %v3716, 2
  %v3718 = vmax.f32 %v3716, %v3717
  %v3719 = vrot.slane %v3718, 1
  %v3720 = vmax.f32 %v3718, %v3719
  %v3721 = vsel %vm2313, %v1834, -inf
  %v3722 = vrot.slane %v3721, 4
  %v3723 = vmax.f32 %v3721, %v3722
  %v3724 = vrot.slane %v3723, 2
  %v3725 = vmax.f32 %v3723, %v3724
  %v3726 = vrot.slane %v3725, 1
  %v3727 = vmax.f32 %v3725, %v3726
  %v3728 = vsel %vm2313, %v1833, -inf
  %v3729 = vrot.slane %v3728, 4
  %v3730 = vmax.f32 %v3728, %v3729
  %v3731 = vrot.slane %v3730, 2
  %v3732 = vmax.f32 %v3730, %v3731
  %v3733 = vrot.slane %v3732, 1
  %v3734 = vmax.f32 %v3732, %v3733
  %v3735 = vsel %vm2313, %v1835, -inf
  %v3736 = vrot.slane %v3735, 4
  %v3737 = vmax.f32 %v3735, %v3736
  %v3738 = vrot.slane %v3737, 2
  %v3739 = vmax.f32 %v3737, %v3738
  %v3740 = vrot.slane %v3739, 1
  %v3741 = vmax.f32 %v3739, %v3740
  %v3742 = vsel %vm2313, %v1843, -inf
  %v3743 = vrot.slane %v3742, 4
  %v3744 = vmax.f32 %v3742, %v3743
  %v3745 = vrot.slane %v3744, 2
  %v3746 = vmax.f32 %v3744, %v3745
  %v3747 = vrot.slane %v3746, 1
  %v3748 = vmax.f32 %v3746, %v3747
  %v3749 = vsel %vm2313, %v1851, -inf
  %v3750 = vrot.slane %v3749, 4
  %v3751 = vmax.f32 %v3749, %v3750
  %v3752 = vrot.slane %v3751, 2
  %v3753 = vmax.f32 %v3751, %v3752
  %v3754 = vrot.slane %v3753, 1
  %v3755 = vmax.f32 %v3753, %v3754
  %v3756 = vsel %vm2313, %v1850, -inf
  %v3757 = vrot.slane %v3756, 4
  %v3758 = vmax.f32 %v3756, %v3757
  %v3759 = vrot.slane %v3758, 2
  %v3760 = vmax.f32 %v3758, %v3759
  %v3761 = vrot.slane %v3760, 1
  %v3762 = vmax.f32 %v3760, %v3761
  %v3763 = vsel %vm2313, %v1852, -inf
  %v3764 = vrot.slane %v3763, 4
  %v3765 = vmax.f32 %v3763, %v3764
  %v3766 = vrot.slane %v3765, 2
  %v3767 = vmax.f32 %v3765, %v3766
  %v3768 = vrot.slane %v3767, 1
  %v3769 = vmax.f32 %v3767, %v3768
  %v3770 = vsel %vm2313, %v1860, -inf
  %v3771 = vrot.slane %v3770, 4
  %v3772 = vmax.f32 %v3770, %v3771
  %v3773 = vrot.slane %v3772, 2
  %v3774 = vmax.f32 %v3772, %v3773
  %v3775 = vrot.slane %v3774, 1
  %v3776 = vmax.f32 %v3774, %v3775
  %v3777 = vsel %vm2313, %v1868, -inf
  %v3778 = vrot.slane %v3777, 4
  %v3779 = vmax.f32 %v3777, %v3778
  %v3780 = vrot.slane %v3779, 2
  %v3781 = vmax.f32 %v3779, %v3780
  %v3782 = vrot.slane %v3781, 1
  %v3783 = vmax.f32 %v3781, %v3782
  %v3784 = vsel %vm2313, %v1867, -inf
  %v3785 = vrot.slane %v3784, 4
  %v3786 = vmax.f32 %v3784, %v3785
  %v3787 = vrot.slane %v3786, 2
  %v3788 = vmax.f32 %v3786, %v3787
  %v3789 = vrot.slane %v3788, 1
  %v3790 = vmax.f32 %v3788, %v3789
  %v3791 = vsel %vm2313, %v1869, -inf
  %v3792 = vrot.slane %v3791, 4
  %v3793 = vmax.f32 %v3791, %v3792
  %v3794 = vrot.slane %v3793, 2
  %v3795 = vmax.f32 %v3793, %v3794
  %v3796 = vrot.slane %v3795, 1
  %v3797 = vmax.f32 %v3795, %v3796
  %v3798 = vsel %vm2313, %v1877, -inf
  %v3799 = vrot.slane %v3798, 4
  %v3800 = vmax.f32 %v3798, %v3799
  %v3801 = vrot.slane %v3800, 2
  %v3802 = vmax.f32 %v3800, %v3801
  %v3803 = vrot.slane %v3802, 1
  %v3804 = vmax.f32 %v3802, %v3803
  %v3805 = vsel %vm2313, %v1885, -inf
  %v3806 = vrot.slane %v3805, 4
  %v3807 = vmax.f32 %v3805, %v3806
  %v3808 = vrot.slane %v3807, 2
  %v3809 = vmax.f32 %v3807, %v3808
  %v3810 = vrot.slane %v3809, 1
  %v3811 = vmax.f32 %v3809, %v3810
  %v3812 = vsel %vm2313, %v1884, -inf
  %v3813 = vrot.slane %v3812, 4
  %v3814 = vmax.f32 %v3812, %v3813
  %v3815 = vrot.slane %v3814, 2
  %v3816 = vmax.f32 %v3814, %v3815
  %v3817 = vrot.slane %v3816, 1
  %v3818 = vmax.f32 %v3816, %v3817
  %v3819 = vsel %vm2313, %v1886, -inf
  %v3820 = vrot.slane %v3819, 4
  %v3821 = vmax.f32 %v3819, %v3820
  %v3822 = vrot.slane %v3821, 2
  %v3823 = vmax.f32 %v3821, %v3822
  %v3824 = vrot.slane %v3823, 1
  %v3825 = vmax.f32 %v3823, %v3824
  %v3826 = vsel %vm2313, %v1894, -inf
  %v3827 = vrot.slane %v3826, 4
  %v3828 = vmax.f32 %v3826, %v3827
  %v3829 = vrot.slane %v3828, 2
  %v3830 = vmax.f32 %v3828, %v3829
  %v3831 = vrot.slane %v3830, 1
  %v3832 = vmax.f32 %v3830, %v3831
  %v3833 = vsel %vm2313, %v1902, -inf
  %v3834 = vrot.slane %v3833, 4
  %v3835 = vmax.f32 %v3833, %v3834
  %v3836 = vrot.slane %v3835, 2
  %v3837 = vmax.f32 %v3835, %v3836
  %v3838 = vrot.slane %v3837, 1
  %v3839 = vmax.f32 %v3837, %v3838
  %v3840 = vsel %vm2313, %v1901, -inf
  %v3841 = vrot.slane %v3840, 4
  %v3842 = vmax.f32 %v3840, %v3841
  %v3843 = vrot.slane %v3842, 2
  %v3844 = vmax.f32 %v3842, %v3843
  %v3845 = vrot.slane %v3844, 1
  %v3846 = vmax.f32 %v3844, %v3845
  %v3847 = vsel %vm2313, %v1903, -inf
  %v3848 = vrot.slane %v3847, 4
  %v3849 = vmax.f32 %v3847, %v3848
  %v3850 = vrot.slane %v3849, 2
  %v3851 = vmax.f32 %v3849, %v3850
  %v3852 = vrot.slane %v3851, 1
  %v3853 = vmax.f32 %v3851, %v3852
  %v3854 = vsel %vm2313, %v1911, -inf
  %v3855 = vrot.slane %v3854, 4
  %v3856 = vmax.f32 %v3854, %v3855
  %v3857 = vrot.slane %v3856, 2
  %v3858 = vmax.f32 %v3856, %v3857
  %v3859 = vrot.slane %v3858, 1
  %v3860 = vmax.f32 %v3858, %v3859
  %v3861 = vsel %vm2313, %v1919, -inf
  %v3862 = vrot.slane %v3861, 4
  %v3863 = vmax.f32 %v3861, %v3862
  %v3864 = vrot.slane %v3863, 2
  %v3865 = vmax.f32 %v3863, %v3864
  %v3866 = vrot.slane %v3865, 1
  %v3867 = vmax.f32 %v3865, %v3866
  %v3868 = vsel %vm2313, %v1918, -inf
  %v3869 = vrot.slane %v3868, 4
  %v3870 = vmax.f32 %v3868, %v3869
  %v3871 = vrot.slane %v3870, 2
  %v3872 = vmax.f32 %v3870, %v3871
  %v3873 = vrot.slane %v3872, 1
  %v3874 = vmax.f32 %v3872, %v3873
  %v3875 = vsel %vm2313, %v1920, -inf
  %v3876 = vrot.slane %v3875, 4
  %v3877 = vmax.f32 %v3875, %v3876
  %v3878 = vrot.slane %v3877, 2
  %v3879 = vmax.f32 %v3877, %v3878
  %v3880 = vrot.slane %v3879, 1
  %v3881 = vmax.f32 %v3879, %v3880
  %v3882 = vsel %vm2313, %v1928, -inf
  %v3883 = vrot.slane %v3882, 4
  %v3884 = vmax.f32 %v3882, %v3883
  %v3885 = vrot.slane %v3884, 2
  %v3886 = vmax.f32 %v3884, %v3885
  %v3887 = vrot.slane %v3886, 1
  %v3888 = vmax.f32 %v3886, %v3887
  %v3889 = vsel %vm2313, %v1936, -inf
  %v3890 = vrot.slane %v3889, 4
  %v3891 = vmax.f32 %v3889, %v3890
  %v3892 = vrot.slane %v3891, 2
  %v3893 = vmax.f32 %v3891, %v3892
  %v3894 = vrot.slane %v3893, 1
  %v3895 = vmax.f32 %v3893, %v3894
  %v3896 = vsel %vm2313, %v1935, -inf
  %v3897 = vrot.slane %v3896, 4
  %v3898 = vmax.f32 %v3896, %v3897
  %v3899 = vrot.slane %v3898, 2
  %v3900 = vmax.f32 %v3898, %v3899
  %v3901 = vrot.slane %v3900, 1
  %v3902 = vmax.f32 %v3900, %v3901
  %v3903 = vsel %vm2313, %v1937, -inf
  %v3904 = vrot.slane %v3903, 4
  %v3905 = vmax.f32 %v3903, %v3904
  %v3906 = vrot.slane %v3905, 2
  %v3907 = vmax.f32 %v3905, %v3906
  %v3908 = vrot.slane %v3907, 1
  %v3909 = vmax.f32 %v3907, %v3908
  %v3910 = vsel %vm2313, %v1945, -inf
  %v3911 = vrot.slane %v3910, 4
  %v3912 = vmax.f32 %v3910, %v3911
  %v3913 = vrot.slane %v3912, 2
  %v3914 = vmax.f32 %v3912, %v3913
  %v3915 = vrot.slane %v3914, 1
  %v3916 = vmax.f32 %v3914, %v3915
  %v3917 = vsel %vm2313, %v1953, -inf
  %v3918 = vrot.slane %v3917, 4
  %v3919 = vmax.f32 %v3917, %v3918
  %v3920 = vrot.slane %v3919, 2
  %v3921 = vmax.f32 %v3919, %v3920
  %v3922 = vrot.slane %v3921, 1
  %v3923 = vmax.f32 %v3921, %v3922
  %v3924 = vsel %vm2313, %v1952, -inf
  %v3925 = vrot.slane %v3924, 4
  %v3926 = vmax.f32 %v3924, %v3925
  %v3927 = vrot.slane %v3926, 2
  %v3928 = vmax.f32 %v3926, %v3927
  %v3929 = vrot.slane %v3928, 1
  %v3930 = vmax.f32 %v3928, %v3929
  %v3931 = vsel %vm2313, %v1954, -inf
  %v3932 = vrot.slane %v3931, 4
  %v3933 = vmax.f32 %v3931, %v3932
  %v3934 = vrot.slane %v3933, 2
  %v3935 = vmax.f32 %v3933, %v3934
  %v3936 = vrot.slane %v3935, 1
  %v3937 = vmax.f32 %v3935, %v3936
  %v3938 = vsel %vm2313, %v1962, -inf
  %v3939 = vrot.slane %v3938, 4
  %v3940 = vmax.f32 %v3938, %v3939
  %v3941 = vrot.slane %v3940, 2
  %v3942 = vmax.f32 %v3940, %v3941
  %v3943 = vrot.slane %v3942, 1
  %v3944 = vmax.f32 %v3942, %v3943
  %v3945 = vsel %vm2313, %v1970, -inf
  %v3946 = vrot.slane %v3945, 4
  %v3947 = vmax.f32 %v3945, %v3946
  %v3948 = vrot.slane %v3947, 2
  %v3949 = vmax.f32 %v3947, %v3948
  %v3950 = vrot.slane %v3949, 1
  %v3951 = vmax.f32 %v3949, %v3950
  %v3952 = vsel %vm2313, %v1969, -inf
  %v3953 = vrot.slane %v3952, 4
  %v3954 = vmax.f32 %v3952, %v3953
  %v3955 = vrot.slane %v3954, 2
  %v3956 = vmax.f32 %v3954, %v3955
  %v3957 = vrot.slane %v3956, 1
  %v3958 = vmax.f32 %v3956, %v3957
  %v3959 = vsel %vm2313, %v1971, -inf
  %v3960 = vrot.slane %v3959, 4
  %v3961 = vmax.f32 %v3959, %v3960
  %v3962 = vrot.slane %v3961, 2
  %v3963 = vmax.f32 %v3961, %v3962
  %v3964 = vrot.slane %v3963, 1
  %v3965 = vmax.f32 %v3963, %v3964
  %v3966 = vsel %vm2313, %v1979, -inf
  %v3967 = vrot.slane %v3966, 4
  %v3968 = vmax.f32 %v3966, %v3967
  %v3969 = vrot.slane %v3968, 2
  %v3970 = vmax.f32 %v3968, %v3969
  %v3971 = vrot.slane %v3970, 1
  %v3972 = vmax.f32 %v3970, %v3971
  %v3973 = vsel %vm2313, %v1987, -inf
  %v3974 = vrot.slane %v3973, 4
  %v3975 = vmax.f32 %v3973, %v3974
  %v3976 = vrot.slane %v3975, 2
  %v3977 = vmax.f32 %v3975, %v3976
  %v3978 = vrot.slane %v3977, 1
  %v3979 = vmax.f32 %v3977, %v3978
  %v3980 = vsel %vm2313, %v1986, -inf
  %v3981 = vrot.slane %v3980, 4
  %v3982 = vmax.f32 %v3980, %v3981
  %v3983 = vrot.slane %v3982, 2
  %v3984 = vmax.f32 %v3982, %v3983
  %v3985 = vrot.slane %v3984, 1
  %v3986 = vmax.f32 %v3984, %v3985
  %v3987 = vsel %vm2313, %v1988, -inf
  %v3988 = vrot.slane %v3987, 4
  %v3989 = vmax.f32 %v3987, %v3988
  %v3990 = vrot.slane %v3989, 2
  %v3991 = vmax.f32 %v3989, %v3990
  %v3992 = vrot.slane %v3991, 1
  %v3993 = vmax.f32 %v3991, %v3992
  %v3994 = vsel %vm2313, %v1996, -inf
  %v3995 = vrot.slane %v3994, 4
  %v3996 = vmax.f32 %v3994, %v3995
  %v3997 = vrot.slane %v3996, 2
  %v3998 = vmax.f32 %v3996, %v3997
  %v3999 = vrot.slane %v3998, 1
  %v4000 = vmax.f32 %v3998, %v3999
  %v4001 = vsel %vm2313, %v2004, -inf
  %v4002 = vrot.slane %v4001, 4
  %v4003 = vmax.f32 %v4001, %v4002
  %v4004 = vrot.slane %v4003, 2
  %v4005 = vmax.f32 %v4003, %v4004
  %v4006 = vrot.slane %v4005, 1
  %v4007 = vmax.f32 %v4005, %v4006
  %v4008 = vsel %vm2313, %v2003, -inf
  %v4009 = vrot.slane %v4008, 4
  %v4010 = vmax.f32 %v4008, %v4009
  %v4011 = vrot.slane %v4010, 2
  %v4012 = vmax.f32 %v4010, %v4011
  %v4013 = vrot.slane %v4012, 1
  %v4014 = vmax.f32 %v4012, %v4013
  %v4015 = vsel %vm2313, %v2005, -inf
  %v4016 = vrot.slane %v4015, 4
  %v4017 = vmax.f32 %v4015, %v4016
  %v4018 = vrot.slane %v4017, 2
  %v4019 = vmax.f32 %v4017, %v4018
  %v4020 = vrot.slane %v4019, 1
  %v4021 = vmax.f32 %v4019, %v4020
  %v4022 = vsel %vm2313, %v2013, -inf
  %v4023 = vrot.slane %v4022, 4
  %v4024 = vmax.f32 %v4022, %v4023
  %v4025 = vrot.slane %v4024, 2
  %v4026 = vmax.f32 %v4024, %v4025
  %v4027 = vrot.slane %v4026, 1
  %v4028 = vmax.f32 %v4026, %v4027
  %v4029 = vsel %vm2313, %v2021, -inf
  %v4030 = vrot.slane %v4029, 4
  %v4031 = vmax.f32 %v4029, %v4030
  %v4032 = vrot.slane %v4031, 2
  %v4033 = vmax.f32 %v4031, %v4032
  %v4034 = vrot.slane %v4033, 1
  %v4035 = vmax.f32 %v4033, %v4034
  %v4036 = vsel %vm2313, %v2020, -inf
  %v4037 = vrot.slane %v4036, 4
  %v4038 = vmax.f32 %v4036, %v4037
  %v4039 = vrot.slane %v4038, 2
  %v4040 = vmax.f32 %v4038, %v4039
  %v4041 = vrot.slane %v4040, 1
  %v4042 = vmax.f32 %v4040, %v4041
  %v4043 = vsel %vm2313, %v2022, -inf
  %v4044 = vrot.slane %v4043, 4
  %v4045 = vmax.f32 %v4043, %v4044
  %v4046 = vrot.slane %v4045, 2
  %v4047 = vmax.f32 %v4045, %v4046
  %v4048 = vrot.slane %v4047, 1
  %v4049 = vmax.f32 %v4047, %v4048
  %v4050 = vsel %vm2313, %v2030, -inf
  %v4051 = vrot.slane %v4050, 4
  %v4052 = vmax.f32 %v4050, %v4051
  %v4053 = vrot.slane %v4052, 2
  %v4054 = vmax.f32 %v4052, %v4053
  %v4055 = vrot.slane %v4054, 1
  %v4056 = vmax.f32 %v4054, %v4055
  %v4057 = vsel %vm2313, %v2038, -inf
  %v4058 = vrot.slane %v4057, 4
  %v4059 = vmax.f32 %v4057, %v4058
  %v4060 = vrot.slane %v4059, 2
  %v4061 = vmax.f32 %v4059, %v4060
  %v4062 = vrot.slane %v4061, 1
  %v4063 = vmax.f32 %v4061, %v4062
  %v4064 = vsel %vm2313, %v2037, -inf
  %v4065 = vrot.slane %v4064, 4
  %v4066 = vmax.f32 %v4064, %v4065
  %v4067 = vrot.slane %v4066, 2
  %v4068 = vmax.f32 %v4066, %v4067
  %v4069 = vrot.slane %v4068, 1
  %v4070 = vmax.f32 %v4068, %v4069
  %v4071 = vsel %vm2313, %v2039, -inf
  %v4072 = vrot.slane %v4071, 4
  %v4073 = vmax.f32 %v4071, %v4072
  %v4074 = vrot.slane %v4073, 2
  %v4075 = vmax.f32 %v4073, %v4074
  %v4076 = vrot.slane %v4075, 1
  %v4077 = vmax.f32 %v4075, %v4076
  %v4078 = vsel %vm2313, %v2047, -inf
  %v4079 = vrot.slane %v4078, 4
  %v4080 = vmax.f32 %v4078, %v4079
  %v4081 = vrot.slane %v4080, 2
  %v4082 = vmax.f32 %v4080, %v4081
  %v4083 = vrot.slane %v4082, 1
  %v4084 = vmax.f32 %v4082, %v4083
  %v4085 = vsel %vm2313, %v2055, -inf
  %v4086 = vrot.slane %v4085, 4
  %v4087 = vmax.f32 %v4085, %v4086
  %v4088 = vrot.slane %v4087, 2
  %v4089 = vmax.f32 %v4087, %v4088
  %v4090 = vrot.slane %v4089, 1
  %v4091 = vmax.f32 %v4089, %v4090
  %v4092 = vsel %vm2313, %v2054, -inf
  %v4093 = vrot.slane %v4092, 4
  %v4094 = vmax.f32 %v4092, %v4093
  %v4095 = vrot.slane %v4094, 2
  %v4096 = vmax.f32 %v4094, %v4095
  %v4097 = vrot.slane %v4096, 1
  %v4098 = vmax.f32 %v4096, %v4097
  %v4099 = vsel %vm2313, %v2056, -inf
  %v4100 = vrot.slane %v4099, 4
  %v4101 = vmax.f32 %v4099, %v4100
  %v4102 = vrot.slane %v4101, 2
  %v4103 = vmax.f32 %v4101, %v4102
  %v4104 = vrot.slane %v4103, 1
  %v4105 = vmax.f32 %v4103, %v4104
  %v4106 = vmax.f32 %v2320, %v2348
  %v4107 = vmax.f32 %v2327, %v2355
  %v4108 = vmax.f32 %v2334, %v2362
  %v4109 = vmax.f32 %v2341, %v2369
  %v4110 = vmax.f32 %v2376, %v2404
  %v4111 = vmax.f32 %v2383, %v2411
  %v4112 = vmax.f32 %v2390, %v2418
  %v4113 = vmax.f32 %v2397, %v2425
  %v4114 = vmax.f32 %v2432, %v2460
  %v4115 = vmax.f32 %v2439, %v2467
  %v4116 = vmax.f32 %v2446, %v2474
  %v4117 = vmax.f32 %v2453, %v2481
  %v4118 = vmax.f32 %v2488, %v2516
  %v4119 = vmax.f32 %v2495, %v2523
  %v4120 = vmax.f32 %v2502, %v2530
  %v4121 = vmax.f32 %v2509, %v2537
  %v4122 = vmax.f32 %v2544, %v2572
  %v4123 = vmax.f32 %v2551, %v2579
  %v4124 = vmax.f32 %v2558, %v2586
  %v4125 = vmax.f32 %v2565, %v2593
  %v4126 = vmax.f32 %v2600, %v2628
  %v4127 = vmax.f32 %v2607, %v2635
  %v4128 = vmax.f32 %v2614, %v2642
  %v4129 = vmax.f32 %v2621, %v2649
  %v4130 = vmax.f32 %v2656, %v2684
  %v4131 = vmax.f32 %v2663, %v2691
  %v4132 = vmax.f32 %v2670, %v2698
  %v4133 = vmax.f32 %v2677, %v2705
  %v4134 = vmax.f32 %v2712, %v2740
  %v4135 = vmax.f32 %v2719, %v2747
  %v4136 = vmax.f32 %v2726, %v2754
  %v4137 = vmax.f32 %v2733, %v2761
  %v4138 = vmax.f32 %v2768, %v2796
  %v4139 = vmax.f32 %v2775, %v2803
  %v4140 = vmax.f32 %v2782, %v2810
  %v4141 = vmax.f32 %v2789, %v2817
  %v4142 = vmax.f32 %v2824, %v2852
  %v4143 = vmax.f32 %v2831, %v2859
  %v4144 = vmax.f32 %v2838, %v2866
  %v4145 = vmax.f32 %v2845, %v2873
  %v4146 = vmax.f32 %v2880, %v2908
  %v4147 = vmax.f32 %v2887, %v2915
  %v4148 = vmax.f32 %v2894, %v2922
  %v4149 = vmax.f32 %v2901, %v2929
  %v4150 = vmax.f32 %v2936, %v2964
  %v4151 = vmax.f32 %v2943, %v2971
  %v4152 = vmax.f32 %v2950, %v2978
  %v4153 = vmax.f32 %v2957, %v2985
  %v4154 = vmax.f32 %v2992, %v3020
  %v4155 = vmax.f32 %v2999, %v3027
  %v4156 = vmax.f32 %v3006, %v3034
  %v4157 = vmax.f32 %v3013, %v3041
  %v4158 = vmax.f32 %v3048, %v3076
  %v4159 = vmax.f32 %v3055, %v3083
  %v4160 = vmax.f32 %v3062, %v3090
  %v4161 = vmax.f32 %v3069, %v3097
  %v4162 = vmax.f32 %v3104, %v3132
  %v4163 = vmax.f32 %v3111, %v3139
  %v4164 = vmax.f32 %v3118, %v3146
  %v4165 = vmax.f32 %v3125, %v3153
  %v4166 = vmax.f32 %v3160, %v3188
  %v4167 = vmax.f32 %v3167, %v3195
  %v4168 = vmax.f32 %v3174, %v3202
  %v4169 = vmax.f32 %v3181, %v3209
  %v4170 = vmax.f32 %v3216, %v3244
  %v4171 = vmax.f32 %v3223, %v3251
  %v4172 = vmax.f32 %v3230, %v3258
  %v4173 = vmax.f32 %v3237, %v3265
  %v4174 = vmax.f32 %v3272, %v3300
  %v4175 = vmax.f32 %v3279, %v3307
  %v4176 = vmax.f32 %v3286, %v3314
  %v4177 = vmax.f32 %v3293, %v3321
  %v4178 = vmax.f32 %v3328, %v3356
  %v4179 = vmax.f32 %v3335, %v3363
  %v4180 = vmax.f32 %v3342, %v3370
  %v4181 = vmax.f32 %v3349, %v3377
  %v4182 = vmax.f32 %v3384, %v3412
  %v4183 = vmax.f32 %v3391, %v3419
  %v4184 = vmax.f32 %v3398, %v3426
  %v4185 = vmax.f32 %v3405, %v3433
  %v4186 = vmax.f32 %v3440, %v3468
  %v4187 = vmax.f32 %v3447, %v3475
  %v4188 = vmax.f32 %v3454, %v3482
  %v4189 = vmax.f32 %v3461, %v3489
  %v4190 = vmax.f32 %v3496, %v3524
  %v4191 = vmax.f32 %v3503, %v3531
  %v4192 = vmax.f32 %v3510, %v3538
  %v4193 = vmax.f32 %v3517, %v3545
  %v4194 = vmax.f32 %v3552, %v3580
  %v4195 = vmax.f32 %v3559, %v3587
  %v4196 = vmax.f32 %v3566, %v3594
  %v4197 = vmax.f32 %v3573, %v3601
  %v4198 = vmax.f32 %v3608, %v3636
  %v4199 = vmax.f32 %v3615, %v3643
  %v4200 = vmax.f32 %v3622, %v3650
  %v4201 = vmax.f32 %v3629, %v3657
  %v4202 = vmax.f32 %v3664, %v3692
  %v4203 = vmax.f32 %v3671, %v3699
  %v4204 = vmax.f32 %v3678, %v3706
  %v4205 = vmax.f32 %v3685, %v3713
  %v4206 = vmax.f32 %v3720, %v3748
  %v4207 = vmax.f32 %v3727, %v3755
  %v4208 = vmax.f32 %v3734, %v3762
  %v4209 = vmax.f32 %v3741, %v3769
  %v4210 = vmax.f32 %v3776, %v3804
  %v4211 = vmax.f32 %v3783, %v3811
  %v4212 = vmax.f32 %v3790, %v3818
  %v4213 = vmax.f32 %v3797, %v3825
  %v4214 = vmax.f32 %v3832, %v3860
  %v4215 = vmax.f32 %v3839, %v3867
  %v4216 = vmax.f32 %v3846, %v3874
  %v4217 = vmax.f32 %v3853, %v3881
  %v4218 = vmax.f32 %v3888, %v3916
  %v4219 = vmax.f32 %v3895, %v3923
  %v4220 = vmax.f32 %v3902, %v3930
  %v4221 = vmax.f32 %v3909, %v3937
  %v4222 = vmax.f32 %v3944, %v3972
  %v4223 = vmax.f32 %v3951, %v3979
  %v4224 = vmax.f32 %v3958, %v3986
  %v4225 = vmax.f32 %v3965, %v3993
  %v4226 = vmax.f32 %v4000, %v4028
  %v4227 = vmax.f32 %v4007, %v4035
  %v4228 = vmax.f32 %v4014, %v4042
  %v4229 = vmax.f32 %v4021, %v4049
  %v4230 = vmax.f32 %v4056, %v4084
  %v4231 = vmax.f32 %v4063, %v4091
  %v4232 = vmax.f32 %v4070, %v4098
  %v4233 = vmax.f32 %v4077, %v4105
  %v4234 = vpack.c.bf16 %v4106, %v4106
  %v4235 = vpack.c.bf16 %v4107, %v4107
  %v4236 = vpack.c.bf16 %v4108, %v4108
  %v4237 = vpack.c.bf16 %v4109, %v4109
  %v4238 = vpack.c.bf16 %v4110, %v4110
  %v4239 = vpack.c.bf16 %v4111, %v4111
  %v4240 = vpack.c.bf16 %v4112, %v4112
  %v4241 = vpack.c.bf16 %v4113, %v4113
  %v4242 = vpack.c.bf16 %v4114, %v4114
  %v4243 = vpack.c.bf16 %v4115, %v4115
  %v4244 = vpack.c.bf16 %v4116, %v4116
  %v4245 = vpack.c.bf16 %v4117, %v4117
  %v4246 = vpack.c.bf16 %v4118, %v4118
  %v4247 = vpack.c.bf16 %v4119, %v4119
  %v4248 = vpack.c.bf16 %v4120, %v4120
  %v4249 = vpack.c.bf16 %v4121, %v4121
  %v4250 = vpack.c.bf16 %v4122, %v4122
  %v4251 = vpack.c.bf16 %v4123, %v4123
  %v4252 = vpack.c.bf16 %v4124, %v4124
  %v4253 = vpack.c.bf16 %v4125, %v4125
  %v4254 = vpack.c.bf16 %v4126, %v4126
  %v4255 = vpack.c.bf16 %v4127, %v4127
  %v4256 = vpack.c.bf16 %v4128, %v4128
  %v4257 = vpack.c.bf16 %v4129, %v4129
  %v4258 = vpack.c.bf16 %v4130, %v4130
  %v4259 = vpack.c.bf16 %v4131, %v4131
  %v4260 = vpack.c.bf16 %v4132, %v4132
  %v4261 = vpack.c.bf16 %v4133, %v4133
  %v4262 = vpack.c.bf16 %v4134, %v4134
  %v4263 = vpack.c.bf16 %v4135, %v4135
  %v4264 = vpack.c.bf16 %v4136, %v4136
  %v4265 = vpack.c.bf16 %v4137, %v4137
  %v4266 = vpack.c.bf16 %v4138, %v4138
  %v4267 = vpack.c.bf16 %v4139, %v4139
  %v4268 = vpack.c.bf16 %v4140, %v4140
  %v4269 = vpack.c.bf16 %v4141, %v4141
  %v4270 = vpack.c.bf16 %v4142, %v4142
  %v4271 = vpack.c.bf16 %v4143, %v4143
  %v4272 = vpack.c.bf16 %v4144, %v4144
  %v4273 = vpack.c.bf16 %v4145, %v4145
  %v4274 = vpack.c.bf16 %v4146, %v4146
  %v4275 = vpack.c.bf16 %v4147, %v4147
  %v4276 = vpack.c.bf16 %v4148, %v4148
  %v4277 = vpack.c.bf16 %v4149, %v4149
  %v4278 = vpack.c.bf16 %v4150, %v4150
  %v4279 = vpack.c.bf16 %v4151, %v4151
  %v4280 = vpack.c.bf16 %v4152, %v4152
  %v4281 = vpack.c.bf16 %v4153, %v4153
  %v4282 = vpack.c.bf16 %v4154, %v4154
  %v4283 = vpack.c.bf16 %v4155, %v4155
  %v4284 = vpack.c.bf16 %v4156, %v4156
  %v4285 = vpack.c.bf16 %v4157, %v4157
  %v4286 = vpack.c.bf16 %v4158, %v4158
  %v4287 = vpack.c.bf16 %v4159, %v4159
  %v4288 = vpack.c.bf16 %v4160, %v4160
  %v4289 = vpack.c.bf16 %v4161, %v4161
  %v4290 = vpack.c.bf16 %v4162, %v4162
  %v4291 = vpack.c.bf16 %v4163, %v4163
  %v4292 = vpack.c.bf16 %v4164, %v4164
  %v4293 = vpack.c.bf16 %v4165, %v4165
  %v4294 = vpack.c.bf16 %v4166, %v4166
  %v4295 = vpack.c.bf16 %v4167, %v4167
  %v4296 = vpack.c.bf16 %v4168, %v4168
  %v4297 = vpack.c.bf16 %v4169, %v4169
  %v4298 = vpack.c.bf16 %v4170, %v4170
  %v4299 = vpack.c.bf16 %v4171, %v4171
  %v4300 = vpack.c.bf16 %v4172, %v4172
  %v4301 = vpack.c.bf16 %v4173, %v4173
  %v4302 = vpack.c.bf16 %v4174, %v4174
  %v4303 = vpack.c.bf16 %v4175, %v4175
  %v4304 = vpack.c.bf16 %v4176, %v4176
  %v4305 = vpack.c.bf16 %v4177, %v4177
  %v4306 = vpack.c.bf16 %v4178, %v4178
  %v4307 = vpack.c.bf16 %v4179, %v4179
  %v4308 = vpack.c.bf16 %v4180, %v4180
  %v4309 = vpack.c.bf16 %v4181, %v4181
  %v4310 = vpack.c.bf16 %v4182, %v4182
  %v4311 = vpack.c.bf16 %v4183, %v4183
  %v4312 = vpack.c.bf16 %v4184, %v4184
  %v4313 = vpack.c.bf16 %v4185, %v4185
  %v4314 = vpack.c.bf16 %v4186, %v4186
  %v4315 = vpack.c.bf16 %v4187, %v4187
  %v4316 = vpack.c.bf16 %v4188, %v4188
  %v4317 = vpack.c.bf16 %v4189, %v4189
  %v4318 = vpack.c.bf16 %v4190, %v4190
  %v4319 = vpack.c.bf16 %v4191, %v4191
  %v4320 = vpack.c.bf16 %v4192, %v4192
  %v4321 = vpack.c.bf16 %v4193, %v4193
  %v4322 = vpack.c.bf16 %v4194, %v4194
  %v4323 = vpack.c.bf16 %v4195, %v4195
  %v4324 = vpack.c.bf16 %v4196, %v4196
  %v4325 = vpack.c.bf16 %v4197, %v4197
  %v4326 = vpack.c.bf16 %v4198, %v4198
  %v4327 = vpack.c.bf16 %v4199, %v4199
  %v4328 = vpack.c.bf16 %v4200, %v4200
  %v4329 = vpack.c.bf16 %v4201, %v4201
  %v4330 = vpack.c.bf16 %v4202, %v4202
  %v4331 = vpack.c.bf16 %v4203, %v4203
  %v4332 = vpack.c.bf16 %v4204, %v4204
  %v4333 = vpack.c.bf16 %v4205, %v4205
  %v4334 = vpack.c.bf16 %v4206, %v4206
  %v4335 = vpack.c.bf16 %v4207, %v4207
  %v4336 = vpack.c.bf16 %v4208, %v4208
  %v4337 = vpack.c.bf16 %v4209, %v4209
  %v4338 = vpack.c.bf16 %v4210, %v4210
  %v4339 = vpack.c.bf16 %v4211, %v4211
  %v4340 = vpack.c.bf16 %v4212, %v4212
  %v4341 = vpack.c.bf16 %v4213, %v4213
  %v4342 = vpack.c.bf16 %v4214, %v4214
  %v4343 = vpack.c.bf16 %v4215, %v4215
  %v4344 = vpack.c.bf16 %v4216, %v4216
  %v4345 = vpack.c.bf16 %v4217, %v4217
  %v4346 = vpack.c.bf16 %v4218, %v4218
  %v4347 = vpack.c.bf16 %v4219, %v4219
  %v4348 = vpack.c.bf16 %v4220, %v4220
  %v4349 = vpack.c.bf16 %v4221, %v4221
  %v4350 = vpack.c.bf16 %v4222, %v4222
  %v4351 = vpack.c.bf16 %v4223, %v4223
  %v4352 = vpack.c.bf16 %v4224, %v4224
  %v4353 = vpack.c.bf16 %v4225, %v4225
  %v4354 = vpack.c.bf16 %v4226, %v4226
  %v4355 = vpack.c.bf16 %v4227, %v4227
  %v4356 = vpack.c.bf16 %v4228, %v4228
  %v4357 = vpack.c.bf16 %v4229, %v4229
  %v4358 = vpack.c.bf16 %v4230, %v4230
  %v4359 = vpack.c.bf16 %v4231, %v4231
  %v4360 = vpack.c.bf16 %v4232, %v4232
  %v4361 = vpack.c.bf16 %v4233, %v4233
  %v4362 = vld [vmem:[%s3] sm:$0xf]
  %v4363 = vld [vmem:[%s3 + $0x4] sm:$0xf]
  %v4364 = vld [vmem:[%s3 + $0x8] sm:$0xf]
  %v4365 = vld [vmem:[%s3 + $0xc] sm:$0xf]
  %v4366 = vld [vmem:[%s3 + $0x10] sm:$0xf]
  %v4367 = vld [vmem:[%s3 + $0x14] sm:$0xf]
  %v4368 = vld [vmem:[%s3 + $0x18] sm:$0xf]
  %v4369 = vld [vmem:[%s3 + $0x1c] sm:$0xf]
  %v4370 = vld [vmem:[%s3 + $0x20] sm:$0xf]
  %v4371 = vld [vmem:[%s3 + $0x24] sm:$0xf]
  %v4372 = vld [vmem:[%s3 + $0x28] sm:$0xf]
  %v4373 = vld [vmem:[%s3 + $0x2c] sm:$0xf]
  %v4374 = vld [vmem:[%s3 + $0x30] sm:$0xf]
  %v4375 = vld [vmem:[%s3 + $0x34] sm:$0xf]
  %v4376 = vld [vmem:[%s3 + $0x38] sm:$0xf]
  %v4377 = vld [vmem:[%s3 + $0x3c] sm:$0xf]
  %s4378 = scalar_lea.vmem %s3, 64
  %v4379 = vld [vmem:[%s4378] sm:$0xf]
  %v4380 = vld [vmem:[%s4378 + $0x4] sm:$0xf]
  %v4381 = vld [vmem:[%s4378 + $0x8] sm:$0xf]
  %v4382 = vld [vmem:[%s4378 + $0xc] sm:$0xf]
  %v4383 = vld [vmem:[%s4378 + $0x10] sm:$0xf]
  %v4384 = vld [vmem:[%s4378 + $0x14] sm:$0xf]
  %v4385 = vld [vmem:[%s4378 + $0x18] sm:$0xf]
  %v4386 = vld [vmem:[%s4378 + $0x1c] sm:$0xf]
  %v4387 = vld [vmem:[%s4378 + $0x20] sm:$0xf]
  %v4388 = vld [vmem:[%s4378 + $0x24] sm:$0xf]
  %v4389 = vld [vmem:[%s4378 + $0x28] sm:$0xf]
  %v4390 = vld [vmem:[%s4378 + $0x2c] sm:$0xf]
  %v4391 = vld [vmem:[%s4378 + $0x30] sm:$0xf]
  %v4392 = vld [vmem:[%s4378 + $0x34] sm:$0xf]
  %v4393 = vld [vmem:[%s4378 + $0x38] sm:$0xf]
  %v4394 = vld [vmem:[%s4378 + $0x3c] sm:$0xf]
  %v4403 = vunpack.c.l.b16 %v4235
  %v4404 = vunpack.c.l.b16 %v4251
  %v4405 = vunpack.c.l.b16 %v4267
  %v4406 = vunpack.c.l.b16 %v4283
  %v4407 = vunpack.c.l.b16 %v4299
  %v4408 = vunpack.c.l.b16 %v4315
  %v4409 = vunpack.c.l.b16 %v4331
  %v4410 = vunpack.c.l.b16 %v4347
  %vm4411 = vcmask 1041409
  %v4412 = vsel %vm4411, %v4404, %v4403
  %vm4413 = vcmask 1042434
  %v4414 = vsel %vm4413, %v4405, %v4412
  %vm4415 = vcmask 1043459
  %v4416 = vsel %vm4415, %v4406, %v4414
  %vm4417 = vcmask 1044484
  %v4418 = vsel %vm4417, %v4407, %v4416
  %vm4419 = vcmask 1045509
  %v4420 = vsel %vm4419, %v4408, %v4418
  %vm4421 = vcmask 1046534
  %v4422 = vsel %vm4421, %v4409, %v4420
  %vm4423 = vcmask 1047559
  %v4424 = vsel %vm4423, %v4410, %v4422
  %v4425 = vpack.c.b16 %v4424, %v4424
  %v4443 = vunpack.c.l.b16 %v4379
  %v4444 = vunpack.c.l.b16 %v4380
  %v4445 = vunpack.c.l.b16 %v4381
  %v4446 = vunpack.c.l.b16 %v4382
  %v4447 = vunpack.c.l.b16 %v4383
  %v4448 = vunpack.c.l.b16 %v4384
  %v4449 = vunpack.c.l.b16 %v4385
  %v4450 = vunpack.c.l.b16 %v4386
  %v4451 = vunpack.c.l.b16 %v4387
  %v4452 = vunpack.c.l.b16 %v4388
  %v4453 = vunpack.c.l.b16 %v4389
  %v4454 = vunpack.c.l.b16 %v4390
  %v4455 = vunpack.c.l.b16 %v4391
  %v4456 = vunpack.c.l.b16 %v4392
  %v4457 = vunpack.c.l.b16 %v4393
  %v4458 = vunpack.c.l.b16 %v4394
  %v4459 = vpack.c.b16 %v4444, %v4443
  %v4460 = vpack.c.b16 %v4446, %v4445
  %v4461 = vpack.c.b16 %v4448, %v4447
  %v4462 = vpack.c.b16 %v4450, %v4449
  %v4463 = vpack.c.b16 %v4452, %v4451
  %v4464 = vpack.c.b16 %v4454, %v4453
  %v4465 = vpack.c.b16 %v4456, %v4455
  %v4466 = vpack.c.b16 %v4458, %v4457
  %4475 = vmatprep.subr.bf16.mxu0 0
  %4476 = vmatpush1.bf16.msra.mxu0 %v4459
  %4477 = vmatprep.subr.bf16.mxu0 0
  %4478 = vmatpush1.bf16.msra.mxu0 %v4460
  %4479 = vmatprep.subr.bf16.mxu0 0
  %4480 = vmatpush1.bf16.msra.mxu0 %v4461
  %4481 = vmatprep.subr.bf16.mxu0 0
  %4482 = vmatpush1.bf16.msra.mxu0 %v4462
  %4483 = vmatprep.subr.bf16.mxu0 0
  %4484 = vmatpush1.bf16.msra.mxu0 %v4463
  %4485 = vmatprep.subr.bf16.mxu0 0
  %4486 = vmatpush1.bf16.msra.mxu0 %v4464
  %4487 = vmatprep.subr.bf16.mxu0 0
  %4488 = vmatpush1.bf16.msra.mxu0 %v4465
  %4489 = vmatprep.subr.bf16.mxu0 0
  %4490 = vmatpush1.bf16.msra.mxu0 %v4466
  %4491 = vmatprep.subr.bf16.mxu0 0
  %4492 = vmatpush1.bf16.msra.mxu0 0
  %4493 = vmatprep.subr.bf16.mxu0 0
  %4494 = vmatpush1.bf16.msra.mxu0 0
  %4495 = vmatprep.subr.bf16.mxu0 0
  %4496 = vmatpush1.bf16.msra.mxu0 0
  %4497 = vmatprep.subr.bf16.mxu0 0
  %4498 = vmatpush1.bf16.msra.mxu0 0
  %4499 = vmatprep.subr.bf16.mxu0 0
  %4500 = vmatpush1.bf16.msra.mxu0 0
  %4501 = vmatprep.subr.bf16.mxu0 0
  %4502 = vmatpush1.bf16.msra.mxu0 0
  %4503 = vmatprep.subr.bf16.mxu0 0
  %4504 = vmatpush1.bf16.msra.mxu0 0
  %4505 = vmatprep.subr.bf16.mxu0 0
  %4506 = vmatpush1.bf16.msra.mxu0 0
  %4507 = vmatprep.mubr.bf16.mxu0 0
  %4508 = vmatmul.mubr.bf16.gmra.mrb[0].mxu0 %v4425
  %v4509 = vpop.f32.mrb[0].mxu0
  %v4510 = vadd.f32 0.0, %v4509
  %v4511 = vpop.f32.mrb[0].mxu0
  %v4512 = vpop.f32.mrb[0].mxu0
  %v4513 = vpop.f32.mrb[0].mxu0
  %4514 = vdwg.mxu0
  %v4523 = vunpack.c.l.b16 %v4234
  %v4524 = vunpack.c.l.b16 %v4250
  %v4525 = vunpack.c.l.b16 %v4266
  %v4526 = vunpack.c.l.b16 %v4282
  %v4527 = vunpack.c.l.b16 %v4298
  %v4528 = vunpack.c.l.b16 %v4314
  %v4529 = vunpack.c.l.b16 %v4330
  %v4530 = vunpack.c.l.b16 %v4346
  %v4531 = vsel %vm4411, %v4524, %v4523
  %v4532 = vsel %vm4413, %v4525, %v4531
  %v4533 = vsel %vm4415, %v4526, %v4532
  %v4534 = vsel %vm4417, %v4527, %v4533
  %v4535 = vsel %vm4419, %v4528, %v4534
  %v4536 = vsel %vm4421, %v4529, %v4535
  %v4537 = vsel %vm4423, %v4530, %v4536
  %v4538 = vpack.c.b16 %v4537, %v4537
  %v4556 = vunpack.c.l.b16 %v4362
  %v4557 = vunpack.c.l.b16 %v4363
  %v4558 = vunpack.c.l.b16 %v4364
  %v4559 = vunpack.c.l.b16 %v4365
  %v4560 = vunpack.c.l.b16 %v4366
  %v4561 = vunpack.c.l.b16 %v4367
  %v4562 = vunpack.c.l.b16 %v4368
  %v4563 = vunpack.c.l.b16 %v4369
  %v4564 = vunpack.c.l.b16 %v4370
  %v4565 = vunpack.c.l.b16 %v4371
  %v4566 = vunpack.c.l.b16 %v4372
  %v4567 = vunpack.c.l.b16 %v4373
  %v4568 = vunpack.c.l.b16 %v4374
  %v4569 = vunpack.c.l.b16 %v4375
  %v4570 = vunpack.c.l.b16 %v4376
  %v4571 = vunpack.c.l.b16 %v4377
  %v4572 = vpack.c.b16 %v4557, %v4556
  %v4573 = vpack.c.b16 %v4559, %v4558
  %v4574 = vpack.c.b16 %v4561, %v4560
  %v4575 = vpack.c.b16 %v4563, %v4562
  %v4576 = vpack.c.b16 %v4565, %v4564
  %v4577 = vpack.c.b16 %v4567, %v4566
  %v4578 = vpack.c.b16 %v4569, %v4568
  %v4579 = vpack.c.b16 %v4571, %v4570
  %4588 = vmatprep.subr.bf16.mxu0 0
  %4589 = vmatpush1.bf16.msra.mxu0 %v4572
  %4590 = vmatprep.subr.bf16.mxu0 0
  %4591 = vmatpush1.bf16.msra.mxu0 %v4573
  %4592 = vmatprep.subr.bf16.mxu0 0
  %4593 = vmatpush1.bf16.msra.mxu0 %v4574
  %4594 = vmatprep.subr.bf16.mxu0 0
  %4595 = vmatpush1.bf16.msra.mxu0 %v4575
  %4596 = vmatprep.subr.bf16.mxu0 0
  %4597 = vmatpush1.bf16.msra.mxu0 %v4576
  %4598 = vmatprep.subr.bf16.mxu0 0
  %4599 = vmatpush1.bf16.msra.mxu0 %v4577
  %4600 = vmatprep.subr.bf16.mxu0 0
  %4601 = vmatpush1.bf16.msra.mxu0 %v4578
  %4602 = vmatprep.subr.bf16.mxu0 0
  %4603 = vmatpush1.bf16.msra.mxu0 %v4579
  %4604 = vmatprep.subr.bf16.mxu0 0
  %4605 = vmatpush1.bf16.msra.mxu0 0
  %4606 = vmatprep.subr.bf16.mxu0 0
  %4607 = vmatpush1.bf16.msra.mxu0 0
  %4608 = vmatprep.subr.bf16.mxu0 0
  %4609 = vmatpush1.bf16.msra.mxu0 0
  %4610 = vmatprep.subr.bf16.mxu0 0
  %4611 = vmatpush1.bf16.msra.mxu0 0
  %4612 = vmatprep.subr.bf16.mxu0 0
  %4613 = vmatpush1.bf16.msra.mxu0 0
  %4614 = vmatprep.subr.bf16.mxu0 0
  %4615 = vmatpush1.bf16.msra.mxu0 0
  %4616 = vmatprep.subr.bf16.mxu0 0
  %4617 = vmatpush1.bf16.msra.mxu0 0
  %4618 = vmatprep.subr.bf16.mxu0 0
  %4619 = vmatpush1.bf16.msra.mxu0 0
  %4620 = vmatprep.mubr.bf16.mxu0 0
  %4621 = vmatmul.mubr.bf16.gmra.mrb[0].mxu0 %v4538
  %v4622 = vpop.f32.mrb[0].mxu0
  %v4623 = vadd.f32 %v4510, %v4622
  %v4624 = vpop.f32.mrb[0].mxu0
  %v4625 = vpop.f32.mrb[0].mxu0
  %v4626 = vpop.f32.mrb[0].mxu0
  %4627 = vdwg.mxu0
  %s4628 = scalar_lea.vmem %s3, 128
  %v4629 = vld [vmem:[%s4628] sm:$0xf]
  %v4630 = vld [vmem:[%s4628 + $0x4] sm:$0xf]
  %v4631 = vld [vmem:[%s4628 + $0x8] sm:$0xf]
  %v4632 = vld [vmem:[%s4628 + $0xc] sm:$0xf]
  %v4633 = vld [vmem:[%s4628 + $0x10] sm:$0xf]
  %v4634 = vld [vmem:[%s4628 + $0x14] sm:$0xf]
  %v4635 = vld [vmem:[%s4628 + $0x18] sm:$0xf]
  %v4636 = vld [vmem:[%s4628 + $0x1c] sm:$0xf]
  %v4637 = vld [vmem:[%s4628 + $0x20] sm:$0xf]
  %v4638 = vld [vmem:[%s4628 + $0x24] sm:$0xf]
  %v4639 = vld [vmem:[%s4628 + $0x28] sm:$0xf]
  %v4640 = vld [vmem:[%s4628 + $0x2c] sm:$0xf]
  %v4641 = vld [vmem:[%s4628 + $0x30] sm:$0xf]
  %v4642 = vld [vmem:[%s4628 + $0x34] sm:$0xf]
  %v4643 = vld [vmem:[%s4628 + $0x38] sm:$0xf]
  %v4644 = vld [vmem:[%s4628 + $0x3c] sm:$0xf]
  %v4653 = vunpack.c.l.b16 %v4236
  %v4654 = vunpack.c.l.b16 %v4252
  %v4655 = vunpack.c.l.b16 %v4268
  %v4656 = vunpack.c.l.b16 %v4284
  %v4657 = vunpack.c.l.b16 %v4300
  %v4658 = vunpack.c.l.b16 %v4316
  %v4659 = vunpack.c.l.b16 %v4332
  %v4660 = vunpack.c.l.b16 %v4348
  %v4661 = vsel %vm4411, %v4654, %v4653
  %v4662 = vsel %vm4413, %v4655, %v4661
  %v4663 = vsel %vm4415, %v4656, %v4662
  %v4664 = vsel %vm4417, %v4657, %v4663
  %v4665 = vsel %vm4419, %v4658, %v4664
  %v4666 = vsel %vm4421, %v4659, %v4665
  %v4667 = vsel %vm4423, %v4660, %v4666
  %v4668 = vpack.c.b16 %v4667, %v4667
  %v4686 = vunpack.c.l.b16 %v4629
  %v4687 = vunpack.c.l.b16 %v4630
  %v4688 = vunpack.c.l.b16 %v4631
  %v4689 = vunpack.c.l.b16 %v4632
  %v4690 = vunpack.c.l.b16 %v4633
  %v4691 = vunpack.c.l.b16 %v4634
  %v4692 = vunpack.c.l.b16 %v4635
  %v4693 = vunpack.c.l.b16 %v4636
  %v4694 = vunpack.c.l.b16 %v4637
  %v4695 = vunpack.c.l.b16 %v4638
  %v4696 = vunpack.c.l.b16 %v4639
  %v4697 = vunpack.c.l.b16 %v4640
  %v4698 = vunpack.c.l.b16 %v4641
  %v4699 = vunpack.c.l.b16 %v4642
  %v4700 = vunpack.c.l.b16 %v4643
  %v4701 = vunpack.c.l.b16 %v4644
  %v4702 = vpack.c.b16 %v4687, %v4686
  %v4703 = vpack.c.b16 %v4689, %v4688
  %v4704 = vpack.c.b16 %v4691, %v4690
  %v4705 = vpack.c.b16 %v4693, %v4692
  %v4706 = vpack.c.b16 %v4695, %v4694
  %v4707 = vpack.c.b16 %v4697, %v4696
  %v4708 = vpack.c.b16 %v4699, %v4698
  %v4709 = vpack.c.b16 %v4701, %v4700
  %4718 = vmatprep.subr.bf16.mxu0 0
  %4719 = vmatpush1.bf16.msra.mxu0 %v4702
  %4720 = vmatprep.subr.bf16.mxu0 0
  %4721 = vmatpush1.bf16.msra.mxu0 %v4703
  %4722 = vmatprep.subr.bf16.mxu0 0
  %4723 = vmatpush1.bf16.msra.mxu0 %v4704
  %4724 = vmatprep.subr.bf16.mxu0 0
  %4725 = vmatpush1.bf16.msra.mxu0 %v4705
  %4726 = vmatprep.subr.bf16.mxu0 0
  %4727 = vmatpush1.bf16.msra.mxu0 %v4706
  %4728 = vmatprep.subr.bf16.mxu0 0
  %4729 = vmatpush1.bf16.msra.mxu0 %v4707
  %4730 = vmatprep.subr.bf16.mxu0 0
  %4731 = vmatpush1.bf16.msra.mxu0 %v4708
  %4732 = vmatprep.subr.bf16.mxu0 0
  %4733 = vmatpush1.bf16.msra.mxu0 %v4709
  %4734 = vmatprep.subr.bf16.mxu0 0
  %4735 = vmatpush1.bf16.msra.mxu0 0
  %4736 = vmatprep.subr.bf16.mxu0 0
  %4737 = vmatpush1.bf16.msra.mxu0 0
  %4738 = vmatprep.subr.bf16.mxu0 0
  %4739 = vmatpush1.bf16.msra.mxu0 0
  %4740 = vmatprep.subr.bf16.mxu0 0
  %4741 = vmatpush1.bf16.msra.mxu0 0
  %4742 = vmatprep.subr.bf16.mxu0 0
  %4743 = vmatpush1.bf16.msra.mxu0 0
  %4744 = vmatprep.subr.bf16.mxu0 0
  %4745 = vmatpush1.bf16.msra.mxu0 0
  %4746 = vmatprep.subr.bf16.mxu0 0
  %4747 = vmatpush1.bf16.msra.mxu0 0
  %4748 = vmatprep.subr.bf16.mxu0 0
  %4749 = vmatpush1.bf16.msra.mxu0 0
  %4750 = vmatprep.mubr.bf16.mxu0 0
  %4751 = vmatmul.mubr.bf16.gmra.mrb[0].mxu0 %v4668
  %v4752 = vpop.f32.mrb[0].mxu0
  %v4753 = vadd.f32 0.0, %v4752
  %v4754 = vpop.f32.mrb[0].mxu0
  %v4755 = vpop.f32.mrb[0].mxu0
  %v4756 = vpop.f32.mrb[0].mxu0
  %4757 = vdwg.mxu0
  %v4758 = vadd.f32 %v4623, %v4753
  %s4759 = scalar_lea.vmem %s3, 192
  %v4760 = vld [vmem:[%s4759] sm:$0xf]
  %v4761 = vld [vmem:[%s4759 + $0x4] sm:$0xf]
  %v4762 = vld [vmem:[%s4759 + $0x8] sm:$0xf]
  %v4763 = vld [vmem:[%s4759 + $0xc] sm:$0xf]
  %v4764 = vld [vmem:[%s4759 + $0x10] sm:$0xf]
  %v4765 = vld [vmem:[%s4759 + $0x14] sm:$0xf]
  %v4766 = vld [vmem:[%s4759 + $0x18] sm:$0xf]
  %v4767 = vld [vmem:[%s4759 + $0x1c] sm:$0xf]
  %v4768 = vld [vmem:[%s4759 + $0x20] sm:$0xf]
  %v4769 = vld [vmem:[%s4759 + $0x24] sm:$0xf]
  %v4770 = vld [vmem:[%s4759 + $0x28] sm:$0xf]
  %v4771 = vld [vmem:[%s4759 + $0x2c] sm:$0xf]
  %v4772 = vld [vmem:[%s4759 + $0x30] sm:$0xf]
  %v4773 = vld [vmem:[%s4759 + $0x34] sm:$0xf]
  %v4774 = vld [vmem:[%s4759 + $0x38] sm:$0xf]
  %v4775 = vld [vmem:[%s4759 + $0x3c] sm:$0xf]
  %v4784 = vunpack.c.l.b16 %v4237
  %v4785 = vunpack.c.l.b16 %v4253
  %v4786 = vunpack.c.l.b16 %v4269
  %v4787 = vunpack.c.l.b16 %v4285
  %v4788 = vunpack.c.l.b16 %v4301
  %v4789 = vunpack.c.l.b16 %v4317
  %v4790 = vunpack.c.l.b16 %v4333
  %v4791 = vunpack.c.l.b16 %v4349
  %v4792 = vsel %vm4411, %v4785, %v4784
  %v4793 = vsel %vm4413, %v4786, %v4792
  %v4794 = vsel %vm4415, %v4787, %v4793
  %v4795 = vsel %vm4417, %v4788, %v4794
  %v4796 = vsel %vm4419, %v4789, %v4795
  %v4797 = vsel %vm4421, %v4790, %v4796
  %v4798 = vsel %vm4423, %v4791, %v4797
  %v4799 = vpack.c.b16 %v4798, %v4798
  %v4817 = vunpack.c.l.b16 %v4760
  %v4818 = vunpack.c.l.b16 %v4761
  %v4819 = vunpack.c.l.b16 %v4762
  %v4820 = vunpack.c.l.b16 %v4763
  %v4821 = vunpack.c.l.b16 %v4764
  %v4822 = vunpack.c.l.b16 %v4765
  %v4823 = vunpack.c.l.b16 %v4766
  %v4824 = vunpack.c.l.b16 %v4767
  %v4825 = vunpack.c.l.b16 %v4768
  %v4826 = vunpack.c.l.b16 %v4769
  %v4827 = vunpack.c.l.b16 %v4770
  %v4828 = vunpack.c.l.b16 %v4771
  %v4829 = vunpack.c.l.b16 %v4772
  %v4830 = vunpack.c.l.b16 %v4773
  %v4831 = vunpack.c.l.b16 %v4774
  %v4832 = vunpack.c.l.b16 %v4775
  %v4833 = vpack.c.b16 %v4818, %v4817
  %v4834 = vpack.c.b16 %v4820, %v4819
  %v4835 = vpack.c.b16 %v4822, %v4821
  %v4836 = vpack.c.b16 %v4824, %v4823
  %v4837 = vpack.c.b16 %v4826, %v4825
  %v4838 = vpack.c.b16 %v4828, %v4827
  %v4839 = vpack.c.b16 %v4830, %v4829
  %v4840 = vpack.c.b16 %v4832, %v4831
  %4849 = vmatprep.subr.bf16.mxu0 0
  %4850 = vmatpush1.bf16.msra.mxu0 %v4833
  %4851 = vmatprep.subr.bf16.mxu0 0
  %4852 = vmatpush1.bf16.msra.mxu0 %v4834
  %4853 = vmatprep.subr.bf16.mxu0 0
  %4854 = vmatpush1.bf16.msra.mxu0 %v4835
  %4855 = vmatprep.subr.bf16.mxu0 0
  %4856 = vmatpush1.bf16.msra.mxu0 %v4836
  %4857 = vmatprep.subr.bf16.mxu0 0
  %4858 = vmatpush1.bf16.msra.mxu0 %v4837
  %4859 = vmatprep.subr.bf16.mxu0 0
  %4860 = vmatpush1.bf16.msra.mxu0 %v4838
  %4861 = vmatprep.subr.bf16.mxu0 0
  %4862 = vmatpush1.bf16.msra.mxu0 %v4839
  %4863 = vmatprep.subr.bf16.mxu0 0
  %4864 = vmatpush1.bf16.msra.mxu0 %v4840
  %4865 = vmatprep.subr.bf16.mxu0 0
  %4866 = vmatpush1.bf16.msra.mxu0 0
  %4867 = vmatprep.subr.bf16.mxu0 0
  %4868 = vmatpush1.bf16.msra.mxu0 0
  %4869 = vmatprep.subr.bf16.mxu0 0
  %4870 = vmatpush1.bf16.msra.mxu0 0
  %4871 = vmatprep.subr.bf16.mxu0 0
  %4872 = vmatpush1.bf16.msra.mxu0 0
  %4873 = vmatprep.subr.bf16.mxu0 0
  %4874 = vmatpush1.bf16.msra.mxu0 0
  %4875 = vmatprep.subr.bf16.mxu0 0
  %4876 = vmatpush1.bf16.msra.mxu0 0
  %4877 = vmatprep.subr.bf16.mxu0 0
  %4878 = vmatpush1.bf16.msra.mxu0 0
  %4879 = vmatprep.subr.bf16.mxu0 0
  %4880 = vmatpush1.bf16.msra.mxu0 0
  %4881 = vmatprep.mubr.bf16.mxu0 0
  %4882 = vmatmul.mubr.bf16.gmra.mrb[0].mxu0 %v4799
  %v4883 = vpop.f32.mrb[0].mxu0
  %v4884 = vadd.f32 0.0, %v4883
  %v4885 = vpop.f32.mrb[0].mxu0
  %v4886 = vpop.f32.mrb[0].mxu0
  %v4887 = vpop.f32.mrb[0].mxu0
  %4888 = vdwg.mxu0
  %v4889 = vadd.f32 %v4758, %v4884
  %s4890 = scalar_lea.vmem %s3, 256
  %v4891 = vld [vmem:[%s4890] sm:$0xf]
  %v4892 = vld [vmem:[%s4890 + $0x4] sm:$0xf]
  %v4893 = vld [vmem:[%s4890 + $0x8] sm:$0xf]
  %v4894 = vld [vmem:[%s4890 + $0xc] sm:$0xf]
  %v4895 = vld [vmem:[%s4890 + $0x10] sm:$0xf]
  %v4896 = vld [vmem:[%s4890 + $0x14] sm:$0xf]
  %v4897 = vld [vmem:[%s4890 + $0x18] sm:$0xf]
  %v4898 = vld [vmem:[%s4890 + $0x1c] sm:$0xf]
  %v4899 = vld [vmem:[%s4890 + $0x20] sm:$0xf]
  %v4900 = vld [vmem:[%s4890 + $0x24] sm:$0xf]
  %v4901 = vld [vmem:[%s4890 + $0x28] sm:$0xf]
  %v4902 = vld [vmem:[%s4890 + $0x2c] sm:$0xf]
  %v4903 = vld [vmem:[%s4890 + $0x30] sm:$0xf]
  %v4904 = vld [vmem:[%s4890 + $0x34] sm:$0xf]
  %v4905 = vld [vmem:[%s4890 + $0x38] sm:$0xf]
  %v4906 = vld [vmem:[%s4890 + $0x3c] sm:$0xf]
  %v4915 = vunpack.c.l.b16 %v4238
  %v4916 = vunpack.c.l.b16 %v4254
  %v4917 = vunpack.c.l.b16 %v4270
  %v4918 = vunpack.c.l.b16 %v4286
  %v4919 = vunpack.c.l.b16 %v4302
  %v4920 = vunpack.c.l.b16 %v4318
  %v4921 = vunpack.c.l.b16 %v4334
  %v4922 = vunpack.c.l.b16 %v4350
  %v4923 = vsel %vm4411, %v4916, %v4915
  %v4924 = vsel %vm4413, %v4917, %v4923
  %v4925 = vsel %vm4415, %v4918, %v4924
  %v4926 = vsel %vm4417, %v4919, %v4925
  %v4927 = vsel %vm4419, %v4920, %v4926
  %v4928 = vsel %vm4421, %v4921, %v4927
  %v4929 = vsel %vm4423, %v4922, %v4928
  %v4930 = vpack.c.b16 %v4929, %v4929
  %v4948 = vunpack.c.l.b16 %v4891
  %v4949 = vunpack.c.l.b16 %v4892
  %v4950 = vunpack.c.l.b16 %v4893
  %v4951 = vunpack.c.l.b16 %v4894
  %v4952 = vunpack.c.l.b16 %v4895
  %v4953 = vunpack.c.l.b16 %v4896
  %v4954 = vunpack.c.l.b16 %v4897
  %v4955 = vunpack.c.l.b16 %v4898
  %v4956 = vunpack.c.l.b16 %v4899
  %v4957 = vunpack.c.l.b16 %v4900
  %v4958 = vunpack.c.l.b16 %v4901
  %v4959 = vunpack.c.l.b16 %v4902
  %v4960 = vunpack.c.l.b16 %v4903
  %v4961 = vunpack.c.l.b16 %v4904
  %v4962 = vunpack.c.l.b16 %v4905
  %v4963 = vunpack.c.l.b16 %v4906
  %v4964 = vpack.c.b16 %v4949, %v4948
  %v4965 = vpack.c.b16 %v4951, %v4950
  %v4966 = vpack.c.b16 %v4953, %v4952
  %v4967 = vpack.c.b16 %v4955, %v4954
  %v4968 = vpack.c.b16 %v4957, %v4956
  %v4969 = vpack.c.b16 %v4959, %v4958
  %v4970 = vpack.c.b16 %v4961, %v4960
  %v4971 = vpack.c.b16 %v4963, %v4962
  %4980 = vmatprep.subr.bf16.mxu0 0
  %4981 = vmatpush1.bf16.msra.mxu0 %v4964
  %4982 = vmatprep.subr.bf16.mxu0 0
  %4983 = vmatpush1.bf16.msra.mxu0 %v4965
  %4984 = vmatprep.subr.bf16.mxu0 0
  %4985 = vmatpush1.bf16.msra.mxu0 %v4966
  %4986 = vmatprep.subr.bf16.mxu0 0
  %4987 = vmatpush1.bf16.msra.mxu0 %v4967
  %4988 = vmatprep.subr.bf16.mxu0 0
  %4989 = vmatpush1.bf16.msra.mxu0 %v4968
  %4990 = vmatprep.subr.bf16.mxu0 0
  %4991 = vmatpush1.bf16.msra.mxu0 %v4969
  %4992 = vmatprep.subr.bf16.mxu0 0
  %4993 = vmatpush1.bf16.msra.mxu0 %v4970
  %4994 = vmatprep.subr.bf16.mxu0 0
  %4995 = vmatpush1.bf16.msra.mxu0 %v4971
  %4996 = vmatprep.subr.bf16.mxu0 0
  %4997 = vmatpush1.bf16.msra.mxu0 0
  %4998 = vmatprep.subr.bf16.mxu0 0
  %4999 = vmatpush1.bf16.msra.mxu0 0
  %5000 = vmatprep.subr.bf16.mxu0 0
  %5001 = vmatpush1.bf16.msra.mxu0 0
  %5002 = vmatprep.subr.bf16.mxu0 0
  %5003 = vmatpush1.bf16.msra.mxu0 0
  %5004 = vmatprep.subr.bf16.mxu0 0
  %5005 = vmatpush1.bf16.msra.mxu0 0
  %5006 = vmatprep.subr.bf16.mxu0 0
  %5007 = vmatpush1.bf16.msra.mxu0 0
  %5008 = vmatprep.subr.bf16.mxu0 0
  %5009 = vmatpush1.bf16.msra.mxu0 0
  %5010 = vmatprep.subr.bf16.mxu0 0
  %5011 = vmatpush1.bf16.msra.mxu0 0
  %5012 = vmatprep.mubr.bf16.mxu0 0
  %5013 = vmatmul.mubr.bf16.gmra.mrb[0].mxu0 %v4930
  %v5014 = vpop.f32.mrb[0].mxu0
  %v5015 = vadd.f32 0.0, %v5014
  %v5016 = vpop.f32.mrb[0].mxu0
  %v5017 = vpop.f32.mrb[0].mxu0
  %v5018 = vpop.f32.mrb[0].mxu0
  %5019 = vdwg.mxu0
  %v5020 = vadd.f32 %v4889, %v5015
  %s5021 = scalar_lea.vmem %s3, 320
  %v5022 = vld [vmem:[%s5021] sm:$0xf]
  %v5023 = vld [vmem:[%s5021 + $0x4] sm:$0xf]
  %v5024 = vld [vmem:[%s5021 + $0x8] sm:$0xf]
  %v5025 = vld [vmem:[%s5021 + $0xc] sm:$0xf]
  %v5026 = vld [vmem:[%s5021 + $0x10] sm:$0xf]
  %v5027 = vld [vmem:[%s5021 + $0x14] sm:$0xf]
  %v5028 = vld [vmem:[%s5021 + $0x18] sm:$0xf]
  %v5029 = vld [vmem:[%s5021 + $0x1c] sm:$0xf]
  %v5030 = vld [vmem:[%s5021 + $0x20] sm:$0xf]
  %v5031 = vld [vmem:[%s5021 + $0x24] sm:$0xf]
  %v5032 = vld [vmem:[%s5021 + $0x28] sm:$0xf]
  %v5033 = vld [vmem:[%s5021 + $0x2c] sm:$0xf]
  %v5034 = vld [vmem:[%s5021 + $0x30] sm:$0xf]
  %v5035 = vld [vmem:[%s5021 + $0x34] sm:$0xf]
  %v5036 = vld [vmem:[%s5021 + $0x38] sm:$0xf]
  %v5037 = vld [vmem:[%s5021 + $0x3c] sm:$0xf]
  %v5046 = vunpack.c.l.b16 %v4239
  %v5047 = vunpack.c.l.b16 %v4255
  %v5048 = vunpack.c.l.b16 %v4271
  %v5049 = vunpack.c.l.b16 %v4287
  %v5050 = vunpack.c.l.b16 %v4303
  %v5051 = vunpack.c.l.b16 %v4319
  %v5052 = vunpack.c.l.b16 %v4335
  %v5053 = vunpack.c.l.b16 %v4351
  %v5054 = vsel %vm4411, %v5047, %v5046
  %v5055 = vsel %vm4413, %v5048, %v5054
  %v5056 = vsel %vm4415, %v5049, %v5055
  %v5057 = vsel %vm4417, %v5050, %v5056
  %v5058 = vsel %vm4419, %v5051, %v5057
  %v5059 = vsel %vm4421, %v5052, %v5058
  %v5060 = vsel %vm4423, %v5053, %v5059
  %v5061 = vpack.c.b16 %v5060, %v5060
  %v5079 = vunpack.c.l.b16 %v5022
  %v5080 = vunpack.c.l.b16 %v5023
  %v5081 = vunpack.c.l.b16 %v5024
  %v5082 = vunpack.c.l.b16 %v5025
  %v5083 = vunpack.c.l.b16 %v5026
  %v5084 = vunpack.c.l.b16 %v5027
  %v5085 = vunpack.c.l.b16 %v5028
  %v5086 = vunpack.c.l.b16 %v5029
  %v5087 = vunpack.c.l.b16 %v5030
  %v5088 = vunpack.c.l.b16 %v5031
  %v5089 = vunpack.c.l.b16 %v5032
  %v5090 = vunpack.c.l.b16 %v5033
  %v5091 = vunpack.c.l.b16 %v5034
  %v5092 = vunpack.c.l.b16 %v5035
  %v5093 = vunpack.c.l.b16 %v5036
  %v5094 = vunpack.c.l.b16 %v5037
  %v5095 = vpack.c.b16 %v5080, %v5079
  %v5096 = vpack.c.b16 %v5082, %v5081
  %v5097 = vpack.c.b16 %v5084, %v5083
  %v5098 = vpack.c.b16 %v5086, %v5085
  %v5099 = vpack.c.b16 %v5088, %v5087
  %v5100 = vpack.c.b16 %v5090, %v5089
  %v5101 = vpack.c.b16 %v5092, %v5091
  %v5102 = vpack.c.b16 %v5094, %v5093
  %5111 = vmatprep.subr.bf16.mxu0 0
  %5112 = vmatpush1.bf16.msra.mxu0 %v5095
  %5113 = vmatprep.subr.bf16.mxu0 0
  %5114 = vmatpush1.bf16.msra.mxu0 %v5096
  %5115 = vmatprep.subr.bf16.mxu0 0
  %5116 = vmatpush1.bf16.msra.mxu0 %v5097
  %5117 = vmatprep.subr.bf16.mxu0 0
  %5118 = vmatpush1.bf16.msra.mxu0 %v5098
  %5119 = vmatprep.subr.bf16.mxu0 0
  %5120 = vmatpush1.bf16.msra.mxu0 %v5099
  %5121 = vmatprep.subr.bf16.mxu0 0
  %5122 = vmatpush1.bf16.msra.mxu0 %v5100
  %5123 = vmatprep.subr.bf16.mxu0 0
  %5124 = vmatpush1.bf16.msra.mxu0 %v5101
  %5125 = vmatprep.subr.bf16.mxu0 0
  %5126 = vmatpush1.bf16.msra.mxu0 %v5102
  %5127 = vmatprep.subr.bf16.mxu0 0
  %5128 = vmatpush1.bf16.msra.mxu0 0
  %5129 = vmatprep.subr.bf16.mxu0 0
  %5130 = vmatpush1.bf16.msra.mxu0 0
  %5131 = vmatprep.subr.bf16.mxu0 0
  %5132 = vmatpush1.bf16.msra.mxu0 0
  %5133 = vmatprep.subr.bf16.mxu0 0
  %5134 = vmatpush1.bf16.msra.mxu0 0
  %5135 = vmatprep.subr.bf16.mxu0 0
  %5136 = vmatpush1.bf16.msra.mxu0 0
  %5137 = vmatprep.subr.bf16.mxu0 0
  %5138 = vmatpush1.bf16.msra.mxu0 0
  %5139 = vmatprep.subr.bf16.mxu0 0
  %5140 = vmatpush1.bf16.msra.mxu0 0
  %5141 = vmatprep.subr.bf16.mxu0 0
  %5142 = vmatpush1.bf16.msra.mxu0 0
  %5143 = vmatprep.mubr.bf16.mxu0 0
  %5144 = vmatmul.mubr.bf16.gmra.mrb[0].mxu0 %v5061
  %v5145 = vpop.f32.mrb[0].mxu0
  %v5146 = vadd.f32 0.0, %v5145
  %v5147 = vpop.f32.mrb[0].mxu0
  %v5148 = vpop.f32.mrb[0].mxu0
  %v5149 = vpop.f32.mrb[0].mxu0
  %5150 = vdwg.mxu0
  %v5151 = vadd.f32 %v5020, %v5146
  %s5152 = scalar_lea.vmem %s3, 384
  %v5153 = vld [vmem:[%s5152] sm:$0xf]
  %v5154 = vld [vmem:[%s5152 + $0x4] sm:$0xf]
  %v5155 = vld [vmem:[%s5152 + $0x8] sm:$0xf]
  %v5156 = vld [vmem:[%s5152 + $0xc] sm:$0xf]
  %v5157 = vld [vmem:[%s5152 + $0x10] sm:$0xf]
  %v5158 = vld [vmem:[%s5152 + $0x14] sm:$0xf]
  %v5159 = vld [vmem:[%s5152 + $0x18] sm:$0xf]
  %v5160 = vld [vmem:[%s5152 + $0x1c] sm:$0xf]
  %v5161 = vld [vmem:[%s5152 + $0x20] sm:$0xf]
  %v5162 = vld [vmem:[%s5152 + $0x24] sm:$0xf]
  %v5163 = vld [vmem:[%s5152 + $0x28] sm:$0xf]
  %v5164 = vld [vmem:[%s5152 + $0x2c] sm:$0xf]
  %v5165 = vld [vmem:[%s5152 + $0x30] sm:$0xf]
  %v5166 = vld [vmem:[%s5152 + $0x34] sm:$0xf]
  %v5167 = vld [vmem:[%s5152 + $0x38] sm:$0xf]
  %v5168 = vld [vmem:[%s5152 + $0x3c] sm:$0xf]
  %v5177 = vunpack.c.l.b16 %v4240
  %v5178 = vunpack.c.l.b16 %v4256
  %v5179 = vunpack.c.l.b16 %v4272
  %v5180 = vunpack.c.l.b16 %v4288
  %v5181 = vunpack.c.l.b16 %v4304
  %v5182 = vunpack.c.l.b16 %v4320
  %v5183 = vunpack.c.l.b16 %v4336
  %v5184 = vunpack.c.l.b16 %v4352
  %v5185 = vsel %vm4411, %v5178, %v5177
  %v5186 = vsel %vm4413, %v5179, %v5185
  %v5187 = vsel %vm4415, %v5180, %v5186
  %v5188 = vsel %vm4417, %v5181, %v5187
  %v5189 = vsel %vm4419, %v5182, %v5188
  %v5190 = vsel %vm4421, %v5183, %v5189
  %v5191 = vsel %vm4423, %v5184, %v5190
  %v5192 = vpack.c.b16 %v5191, %v5191
  %v5210 = vunpack.c.l.b16 %v5153
  %v5211 = vunpack.c.l.b16 %v5154
  %v5212 = vunpack.c.l.b16 %v5155
  %v5213 = vunpack.c.l.b16 %v5156
  %v5214 = vunpack.c.l.b16 %v5157
  %v5215 = vunpack.c.l.b16 %v5158
  %v5216 = vunpack.c.l.b16 %v5159
  %v5217 = vunpack.c.l.b16 %v5160
  %v5218 = vunpack.c.l.b16 %v5161
  %v5219 = vunpack.c.l.b16 %v5162
  %v5220 = vunpack.c.l.b16 %v5163
  %v5221 = vunpack.c.l.b16 %v5164
  %v5222 = vunpack.c.l.b16 %v5165
  %v5223 = vunpack.c.l.b16 %v5166
  %v5224 = vunpack.c.l.b16 %v5167
  %v5225 = vunpack.c.l.b16 %v5168
  %v5226 = vpack.c.b16 %v5211, %v5210
  %v5227 = vpack.c.b16 %v5213, %v5212
  %v5228 = vpack.c.b16 %v5215, %v5214
  %v5229 = vpack.c.b16 %v5217, %v5216
  %v5230 = vpack.c.b16 %v5219, %v5218
  %v5231 = vpack.c.b16 %v5221, %v5220
  %v5232 = vpack.c.b16 %v5223, %v5222
  %v5233 = vpack.c.b16 %v5225, %v5224
  %5242 = vmatprep.subr.bf16.mxu0 0
  %5243 = vmatpush1.bf16.msra.mxu0 %v5226
  %5244 = vmatprep.subr.bf16.mxu0 0
  %5245 = vmatpush1.bf16.msra.mxu0 %v5227
  %5246 = vmatprep.subr.bf16.mxu0 0
  %5247 = vmatpush1.bf16.msra.mxu0 %v5228
  %5248 = vmatprep.subr.bf16.mxu0 0
  %5249 = vmatpush1.bf16.msra.mxu0 %v5229
  %5250 = vmatprep.subr.bf16.mxu0 0
  %5251 = vmatpush1.bf16.msra.mxu0 %v5230
  %5252 = vmatprep.subr.bf16.mxu0 0
  %5253 = vmatpush1.bf16.msra.mxu0 %v5231
  %5254 = vmatprep.subr.bf16.mxu0 0
  %5255 = vmatpush1.bf16.msra.mxu0 %v5232
  %5256 = vmatprep.subr.bf16.mxu0 0
  %5257 = vmatpush1.bf16.msra.mxu0 %v5233
  %5258 = vmatprep.subr.bf16.mxu0 0
  %5259 = vmatpush1.bf16.msra.mxu0 0
  %5260 = vmatprep.subr.bf16.mxu0 0
  %5261 = vmatpush1.bf16.msra.mxu0 0
  %5262 = vmatprep.subr.bf16.mxu0 0
  %5263 = vmatpush1.bf16.msra.mxu0 0
  %5264 = vmatprep.subr.bf16.mxu0 0
  %5265 = vmatpush1.bf16.msra.mxu0 0
  %5266 = vmatprep.subr.bf16.mxu0 0
  %5267 = vmatpush1.bf16.msra.mxu0 0
  %5268 = vmatprep.subr.bf16.mxu0 0
  %5269 = vmatpush1.bf16.msra.mxu0 0
  %5270 = vmatprep.subr.bf16.mxu0 0
  %5271 = vmatpush1.bf16.msra.mxu0 0
  %5272 = vmatprep.subr.bf16.mxu0 0
  %5273 = vmatpush1.bf16.msra.mxu0 0
  %5274 = vmatprep.mubr.bf16.mxu0 0
  %5275 = vmatmul.mubr.bf16.gmra.mrb[0].mxu0 %v5192
  %v5276 = vpop.f32.mrb[0].mxu0
  %v5277 = vadd.f32 0.0, %v5276
  %v5278 = vpop.f32.mrb[0].mxu0
  %v5279 = vpop.f32.mrb[0].mxu0
  %v5280 = vpop.f32.mrb[0].mxu0
  %5281 = vdwg.mxu0
  %v5282 = vadd.f32 %v5151, %v5277
  %s5283 = scalar_lea.vmem %s3, 448
  %v5284 = vld [vmem:[%s5283] sm:$0xf]
  %v5285 = vld [vmem:[%s5283 + $0x4] sm:$0xf]
  %v5286 = vld [vmem:[%s5283 + $0x8] sm:$0xf]
  %v5287 = vld [vmem:[%s5283 + $0xc] sm:$0xf]
  %v5288 = vld [vmem:[%s5283 + $0x10] sm:$0xf]
  %v5289 = vld [vmem:[%s5283 + $0x14] sm:$0xf]
  %v5290 = vld [vmem:[%s5283 + $0x18] sm:$0xf]
  %v5291 = vld [vmem:[%s5283 + $0x1c] sm:$0xf]
  %v5292 = vld [vmem:[%s5283 + $0x20] sm:$0xf]
  %v5293 = vld [vmem:[%s5283 + $0x24] sm:$0xf]
  %v5294 = vld [vmem:[%s5283 + $0x28] sm:$0xf]
  %v5295 = vld [vmem:[%s5283 + $0x2c] sm:$0xf]
  %v5296 = vld [vmem:[%s5283 + $0x30] sm:$0xf]
  %v5297 = vld [vmem:[%s5283 + $0x34] sm:$0xf]
  %v5298 = vld [vmem:[%s5283 + $0x38] sm:$0xf]
  %v5299 = vld [vmem:[%s5283 + $0x3c] sm:$0xf]
  %v5308 = vunpack.c.l.b16 %v4241
  %v5309 = vunpack.c.l.b16 %v4257
  %v5310 = vunpack.c.l.b16 %v4273
  %v5311 = vunpack.c.l.b16 %v4289
  %v5312 = vunpack.c.l.b16 %v4305
  %v5313 = vunpack.c.l.b16 %v4321
  %v5314 = vunpack.c.l.b16 %v4337
  %v5315 = vunpack.c.l.b16 %v4353
  %v5316 = vsel %vm4411, %v5309, %v5308
  %v5317 = vsel %vm4413, %v5310, %v5316
  %v5318 = vsel %vm4415, %v5311, %v5317
  %v5319 = vsel %vm4417, %v5312, %v5318
  %v5320 = vsel %vm4419, %v5313, %v5319
  %v5321 = vsel %vm4421, %v5314, %v5320
  %v5322 = vsel %vm4423, %v5315, %v5321
  %v5323 = vpack.c.b16 %v5322, %v5322
  %v5341 = vunpack.c.l.b16 %v5284
  %v5342 = vunpack.c.l.b16 %v5285
  %v5343 = vunpack.c.l.b16 %v5286
  %v5344 = vunpack.c.l.b16 %v5287
  %v5345 = vunpack.c.l.b16 %v5288
  %v5346 = vunpack.c.l.b16 %v5289
  %v5347 = vunpack.c.l.b16 %v5290
  %v5348 = vunpack.c.l.b16 %v5291
  %v5349 = vunpack.c.l.b16 %v5292
  %v5350 = vunpack.c.l.b16 %v5293
  %v5351 = vunpack.c.l.b16 %v5294
  %v5352 = vunpack.c.l.b16 %v5295
  %v5353 = vunpack.c.l.b16 %v5296
  %v5354 = vunpack.c.l.b16 %v5297
  %v5355 = vunpack.c.l.b16 %v5298
  %v5356 = vunpack.c.l.b16 %v5299
  %v5357 = vpack.c.b16 %v5342, %v5341
  %v5358 = vpack.c.b16 %v5344, %v5343
  %v5359 = vpack.c.b16 %v5346, %v5345
  %v5360 = vpack.c.b16 %v5348, %v5347
  %v5361 = vpack.c.b16 %v5350, %v5349
  %v5362 = vpack.c.b16 %v5352, %v5351
  %v5363 = vpack.c.b16 %v5354, %v5353
  %v5364 = vpack.c.b16 %v5356, %v5355
  %5373 = vmatprep.subr.bf16.mxu0 0
  %5374 = vmatpush1.bf16.msra.mxu0 %v5357
  %5375 = vmatprep.subr.bf16.mxu0 0
  %5376 = vmatpush1.bf16.msra.mxu0 %v5358
  %5377 = vmatprep.subr.bf16.mxu0 0
  %5378 = vmatpush1.bf16.msra.mxu0 %v5359
  %5379 = vmatprep.subr.bf16.mxu0 0
  %5380 = vmatpush1.bf16.msra.mxu0 %v5360
  %5381 = vmatprep.subr.bf16.mxu0 0
  %5382 = vmatpush1.bf16.msra.mxu0 %v5361
  %5383 = vmatprep.subr.bf16.mxu0 0
  %5384 = vmatpush1.bf16.msra.mxu0 %v5362
  %5385 = vmatprep.subr.bf16.mxu0 0
  %5386 = vmatpush1.bf16.msra.mxu0 %v5363
  %5387 = vmatprep.subr.bf16.mxu0 0
  %5388 = vmatpush1.bf16.msra.mxu0 %v5364
  %5389 = vmatprep.subr.bf16.mxu0 0
  %5390 = vmatpush1.bf16.msra.mxu0 0
  %5391 = vmatprep.subr.bf16.mxu0 0
  %5392 = vmatpush1.bf16.msra.mxu0 0
  %5393 = vmatprep.subr.bf16.mxu0 0
  %5394 = vmatpush1.bf16.msra.mxu0 0
  %5395 = vmatprep.subr.bf16.mxu0 0
  %5396 = vmatpush1.bf16.msra.mxu0 0
  %5397 = vmatprep.subr.bf16.mxu0 0
  %5398 = vmatpush1.bf16.msra.mxu0 0
  %5399 = vmatprep.subr.bf16.mxu0 0
  %5400 = vmatpush1.bf16.msra.mxu0 0
  %5401 = vmatprep.subr.bf16.mxu0 0
  %5402 = vmatpush1.bf16.msra.mxu0 0
  %5403 = vmatprep.subr.bf16.mxu0 0
  %5404 = vmatpush1.bf16.msra.mxu0 0
  %5405 = vmatprep.mubr.bf16.mxu0 0
  %5406 = vmatmul.mubr.bf16.gmra.mrb[0].mxu0 %v5323
  %v5407 = vpop.f32.mrb[0].mxu0
  %v5408 = vadd.f32 0.0, %v5407
  %v5409 = vpop.f32.mrb[0].mxu0
  %v5410 = vpop.f32.mrb[0].mxu0
  %v5411 = vpop.f32.mrb[0].mxu0
  %5412 = vdwg.mxu0
  %v5413 = vadd.f32 %v5282, %v5408
  %s5414 = scalar_lea.vmem %s3, 512
  %v5415 = vld [vmem:[%s5414] sm:$0xf]
  %v5416 = vld [vmem:[%s5414 + $0x4] sm:$0xf]
  %v5417 = vld [vmem:[%s5414 + $0x8] sm:$0xf]
  %v5418 = vld [vmem:[%s5414 + $0xc] sm:$0xf]
  %v5419 = vld [vmem:[%s5414 + $0x10] sm:$0xf]
  %v5420 = vld [vmem:[%s5414 + $0x14] sm:$0xf]
  %v5421 = vld [vmem:[%s5414 + $0x18] sm:$0xf]
  %v5422 = vld [vmem:[%s5414 + $0x1c] sm:$0xf]
  %v5423 = vld [vmem:[%s5414 + $0x20] sm:$0xf]
  %v5424 = vld [vmem:[%s5414 + $0x24] sm:$0xf]
  %v5425 = vld [vmem:[%s5414 + $0x28] sm:$0xf]
  %v5426 = vld [vmem:[%s5414 + $0x2c] sm:$0xf]
  %v5427 = vld [vmem:[%s5414 + $0x30] sm:$0xf]
  %v5428 = vld [vmem:[%s5414 + $0x34] sm:$0xf]
  %v5429 = vld [vmem:[%s5414 + $0x38] sm:$0xf]
  %v5430 = vld [vmem:[%s5414 + $0x3c] sm:$0xf]
  %v5439 = vunpack.c.l.b16 %v4242
  %v5440 = vunpack.c.l.b16 %v4258
  %v5441 = vunpack.c.l.b16 %v4274
  %v5442 = vunpack.c.l.b16 %v4290
  %v5443 = vunpack.c.l.b16 %v4306
  %v5444 = vunpack.c.l.b16 %v4322
  %v5445 = vunpack.c.l.b16 %v4338
  %v5446 = vunpack.c.l.b16 %v4354
  %v5447 = vsel %vm4411, %v5440, %v5439
  %v5448 = vsel %vm4413, %v5441, %v5447
  %v5449 = vsel %vm4415, %v5442, %v5448
  %v5450 = vsel %vm4417, %v5443, %v5449
  %v5451 = vsel %vm4419, %v5444, %v5450
  %v5452 = vsel %vm4421, %v5445, %v5451
  %v5453 = vsel %vm4423, %v5446, %v5452
  %v5454 = vpack.c.b16 %v5453, %v5453
  %v5472 = vunpack.c.l.b16 %v5415
  %v5473 = vunpack.c.l.b16 %v5416
  %v5474 = vunpack.c.l.b16 %v5417
  %v5475 = vunpack.c.l.b16 %v5418
  %v5476 = vunpack.c.l.b16 %v5419
  %v5477 = vunpack.c.l.b16 %v5420
  %v5478 = vunpack.c.l.b16 %v5421
  %v5479 = vunpack.c.l.b16 %v5422
  %v5480 = vunpack.c.l.b16 %v5423
  %v5481 = vunpack.c.l.b16 %v5424
  %v5482 = vunpack.c.l.b16 %v5425
  %v5483 = vunpack.c.l.b16 %v5426
  %v5484 = vunpack.c.l.b16 %v5427
  %v5485 = vunpack.c.l.b16 %v5428
  %v5486 = vunpack.c.l.b16 %v5429
  %v5487 = vunpack.c.l.b16 %v5430
  %v5488 = vpack.c.b16 %v5473, %v5472
  %v5489 = vpack.c.b16 %v5475, %v5474
  %v5490 = vpack.c.b16 %v5477, %v5476
  %v5491 = vpack.c.b16 %v5479, %v5478
  %v5492 = vpack.c.b16 %v5481, %v5480
  %v5493 = vpack.c.b16 %v5483, %v5482
  %v5494 = vpack.c.b16 %v5485, %v5484
  %v5495 = vpack.c.b16 %v5487, %v5486
  %5504 = vmatprep.subr.bf16.mxu0 0
  %5505 = vmatpush1.bf16.msra.mxu0 %v5488
  %5506 = vmatprep.subr.bf16.mxu0 0
  %5507 = vmatpush1.bf16.msra.mxu0 %v5489
  %5508 = vmatprep.subr.bf16.mxu0 0
  %5509 = vmatpush1.bf16.msra.mxu0 %v5490
  %5510 = vmatprep.subr.bf16.mxu0 0
  %5511 = vmatpush1.bf16.msra.mxu0 %v5491
  %5512 = vmatprep.subr.bf16.mxu0 0
  %5513 = vmatpush1.bf16.msra.mxu0 %v5492
  %5514 = vmatprep.subr.bf16.mxu0 0
  %5515 = vmatpush1.bf16.msra.mxu0 %v5493
  %5516 = vmatprep.subr.bf16.mxu0 0
  %5517 = vmatpush1.bf16.msra.mxu0 %v5494
  %5518 = vmatprep.subr.bf16.mxu0 0
  %5519 = vmatpush1.bf16.msra.mxu0 %v5495
  %5520 = vmatprep.subr.bf16.mxu0 0
  %5521 = vmatpush1.bf16.msra.mxu0 0
  %5522 = vmatprep.subr.bf16.mxu0 0
  %5523 = vmatpush1.bf16.msra.mxu0 0
  %5524 = vmatprep.subr.bf16.mxu0 0
  %5525 = vmatpush1.bf16.msra.mxu0 0
  %5526 = vmatprep.subr.bf16.mxu0 0
  %5527 = vmatpush1.bf16.msra.mxu0 0
  %5528 = vmatprep.subr.bf16.mxu0 0
  %5529 = vmatpush1.bf16.msra.mxu0 0
  %5530 = vmatprep.subr.bf16.mxu0 0
  %5531 = vmatpush1.bf16.msra.mxu0 0
  %5532 = vmatprep.subr.bf16.mxu0 0
  %5533 = vmatpush1.bf16.msra.mxu0 0
  %5534 = vmatprep.subr.bf16.mxu0 0
  %5535 = vmatpush1.bf16.msra.mxu0 0
  %5536 = vmatprep.mubr.bf16.mxu0 0
  %5537 = vmatmul.mubr.bf16.gmra.mrb[0].mxu0 %v5454
  %v5538 = vpop.f32.mrb[0].mxu0
  %v5539 = vadd.f32 0.0, %v5538
  %v5540 = vpop.f32.mrb[0].mxu0
  %v5541 = vpop.f32.mrb[0].mxu0
  %v5542 = vpop.f32.mrb[0].mxu0
  %5543 = vdwg.mxu0
  %v5544 = vadd.f32 %v5413, %v5539
  %s5545 = scalar_lea.vmem %s3, 576
  %v5546 = vld [vmem:[%s5545] sm:$0xf]
  %v5547 = vld [vmem:[%s5545 + $0x4] sm:$0xf]
  %v5548 = vld [vmem:[%s5545 + $0x8] sm:$0xf]
  %v5549 = vld [vmem:[%s5545 + $0xc] sm:$0xf]
  %v5550 = vld [vmem:[%s5545 + $0x10] sm:$0xf]
  %v5551 = vld [vmem:[%s5545 + $0x14] sm:$0xf]
  %v5552 = vld [vmem:[%s5545 + $0x18] sm:$0xf]
  %v5553 = vld [vmem:[%s5545 + $0x1c] sm:$0xf]
  %v5554 = vld [vmem:[%s5545 + $0x20] sm:$0xf]
  %v5555 = vld [vmem:[%s5545 + $0x24] sm:$0xf]
  %v5556 = vld [vmem:[%s5545 + $0x28] sm:$0xf]
  %v5557 = vld [vmem:[%s5545 + $0x2c] sm:$0xf]
  %v5558 = vld [vmem:[%s5545 + $0x30] sm:$0xf]
  %v5559 = vld [vmem:[%s5545 + $0x34] sm:$0xf]
  %v5560 = vld [vmem:[%s5545 + $0x38] sm:$0xf]
  %v5561 = vld [vmem:[%s5545 + $0x3c] sm:$0xf]
  %v5570 = vunpack.c.l.b16 %v4243
  %v5571 = vunpack.c.l.b16 %v4259
  %v5572 = vunpack.c.l.b16 %v4275
  %v5573 = vunpack.c.l.b16 %v4291
  %v5574 = vunpack.c.l.b16 %v4307
  %v5575 = vunpack.c.l.b16 %v4323
  %v5576 = vunpack.c.l.b16 %v4339
  %v5577 = vunpack.c.l.b16 %v4355
  %v5578 = vsel %vm4411, %v5571, %v5570
  %v5579 = vsel %vm4413, %v5572, %v5578
  %v5580 = vsel %vm4415, %v5573, %v5579
  %v5581 = vsel %vm4417, %v5574, %v5580
  %v5582 = vsel %vm4419, %v5575, %v5581
  %v5583 = vsel %vm4421, %v5576, %v5582
  %v5584 = vsel %vm4423, %v5577, %v5583
  %v5585 = vpack.c.b16 %v5584, %v5584
  %v5603 = vunpack.c.l.b16 %v5546
  %v5604 = vunpack.c.l.b16 %v5547
  %v5605 = vunpack.c.l.b16 %v5548
  %v5606 = vunpack.c.l.b16 %v5549
  %v5607 = vunpack.c.l.b16 %v5550
  %v5608 = vunpack.c.l.b16 %v5551
  %v5609 = vunpack.c.l.b16 %v5552
  %v5610 = vunpack.c.l.b16 %v5553
  %v5611 = vunpack.c.l.b16 %v5554
  %v5612 = vunpack.c.l.b16 %v5555
  %v5613 = vunpack.c.l.b16 %v5556
  %v5614 = vunpack.c.l.b16 %v5557
  %v5615 = vunpack.c.l.b16 %v5558
  %v5616 = vunpack.c.l.b16 %v5559
  %v5617 = vunpack.c.l.b16 %v5560
  %v5618 = vunpack.c.l.b16 %v5561
  %v5619 = vpack.c.b16 %v5604, %v5603
  %v5620 = vpack.c.b16 %v5606, %v5605
  %v5621 = vpack.c.b16 %v5608, %v5607
  %v5622 = vpack.c.b16 %v5610, %v5609
  %v5623 = vpack.c.b16 %v5612, %v5611
  %v5624 = vpack.c.b16 %v5614, %v5613
  %v5625 = vpack.c.b16 %v5616, %v5615
  %v5626 = vpack.c.b16 %v5618, %v5617
  %5635 = vmatprep.subr.bf16.mxu0 0
  %5636 = vmatpush1.bf16.msra.mxu0 %v5619
  %5637 = vmatprep.subr.bf16.mxu0 0
  %5638 = vmatpush1.bf16.msra.mxu0 %v5620
  %5639 = vmatprep.subr.bf16.mxu0 0
  %5640 = vmatpush1.bf16.msra.mxu0 %v5621
  %5641 = vmatprep.subr.bf16.mxu0 0
  %5642 = vmatpush1.bf16.msra.mxu0 %v5622
  %5643 = vmatprep.subr.bf16.mxu0 0
  %5644 = vmatpush1.bf16.msra.mxu0 %v5623
  %5645 = vmatprep.subr.bf16.mxu0 0
  %5646 = vmatpush1.bf16.msra.mxu0 %v5624
  %5647 = vmatprep.subr.bf16.mxu0 0
  %5648 = vmatpush1.bf16.msra.mxu0 %v5625
  %5649 = vmatprep.subr.bf16.mxu0 0
  %5650 = vmatpush1.bf16.msra.mxu0 %v5626
  %5651 = vmatprep.subr.bf16.mxu0 0
  %5652 = vmatpush1.bf16.msra.mxu0 0
  %5653 = vmatprep.subr.bf16.mxu0 0
  %5654 = vmatpush1.bf16.msra.mxu0 0
  %5655 = vmatprep.subr.bf16.mxu0 0
  %5656 = vmatpush1.bf16.msra.mxu0 0
  %5657 = vmatprep.subr.bf16.mxu0 0
  %5658 = vmatpush1.bf16.msra.mxu0 0
  %5659 = vmatprep.subr.bf16.mxu0 0
  %5660 = vmatpush1.bf16.msra.mxu0 0
  %5661 = vmatprep.subr.bf16.mxu0 0
  %5662 = vmatpush1.bf16.msra.mxu0 0
  %5663 = vmatprep.subr.bf16.mxu0 0
  %5664 = vmatpush1.bf16.msra.mxu0 0
  %5665 = vmatprep.subr.bf16.mxu0 0
  %5666 = vmatpush1.bf16.msra.mxu0 0
  %5667 = vmatprep.mubr.bf16.mxu0 0
  %5668 = vmatmul.mubr.bf16.gmra.mrb[0].mxu0 %v5585
  %v5669 = vpop.f32.mrb[0].mxu0
  %v5670 = vadd.f32 0.0, %v5669
  %v5671 = vpop.f32.mrb[0].mxu0
  %v5672 = vpop.f32.mrb[0].mxu0
  %v5673 = vpop.f32.mrb[0].mxu0
  %5674 = vdwg.mxu0
  %v5675 = vadd.f32 %v5544, %v5670
  %s5676 = scalar_lea.vmem %s3, 640
  %v5677 = vld [vmem:[%s5676] sm:$0xf]
  %v5678 = vld [vmem:[%s5676 + $0x4] sm:$0xf]
  %v5679 = vld [vmem:[%s5676 + $0x8] sm:$0xf]
  %v5680 = vld [vmem:[%s5676 + $0xc] sm:$0xf]
  %v5681 = vld [vmem:[%s5676 + $0x10] sm:$0xf]
  %v5682 = vld [vmem:[%s5676 + $0x14] sm:$0xf]
  %v5683 = vld [vmem:[%s5676 + $0x18] sm:$0xf]
  %v5684 = vld [vmem:[%s5676 + $0x1c] sm:$0xf]
  %v5685 = vld [vmem:[%s5676 + $0x20] sm:$0xf]
  %v5686 = vld [vmem:[%s5676 + $0x24] sm:$0xf]
  %v5687 = vld [vmem:[%s5676 + $0x28] sm:$0xf]
  %v5688 = vld [vmem:[%s5676 + $0x2c] sm:$0xf]
  %v5689 = vld [vmem:[%s5676 + $0x30] sm:$0xf]
  %v5690 = vld [vmem:[%s5676 + $0x34] sm:$0xf]
  %v5691 = vld [vmem:[%s5676 + $0x38] sm:$0xf]
  %v5692 = vld [vmem:[%s5676 + $0x3c] sm:$0xf]
  %v5701 = vunpack.c.l.b16 %v4244
  %v5702 = vunpack.c.l.b16 %v4260
  %v5703 = vunpack.c.l.b16 %v4276
  %v5704 = vunpack.c.l.b16 %v4292
  %v5705 = vunpack.c.l.b16 %v4308
  %v5706 = vunpack.c.l.b16 %v4324
  %v5707 = vunpack.c.l.b16 %v4340
  %v5708 = vunpack.c.l.b16 %v4356
  %v5709 = vsel %vm4411, %v5702, %v5701
  %v5710 = vsel %vm4413, %v5703, %v5709
  %v5711 = vsel %vm4415, %v5704, %v5710
  %v5712 = vsel %vm4417, %v5705, %v5711
  %v5713 = vsel %vm4419, %v5706, %v5712
  %v5714 = vsel %vm4421, %v5707, %v5713
  %v5715 = vsel %vm4423, %v5708, %v5714
  %v5716 = vpack.c.b16 %v5715, %v5715
  %v5734 = vunpack.c.l.b16 %v5677
  %v5735 = vunpack.c.l.b16 %v5678
  %v5736 = vunpack.c.l.b16 %v5679
  %v5737 = vunpack.c.l.b16 %v5680
  %v5738 = vunpack.c.l.b16 %v5681
  %v5739 = vunpack.c.l.b16 %v5682
  %v5740 = vunpack.c.l.b16 %v5683
  %v5741 = vunpack.c.l.b16 %v5684
  %v5742 = vunpack.c.l.b16 %v5685
  %v5743 = vunpack.c.l.b16 %v5686
  %v5744 = vunpack.c.l.b16 %v5687
  %v5745 = vunpack.c.l.b16 %v5688
  %v5746 = vunpack.c.l.b16 %v5689
  %v5747 = vunpack.c.l.b16 %v5690
  %v5748 = vunpack.c.l.b16 %v5691
  %v5749 = vunpack.c.l.b16 %v5692
  %v5750 = vpack.c.b16 %v5735, %v5734
  %v5751 = vpack.c.b16 %v5737, %v5736
  %v5752 = vpack.c.b16 %v5739, %v5738
  %v5753 = vpack.c.b16 %v5741, %v5740
  %v5754 = vpack.c.b16 %v5743, %v5742
  %v5755 = vpack.c.b16 %v5745, %v5744
  %v5756 = vpack.c.b16 %v5747, %v5746
  %v5757 = vpack.c.b16 %v5749, %v5748
  %5766 = vmatprep.subr.bf16.mxu0 0
  %5767 = vmatpush1.bf16.msra.mxu0 %v5750
  %5768 = vmatprep.subr.bf16.mxu0 0
  %5769 = vmatpush1.bf16.msra.mxu0 %v5751
  %5770 = vmatprep.subr.bf16.mxu0 0
  %5771 = vmatpush1.bf16.msra.mxu0 %v5752
  %5772 = vmatprep.subr.bf16.mxu0 0
  %5773 = vmatpush1.bf16.msra.mxu0 %v5753
  %5774 = vmatprep.subr.bf16.mxu0 0
  %5775 = vmatpush1.bf16.msra.mxu0 %v5754
  %5776 = vmatprep.subr.bf16.mxu0 0
  %5777 = vmatpush1.bf16.msra.mxu0 %v5755
  %5778 = vmatprep.subr.bf16.mxu0 0
  %5779 = vmatpush1.bf16.msra.mxu0 %v5756
  %5780 = vmatprep.subr.bf16.mxu0 0
  %5781 = vmatpush1.bf16.msra.mxu0 %v5757
  %5782 = vmatprep.subr.bf16.mxu0 0
  %5783 = vmatpush1.bf16.msra.mxu0 0
  %5784 = vmatprep.subr.bf16.mxu0 0
  %5785 = vmatpush1.bf16.msra.mxu0 0
  %5786 = vmatprep.subr.bf16.mxu0 0
  %5787 = vmatpush1.bf16.msra.mxu0 0
  %5788 = vmatprep.subr.bf16.mxu0 0
  %5789 = vmatpush1.bf16.msra.mxu0 0
  %5790 = vmatprep.subr.bf16.mxu0 0
  %5791 = vmatpush1.bf16.msra.mxu0 0
  %5792 = vmatprep.subr.bf16.mxu0 0
  %5793 = vmatpush1.bf16.msra.mxu0 0
  %5794 = vmatprep.subr.bf16.mxu0 0
  %5795 = vmatpush1.bf16.msra.mxu0 0
  %5796 = vmatprep.subr.bf16.mxu0 0
  %5797 = vmatpush1.bf16.msra.mxu0 0
  %5798 = vmatprep.mubr.bf16.mxu0 0
  %5799 = vmatmul.mubr.bf16.gmra.mrb[0].mxu0 %v5716
  %v5800 = vpop.f32.mrb[0].mxu0
  %v5801 = vadd.f32 0.0, %v5800
  %v5802 = vpop.f32.mrb[0].mxu0
  %v5803 = vpop.f32.mrb[0].mxu0
  %v5804 = vpop.f32.mrb[0].mxu0
  %5805 = vdwg.mxu0
  %v5806 = vadd.f32 %v5675, %v5801
  %s5807 = scalar_lea.vmem %s3, 704
  %v5808 = vld [vmem:[%s5807] sm:$0xf]
  %v5809 = vld [vmem:[%s5807 + $0x4] sm:$0xf]
  %v5810 = vld [vmem:[%s5807 + $0x8] sm:$0xf]
  %v5811 = vld [vmem:[%s5807 + $0xc] sm:$0xf]
  %v5812 = vld [vmem:[%s5807 + $0x10] sm:$0xf]
  %v5813 = vld [vmem:[%s5807 + $0x14] sm:$0xf]
  %v5814 = vld [vmem:[%s5807 + $0x18] sm:$0xf]
  %v5815 = vld [vmem:[%s5807 + $0x1c] sm:$0xf]
  %v5816 = vld [vmem:[%s5807 + $0x20] sm:$0xf]
  %v5817 = vld [vmem:[%s5807 + $0x24] sm:$0xf]
  %v5818 = vld [vmem:[%s5807 + $0x28] sm:$0xf]
  %v5819 = vld [vmem:[%s5807 + $0x2c] sm:$0xf]
  %v5820 = vld [vmem:[%s5807 + $0x30] sm:$0xf]
  %v5821 = vld [vmem:[%s5807 + $0x34] sm:$0xf]
  %v5822 = vld [vmem:[%s5807 + $0x38] sm:$0xf]
  %v5823 = vld [vmem:[%s5807 + $0x3c] sm:$0xf]
  %v5832 = vunpack.c.l.b16 %v4245
  %v5833 = vunpack.c.l.b16 %v4261
  %v5834 = vunpack.c.l.b16 %v4277
  %v5835 = vunpack.c.l.b16 %v4293
  %v5836 = vunpack.c.l.b16 %v4309
  %v5837 = vunpack.c.l.b16 %v4325
  %v5838 = vunpack.c.l.b16 %v4341
  %v5839 = vunpack.c.l.b16 %v4357
  %v5840 = vsel %vm4411, %v5833, %v5832
  %v5841 = vsel %vm4413, %v5834, %v5840
  %v5842 = vsel %vm4415, %v5835, %v5841
  %v5843 = vsel %vm4417, %v5836, %v5842
  %v5844 = vsel %vm4419, %v5837, %v5843
  %v5845 = vsel %vm4421, %v5838, %v5844
  %v5846 = vsel %vm4423, %v5839, %v5845
  %v5847 = vpack.c.b16 %v5846, %v5846
  %v5865 = vunpack.c.l.b16 %v5808
  %v5866 = vunpack.c.l.b16 %v5809
  %v5867 = vunpack.c.l.b16 %v5810
  %v5868 = vunpack.c.l.b16 %v5811
  %v5869 = vunpack.c.l.b16 %v5812
  %v5870 = vunpack.c.l.b16 %v5813
  %v5871 = vunpack.c.l.b16 %v5814
  %v5872 = vunpack.c.l.b16 %v5815
  %v5873 = vunpack.c.l.b16 %v5816
  %v5874 = vunpack.c.l.b16 %v5817
  %v5875 = vunpack.c.l.b16 %v5818
  %v5876 = vunpack.c.l.b16 %v5819
  %v5877 = vunpack.c.l.b16 %v5820
  %v5878 = vunpack.c.l.b16 %v5821
  %v5879 = vunpack.c.l.b16 %v5822
  %v5880 = vunpack.c.l.b16 %v5823
  %v5881 = vpack.c.b16 %v5866, %v5865
  %v5882 = vpack.c.b16 %v5868, %v5867
  %v5883 = vpack.c.b16 %v5870, %v5869
  %v5884 = vpack.c.b16 %v5872, %v5871
  %v5885 = vpack.c.b16 %v5874, %v5873
  %v5886 = vpack.c.b16 %v5876, %v5875
  %v5887 = vpack.c.b16 %v5878, %v5877
  %v5888 = vpack.c.b16 %v5880, %v5879
  %5897 = vmatprep.subr.bf16.mxu0 0
  %5898 = vmatpush1.bf16.msra.mxu0 %v5881
  %5899 = vmatprep.subr.bf16.mxu0 0
  %5900 = vmatpush1.bf16.msra.mxu0 %v5882
  %5901 = vmatprep.subr.bf16.mxu0 0
  %5902 = vmatpush1.bf16.msra.mxu0 %v5883
  %5903 = vmatprep.subr.bf16.mxu0 0
  %5904 = vmatpush1.bf16.msra.mxu0 %v5884
  %5905 = vmatprep.subr.bf16.mxu0 0
  %5906 = vmatpush1.bf16.msra.mxu0 %v5885
  %5907 = vmatprep.subr.bf16.mxu0 0
  %5908 = vmatpush1.bf16.msra.mxu0 %v5886
  %5909 = vmatprep.subr.bf16.mxu0 0
  %5910 = vmatpush1.bf16.msra.mxu0 %v5887
  %5911 = vmatprep.subr.bf16.mxu0 0
  %5912 = vmatpush1.bf16.msra.mxu0 %v5888
  %5913 = vmatprep.subr.bf16.mxu0 0
  %5914 = vmatpush1.bf16.msra.mxu0 0
  %5915 = vmatprep.subr.bf16.mxu0 0
  %5916 = vmatpush1.bf16.msra.mxu0 0
  %5917 = vmatprep.subr.bf16.mxu0 0
  %5918 = vmatpush1.bf16.msra.mxu0 0
  %5919 = vmatprep.subr.bf16.mxu0 0
  %5920 = vmatpush1.bf16.msra.mxu0 0
  %5921 = vmatprep.subr.bf16.mxu0 0
  %5922 = vmatpush1.bf16.msra.mxu0 0
  %5923 = vmatprep.subr.bf16.mxu0 0
  %5924 = vmatpush1.bf16.msra.mxu0 0
  %5925 = vmatprep.subr.bf16.mxu0 0
  %5926 = vmatpush1.bf16.msra.mxu0 0
  %5927 = vmatprep.subr.bf16.mxu0 0
  %5928 = vmatpush1.bf16.msra.mxu0 0
  %5929 = vmatprep.mubr.bf16.mxu0 0
  %5930 = vmatmul.mubr.bf16.gmra.mrb[0].mxu0 %v5847
  %v5931 = vpop.f32.mrb[0].mxu0
  %v5932 = vadd.f32 0.0, %v5931
  %v5933 = vpop.f32.mrb[0].mxu0
  %v5934 = vpop.f32.mrb[0].mxu0
  %v5935 = vpop.f32.mrb[0].mxu0
  %5936 = vdwg.mxu0
  %v5937 = vadd.f32 %v5806, %v5932
  %s5938 = scalar_lea.vmem %s3, 768
  %v5939 = vld [vmem:[%s5938] sm:$0xf]
  %v5940 = vld [vmem:[%s5938 + $0x4] sm:$0xf]
  %v5941 = vld [vmem:[%s5938 + $0x8] sm:$0xf]
  %v5942 = vld [vmem:[%s5938 + $0xc] sm:$0xf]
  %v5943 = vld [vmem:[%s5938 + $0x10] sm:$0xf]
  %v5944 = vld [vmem:[%s5938 + $0x14] sm:$0xf]
  %v5945 = vld [vmem:[%s5938 + $0x18] sm:$0xf]
  %v5946 = vld [vmem:[%s5938 + $0x1c] sm:$0xf]
  %v5947 = vld [vmem:[%s5938 + $0x20] sm:$0xf]
  %v5948 = vld [vmem:[%s5938 + $0x24] sm:$0xf]
  %v5949 = vld [vmem:[%s5938 + $0x28] sm:$0xf]
  %v5950 = vld [vmem:[%s5938 + $0x2c] sm:$0xf]
  %v5951 = vld [vmem:[%s5938 + $0x30] sm:$0xf]
  %v5952 = vld [vmem:[%s5938 + $0x34] sm:$0xf]
  %v5953 = vld [vmem:[%s5938 + $0x38] sm:$0xf]
  %v5954 = vld [vmem:[%s5938 + $0x3c] sm:$0xf]
  %v5963 = vunpack.c.l.b16 %v4246
  %v5964 = vunpack.c.l.b16 %v4262
  %v5965 = vunpack.c.l.b16 %v4278
  %v5966 = vunpack.c.l.b16 %v4294
  %v5967 = vunpack.c.l.b16 %v4310
  %v5968 = vunpack.c.l.b16 %v4326
  %v5969 = vunpack.c.l.b16 %v4342
  %v5970 = vunpack.c.l.b16 %v4358
  %v5971 = vsel %vm4411, %v5964, %v5963
  %v5972 = vsel %vm4413, %v5965, %v5971
  %v5973 = vsel %vm4415, %v5966, %v5972
  %v5974 = vsel %vm4417, %v5967, %v5973
  %v5975 = vsel %vm4419, %v5968, %v5974
  %v5976 = vsel %vm4421, %v5969, %v5975
  %v5977 = vsel %vm4423, %v5970, %v5976
  %v5978 = vpack.c.b16 %v5977, %v5977
  %v5996 = vunpack.c.l.b16 %v5939
  %v5997 = vunpack.c.l.b16 %v5940
  %v5998 = vunpack.c.l.b16 %v5941
  %v5999 = vunpack.c.l.b16 %v5942
  %v6000 = vunpack.c.l.b16 %v5943
  %v6001 = vunpack.c.l.b16 %v5944
  %v6002 = vunpack.c.l.b16 %v5945
  %v6003 = vunpack.c.l.b16 %v5946
  %v6004 = vunpack.c.l.b16 %v5947
  %v6005 = vunpack.c.l.b16 %v5948
  %v6006 = vunpack.c.l.b16 %v5949
  %v6007 = vunpack.c.l.b16 %v5950
  %v6008 = vunpack.c.l.b16 %v5951
  %v6009 = vunpack.c.l.b16 %v5952
  %v6010 = vunpack.c.l.b16 %v5953
  %v6011 = vunpack.c.l.b16 %v5954
  %v6012 = vpack.c.b16 %v5997, %v5996
  %v6013 = vpack.c.b16 %v5999, %v5998
  %v6014 = vpack.c.b16 %v6001, %v6000
  %v6015 = vpack.c.b16 %v6003, %v6002
  %v6016 = vpack.c.b16 %v6005, %v6004
  %v6017 = vpack.c.b16 %v6007, %v6006
  %v6018 = vpack.c.b16 %v6009, %v6008
  %v6019 = vpack.c.b16 %v6011, %v6010
  %6028 = vmatprep.subr.bf16.mxu0 0
  %6029 = vmatpush1.bf16.msra.mxu0 %v6012
  %6030 = vmatprep.subr.bf16.mxu0 0
  %6031 = vmatpush1.bf16.msra.mxu0 %v6013
  %6032 = vmatprep.subr.bf16.mxu0 0
  %6033 = vmatpush1.bf16.msra.mxu0 %v6014
  %6034 = vmatprep.subr.bf16.mxu0 0
  %6035 = vmatpush1.bf16.msra.mxu0 %v6015
  %6036 = vmatprep.subr.bf16.mxu0 0
  %6037 = vmatpush1.bf16.msra.mxu0 %v6016
  %6038 = vmatprep.subr.bf16.mxu0 0
  %6039 = vmatpush1.bf16.msra.mxu0 %v6017
  %6040 = vmatprep.subr.bf16.mxu0 0
  %6041 = vmatpush1.bf16.msra.mxu0 %v6018
  %6042 = vmatprep.subr.bf16.mxu0 0
  %6043 = vmatpush1.bf16.msra.mxu0 %v6019
  %6044 = vmatprep.subr.bf16.mxu0 0
  %6045 = vmatpush1.bf16.msra.mxu0 0
  %6046 = vmatprep.subr.bf16.mxu0 0
  %6047 = vmatpush1.bf16.msra.mxu0 0
  %6048 = vmatprep.subr.bf16.mxu0 0
  %6049 = vmatpush1.bf16.msra.mxu0 0
  %6050 = vmatprep.subr.bf16.mxu0 0
  %6051 = vmatpush1.bf16.msra.mxu0 0
  %6052 = vmatprep.subr.bf16.mxu0 0
  %6053 = vmatpush1.bf16.msra.mxu0 0
  %6054 = vmatprep.subr.bf16.mxu0 0
  %6055 = vmatpush1.bf16.msra.mxu0 0
  %6056 = vmatprep.subr.bf16.mxu0 0
  %6057 = vmatpush1.bf16.msra.mxu0 0
  %6058 = vmatprep.subr.bf16.mxu0 0
  %6059 = vmatpush1.bf16.msra.mxu0 0
  %6060 = vmatprep.mubr.bf16.mxu0 0
  %6061 = vmatmul.mubr.bf16.gmra.mrb[0].mxu0 %v5978
  %v6062 = vpop.f32.mrb[0].mxu0
  %v6063 = vadd.f32 0.0, %v6062
  %v6064 = vpop.f32.mrb[0].mxu0
  %v6065 = vpop.f32.mrb[0].mxu0
  %v6066 = vpop.f32.mrb[0].mxu0
  %6067 = vdwg.mxu0
  %v6068 = vadd.f32 %v5937, %v6063
  %s6069 = scalar_lea.vmem %s3, 832
  %v6070 = vld [vmem:[%s6069] sm:$0xf]
  %v6071 = vld [vmem:[%s6069 + $0x4] sm:$0xf]
  %v6072 = vld [vmem:[%s6069 + $0x8] sm:$0xf]
  %v6073 = vld [vmem:[%s6069 + $0xc] sm:$0xf]
  %v6074 = vld [vmem:[%s6069 + $0x10] sm:$0xf]
  %v6075 = vld [vmem:[%s6069 + $0x14] sm:$0xf]
  %v6076 = vld [vmem:[%s6069 + $0x18] sm:$0xf]
  %v6077 = vld [vmem:[%s6069 + $0x1c] sm:$0xf]
  %v6078 = vld [vmem:[%s6069 + $0x20] sm:$0xf]
  %v6079 = vld [vmem:[%s6069 + $0x24] sm:$0xf]
  %v6080 = vld [vmem:[%s6069 + $0x28] sm:$0xf]
  %v6081 = vld [vmem:[%s6069 + $0x2c] sm:$0xf]
  %v6082 = vld [vmem:[%s6069 + $0x30] sm:$0xf]
  %v6083 = vld [vmem:[%s6069 + $0x34] sm:$0xf]
  %v6084 = vld [vmem:[%s6069 + $0x38] sm:$0xf]
  %v6085 = vld [vmem:[%s6069 + $0x3c] sm:$0xf]
  %v6094 = vunpack.c.l.b16 %v4247
  %v6095 = vunpack.c.l.b16 %v4263
  %v6096 = vunpack.c.l.b16 %v4279
  %v6097 = vunpack.c.l.b16 %v4295
  %v6098 = vunpack.c.l.b16 %v4311
  %v6099 = vunpack.c.l.b16 %v4327
  %v6100 = vunpack.c.l.b16 %v4343
  %v6101 = vunpack.c.l.b16 %v4359
  %v6102 = vsel %vm4411, %v6095, %v6094
  %v6103 = vsel %vm4413, %v6096, %v6102
  %v6104 = vsel %vm4415, %v6097, %v6103
  %v6105 = vsel %vm4417, %v6098, %v6104
  %v6106 = vsel %vm4419, %v6099, %v6105
  %v6107 = vsel %vm4421, %v6100, %v6106
  %v6108 = vsel %vm4423, %v6101, %v6107
  %v6109 = vpack.c.b16 %v6108, %v6108
  %v6127 = vunpack.c.l.b16 %v6070
  %v6128 = vunpack.c.l.b16 %v6071
  %v6129 = vunpack.c.l.b16 %v6072
  %v6130 = vunpack.c.l.b16 %v6073
  %v6131 = vunpack.c.l.b16 %v6074
  %v6132 = vunpack.c.l.b16 %v6075
  %v6133 = vunpack.c.l.b16 %v6076
  %v6134 = vunpack.c.l.b16 %v6077
  %v6135 = vunpack.c.l.b16 %v6078
  %v6136 = vunpack.c.l.b16 %v6079
  %v6137 = vunpack.c.l.b16 %v6080
  %v6138 = vunpack.c.l.b16 %v6081
  %v6139 = vunpack.c.l.b16 %v6082
  %v6140 = vunpack.c.l.b16 %v6083
  %v6141 = vunpack.c.l.b16 %v6084
  %v6142 = vunpack.c.l.b16 %v6085
  %v6143 = vpack.c.b16 %v6128, %v6127
  %v6144 = vpack.c.b16 %v6130, %v6129
  %v6145 = vpack.c.b16 %v6132, %v6131
  %v6146 = vpack.c.b16 %v6134, %v6133
  %v6147 = vpack.c.b16 %v6136, %v6135
  %v6148 = vpack.c.b16 %v6138, %v6137
  %v6149 = vpack.c.b16 %v6140, %v6139
  %v6150 = vpack.c.b16 %v6142, %v6141
  %6159 = vmatprep.subr.bf16.mxu0 0
  %6160 = vmatpush1.bf16.msra.mxu0 %v6143
  %6161 = vmatprep.subr.bf16.mxu0 0
  %6162 = vmatpush1.bf16.msra.mxu0 %v6144
  %6163 = vmatprep.subr.bf16.mxu0 0
  %6164 = vmatpush1.bf16.msra.mxu0 %v6145
  %6165 = vmatprep.subr.bf16.mxu0 0
  %6166 = vmatpush1.bf16.msra.mxu0 %v6146
  %6167 = vmatprep.subr.bf16.mxu0 0
  %6168 = vmatpush1.bf16.msra.mxu0 %v6147
  %6169 = vmatprep.subr.bf16.mxu0 0
  %6170 = vmatpush1.bf16.msra.mxu0 %v6148
  %6171 = vmatprep.subr.bf16.mxu0 0
  %6172 = vmatpush1.bf16.msra.mxu0 %v6149
  %6173 = vmatprep.subr.bf16.mxu0 0
  %6174 = vmatpush1.bf16.msra.mxu0 %v6150
  %6175 = vmatprep.subr.bf16.mxu0 0
  %6176 = vmatpush1.bf16.msra.mxu0 0
  %6177 = vmatprep.subr.bf16.mxu0 0
  %6178 = vmatpush1.bf16.msra.mxu0 0
  %6179 = vmatprep.subr.bf16.mxu0 0
  %6180 = vmatpush1.bf16.msra.mxu0 0
  %6181 = vmatprep.subr.bf16.mxu0 0
  %6182 = vmatpush1.bf16.msra.mxu0 0
  %6183 = vmatprep.subr.bf16.mxu0 0
  %6184 = vmatpush1.bf16.msra.mxu0 0
  %6185 = vmatprep.subr.bf16.mxu0 0
  %6186 = vmatpush1.bf16.msra.mxu0 0
  %6187 = vmatprep.subr.bf16.mxu0 0
  %6188 = vmatpush1.bf16.msra.mxu0 0
  %6189 = vmatprep.subr.bf16.mxu0 0
  %6190 = vmatpush1.bf16.msra.mxu0 0
  %6191 = vmatprep.mubr.bf16.mxu0 0
  %6192 = vmatmul.mubr.bf16.gmra.mrb[0].mxu0 %v6109
  %v6193 = vpop.f32.mrb[0].mxu0
  %v6194 = vadd.f32 0.0, %v6193
  %v6195 = vpop.f32.mrb[0].mxu0
  %v6196 = vpop.f32.mrb[0].mxu0
  %v6197 = vpop.f32.mrb[0].mxu0
  %6198 = vdwg.mxu0
  %v6199 = vadd.f32 %v6068, %v6194
  %s6200 = scalar_lea.vmem %s3, 896
  %v6201 = vld [vmem:[%s6200] sm:$0xf]
  %v6202 = vld [vmem:[%s6200 + $0x4] sm:$0xf]
  %v6203 = vld [vmem:[%s6200 + $0x8] sm:$0xf]
  %v6204 = vld [vmem:[%s6200 + $0xc] sm:$0xf]
  %v6205 = vld [vmem:[%s6200 + $0x10] sm:$0xf]
  %v6206 = vld [vmem:[%s6200 + $0x14] sm:$0xf]
  %v6207 = vld [vmem:[%s6200 + $0x18] sm:$0xf]
  %v6208 = vld [vmem:[%s6200 + $0x1c] sm:$0xf]
  %v6209 = vld [vmem:[%s6200 + $0x20] sm:$0xf]
  %v6210 = vld [vmem:[%s6200 + $0x24] sm:$0xf]
  %v6211 = vld [vmem:[%s6200 + $0x28] sm:$0xf]
  %v6212 = vld [vmem:[%s6200 + $0x2c] sm:$0xf]
  %v6213 = vld [vmem:[%s6200 + $0x30] sm:$0xf]
  %v6214 = vld [vmem:[%s6200 + $0x34] sm:$0xf]
  %v6215 = vld [vmem:[%s6200 + $0x38] sm:$0xf]
  %v6216 = vld [vmem:[%s6200 + $0x3c] sm:$0xf]
  %v6225 = vunpack.c.l.b16 %v4248
  %v6226 = vunpack.c.l.b16 %v4264
  %v6227 = vunpack.c.l.b16 %v4280
  %v6228 = vunpack.c.l.b16 %v4296
  %v6229 = vunpack.c.l.b16 %v4312
  %v6230 = vunpack.c.l.b16 %v4328
  %v6231 = vunpack.c.l.b16 %v4344
  %v6232 = vunpack.c.l.b16 %v4360
  %v6233 = vsel %vm4411, %v6226, %v6225
  %v6234 = vsel %vm4413, %v6227, %v6233
  %v6235 = vsel %vm4415, %v6228, %v6234
  %v6236 = vsel %vm4417, %v6229, %v6235
  %v6237 = vsel %vm4419, %v6230, %v6236
  %v6238 = vsel %vm4421, %v6231, %v6237
  %v6239 = vsel %vm4423, %v6232, %v6238
  %v6240 = vpack.c.b16 %v6239, %v6239
  %v6258 = vunpack.c.l.b16 %v6201
  %v6259 = vunpack.c.l.b16 %v6202
  %v6260 = vunpack.c.l.b16 %v6203
  %v6261 = vunpack.c.l.b16 %v6204
  %v6262 = vunpack.c.l.b16 %v6205
  %v6263 = vunpack.c.l.b16 %v6206
  %v6264 = vunpack.c.l.b16 %v6207
  %v6265 = vunpack.c.l.b16 %v6208
  %v6266 = vunpack.c.l.b16 %v6209
  %v6267 = vunpack.c.l.b16 %v6210
  %v6268 = vunpack.c.l.b16 %v6211
  %v6269 = vunpack.c.l.b16 %v6212
  %v6270 = vunpack.c.l.b16 %v6213
  %v6271 = vunpack.c.l.b16 %v6214
  %v6272 = vunpack.c.l.b16 %v6215
  %v6273 = vunpack.c.l.b16 %v6216
  %v6274 = vpack.c.b16 %v6259, %v6258
  %v6275 = vpack.c.b16 %v6261, %v6260
  %v6276 = vpack.c.b16 %v6263, %v6262
  %v6277 = vpack.c.b16 %v6265, %v6264
  %v6278 = vpack.c.b16 %v6267, %v6266
  %v6279 = vpack.c.b16 %v6269, %v6268
  %v6280 = vpack.c.b16 %v6271, %v6270
  %v6281 = vpack.c.b16 %v6273, %v6272
  %6290 = vmatprep.subr.bf16.mxu0 0
  %6291 = vmatpush1.bf16.msra.mxu0 %v6274
  %6292 = vmatprep.subr.bf16.mxu0 0
  %6293 = vmatpush1.bf16.msra.mxu0 %v6275
  %6294 = vmatprep.subr.bf16.mxu0 0
  %6295 = vmatpush1.bf16.msra.mxu0 %v6276
  %6296 = vmatprep.subr.bf16.mxu0 0
  %6297 = vmatpush1.bf16.msra.mxu0 %v6277
  %6298 = vmatprep.subr.bf16.mxu0 0
  %6299 = vmatpush1.bf16.msra.mxu0 %v6278
  %6300 = vmatprep.subr.bf16.mxu0 0
  %6301 = vmatpush1.bf16.msra.mxu0 %v6279
  %6302 = vmatprep.subr.bf16.mxu0 0
  %6303 = vmatpush1.bf16.msra.mxu0 %v6280
  %6304 = vmatprep.subr.bf16.mxu0 0
  %6305 = vmatpush1.bf16.msra.mxu0 %v6281
  %6306 = vmatprep.subr.bf16.mxu0 0
  %6307 = vmatpush1.bf16.msra.mxu0 0
  %6308 = vmatprep.subr.bf16.mxu0 0
  %6309 = vmatpush1.bf16.msra.mxu0 0
  %6310 = vmatprep.subr.bf16.mxu0 0
  %6311 = vmatpush1.bf16.msra.mxu0 0
  %6312 = vmatprep.subr.bf16.mxu0 0
  %6313 = vmatpush1.bf16.msra.mxu0 0
  %6314 = vmatprep.subr.bf16.mxu0 0
  %6315 = vmatpush1.bf16.msra.mxu0 0
  %6316 = vmatprep.subr.bf16.mxu0 0
  %6317 = vmatpush1.bf16.msra.mxu0 0
  %6318 = vmatprep.subr.bf16.mxu0 0
  %6319 = vmatpush1.bf16.msra.mxu0 0
  %6320 = vmatprep.subr.bf16.mxu0 0
  %6321 = vmatpush1.bf16.msra.mxu0 0
  %6322 = vmatprep.mubr.bf16.mxu0 0
  %6323 = vmatmul.mubr.bf16.gmra.mrb[0].mxu0 %v6240
  %v6324 = vpop.f32.mrb[0].mxu0
  %v6325 = vadd.f32 0.0, %v6324
  %v6326 = vpop.f32.mrb[0].mxu0
  %v6327 = vpop.f32.mrb[0].mxu0
  %v6328 = vpop.f32.mrb[0].mxu0
  %6329 = vdwg.mxu0
  %v6330 = vadd.f32 %v6199, %v6325
  %s6331 = scalar_lea.vmem %s3, 960
  %v6332 = vld [vmem:[%s6331] sm:$0xf]
  %v6333 = vld [vmem:[%s6331 + $0x4] sm:$0xf]
  %v6334 = vld [vmem:[%s6331 + $0x8] sm:$0xf]
  %v6335 = vld [vmem:[%s6331 + $0xc] sm:$0xf]
  %v6336 = vld [vmem:[%s6331 + $0x10] sm:$0xf]
  %v6337 = vld [vmem:[%s6331 + $0x14] sm:$0xf]
  %v6338 = vld [vmem:[%s6331 + $0x18] sm:$0xf]
  %v6339 = vld [vmem:[%s6331 + $0x1c] sm:$0xf]
  %v6340 = vld [vmem:[%s6331 + $0x20] sm:$0xf]
  %v6341 = vld [vmem:[%s6331 + $0x24] sm:$0xf]
  %v6342 = vld [vmem:[%s6331 + $0x28] sm:$0xf]
  %v6343 = vld [vmem:[%s6331 + $0x2c] sm:$0xf]
  %v6344 = vld [vmem:[%s6331 + $0x30] sm:$0xf]
  %v6345 = vld [vmem:[%s6331 + $0x34] sm:$0xf]
  %v6346 = vld [vmem:[%s6331 + $0x38] sm:$0xf]
  %v6347 = vld [vmem:[%s6331 + $0x3c] sm:$0xf]
  %v6356 = vunpack.c.l.b16 %v4249
  %v6357 = vunpack.c.l.b16 %v4265
  %v6358 = vunpack.c.l.b16 %v4281
  %v6359 = vunpack.c.l.b16 %v4297
  %v6360 = vunpack.c.l.b16 %v4313
  %v6361 = vunpack.c.l.b16 %v4329
  %v6362 = vunpack.c.l.b16 %v4345
  %v6363 = vunpack.c.l.b16 %v4361
  %v6364 = vsel %vm4411, %v6357, %v6356
  %v6365 = vsel %vm4413, %v6358, %v6364
  %v6366 = vsel %vm4415, %v6359, %v6365
  %v6367 = vsel %vm4417, %v6360, %v6366
  %v6368 = vsel %vm4419, %v6361, %v6367
  %v6369 = vsel %vm4421, %v6362, %v6368
  %v6370 = vsel %vm4423, %v6363, %v6369
  %v6371 = vpack.c.b16 %v6370, %v6370
  %v6389 = vunpack.c.l.b16 %v6332
  %v6390 = vunpack.c.l.b16 %v6333
  %v6391 = vunpack.c.l.b16 %v6334
  %v6392 = vunpack.c.l.b16 %v6335
  %v6393 = vunpack.c.l.b16 %v6336
  %v6394 = vunpack.c.l.b16 %v6337
  %v6395 = vunpack.c.l.b16 %v6338
  %v6396 = vunpack.c.l.b16 %v6339
  %v6397 = vunpack.c.l.b16 %v6340
  %v6398 = vunpack.c.l.b16 %v6341
  %v6399 = vunpack.c.l.b16 %v6342
  %v6400 = vunpack.c.l.b16 %v6343
  %v6401 = vunpack.c.l.b16 %v6344
  %v6402 = vunpack.c.l.b16 %v6345
  %v6403 = vunpack.c.l.b16 %v6346
  %v6404 = vunpack.c.l.b16 %v6347
  %v6405 = vpack.c.b16 %v6390, %v6389
  %v6406 = vpack.c.b16 %v6392, %v6391
  %v6407 = vpack.c.b16 %v6394, %v6393
  %v6408 = vpack.c.b16 %v6396, %v6395
  %v6409 = vpack.c.b16 %v6398, %v6397
  %v6410 = vpack.c.b16 %v6400, %v6399
  %v6411 = vpack.c.b16 %v6402, %v6401
  %v6412 = vpack.c.b16 %v6404, %v6403
  %6421 = vmatprep.subr.bf16.mxu0 0
  %6422 = vmatpush1.bf16.msra.mxu0 %v6405
  %6423 = vmatprep.subr.bf16.mxu0 0
  %6424 = vmatpush1.bf16.msra.mxu0 %v6406
  %6425 = vmatprep.subr.bf16.mxu0 0
  %6426 = vmatpush1.bf16.msra.mxu0 %v6407
  %6427 = vmatprep.subr.bf16.mxu0 0
  %6428 = vmatpush1.bf16.msra.mxu0 %v6408
  %6429 = vmatprep.subr.bf16.mxu0 0
  %6430 = vmatpush1.bf16.msra.mxu0 %v6409
  %6431 = vmatprep.subr.bf16.mxu0 0
  %6432 = vmatpush1.bf16.msra.mxu0 %v6410
  %6433 = vmatprep.subr.bf16.mxu0 0
  %6434 = vmatpush1.bf16.msra.mxu0 %v6411
  %6435 = vmatprep.subr.bf16.mxu0 0
  %6436 = vmatpush1.bf16.msra.mxu0 %v6412
  %6437 = vmatprep.subr.bf16.mxu0 0
  %6438 = vmatpush1.bf16.msra.mxu0 0
  %6439 = vmatprep.subr.bf16.mxu0 0
  %6440 = vmatpush1.bf16.msra.mxu0 0
  %6441 = vmatprep.subr.bf16.mxu0 0
  %6442 = vmatpush1.bf16.msra.mxu0 0
  %6443 = vmatprep.subr.bf16.mxu0 0
  %6444 = vmatpush1.bf16.msra.mxu0 0
  %6445 = vmatprep.subr.bf16.mxu0 0
  %6446 = vmatpush1.bf16.msra.mxu0 0
  %6447 = vmatprep.subr.bf16.mxu0 0
  %6448 = vmatpush1.bf16.msra.mxu0 0
  %6449 = vmatprep.subr.bf16.mxu0 0
  %6450 = vmatpush1.bf16.msra.mxu0 0
  %6451 = vmatprep.subr.bf16.mxu0 0
  %6452 = vmatpush1.bf16.msra.mxu0 0
  %6453 = vmatprep.mubr.bf16.mxu0 0
  %6454 = vmatmul.mubr.bf16.gmra.mrb[0].mxu0 %v6371
  %v6455 = vpop.f32.mrb[0].mxu0
  %v6456 = vadd.f32 0.0, %v6455
  %v6457 = vpop.f32.mrb[0].mxu0
  %v6458 = vpop.f32.mrb[0].mxu0
  %v6459 = vpop.f32.mrb[0].mxu0
  %6460 = vdwg.mxu0
  %v6461 = vadd.f32 %v6330, %v6456
  %v6462 = vld [vmem:[%s4] sm:$0x1]
  %v6464 = vlaneseq
  %v6465 = vshrl.u32 %v6464, 7
  %v6466 = vsub.s32 0, %v6465
  %v6467 = vrot.slane %v6462, %v6466
  %v6469 = vadd.f32 %v6461, %v6467
  %v6470 = vmax.f32 %v6469, 0.0
  %v6471 = vpack.c.bf16 %v6470, %v6470
  %v6472 = vld [vmem:[%s5] sm:$0xf]
  %v6473 = vld [vmem:[%s5 + $0x4] sm:$0xf]
  %v6474 = vld [vmem:[%s5 + $0x8] sm:$0xf]
  %v6475 = vld [vmem:[%s5 + $0xc] sm:$0xf]
  %v6476 = vld [vmem:[%s5 + $0x10] sm:$0xf]
  %v6477 = vld [vmem:[%s5 + $0x14] sm:$0xf]
  %v6478 = vld [vmem:[%s5 + $0x18] sm:$0xf]
  %v6479 = vld [vmem:[%s5 + $0x1c] sm:$0xf]
  %v6480 = vld [vmem:[%s5 + $0x20] sm:$0xf]
  %v6481 = vld [vmem:[%s5 + $0x24] sm:$0xf]
  %v6482 = vld [vmem:[%s5 + $0x28] sm:$0xf]
  %v6483 = vld [vmem:[%s5 + $0x2c] sm:$0xf]
  %v6484 = vld [vmem:[%s5 + $0x30] sm:$0xf]
  %v6485 = vld [vmem:[%s5 + $0x34] sm:$0xf]
  %v6486 = vld [vmem:[%s5 + $0x38] sm:$0xf]
  %v6487 = vld [vmem:[%s5 + $0x3c] sm:$0xf]
  %v6488 = vld [vmem:[%s6] sm:$0x1]
  %v6490 = vlaneseq
  %v6491 = vshrl.u32 %v6490, 7
  %v6492 = vsub.s32 0, %v6491
  %v6493 = vrot.slane %v6488, %v6492
  %v6511 = vunpack.c.l.b16 %v6472
  %v6512 = vunpack.c.l.b16 %v6473
  %v6513 = vunpack.c.l.b16 %v6474
  %v6514 = vunpack.c.l.b16 %v6475
  %v6515 = vunpack.c.l.b16 %v6476
  %v6516 = vunpack.c.l.b16 %v6477
  %v6517 = vunpack.c.l.b16 %v6478
  %v6518 = vunpack.c.l.b16 %v6479
  %v6519 = vunpack.c.l.b16 %v6480
  %v6520 = vunpack.c.l.b16 %v6481
  %v6521 = vunpack.c.l.b16 %v6482
  %v6522 = vunpack.c.l.b16 %v6483
  %v6523 = vunpack.c.l.b16 %v6484
  %v6524 = vunpack.c.l.b16 %v6485
  %v6525 = vunpack.c.l.b16 %v6486
  %v6526 = vunpack.c.l.b16 %v6487
  %v6527 = vpack.c.b16 %v6512, %v6511
  %v6528 = vpack.c.b16 %v6514, %v6513
  %v6529 = vpack.c.b16 %v6516, %v6515
  %v6530 = vpack.c.b16 %v6518, %v6517
  %v6531 = vpack.c.b16 %v6520, %v6519
  %v6532 = vpack.c.b16 %v6522, %v6521
  %v6533 = vpack.c.b16 %v6524, %v6523
  %v6534 = vpack.c.b16 %v6526, %v6525
  %6543 = vmatprep.subr.bf16.mxu0 0
  %6544 = vmatpush1.bf16.msra.mxu0 %v6527
  %6545 = vmatprep.subr.bf16.mxu0 0
  %6546 = vmatpush1.bf16.msra.mxu0 %v6528
  %6547 = vmatprep.subr.bf16.mxu0 0
  %6548 = vmatpush1.bf16.msra.mxu0 %v6529
  %6549 = vmatprep.subr.bf16.mxu0 0
  %6550 = vmatpush1.bf16.msra.mxu0 %v6530
  %6551 = vmatprep.subr.bf16.mxu0 0
  %6552 = vmatpush1.bf16.msra.mxu0 %v6531
  %6553 = vmatprep.subr.bf16.mxu0 0
  %6554 = vmatpush1.bf16.msra.mxu0 %v6532
  %6555 = vmatprep.subr.bf16.mxu0 0
  %6556 = vmatpush1.bf16.msra.mxu0 %v6533
  %6557 = vmatprep.subr.bf16.mxu0 0
  %6558 = vmatpush1.bf16.msra.mxu0 %v6534
  %6559 = vmatprep.subr.bf16.mxu0 0
  %6560 = vmatpush1.bf16.msra.mxu0 0
  %6561 = vmatprep.subr.bf16.mxu0 0
  %6562 = vmatpush1.bf16.msra.mxu0 0
  %6563 = vmatprep.subr.bf16.mxu0 0
  %6564 = vmatpush1.bf16.msra.mxu0 0
  %6565 = vmatprep.subr.bf16.mxu0 0
  %6566 = vmatpush1.bf16.msra.mxu0 0
  %6567 = vmatprep.subr.bf16.mxu0 0
  %6568 = vmatpush1.bf16.msra.mxu0 0
  %6569 = vmatprep.subr.bf16.mxu0 0
  %6570 = vmatpush1.bf16.msra.mxu0 0
  %6571 = vmatprep.subr.bf16.mxu0 0
  %6572 = vmatpush1.bf16.msra.mxu0 0
  %6573 = vmatprep.subr.bf16.mxu0 0
  %6574 = vmatpush1.bf16.msra.mxu0 0
  %6575 = vmatprep.mubr.bf16.mxu0 0
  %6576 = vmatmul.mubr.bf16.gmra.mrb[0].mxu0 %v6471
  %v6577 = vpop.f32.mrb[0].mxu0
  %v6578 = vadd.f32 %v6493, %v6577
  %v6579 = vpop.f32.mrb[0].mxu0
  %v6580 = vpop.f32.mrb[0].mxu0
  %v6581 = vpop.f32.mrb[0].mxu0
  %6582 = vdwg.mxu0
  %v6583 = vmax.f32 %v6578, 0.0
  %v6584 = vpack.c.bf16 %v6583, %v6583
  %v6585 = vld [vmem:[%s7] sm:$0xf]
  %v6586 = vld [vmem:[%s7 + $0x4] sm:$0xf]
  %v6587 = vld [vmem:[%s7 + $0x8] sm:$0xf]
  %v6588 = vld [vmem:[%s7 + $0xc] sm:$0xf]
  %v6589 = vld [vmem:[%s7 + $0x10] sm:$0xf]
  %v6590 = vld [vmem:[%s7 + $0x14] sm:$0xf]
  %v6591 = vld [vmem:[%s7 + $0x18] sm:$0xf]
  %v6592 = vld [vmem:[%s7 + $0x1c] sm:$0xf]
  %v6593 = vld [vmem:[%s7 + $0x20] sm:$0xf]
  %v6594 = vld [vmem:[%s7 + $0x24] sm:$0xf]
  %v6595 = vld [vmem:[%s7 + $0x28] sm:$0xf]
  %v6596 = vld [vmem:[%s7 + $0x2c] sm:$0xf]
  %v6597 = vld [vmem:[%s7 + $0x30] sm:$0xf]
  %v6598 = vld [vmem:[%s7 + $0x34] sm:$0xf]
  %v6599 = vld [vmem:[%s7 + $0x38] sm:$0xf]
  %v6600 = vld [vmem:[%s7 + $0x3c] sm:$0xf]
  %v6601 = vld [vmem:[%s8] sm:$0x1]
  %v6603 = vlaneseq
  %v6604 = vshrl.u32 %v6603, 7
  %v6605 = vsub.s32 0, %v6604
  %v6606 = vrot.slane %v6601, %v6605
  %v6624 = vunpack.c.l.b16 %v6585
  %v6625 = vunpack.c.l.b16 %v6586
  %v6626 = vunpack.c.l.b16 %v6587
  %v6627 = vunpack.c.l.b16 %v6588
  %v6628 = vunpack.c.l.b16 %v6589
  %v6629 = vunpack.c.l.b16 %v6590
  %v6630 = vunpack.c.l.b16 %v6591
  %v6631 = vunpack.c.l.b16 %v6592
  %v6632 = vunpack.c.l.b16 %v6593
  %v6633 = vunpack.c.l.b16 %v6594
  %v6634 = vunpack.c.l.b16 %v6595
  %v6635 = vunpack.c.l.b16 %v6596
  %v6636 = vunpack.c.l.b16 %v6597
  %v6637 = vunpack.c.l.b16 %v6598
  %v6638 = vunpack.c.l.b16 %v6599
  %v6639 = vunpack.c.l.b16 %v6600
  %v6640 = vpack.c.b16 %v6625, %v6624
  %v6641 = vpack.c.b16 %v6627, %v6626
  %v6642 = vpack.c.b16 %v6629, %v6628
  %v6643 = vpack.c.b16 %v6631, %v6630
  %v6644 = vpack.c.b16 %v6633, %v6632
  %v6645 = vpack.c.b16 %v6635, %v6634
  %v6646 = vpack.c.b16 %v6637, %v6636
  %v6647 = vpack.c.b16 %v6639, %v6638
  %6656 = vmatprep.subr.bf16.mxu0 0
  %6657 = vmatpush1.bf16.msra.mxu0 %v6640
  %6658 = vmatprep.subr.bf16.mxu0 0
  %6659 = vmatpush1.bf16.msra.mxu0 %v6641
  %6660 = vmatprep.subr.bf16.mxu0 0
  %6661 = vmatpush1.bf16.msra.mxu0 %v6642
  %6662 = vmatprep.subr.bf16.mxu0 0
  %6663 = vmatpush1.bf16.msra.mxu0 %v6643
  %6664 = vmatprep.subr.bf16.mxu0 0
  %6665 = vmatpush1.bf16.msra.mxu0 %v6644
  %6666 = vmatprep.subr.bf16.mxu0 0
  %6667 = vmatpush1.bf16.msra.mxu0 %v6645
  %6668 = vmatprep.subr.bf16.mxu0 0
  %6669 = vmatpush1.bf16.msra.mxu0 %v6646
  %6670 = vmatprep.subr.bf16.mxu0 0
  %6671 = vmatpush1.bf16.msra.mxu0 %v6647
  %6672 = vmatprep.subr.bf16.mxu0 0
  %6673 = vmatpush1.bf16.msra.mxu0 0
  %6674 = vmatprep.subr.bf16.mxu0 0
  %6675 = vmatpush1.bf16.msra.mxu0 0
  %6676 = vmatprep.subr.bf16.mxu0 0
  %6677 = vmatpush1.bf16.msra.mxu0 0
  %6678 = vmatprep.subr.bf16.mxu0 0
  %6679 = vmatpush1.bf16.msra.mxu0 0
  %6680 = vmatprep.subr.bf16.mxu0 0
  %6681 = vmatpush1.bf16.msra.mxu0 0
  %6682 = vmatprep.subr.bf16.mxu0 0
  %6683 = vmatpush1.bf16.msra.mxu0 0
  %6684 = vmatprep.subr.bf16.mxu0 0
  %6685 = vmatpush1.bf16.msra.mxu0 0
  %6686 = vmatprep.subr.bf16.mxu0 0
  %6687 = vmatpush1.bf16.msra.mxu0 0
  %6688 = vmatprep.mubr.bf16.mxu0 0
  %6689 = vmatmul.mubr.bf16.gmra.mrb[0].mxu0 %v6584
  %v6690 = vpop.f32.mrb[0].mxu0
  %v6691 = vadd.f32 %v6606, %v6690
  %v6692 = vpop.f32.mrb[0].mxu0
  %v6693 = vpop.f32.mrb[0].mxu0
  %v6694 = vpop.f32.mrb[0].mxu0
  %6695 = vdwg.mxu0
  %6696 = vst [vmem:[%s9] sm:$0xff] %v6691
  // Predicated region
  $region38: #{lenet_forward.3} parent=0 // pred_check
    _
  $region39: #{lenet_forward.3} parent=0 // pred_check_branch
    %6698 = sbr.rel (0) target = $region41
  $region40: #{lenet_forward.3} parent=0 // pred_region
    _
  $region41: #{lenet_forward.3} parent=0 // pred_fallthru
    _
  // Predicated region
  $region42: #{lenet_forward.3} parent=0 // pred_check
    _
  $region43: #{lenet_forward.3} parent=0 // pred_check_branch
    %6700 = sbr.rel (0) target = $region45
  $region44: #{lenet_forward.3} parent=0 // pred_region
    _
  $region45: #{lenet_forward.3} parent=0 // pred_fallthru
    _

</llo_original>
